<compile_context>
chip_gen: v5e
topology: v5e:2x2
jax: 0.10.0
libtpu: 0.0.40
codegen_flags: <defaults>
</compile_context>

<pallas_src>
import jax
import jax.numpy as jnp
from jax.experimental import pallas as pl
from jax.experimental.pallas import tpu as pltpu


def _pick_tile(dim, cap, align):
    """Largest tile t <= cap with dim % t == 0 and (t == dim or t % align == 0)."""
    cap = min(cap, dim)
    for t in range(cap, 0, -1):
        if dim % t == 0 and (t == dim or t % align == 0):
            return t
    return dim


# ---------------------------------------------------------------------------
# Pallas kernels
# ---------------------------------------------------------------------------

def _matmul_q8_bias_relu_kernel(a_ref, w_ref, scale_ref, bias_ref, o_ref,
                                acc_ref):
    """relu((a @ w_int8) * col_scale + bias) with f32 accumulation."""
    k = pl.program_id(2)

    @pl.when(k == 0)
    def _():
        acc_ref[...] = jnp.zeros_like(acc_ref)

    # Upcast the int8 weight tile to bf16 on the VPU (exact: |w| <= 127),
    # hit the MXU bf16 path, accumulate in f32.
    acc_ref[...] += jnp.dot(a_ref[...], w_ref[...].astype(jnp.bfloat16),
                            preferred_element_type=jnp.float32)

    @pl.when(k == pl.num_programs(2) - 1)
    def _():
        o_ref[...] = jnp.maximum(
            acc_ref[...] * scale_ref[...] + bias_ref[...], 0.0
        ).astype(o_ref.dtype)


def matmul_q8_bias_relu(a, w_q, w_scale, b):
    """relu(a @ (w_q * scale) + b).  a:(M,K) bf16, w_q:(K,N) int8,
    w_scale:(N,) f32 per-output-channel, b:(N,) f32."""
    a = a.astype(jnp.bfloat16)
    M, K = a.shape
    K2, N = w_q.shape
    assert K == K2

    # tm is VMEM-driven (review): conv1 (M=12288, K=9) runs in 3 steps, not 24.
    tm = _pick_tile(M, 4096, 16)
    # Cap tn at 2048: FC1/FC2 (N=4096) keep exactly 2 parallel N blocks so both
    # v7x TensorCores stream half the weights each (do not over-split).
    tn = _pick_tile(N, 2048, 128)
    # int8 weight tile budget ~16 MiB (1 byte/elem): FC1 K runs in 2 steps,
    # every conv weight is fully K-resident in a single step.
    tk_cap = max(128, (16 * 1024 * 1024) // tn)
    tk = _pick_tile(K, tk_cap, 128)

    grid = (M // tm, N // tn, K // tk)
    scale2d = w_scale.reshape(1, N).astype(jnp.float32)
    bias2d = b.reshape(1, N).astype(jnp.float32)

    return pl.pallas_call(
        _matmul_q8_bias_relu_kernel,
        out_shape=jax.ShapeDtypeStruct((M, N), jnp.bfloat16),
        grid_spec=pltpu.PrefetchScalarGridSpec(
            num_scalar_prefetch=0,
            grid=grid,
            in_specs=[
                pl.BlockSpec((tm, tk), lambda i, j, k: (i, k)),
                pl.BlockSpec((tk, tn), lambda i, j, k: (k, j)),
                pl.BlockSpec((1, tn), lambda i, j, k: (0, j)),
                pl.BlockSpec((1, tn), lambda i, j, k: (0, j)),
            ],
            out_specs=pl.BlockSpec((tm, tn), lambda i, j, k: (i, j)),
            scratch_shapes=[pltpu.VMEM((tm, tn), jnp.float32)],
        ),
        compiler_params=pltpu.CompilerParams(
            dimension_semantics=("parallel", "parallel", "arbitrary"),
            # Worst case live set here is ~25 MiB (FC1); 48 MiB is safe on
            # v7x's 64 MiB/TC VMEM and leaves room on v5e/v6e.
            vmem_limit_bytes=48 * 1024 * 1024,
        ),
    )(a, w_q, scale2d, bias2d)


def _maxpool_kernel(x_ref, o_ref):
    """x tile: (R, 2*Wo, 2*C) laid out as [h2*Wo+wo, w2*C+c]; out: (R, Wo, C)."""
    wo = o_ref.shape[1]
    c = o_ref.shape[2]
    t = x_ref[...]
    m = jnp.maximum(t[:, :wo, :], t[:, wo:, :])          # max over the 2 rows
    o_ref[...] = jnp.maximum(m[:, :, :c], m[:, :, c:])   # max over the 2 cols


def maxpool2x2(x):
    """2x2 stride-2 max pool on NHWC.  The stride-2 selection happens inside
    the kernel on a free contiguous reshape, so XLA never materializes the
    four strided sub-views."""
    Nb, H, W, C = x.shape
    Ho, Wo = H // 2, W // 2
    R = Nb * Ho
    # Pure reshape of the contiguous NHWC array (element order unchanged).
    xr = x.reshape(R, 2 * Wo, 2 * C)
    out = pl.pallas_call(
        _maxpool_kernel,
        out_shape=jax.ShapeDtypeStruct((R, Wo, C), x.dtype),
        grid_spec=pltpu.PrefetchScalarGridSpec(
            num_scalar_prefetch=0,
            grid=(1,),
            in_specs=[pl.BlockSpec((R, 2 * Wo, 2 * C), lambda i: (0, 0, 0))],
            out_specs=pl.BlockSpec((R, Wo, C), lambda i: (0, 0, 0)),
        ),
    )(xr)
    return out.reshape(Nb, Ho, Wo, C)


def conv3x3_relu(x, w_q, w_scale, b):
    """3x3 'same' conv + ReLU.  x:(N,H,W,Cin), w_q:(9*Cin,Cout) int8,
    w_scale:(Cout,), b:(Cout,)."""
    Nb, H, W, Cin = x.shape
    Cout = w_q.shape[-1]
    x = x.astype(jnp.bfloat16)           # im2col glue materializes in bf16
    xp = jnp.pad(x, ((0, 0), (1, 1), (1, 1), (0, 0)))
    # TODO(synk): im2col patches still round-trip HBM (XLA pad+concat); a
    # fully-fused Pallas conv (manual overlapping-row DMA) would cut ~20% of
    # the remaining activation traffic but is left out to keep lowering safe.
    patches = jnp.concatenate(
        [xp[:, dh:dh + H, dw:dw + W, :] for dh in range(3) for dw in range(3)],
        axis=-1)
    a = patches.reshape(Nb * H * W, 9 * Cin)   # (dh, dw, cin) ordering
    y = matmul_q8_bias_relu(a, w_q, w_scale, b)
    return y.reshape(Nb, H, W, Cout)


# ---------------------------------------------------------------------------
# VGGish model (synthetic deterministic parameters, int8 weights + f32 scales)
# ---------------------------------------------------------------------------

CONV_DIMS = [(1, 64), (64, 128), (128, 256), (256, 256), (256, 512), (512, 512)]
FC_DIMS = [(512 * 24, 4096), (4096, 4096), (4096, 128)]


def _quantize_per_col(w):
    """Symmetric per-output-channel int8 quantization of a (K, N) matrix."""
    amax = jnp.max(jnp.abs(w), axis=0)
    scale = jnp.maximum(amax, 1e-8) / 127.0
    w_q = jnp.clip(jnp.round(w / scale), -127.0, 127.0).astype(jnp.int8)
    return w_q, scale.astype(jnp.float32)


def init_params(key):
    params = {"conv": [], "fc": []}
    keys = jax.random.split(key, len(CONV_DIMS) + len(FC_DIMS))
    for i, (cin, cout) in enumerate(CONV_DIMS):
        w = jax.random.normal(keys[i], (3, 3, cin, cout), jnp.float32)
        w = w * jnp.sqrt(2.0 / (9.0 * cin))
        w_q, scale = _quantize_per_col(w.reshape(9 * cin, cout))
        params["conv"].append((w_q, scale, jnp.zeros((cout,), jnp.float32)))
    for j, (din, dout) in enumerate(FC_DIMS):
        w = jax.random.normal(keys[len(CONV_DIMS) + j], (din, dout), jnp.float32)
        w = w * jnp.sqrt(2.0 / din)
        w_q, scale = _quantize_per_col(w)
        params["fc"].append((w_q, scale, jnp.zeros((dout,), jnp.float32)))
    return params


def vggish_forward(params, x_nchw):
    x = jnp.transpose(x_nchw, (0, 2, 3, 1))          # NCHW -> NHWC
    c = params["conv"]
    x = conv3x3_relu(x, *c[0]); x = maxpool2x2(x)
    x = conv3x3_relu(x, *c[1]); x = maxpool2x2(x)
    x = conv3x3_relu(x, *c[2])
    x = conv3x3_relu(x, *c[3]); x = maxpool2x2(x)
    x = conv3x3_relu(x, *c[4])
    x = conv3x3_relu(x, *c[5]); x = maxpool2x2(x)
    # NHWC flatten == PyTorch permute(0,2,3,1).contiguous().view(N, -1)
    x = x.reshape(x.shape[0], -1)                    # (N, 6*4*512) = (N, 512*24)
    for w_q, scale, b in params["fc"]:
        x = matmul_q8_bias_relu(x, w_q, scale, b)
    return x


def vggish_reference(params, x_nchw):
    """Pure-JAX f32 reference (XLA ops) using the same dequantized weights."""
    x = jnp.transpose(x_nchw, (0, 2, 3, 1))
    x = x.astype(jnp.bfloat16).astype(jnp.float32)   # share input rounding

    def deq(w_q, s):
        return w_q.astype(jnp.float32) * s[None, :]

    def conv(x, w_q, s, b):
        cin = w_q.shape[0] // 9
        cout = w_q.shape[1]
        w = deq(w_q, s).reshape(3, 3, cin, cout)
        y = jax.lax.conv_general_dilated(
            x, w, window_strides=(1, 1), padding="SAME",
            dimension_numbers=("NHWC", "HWIO", "NHWC"))
        return jax.nn.relu(y + b)

    def pool(x):
        Nb, H, W, C = x.shape
        return x.reshape(Nb, H // 2, 2, W // 2, 2, C).max(axis=(2, 4))

    c = params["conv"]
    x = pool(conv(x, *c[0]))
    x = pool(conv(x, *c[1]))
    x = conv(x, *c[2])
    x = pool(conv(x, *c[3]))
    x = conv(x, *c[4])
    x = pool(conv(x, *c[5]))
    x = x.reshape(x.shape[0], -1)
    for w_q, s, b in params["fc"]:
        x = jax.nn.relu(x @ deq(w_q, s) + b)
    return x


if __name__ == "__main__":
    key = jax.random.PRNGKey(0)
    pkey, xkey = jax.random.split(key)
    params = init_params(pkey)

    # VGGish input: (N, 1, 96, 64) log-mel patches in NCHW (as in PyTorch).
    # The 96x64 spatial size is forced by the module's Linear(512 * 24, ...)
    # (four 2x2 pools: 96/16 * 64/16 = 6 * 4 = 24); batch kept small (2).
    x = jax.random.normal(xkey, (2, 1, 96, 64), jnp.float32)

    out = vggish_forward(params, x)
    out = jax.block_until_ready(out)

    assert out.shape == (2, 128), out.shape
    assert bool(jnp.all(jnp.isfinite(out)))

    ref = jax.block_until_ready(vggish_reference(params, x))
    out32 = out.astype(jnp.float32)
    rel_err = float(jnp.linalg.norm(out32 - ref) / (jnp.linalg.norm(ref) + 1e-6))
    assert rel_err < 5e-2, f"relative error too large: {rel_err}"

    print("KERNEL_OK")
</pallas_src>

<mosaic_0001>
module attributes {stable_mosaic.version = 11 : i64} {
  func.func @_matmul_q8_bias_relu_kernel(%arg0: i32, %arg1: i32, %arg2: i32, %arg3: memref<4096x9xbf16, #tpu.memory_space<vmem>>, %arg4: memref<9x64xi8, #tpu.memory_space<vmem>>, %arg5: memref<1x64xf32, #tpu.memory_space<vmem>>, %arg6: memref<1x64xf32, #tpu.memory_space<vmem>>, %arg7: memref<4096x64xbf16, #tpu.memory_space<vmem>>, %arg8: memref<4096x64xf32, #tpu.memory_space<vmem>>) attributes {dimension_semantics = [#tpu.dimension_semantics<parallel>, #tpu.dimension_semantics<parallel>, #tpu.dimension_semantics<arbitrary>], iteration_bounds = array<i64: 3, 1, 1>, scalar_prefetch = 0 : i64, scratch_operands = 1 : i64, tpu.core_type = #tpu.core_type<tc>, window_params = [{transform_indices = @transform_0, window_bounds = array<i64: 4096, 9>}, {transform_indices = @transform_1, window_bounds = array<i64: 9, 64>}, {transform_indices = @transform_2, window_bounds = array<i64: 1, 64>}, {transform_indices = @transform_3, window_bounds = array<i64: 1, 64>}, {transform_indices = @transform_4, window_bounds = array<i64: 4096, 64>}]} {
    %c0_i32 = arith.constant 0 : i32
    %0 = arith.cmpi eq, %arg2, %c0_i32 : i32
    %1 = arith.extui %0 : i1 to i32
    %c0_i32_0 = arith.constant 0 : i32
    %2 = arith.cmpi ne, %1, %c0_i32_0 : i32
    scf.if %2 {
      %cst_10 = arith.constant 0.000000e+00 : f32
      %13 = vector.broadcast %cst_10 : f32 to vector<4096x64xf32>
      %c0_11 = arith.constant 0 : index
      %c0_12 = arith.constant 0 : index
      %14 = vector.load %arg8[%c0_11, %c0_12] : memref<4096x64xf32, #tpu.memory_space<vmem>>, vector<4096x64xf32>
      tpu.vector_store %arg8[%c0_11, %c0_12], %13 {strides = array<i32>} : memref<4096x64xf32, #tpu.memory_space<vmem>>, vector<4096x64xf32>,
    } else {
    }
    %c0 = arith.constant 0 : index
    %c0_1 = arith.constant 0 : index
    %3 = vector.load %arg8[%c0, %c0_1] : memref<4096x64xf32, #tpu.memory_space<vmem>>, vector<4096x64xf32>
    %c0_2 = arith.constant 0 : index
    %c0_3 = arith.constant 0 : index
    %4 = vector.load %arg3[%c0_2, %c0_3] : memref<4096x9xbf16, #tpu.memory_space<vmem>>, vector<4096x9xbf16>
    %c0_4 = arith.constant 0 : index
    %c0_5 = arith.constant 0 : index
    %5 = vector.load %arg4[%c0_4, %c0_5] : memref<9x64xi8, #tpu.memory_space<vmem>>, vector<9x64xi8>
    %6 = arith.sitofp %5 : vector<9x64xi8> to vector<9x64xbf16>
    %cst = arith.constant dense<0.000000e+00> : vector<4096x64xf32>
    %7 = tpu.matmul %4, %6, %cst {dimension_numbers = #tpu.dot_dimension_numbers<[1], [0], [0], [1], [0, 0, 1, 1], [], []>} : vector<4096x9xbf16>, vector<9x64xbf16>, vector<4096x64xf32> -> vector<4096x64xf32>
    %8 = arith.addf %3, %7 : vector<4096x64xf32>
    %c0_6 = arith.constant 0 : index
    %c0_7 = arith.constant 0 : index
    %9 = vector.load %arg8[%c0_6, %c0_7] : memref<4096x64xf32, #tpu.memory_space<vmem>>, vector<4096x64xf32>
    tpu.vector_store %arg8[%c0_6, %c0_7], %8 {strides = array<i32>} : memref<4096x64xf32, #tpu.memory_space<vmem>>, vector<4096x64xf32>,
    %c0_i32_8 = arith.constant 0 : i32
    %10 = arith.cmpi eq, %arg2, %c0_i32_8 : i32
    %11 = arith.extui %10 : i1 to i32
    %c0_i32_9 = arith.constant 0 : i32
    %12 = arith.cmpi ne, %11, %c0_i32_9 : i32
    scf.if %12 {
      %c0_10 = arith.constant 0 : index
      %c0_11 = arith.constant 0 : index
      %13 = vector.load %arg8[%c0_10, %c0_11] : memref<4096x64xf32, #tpu.memory_space<vmem>>, vector<4096x64xf32>
      %c0_12 = arith.constant 0 : index
      %c0_13 = arith.constant 0 : index
      %14 = vector.load %arg5[%c0_12, %c0_13] : memref<1x64xf32, #tpu.memory_space<vmem>>, vector<1x64xf32>
      %15 = vector.broadcast %14 : vector<1x64xf32> to vector<4096x64xf32>
      %16 = arith.mulf %13, %15 : vector<4096x64xf32>
      %c0_14 = arith.constant 0 : index
      %c0_15 = arith.constant 0 : index
      %17 = vector.load %arg6[%c0_14, %c0_15] : memref<1x64xf32, #tpu.memory_space<vmem>>, vector<1x64xf32>
      %18 = vector.broadcast %17 : vector<1x64xf32> to vector<4096x64xf32>
      %19 = arith.addf %16, %18 : vector<4096x64xf32>
      %cst_16 = arith.constant 0.000000e+00 : f32
      %20 = vector.broadcast %cst_16 : f32 to vector<4096x64xf32>
      %21 = arith.maximumf %19, %20 : vector<4096x64xf32>
      %22 = arith.truncf %21 : vector<4096x64xf32> to vector<4096x64xbf16>
      %c0_17 = arith.constant 0 : index
      %c0_18 = arith.constant 0 : index
      %23 = vector.load %arg7[%c0_17, %c0_18] : memref<4096x64xbf16, #tpu.memory_space<vmem>>, vector<4096x64xbf16>
      tpu.vector_store %arg7[%c0_17, %c0_18], %22 {strides = array<i32>} : memref<4096x64xbf16, #tpu.memory_space<vmem>>, vector<4096x64xbf16>,
    } else {
    }
    return
  }
  func.func @transform_0(%arg0: i32, %arg1: i32, %arg2: i32) -> (i32, i32) {
    %c0_i32 = arith.constant 0 : i32
    return %arg0, %arg2 : i32, i32
  }
  func.func @transform_1(%arg0: i32, %arg1: i32, %arg2: i32) -> (i32, i32) {
    %c0_i32 = arith.constant 0 : i32
    return %arg2, %arg1 : i32, i32
  }
  func.func @transform_2(%arg0: i32, %arg1: i32, %arg2: i32) -> (i32, i32) {
    %c0_i32 = arith.constant 0 : i32
    %c0_i32_0 = arith.constant 0 : i32
    return %c0_i32, %arg1 : i32, i32
  }
  func.func @transform_3(%arg0: i32, %arg1: i32, %arg2: i32) -> (i32, i32) {
    %c0_i32 = arith.constant 0 : i32
    %c0_i32_0 = arith.constant 0 : i32
    return %c0_i32, %arg1 : i32, i32
  }
  func.func @transform_4(%arg0: i32, %arg1: i32, %arg2: i32) -> (i32, i32) {
    %c0_i32 = arith.constant 0 : i32
    return %arg0, %arg1 : i32, i32
  }
}

</mosaic_0001>

<llo_original>
// kernel: tpu_custom_call.1
$region0: #{tpu_custom_call.1}
  #allocation0 [shape = 'u32[]', space=smem, size = 0x4, offset = 0x4, fixed_abs, tag = 'smem constant byte address 0x4 - core index']
  #allocation1 [shape = 'u32[72,128]{1,0:T(1,128)}', space=vmem, size = 0x9000, scoped, tag = 'internal scratch']
  #allocation2 [shape = 'f32[4096,64]{1,0:T(8,128)}', space=vmem, size = 0x200000, scoped, tag = 'scratch operand']
  %s0 = inlined_call_operand.vmem [shape: bf16[12288,9], index: 0, kind: input, shape index: {}]
  %s1 = inlined_call_operand.vmem [shape: s8[9,64], index: 1, kind: input, shape index: {}]
  %s2 = inlined_call_operand.vmem [shape: f32[1,64], index: 2, kind: input, shape index: {}]
  %s3 = inlined_call_operand.vmem [shape: f32[1,64], index: 3, kind: input, shape index: {}]
  %s4 = inlined_call_operand.vmem [shape: bf16[12288,64], index: 4, kind: output, shape index: {}]
  %s5 = sld [smem:[#allocation0]]
  $region57: #{tpu_custom_call.1} parent=0
    _
  %s7 = ssub.s32 1, %s5
  %s8 = scalar_select 0, %s7, %s5
  loop: start=0, step=1, limit=5
  $region2: #{tpu_custom_call.1} parent=0 // loop_pre_header
    _
  $region3: #{tpu_custom_call.1} parent=0 // loop_header
    %s10 = sphi 0, %s14
    %p11 = scmp.ge.s32.totalorder %s10, 5
    %s17 = sphi 0, %s36
    %s18 = sphi 0, %s32
    %s19 = sphi 0, %s28
    %s20 = sphi 0, %s17
    %s21 = sphi 0, %s18
    %s22 = sphi 0, %s19
    %s23 = sphi 0, %s20
    %s24 = sphi 0, %s21
    %s25 = sphi 0, %s22
    %s41 = sphi 0, %s43
    %s44 = sphi 0, %s41
    %s45 = sphi 0, %s44
    %s61 = sphi 0, %s45
    %s69 = sphi 0, %s71
    %s72 = sphi 0, %s69
    %s73 = sphi 0, %s72
    %s89 = sphi 0, %s73
    %s95 = sphi 0, %s97
    %s98 = sphi 0, %s95
    %s99 = sphi 0, %s98
    %s115 = sphi 0, %s99
    %s121 = sphi 0, %s123
    %s124 = sphi 0, %s121
    %s125 = sphi 0, %s124
    %s141 = sphi 0, %s125
    %s149 = sphi 0, %s151
    %s152 = sphi 0, %s149
    %s153 = sphi 0, %s152
    %s169 = sphi 0, %s153
  $region4: #{tpu_custom_call.1} parent=0 // loop_header_branch
    %13 = sbr.rel (%p11) target = $region8
  $region5: #{tpu_custom_call.1} parent=0 // loop_body
    %s15 = ssub.s32 %s10, 1
    %s16 = ssub.s32 %s10, 2
    %s26 = sadd.s32 1, %s19
    %p27 = scmp.ge.s32.totalorder %s26, 1
    %s28 = scalar_select %p27, 0, %s26
    %s29 = sadd.s32 1, %s18
    %s30 = scalar_select %p27, %s29, %s18
    %p31 = scmp.ge.s32.totalorder %s30, 1
    %s32 = scalar_select %p31, 0, %s30
    %s33 = sadd.s32 1, %s17
    %s34 = scalar_select %p31, %s33, %s17
    %p35 = scmp.ge.s32.totalorder %s34, 3
    %s36 = scalar_select %p35, 0, %s34
    %s37 = ssub.s32 %s17, %s36
    %s38 = ssub.s32 %s19, %s28
    %s39 = sor.u32 %s37, %s38
    %p40 = scmp.eq.s32.totalorder %s39, 0
    %s42 = sadd.s32 %s41, 1
    %s43 = scalar_select %p40, %s41, %s42
    %p46 = pneg %p40
    %p47 = scmp.eq.s32.totalorder %s10, 2
    %p48 = por %p46, %p47
    %p49 = scmp.ne.s32.totalorder %s41, %s44
    %p50 = scmp.eq.s32.totalorder %s10, 0
    %p51 = por %p49, %p50
    %p52 = scmp.ne.s32.totalorder %s41, %s44
    %p53 = scmp.eq.s32.totalorder %s15, 2
    %p54 = por %p52, %p53
    %p55 = scmp.ne.s32.totalorder %s44, %s45
    %p56 = scmp.eq.s32.totalorder %s15, 0
    %p57 = por %p55, %p56
    %p58 = scmp.ne.s32.totalorder %s44, %s45
    %p59 = scmp.eq.s32.totalorder %s16, 2
    %p60 = por %p58, %p59
    %p62 = scmp.ne.s32.totalorder %s45, %s61
    %p63 = scmp.eq.s32.totalorder %s16, 0
    %p64 = por %p62, %p63
    %s65 = ssub.s32 %s19, %s28
    %s66 = ssub.s32 %s18, %s32
    %s67 = sor.u32 %s65, %s66
    %p68 = scmp.eq.s32.totalorder %s67, 0
    %s70 = sadd.s32 %s69, 1
    %s71 = scalar_select %p68, %s69, %s70
    %p74 = pneg %p68
    %p75 = scmp.eq.s32.totalorder %s10, 2
    %p76 = por %p74, %p75
    %p77 = scmp.ne.s32.totalorder %s69, %s72
    %p78 = scmp.eq.s32.totalorder %s10, 0
    %p79 = por %p77, %p78
    %p80 = scmp.ne.s32.totalorder %s69, %s72
    %p81 = scmp.eq.s32.totalorder %s15, 2
    %p82 = por %p80, %p81
    %p83 = scmp.ne.s32.totalorder %s72, %s73
    %p84 = scmp.eq.s32.totalorder %s15, 0
    %p85 = por %p83, %p84
    %p86 = scmp.ne.s32.totalorder %s72, %s73
    %p87 = scmp.eq.s32.totalorder %s16, 2
    %p88 = por %p86, %p87
    %p90 = scmp.ne.s32.totalorder %s73, %s89
    %p91 = scmp.eq.s32.totalorder %s16, 0
    %p92 = por %p90, %p91
    %s93 = ssub.s32 %s18, %s32
    %p94 = scmp.eq.s32.totalorder %s93, 0
    %s96 = sadd.s32 %s95, 1
    %s97 = scalar_select %p94, %s95, %s96
    %p100 = pneg %p94
    %p101 = scmp.eq.s32.totalorder %s10, 2
    %p102 = por %p100, %p101
    %p103 = scmp.ne.s32.totalorder %s95, %s98
    %p104 = scmp.eq.s32.totalorder %s10, 0
    %p105 = por %p103, %p104
    %p106 = scmp.ne.s32.totalorder %s95, %s98
    %p107 = scmp.eq.s32.totalorder %s15, 2
    %p108 = por %p106, %p107
    %p109 = scmp.ne.s32.totalorder %s98, %s99
    %p110 = scmp.eq.s32.totalorder %s15, 0
    %p111 = por %p109, %p110
    %p112 = scmp.ne.s32.totalorder %s98, %s99
    %p113 = scmp.eq.s32.totalorder %s16, 2
    %p114 = por %p112, %p113
    %p116 = scmp.ne.s32.totalorder %s99, %s115
    %p117 = scmp.eq.s32.totalorder %s16, 0
    %p118 = por %p116, %p117
    %s119 = ssub.s32 %s18, %s32
    %p120 = scmp.eq.s32.totalorder %s119, 0
    %s122 = sadd.s32 %s121, 1
    %s123 = scalar_select %p120, %s121, %s122
    %p126 = pneg %p120
    %p127 = scmp.eq.s32.totalorder %s10, 2
    %p128 = por %p126, %p127
    %p129 = scmp.ne.s32.totalorder %s121, %s124
    %p130 = scmp.eq.s32.totalorder %s10, 0
    %p131 = por %p129, %p130
    %p132 = scmp.ne.s32.totalorder %s121, %s124
    %p133 = scmp.eq.s32.totalorder %s15, 2
    %p134 = por %p132, %p133
    %p135 = scmp.ne.s32.totalorder %s124, %s125
    %p136 = scmp.eq.s32.totalorder %s15, 0
    %p137 = por %p135, %p136
    %p138 = scmp.ne.s32.totalorder %s124, %s125
    %p139 = scmp.eq.s32.totalorder %s16, 2
    %p140 = por %p138, %p139
    %p142 = scmp.ne.s32.totalorder %s125, %s141
    %p143 = scmp.eq.s32.totalorder %s16, 0
    %p144 = por %p142, %p143
    %s145 = ssub.s32 %s17, %s36
    %s146 = ssub.s32 %s18, %s32
    %s147 = sor.u32 %s145, %s146
    %p148 = scmp.eq.s32.totalorder %s147, 0
    %s150 = sadd.s32 %s149, 1
    %s151 = scalar_select %p148, %s149, %s150
    %p154 = pneg %p148
    %p155 = scmp.eq.s32.totalorder %s10, 2
    %p156 = por %p154, %p155
    %p157 = scmp.ne.s32.totalorder %s149, %s152
    %p158 = scmp.eq.s32.totalorder %s10, 0
    %p159 = por %p157, %p158
    %p160 = scmp.ne.s32.totalorder %s149, %s152
    %p161 = scmp.eq.s32.totalorder %s15, 2
    %p162 = por %p160, %p161
    %p163 = scmp.ne.s32.totalorder %s152, %s153
    %p164 = scmp.eq.s32.totalorder %s15, 0
    %p165 = por %p163, %p164
    %p166 = scmp.ne.s32.totalorder %s152, %s153
    %p167 = scmp.eq.s32.totalorder %s16, 2
    %p168 = por %p166, %p167
    %p170 = scmp.ne.s32.totalorder %s153, %s169
    %p171 = scmp.eq.s32.totalorder %s16, 0
    %p172 = por %p170, %p171
    %p173 = scmp.le.s32.totalorder 1, %s10
    %p174 = scmp.lt.s32.totalorder %s10, 4
    %p175 = pnand %p173, %p174
    %p176 = pneg %p175
    // Predicated region
    $region9: #{tpu_custom_call.1} parent=5 // pred_check
      _
    $region10: #{tpu_custom_call.1} parent=5 // pred_check_branch
      %178 = sbr.rel (%p175) target = $region12
    $region11: #{tpu_custom_call.1} parent=5 // pred_region
      %s179 = ssub.s32 %s10, 1
      // Predicated region
      $region13: #{tpu_custom_call.1} parent=11 // pred_check
        %p180 = pneg %p85
      $region14: #{tpu_custom_call.1} parent=11 // pred_check_branch
        %182 = sbr.rel (%p180) target = $region16
      $region15: #{tpu_custom_call.1} parent=11 // pred_region
        %s183 = smul.u32 2, %s22
        %p184 = scmp.lt.s32.totalorder %s183, 1
        %s185 = scalar_select %p184, %s183, 1
        %p186 = scmp.lt.s32.totalorder %s21, 0
        %s187 = scalar_select %p186, %s21, 0
        %s188 = sadd.s32 %s187, %s185
        %s189 = smul.addr %s188, 2
        %s190 = scalar_lea.vmem %s1, %s189
        %s191 = smul.u32 2, %s22
      $region16: #{tpu_custom_call.1} parent=11 // pred_fallthru
        _
      // Predicated region
      $region17: #{tpu_custom_call.1} parent=11 // pred_check
        %p192 = pneg %p111
      $region18: #{tpu_custom_call.1} parent=11 // pred_check_branch
        %194 = sbr.rel (%p192) target = $region20
      $region19: #{tpu_custom_call.1} parent=11 // pred_region
        %p195 = scmp.lt.s32.totalorder %s21, 0
        %s196 = scalar_select %p195, %s21, 0
        %s197 = scalar_lea.vmem %s2, %s196
      $region20: #{tpu_custom_call.1} parent=11 // pred_fallthru
        _
      // Predicated region
      $region21: #{tpu_custom_call.1} parent=11 // pred_check
        %p198 = pneg %p137
      $region22: #{tpu_custom_call.1} parent=11 // pred_check_branch
        %200 = sbr.rel (%p198) target = $region24
      $region23: #{tpu_custom_call.1} parent=11 // pred_region
        %p201 = scmp.lt.s32.totalorder %s21, 0
        %s202 = scalar_select %p201, %s21, 0
        %s203 = scalar_lea.vmem %s3, %s202
      $region24: #{tpu_custom_call.1} parent=11 // pred_fallthru
        _
    $region12: #{tpu_custom_call.1} parent=5 // pred_fallthru
      _
    %p204 = scmp.lt.s32.totalorder %s10, 3
    // Predicated region
    $region25: #{tpu_custom_call.1} parent=5 // pred_check
      %p205 = pneg %p204
    $region26: #{tpu_custom_call.1} parent=5 // pred_check_branch
      %207 = sbr.rel (%p205) target = $region28
    $region27: #{tpu_custom_call.1} parent=5 // pred_region
      // Predicated region
      $region29: #{tpu_custom_call.1} parent=27 // pred_check
        %p208 = pneg %p51
      $region30: #{tpu_custom_call.1} parent=27 // pred_check_branch
        %210 = sbr.rel (%p208) target = $region32
      $region31: #{tpu_custom_call.1} parent=27 // pred_region
        %s211 = smul.u32 512, %s17
        %p212 = scmp.lt.s32.totalorder %s211, 1535
        %s213 = scalar_select %p212, %s211, 1535
        %p214 = scmp.lt.s32.totalorder %s19, 0
        %s215 = scalar_select %p214, %s19, 0
        %s216 = sadd.s32 %s215, %s213
        %s217 = smul.addr %s216, 4
        %s218 = scalar_lea.vmem %s0, %s217
        %s219 = smul.u32 512, %s17
      $region32: #{tpu_custom_call.1} parent=27 // pred_fallthru
        _
    $region28: #{tpu_custom_call.1} parent=5 // pred_fallthru
      _
    %p220 = scmp.le.s32.totalorder 1, %s10
    %p221 = scmp.lt.s32.totalorder %s10, 4
    %p222 = pnand %p220, %p221
    %p223 = pneg %p222
    // Predicated region
    $region33: #{tpu_custom_call.1} parent=5 // pred_check
      _
    $region34: #{tpu_custom_call.1} parent=5 // pred_check_branch
      %225 = sbr.rel (%p222) target = $region36
    $region35: #{tpu_custom_call.1} parent=5 // pred_region
      %s226 = ssub.s32 %s10, 1
      %s227 = smul.u32 512, %s20
      %p228 = scmp.lt.s32.totalorder %s227, 1535
      %s229 = scalar_select %p228, %s227, 1535
      %p230 = scmp.lt.s32.totalorder %s22, 0
      %s231 = scalar_select %p230, %s22, 0
      %s232 = sadd.s32 %s231, %s229
      %s233 = smul.addr %s232, 4
      %s234 = scalar_lea.vmem %s0, %s233
      %p235 = pneg %p57
      %p236 = pneg %p54
      %s237 = smul.u32 2, %s22
      %p238 = scmp.lt.s32.totalorder %s237, 1
      %s239 = scalar_select %p238, %s237, 1
      %p240 = scmp.lt.s32.totalorder %s21, 0
      %s241 = scalar_select %p240, %s21, 0
      %s242 = sadd.s32 %s241, %s239
      %s243 = smul.addr %s242, 2
      %s244 = scalar_lea.vmem %s1, %s243
      %p245 = pneg %p85
      %p246 = pneg %p82
      %p247 = scmp.lt.s32.totalorder %s21, 0
      %s248 = scalar_select %p247, %s21, 0
      %s249 = scalar_lea.vmem %s2, %s248
      %p250 = pneg %p111
      %p251 = pneg %p108
      %p252 = scmp.lt.s32.totalorder %s21, 0
      %s253 = scalar_select %p252, %s21, 0
      %s254 = scalar_lea.vmem %s3, %s253
      %p255 = pneg %p137
      %p256 = pneg %p134
      %p257 = pneg %p165
      %p258 = pneg %p162
      %s259 = smul.u32 512, %s20
      %p260 = scmp.lt.s32.totalorder %s259, 1535
      %s261 = scalar_select %p260, %s259, 1535
      %p262 = scmp.lt.s32.totalorder %s21, 0
      %s263 = scalar_select %p262, %s21, 0
      %s264 = sadd.s32 %s263, %s261
      %s265 = smul.addr %s264, 4
      %s266 = scalar_lea.vmem %s4, %s265
      %s267 = smul.u32 512, %s20
      %p268 = scmp.lt.s32.totalorder %s267, 1535
      %s269 = scalar_select %p268, %s267, 1535
      %p270 = scmp.lt.s32.totalorder %s22, 0
      %s271 = scalar_select %p270, %s22, 0
      %s272 = sadd.s32 %s271, %s269
      %s273 = smul.addr %s272, 4
      %s274 = scalar_lea.vmem %s0, %s273
      %s275 = smul.u32 512, %s20
      %s276 = smul.u32 2, %s22
      %p277 = scmp.lt.s32.totalorder %s276, 1
      %s278 = scalar_select %p277, %s276, 1
      %p279 = scmp.lt.s32.totalorder %s21, 0
      %s280 = scalar_select %p279, %s21, 0
      %s281 = sadd.s32 %s280, %s278
      %s282 = smul.addr %s281, 2
      %s283 = scalar_lea.vmem %s1, %s282
      %s284 = smul.u32 2, %s22
      %p285 = scmp.lt.s32.totalorder %s21, 0
      %s286 = scalar_select %p285, %s21, 0
      %s287 = scalar_lea.vmem %s2, %s286
      %p288 = scmp.lt.s32.totalorder %s21, 0
      %s289 = scalar_select %p288, %s21, 0
      %s290 = scalar_lea.vmem %s3, %s289
      %s291 = smul.u32 512, %s20
      %p292 = scmp.lt.s32.totalorder %s291, 1535
      %s293 = scalar_select %p292, %s291, 1535
      %p294 = scmp.lt.s32.totalorder %s21, 0
      %s295 = scalar_select %p294, %s21, 0
      %s296 = sadd.s32 %s295, %s293
      %s297 = smul.addr %s296, 4
      %s298 = scalar_lea.vmem %s4, %s297
      %s299 = smul.u32 512, %s20
      %p301 = scmp.eq.s32.totalorder %s22, 0
      // Predicated region
      $region37: #{tpu_custom_call.1} parent=35 // pred_check
        %p302 = pneg %p301
      $region38: #{tpu_custom_call.1} parent=35 // pred_check_branch
        %304 = sbr.rel (%p302) target = $region40
      $region39: #{tpu_custom_call.1} parent=35 // pred_region
        %vm305 = vcmask 523264
        %306 = vst.msk [vmem:[#allocation2] sm:$0xff] %vm305, 0.0
        %307 = vst.msk [vmem:[#allocation2 + $0x8] sm:$0xff] %vm305, 0.0
        %308 = vst.msk [vmem:[#allocation2 + $0x10] sm:$0xff] %vm305, 0.0
        %309 = vst.msk [vmem:[#allocation2 + $0x18] sm:$0xff] %vm305, 0.0
        %310 = vst.msk [vmem:[#allocation2 + $0x20] sm:$0xff] %vm305, 0.0
        %311 = vst.msk [vmem:[#allocation2 + $0x28] sm:$0xff] %vm305, 0.0
        %312 = vst.msk [vmem:[#allocation2 + $0x30] sm:$0xff] %vm305, 0.0
        %313 = vst.msk [vmem:[#allocation2 + $0x38] sm:$0xff] %vm305, 0.0
        %314 = vst.msk [vmem:[#allocation2 + $0x40] sm:$0xff] %vm305, 0.0
        %315 = vst.msk [vmem:[#allocation2 + $0x48] sm:$0xff] %vm305, 0.0
        %316 = vst.msk [vmem:[#allocation2 + $0x50] sm:$0xff] %vm305, 0.0
        %317 = vst.msk [vmem:[#allocation2 + $0x58] sm:$0xff] %vm305, 0.0
        %318 = vst.msk [vmem:[#allocation2 + $0x60] sm:$0xff] %vm305, 0.0
        %319 = vst.msk [vmem:[#allocation2 + $0x68] sm:$0xff] %vm305, 0.0
        %320 = vst.msk [vmem:[#allocation2 + $0x70] sm:$0xff] %vm305, 0.0
        %321 = vst.msk [vmem:[#allocation2 + $0x78] sm:$0xff] %vm305, 0.0
        %322 = vst.msk [vmem:[#allocation2 + $0x80] sm:$0xff] %vm305, 0.0
        %323 = vst.msk [vmem:[#allocation2 + $0x88] sm:$0xff] %vm305, 0.0
        %324 = vst.msk [vmem:[#allocation2 + $0x90] sm:$0xff] %vm305, 0.0
        %325 = vst.msk [vmem:[#allocation2 + $0x98] sm:$0xff] %vm305, 0.0
        %326 = vst.msk [vmem:[#allocation2 + $0xa0] sm:$0xff] %vm305, 0.0
        %327 = vst.msk [vmem:[#allocation2 + $0xa8] sm:$0xff] %vm305, 0.0
        %328 = vst.msk [vmem:[#allocation2 + $0xb0] sm:$0xff] %vm305, 0.0
        %329 = vst.msk [vmem:[#allocation2 + $0xb8] sm:$0xff] %vm305, 0.0
        %330 = vst.msk [vmem:[#allocation2 + $0xc0] sm:$0xff] %vm305, 0.0
        %331 = vst.msk [vmem:[#allocation2 + $0xc8] sm:$0xff] %vm305, 0.0
        %332 = vst.msk [vmem:[#allocation2 + $0xd0] sm:$0xff] %vm305, 0.0
        %333 = vst.msk [vmem:[#allocation2 + $0xd8] sm:$0xff] %vm305, 0.0
        %334 = vst.msk [vmem:[#allocation2 + $0xe0] sm:$0xff] %vm305, 0.0
        %335 = vst.msk [vmem:[#allocation2 + $0xe8] sm:$0xff] %vm305, 0.0
        %336 = vst.msk [vmem:[#allocation2 + $0xf0] sm:$0xff] %vm305, 0.0
        %337 = vst.msk [vmem:[#allocation2 + $0xf8] sm:$0xff] %vm305, 0.0
        %338 = vst.msk [vmem:[#allocation2 + $0x100] sm:$0xff] %vm305, 0.0
        %339 = vst.msk [vmem:[#allocation2 + $0x108] sm:$0xff] %vm305, 0.0
        %340 = vst.msk [vmem:[#allocation2 + $0x110] sm:$0xff] %vm305, 0.0
        %341 = vst.msk [vmem:[#allocation2 + $0x118] sm:$0xff] %vm305, 0.0
        %342 = vst.msk [vmem:[#allocation2 + $0x120] sm:$0xff] %vm305, 0.0
        %343 = vst.msk [vmem:[#allocation2 + $0x128] sm:$0xff] %vm305, 0.0
        %344 = vst.msk [vmem:[#allocation2 + $0x130] sm:$0xff] %vm305, 0.0
        %345 = vst.msk [vmem:[#allocation2 + $0x138] sm:$0xff] %vm305, 0.0
        %346 = vst.msk [vmem:[#allocation2 + $0x140] sm:$0xff] %vm305, 0.0
        %347 = vst.msk [vmem:[#allocation2 + $0x148] sm:$0xff] %vm305, 0.0
        %348 = vst.msk [vmem:[#allocation2 + $0x150] sm:$0xff] %vm305, 0.0
        %349 = vst.msk [vmem:[#allocation2 + $0x158] sm:$0xff] %vm305, 0.0
        %350 = vst.msk [vmem:[#allocation2 + $0x160] sm:$0xff] %vm305, 0.0
        %351 = vst.msk [vmem:[#allocation2 + $0x168] sm:$0xff] %vm305, 0.0
        %352 = vst.msk [vmem:[#allocation2 + $0x170] sm:$0xff] %vm305, 0.0
        %353 = vst.msk [vmem:[#allocation2 + $0x178] sm:$0xff] %vm305, 0.0
        %354 = vst.msk [vmem:[#allocation2 + $0x180] sm:$0xff] %vm305, 0.0
        %355 = vst.msk [vmem:[#allocation2 + $0x188] sm:$0xff] %vm305, 0.0
        %356 = vst.msk [vmem:[#allocation2 + $0x190] sm:$0xff] %vm305, 0.0
        %357 = vst.msk [vmem:[#allocation2 + $0x198] sm:$0xff] %vm305, 0.0
        %358 = vst.msk [vmem:[#allocation2 + $0x1a0] sm:$0xff] %vm305, 0.0
        %359 = vst.msk [vmem:[#allocation2 + $0x1a8] sm:$0xff] %vm305, 0.0
        %360 = vst.msk [vmem:[#allocation2 + $0x1b0] sm:$0xff] %vm305, 0.0
        %361 = vst.msk [vmem:[#allocation2 + $0x1b8] sm:$0xff] %vm305, 0.0
        %362 = vst.msk [vmem:[#allocation2 + $0x1c0] sm:$0xff] %vm305, 0.0
        %363 = vst.msk [vmem:[#allocation2 + $0x1c8] sm:$0xff] %vm305, 0.0
        %364 = vst.msk [vmem:[#allocation2 + $0x1d0] sm:$0xff] %vm305, 0.0
        %365 = vst.msk [vmem:[#allocation2 + $0x1d8] sm:$0xff] %vm305, 0.0
        %366 = vst.msk [vmem:[#allocation2 + $0x1e0] sm:$0xff] %vm305, 0.0
        %367 = vst.msk [vmem:[#allocation2 + $0x1e8] sm:$0xff] %vm305, 0.0
        %368 = vst.msk [vmem:[#allocation2 + $0x1f0] sm:$0xff] %vm305, 0.0
        %369 = vst.msk [vmem:[#allocation2 + $0x1f8] sm:$0xff] %vm305, 0.0
        %370 = vst.msk [vmem:[#allocation2 + $0x200] sm:$0xff] %vm305, 0.0
        %371 = vst.msk [vmem:[#allocation2 + $0x208] sm:$0xff] %vm305, 0.0
        %372 = vst.msk [vmem:[#allocation2 + $0x210] sm:$0xff] %vm305, 0.0
        %373 = vst.msk [vmem:[#allocation2 + $0x218] sm:$0xff] %vm305, 0.0
        %374 = vst.msk [vmem:[#allocation2 + $0x220] sm:$0xff] %vm305, 0.0
        %375 = vst.msk [vmem:[#allocation2 + $0x228] sm:$0xff] %vm305, 0.0
        %376 = vst.msk [vmem:[#allocation2 + $0x230] sm:$0xff] %vm305, 0.0
        %377 = vst.msk [vmem:[#allocation2 + $0x238] sm:$0xff] %vm305, 0.0
        %378 = vst.msk [vmem:[#allocation2 + $0x240] sm:$0xff] %vm305, 0.0
        %379 = vst.msk [vmem:[#allocation2 + $0x248] sm:$0xff] %vm305, 0.0
        %380 = vst.msk [vmem:[#allocation2 + $0x250] sm:$0xff] %vm305, 0.0
        %381 = vst.msk [vmem:[#allocation2 + $0x258] sm:$0xff] %vm305, 0.0
        %382 = vst.msk [vmem:[#allocation2 + $0x260] sm:$0xff] %vm305, 0.0
        %383 = vst.msk [vmem:[#allocation2 + $0x268] sm:$0xff] %vm305, 0.0
        %384 = vst.msk [vmem:[#allocation2 + $0x270] sm:$0xff] %vm305, 0.0
        %385 = vst.msk [vmem:[#allocation2 + $0x278] sm:$0xff] %vm305, 0.0
        %386 = vst.msk [vmem:[#allocation2 + $0x280] sm:$0xff] %vm305, 0.0
        %387 = vst.msk [vmem:[#allocation2 + $0x288] sm:$0xff] %vm305, 0.0
        %388 = vst.msk [vmem:[#allocation2 + $0x290] sm:$0xff] %vm305, 0.0
        %389 = vst.msk [vmem:[#allocation2 + $0x298] sm:$0xff] %vm305, 0.0
        %390 = vst.msk [vmem:[#allocation2 + $0x2a0] sm:$0xff] %vm305, 0.0
        %391 = vst.msk [vmem:[#allocation2 + $0x2a8] sm:$0xff] %vm305, 0.0
        %392 = vst.msk [vmem:[#allocation2 + $0x2b0] sm:$0xff] %vm305, 0.0
        %393 = vst.msk [vmem:[#allocation2 + $0x2b8] sm:$0xff] %vm305, 0.0
        %394 = vst.msk [vmem:[#allocation2 + $0x2c0] sm:$0xff] %vm305, 0.0
        %395 = vst.msk [vmem:[#allocation2 + $0x2c8] sm:$0xff] %vm305, 0.0
        %396 = vst.msk [vmem:[#allocation2 + $0x2d0] sm:$0xff] %vm305, 0.0
        %397 = vst.msk [vmem:[#allocation2 + $0x2d8] sm:$0xff] %vm305, 0.0
        %398 = vst.msk [vmem:[#allocation2 + $0x2e0] sm:$0xff] %vm305, 0.0
        %399 = vst.msk [vmem:[#allocation2 + $0x2e8] sm:$0xff] %vm305, 0.0
        %400 = vst.msk [vmem:[#allocation2 + $0x2f0] sm:$0xff] %vm305, 0.0
        %401 = vst.msk [vmem:[#allocation2 + $0x2f8] sm:$0xff] %vm305, 0.0
        %402 = vst.msk [vmem:[#allocation2 + $0x300] sm:$0xff] %vm305, 0.0
        %403 = vst.msk [vmem:[#allocation2 + $0x308] sm:$0xff] %vm305, 0.0
        %404 = vst.msk [vmem:[#allocation2 + $0x310] sm:$0xff] %vm305, 0.0
        %405 = vst.msk [vmem:[#allocation2 + $0x318] sm:$0xff] %vm305, 0.0
        %406 = vst.msk [vmem:[#allocation2 + $0x320] sm:$0xff] %vm305, 0.0
        %407 = vst.msk [vmem:[#allocation2 + $0x328] sm:$0xff] %vm305, 0.0
        %408 = vst.msk [vmem:[#allocation2 + $0x330] sm:$0xff] %vm305, 0.0
        %409 = vst.msk [vmem:[#allocation2 + $0x338] sm:$0xff] %vm305, 0.0
        %410 = vst.msk [vmem:[#allocation2 + $0x340] sm:$0xff] %vm305, 0.0
        %411 = vst.msk [vmem:[#allocation2 + $0x348] sm:$0xff] %vm305, 0.0
        %412 = vst.msk [vmem:[#allocation2 + $0x350] sm:$0xff] %vm305, 0.0
        %413 = vst.msk [vmem:[#allocation2 + $0x358] sm:$0xff] %vm305, 0.0
        %414 = vst.msk [vmem:[#allocation2 + $0x360] sm:$0xff] %vm305, 0.0
        %415 = vst.msk [vmem:[#allocation2 + $0x368] sm:$0xff] %vm305, 0.0
        %416 = vst.msk [vmem:[#allocation2 + $0x370] sm:$0xff] %vm305, 0.0
        %417 = vst.msk [vmem:[#allocation2 + $0x378] sm:$0xff] %vm305, 0.0
        %418 = vst.msk [vmem:[#allocation2 + $0x380] sm:$0xff] %vm305, 0.0
        %419 = vst.msk [vmem:[#allocation2 + $0x388] sm:$0xff] %vm305, 0.0
        %420 = vst.msk [vmem:[#allocation2 + $0x390] sm:$0xff] %vm305, 0.0
        %421 = vst.msk [vmem:[#allocation2 + $0x398] sm:$0xff] %vm305, 0.0
        %422 = vst.msk [vmem:[#allocation2 + $0x3a0] sm:$0xff] %vm305, 0.0
        %423 = vst.msk [vmem:[#allocation2 + $0x3a8] sm:$0xff] %vm305, 0.0
        %424 = vst.msk [vmem:[#allocation2 + $0x3b0] sm:$0xff] %vm305, 0.0
        %425 = vst.msk [vmem:[#allocation2 + $0x3b8] sm:$0xff] %vm305, 0.0
        %426 = vst.msk [vmem:[#allocation2 + $0x3c0] sm:$0xff] %vm305, 0.0
        %427 = vst.msk [vmem:[#allocation2 + $0x3c8] sm:$0xff] %vm305, 0.0
        %428 = vst.msk [vmem:[#allocation2 + $0x3d0] sm:$0xff] %vm305, 0.0
        %429 = vst.msk [vmem:[#allocation2 + $0x3d8] sm:$0xff] %vm305, 0.0
        %430 = vst.msk [vmem:[#allocation2 + $0x3e0] sm:$0xff] %vm305, 0.0
        %431 = vst.msk [vmem:[#allocation2 + $0x3e8] sm:$0xff] %vm305, 0.0
        %432 = vst.msk [vmem:[#allocation2 + $0x3f0] sm:$0xff] %vm305, 0.0
        %433 = vst.msk [vmem:[#allocation2 + $0x3f8] sm:$0xff] %vm305, 0.0
        %434 = vst.msk [vmem:[#allocation2 + $0x400] sm:$0xff] %vm305, 0.0
        %435 = vst.msk [vmem:[#allocation2 + $0x408] sm:$0xff] %vm305, 0.0
        %436 = vst.msk [vmem:[#allocation2 + $0x410] sm:$0xff] %vm305, 0.0
        %437 = vst.msk [vmem:[#allocation2 + $0x418] sm:$0xff] %vm305, 0.0
        %438 = vst.msk [vmem:[#allocation2 + $0x420] sm:$0xff] %vm305, 0.0
        %439 = vst.msk [vmem:[#allocation2 + $0x428] sm:$0xff] %vm305, 0.0
        %440 = vst.msk [vmem:[#allocation2 + $0x430] sm:$0xff] %vm305, 0.0
        %441 = vst.msk [vmem:[#allocation2 + $0x438] sm:$0xff] %vm305, 0.0
        %442 = vst.msk [vmem:[#allocation2 + $0x440] sm:$0xff] %vm305, 0.0
        %443 = vst.msk [vmem:[#allocation2 + $0x448] sm:$0xff] %vm305, 0.0
        %444 = vst.msk [vmem:[#allocation2 + $0x450] sm:$0xff] %vm305, 0.0
        %445 = vst.msk [vmem:[#allocation2 + $0x458] sm:$0xff] %vm305, 0.0
        %446 = vst.msk [vmem:[#allocation2 + $0x460] sm:$0xff] %vm305, 0.0
        %447 = vst.msk [vmem:[#allocation2 + $0x468] sm:$0xff] %vm305, 0.0
        %448 = vst.msk [vmem:[#allocation2 + $0x470] sm:$0xff] %vm305, 0.0
        %449 = vst.msk [vmem:[#allocation2 + $0x478] sm:$0xff] %vm305, 0.0
        %450 = vst.msk [vmem:[#allocation2 + $0x480] sm:$0xff] %vm305, 0.0
        %451 = vst.msk [vmem:[#allocation2 + $0x488] sm:$0xff] %vm305, 0.0
        %452 = vst.msk [vmem:[#allocation2 + $0x490] sm:$0xff] %vm305, 0.0
        %453 = vst.msk [vmem:[#allocation2 + $0x498] sm:$0xff] %vm305, 0.0
        %454 = vst.msk [vmem:[#allocation2 + $0x4a0] sm:$0xff] %vm305, 0.0
        %455 = vst.msk [vmem:[#allocation2 + $0x4a8] sm:$0xff] %vm305, 0.0
        %456 = vst.msk [vmem:[#allocation2 + $0x4b0] sm:$0xff] %vm305, 0.0
        %457 = vst.msk [vmem:[#allocation2 + $0x4b8] sm:$0xff] %vm305, 0.0
        %458 = vst.msk [vmem:[#allocation2 + $0x4c0] sm:$0xff] %vm305, 0.0
        %459 = vst.msk [vmem:[#allocation2 + $0x4c8] sm:$0xff] %vm305, 0.0
        %460 = vst.msk [vmem:[#allocation2 + $0x4d0] sm:$0xff] %vm305, 0.0
        %461 = vst.msk [vmem:[#allocation2 + $0x4d8] sm:$0xff] %vm305, 0.0
        %462 = vst.msk [vmem:[#allocation2 + $0x4e0] sm:$0xff] %vm305, 0.0
        %463 = vst.msk [vmem:[#allocation2 + $0x4e8] sm:$0xff] %vm305, 0.0
        %464 = vst.msk [vmem:[#allocation2 + $0x4f0] sm:$0xff] %vm305, 0.0
        %465 = vst.msk [vmem:[#allocation2 + $0x4f8] sm:$0xff] %vm305, 0.0
        %466 = vst.msk [vmem:[#allocation2 + $0x500] sm:$0xff] %vm305, 0.0
        %467 = vst.msk [vmem:[#allocation2 + $0x508] sm:$0xff] %vm305, 0.0
        %468 = vst.msk [vmem:[#allocation2 + $0x510] sm:$0xff] %vm305, 0.0
        %469 = vst.msk [vmem:[#allocation2 + $0x518] sm:$0xff] %vm305, 0.0
        %470 = vst.msk [vmem:[#allocation2 + $0x520] sm:$0xff] %vm305, 0.0
        %471 = vst.msk [vmem:[#allocation2 + $0x528] sm:$0xff] %vm305, 0.0
        %472 = vst.msk [vmem:[#allocation2 + $0x530] sm:$0xff] %vm305, 0.0
        %473 = vst.msk [vmem:[#allocation2 + $0x538] sm:$0xff] %vm305, 0.0
        %474 = vst.msk [vmem:[#allocation2 + $0x540] sm:$0xff] %vm305, 0.0
        %475 = vst.msk [vmem:[#allocation2 + $0x548] sm:$0xff] %vm305, 0.0
        %476 = vst.msk [vmem:[#allocation2 + $0x550] sm:$0xff] %vm305, 0.0
        %477 = vst.msk [vmem:[#allocation2 + $0x558] sm:$0xff] %vm305, 0.0
        %478 = vst.msk [vmem:[#allocation2 + $0x560] sm:$0xff] %vm305, 0.0
        %479 = vst.msk [vmem:[#allocation2 + $0x568] sm:$0xff] %vm305, 0.0
        %480 = vst.msk [vmem:[#allocation2 + $0x570] sm:$0xff] %vm305, 0.0
        %481 = vst.msk [vmem:[#allocation2 + $0x578] sm:$0xff] %vm305, 0.0
        %482 = vst.msk [vmem:[#allocation2 + $0x580] sm:$0xff] %vm305, 0.0
        %483 = vst.msk [vmem:[#allocation2 + $0x588] sm:$0xff] %vm305, 0.0
        %484 = vst.msk [vmem:[#allocation2 + $0x590] sm:$0xff] %vm305, 0.0
        %485 = vst.msk [vmem:[#allocation2 + $0x598] sm:$0xff] %vm305, 0.0
        %486 = vst.msk [vmem:[#allocation2 + $0x5a0] sm:$0xff] %vm305, 0.0
        %487 = vst.msk [vmem:[#allocation2 + $0x5a8] sm:$0xff] %vm305, 0.0
        %488 = vst.msk [vmem:[#allocation2 + $0x5b0] sm:$0xff] %vm305, 0.0
        %489 = vst.msk [vmem:[#allocation2 + $0x5b8] sm:$0xff] %vm305, 0.0
        %490 = vst.msk [vmem:[#allocation2 + $0x5c0] sm:$0xff] %vm305, 0.0
        %491 = vst.msk [vmem:[#allocation2 + $0x5c8] sm:$0xff] %vm305, 0.0
        %492 = vst.msk [vmem:[#allocation2 + $0x5d0] sm:$0xff] %vm305, 0.0
        %493 = vst.msk [vmem:[#allocation2 + $0x5d8] sm:$0xff] %vm305, 0.0
        %494 = vst.msk [vmem:[#allocation2 + $0x5e0] sm:$0xff] %vm305, 0.0
        %495 = vst.msk [vmem:[#allocation2 + $0x5e8] sm:$0xff] %vm305, 0.0
        %496 = vst.msk [vmem:[#allocation2 + $0x5f0] sm:$0xff] %vm305, 0.0
        %497 = vst.msk [vmem:[#allocation2 + $0x5f8] sm:$0xff] %vm305, 0.0
        %498 = vst.msk [vmem:[#allocation2 + $0x600] sm:$0xff] %vm305, 0.0
        %499 = vst.msk [vmem:[#allocation2 + $0x608] sm:$0xff] %vm305, 0.0
        %500 = vst.msk [vmem:[#allocation2 + $0x610] sm:$0xff] %vm305, 0.0
        %501 = vst.msk [vmem:[#allocation2 + $0x618] sm:$0xff] %vm305, 0.0
        %502 = vst.msk [vmem:[#allocation2 + $0x620] sm:$0xff] %vm305, 0.0
        %503 = vst.msk [vmem:[#allocation2 + $0x628] sm:$0xff] %vm305, 0.0
        %504 = vst.msk [vmem:[#allocation2 + $0x630] sm:$0xff] %vm305, 0.0
        %505 = vst.msk [vmem:[#allocation2 + $0x638] sm:$0xff] %vm305, 0.0
        %506 = vst.msk [vmem:[#allocation2 + $0x640] sm:$0xff] %vm305, 0.0
        %507 = vst.msk [vmem:[#allocation2 + $0x648] sm:$0xff] %vm305, 0.0
        %508 = vst.msk [vmem:[#allocation2 + $0x650] sm:$0xff] %vm305, 0.0
        %509 = vst.msk [vmem:[#allocation2 + $0x658] sm:$0xff] %vm305, 0.0
        %510 = vst.msk [vmem:[#allocation2 + $0x660] sm:$0xff] %vm305, 0.0
        %511 = vst.msk [vmem:[#allocation2 + $0x668] sm:$0xff] %vm305, 0.0
        %512 = vst.msk [vmem:[#allocation2 + $0x670] sm:$0xff] %vm305, 0.0
        %513 = vst.msk [vmem:[#allocation2 + $0x678] sm:$0xff] %vm305, 0.0
        %514 = vst.msk [vmem:[#allocation2 + $0x680] sm:$0xff] %vm305, 0.0
        %515 = vst.msk [vmem:[#allocation2 + $0x688] sm:$0xff] %vm305, 0.0
        %516 = vst.msk [vmem:[#allocation2 + $0x690] sm:$0xff] %vm305, 0.0
        %517 = vst.msk [vmem:[#allocation2 + $0x698] sm:$0xff] %vm305, 0.0
        %518 = vst.msk [vmem:[#allocation2 + $0x6a0] sm:$0xff] %vm305, 0.0
        %519 = vst.msk [vmem:[#allocation2 + $0x6a8] sm:$0xff] %vm305, 0.0
        %520 = vst.msk [vmem:[#allocation2 + $0x6b0] sm:$0xff] %vm305, 0.0
        %521 = vst.msk [vmem:[#allocation2 + $0x6b8] sm:$0xff] %vm305, 0.0
        %522 = vst.msk [vmem:[#allocation2 + $0x6c0] sm:$0xff] %vm305, 0.0
        %523 = vst.msk [vmem:[#allocation2 + $0x6c8] sm:$0xff] %vm305, 0.0
        %524 = vst.msk [vmem:[#allocation2 + $0x6d0] sm:$0xff] %vm305, 0.0
        %525 = vst.msk [vmem:[#allocation2 + $0x6d8] sm:$0xff] %vm305, 0.0
        %526 = vst.msk [vmem:[#allocation2 + $0x6e0] sm:$0xff] %vm305, 0.0
        %527 = vst.msk [vmem:[#allocation2 + $0x6e8] sm:$0xff] %vm305, 0.0
        %528 = vst.msk [vmem:[#allocation2 + $0x6f0] sm:$0xff] %vm305, 0.0
        %529 = vst.msk [vmem:[#allocation2 + $0x6f8] sm:$0xff] %vm305, 0.0
        %530 = vst.msk [vmem:[#allocation2 + $0x700] sm:$0xff] %vm305, 0.0
        %531 = vst.msk [vmem:[#allocation2 + $0x708] sm:$0xff] %vm305, 0.0
        %532 = vst.msk [vmem:[#allocation2 + $0x710] sm:$0xff] %vm305, 0.0
        %533 = vst.msk [vmem:[#allocation2 + $0x718] sm:$0xff] %vm305, 0.0
        %534 = vst.msk [vmem:[#allocation2 + $0x720] sm:$0xff] %vm305, 0.0
        %535 = vst.msk [vmem:[#allocation2 + $0x728] sm:$0xff] %vm305, 0.0
        %536 = vst.msk [vmem:[#allocation2 + $0x730] sm:$0xff] %vm305, 0.0
        %537 = vst.msk [vmem:[#allocation2 + $0x738] sm:$0xff] %vm305, 0.0
        %538 = vst.msk [vmem:[#allocation2 + $0x740] sm:$0xff] %vm305, 0.0
        %539 = vst.msk [vmem:[#allocation2 + $0x748] sm:$0xff] %vm305, 0.0
        %540 = vst.msk [vmem:[#allocation2 + $0x750] sm:$0xff] %vm305, 0.0
        %541 = vst.msk [vmem:[#allocation2 + $0x758] sm:$0xff] %vm305, 0.0
        %542 = vst.msk [vmem:[#allocation2 + $0x760] sm:$0xff] %vm305, 0.0
        %543 = vst.msk [vmem:[#allocation2 + $0x768] sm:$0xff] %vm305, 0.0
        %544 = vst.msk [vmem:[#allocation2 + $0x770] sm:$0xff] %vm305, 0.0
        %545 = vst.msk [vmem:[#allocation2 + $0x778] sm:$0xff] %vm305, 0.0
        %546 = vst.msk [vmem:[#allocation2 + $0x780] sm:$0xff] %vm305, 0.0
        %547 = vst.msk [vmem:[#allocation2 + $0x788] sm:$0xff] %vm305, 0.0
        %548 = vst.msk [vmem:[#allocation2 + $0x790] sm:$0xff] %vm305, 0.0
        %549 = vst.msk [vmem:[#allocation2 + $0x798] sm:$0xff] %vm305, 0.0
        %550 = vst.msk [vmem:[#allocation2 + $0x7a0] sm:$0xff] %vm305, 0.0
        %551 = vst.msk [vmem:[#allocation2 + $0x7a8] sm:$0xff] %vm305, 0.0
        %552 = vst.msk [vmem:[#allocation2 + $0x7b0] sm:$0xff] %vm305, 0.0
        %553 = vst.msk [vmem:[#allocation2 + $0x7b8] sm:$0xff] %vm305, 0.0
        %554 = vst.msk [vmem:[#allocation2 + $0x7c0] sm:$0xff] %vm305, 0.0
        %555 = vst.msk [vmem:[#allocation2 + $0x7c8] sm:$0xff] %vm305, 0.0
        %556 = vst.msk [vmem:[#allocation2 + $0x7d0] sm:$0xff] %vm305, 0.0
        %557 = vst.msk [vmem:[#allocation2 + $0x7d8] sm:$0xff] %vm305, 0.0
        %558 = vst.msk [vmem:[#allocation2 + $0x7e0] sm:$0xff] %vm305, 0.0
        %559 = vst.msk [vmem:[#allocation2 + $0x7e8] sm:$0xff] %vm305, 0.0
        %560 = vst.msk [vmem:[#allocation2 + $0x7f0] sm:$0xff] %vm305, 0.0
        %561 = vst.msk [vmem:[#allocation2 + $0x7f8] sm:$0xff] %vm305, 0.0
        %562 = vst.msk [vmem:[#allocation2 + $0x800] sm:$0xff] %vm305, 0.0
        %563 = vst.msk [vmem:[#allocation2 + $0x808] sm:$0xff] %vm305, 0.0
        %564 = vst.msk [vmem:[#allocation2 + $0x810] sm:$0xff] %vm305, 0.0
        %565 = vst.msk [vmem:[#allocation2 + $0x818] sm:$0xff] %vm305, 0.0
        %566 = vst.msk [vmem:[#allocation2 + $0x820] sm:$0xff] %vm305, 0.0
        %567 = vst.msk [vmem:[#allocation2 + $0x828] sm:$0xff] %vm305, 0.0
        %568 = vst.msk [vmem:[#allocation2 + $0x830] sm:$0xff] %vm305, 0.0
        %569 = vst.msk [vmem:[#allocation2 + $0x838] sm:$0xff] %vm305, 0.0
        %570 = vst.msk [vmem:[#allocation2 + $0x840] sm:$0xff] %vm305, 0.0
        %571 = vst.msk [vmem:[#allocation2 + $0x848] sm:$0xff] %vm305, 0.0
        %572 = vst.msk [vmem:[#allocation2 + $0x850] sm:$0xff] %vm305, 0.0
        %573 = vst.msk [vmem:[#allocation2 + $0x858] sm:$0xff] %vm305, 0.0
        %574 = vst.msk [vmem:[#allocation2 + $0x860] sm:$0xff] %vm305, 0.0
        %575 = vst.msk [vmem:[#allocation2 + $0x868] sm:$0xff] %vm305, 0.0
        %576 = vst.msk [vmem:[#allocation2 + $0x870] sm:$0xff] %vm305, 0.0
        %577 = vst.msk [vmem:[#allocation2 + $0x878] sm:$0xff] %vm305, 0.0
        %578 = vst.msk [vmem:[#allocation2 + $0x880] sm:$0xff] %vm305, 0.0
        %579 = vst.msk [vmem:[#allocation2 + $0x888] sm:$0xff] %vm305, 0.0
        %580 = vst.msk [vmem:[#allocation2 + $0x890] sm:$0xff] %vm305, 0.0
        %581 = vst.msk [vmem:[#allocation2 + $0x898] sm:$0xff] %vm305, 0.0
        %582 = vst.msk [vmem:[#allocation2 + $0x8a0] sm:$0xff] %vm305, 0.0
        %583 = vst.msk [vmem:[#allocation2 + $0x8a8] sm:$0xff] %vm305, 0.0
        %584 = vst.msk [vmem:[#allocation2 + $0x8b0] sm:$0xff] %vm305, 0.0
        %585 = vst.msk [vmem:[#allocation2 + $0x8b8] sm:$0xff] %vm305, 0.0
        %586 = vst.msk [vmem:[#allocation2 + $0x8c0] sm:$0xff] %vm305, 0.0
        %587 = vst.msk [vmem:[#allocation2 + $0x8c8] sm:$0xff] %vm305, 0.0
        %588 = vst.msk [vmem:[#allocation2 + $0x8d0] sm:$0xff] %vm305, 0.0
        %589 = vst.msk [vmem:[#allocation2 + $0x8d8] sm:$0xff] %vm305, 0.0
        %590 = vst.msk [vmem:[#allocation2 + $0x8e0] sm:$0xff] %vm305, 0.0
        %591 = vst.msk [vmem:[#allocation2 + $0x8e8] sm:$0xff] %vm305, 0.0
        %592 = vst.msk [vmem:[#allocation2 + $0x8f0] sm:$0xff] %vm305, 0.0
        %593 = vst.msk [vmem:[#allocation2 + $0x8f8] sm:$0xff] %vm305, 0.0
        %594 = vst.msk [vmem:[#allocation2 + $0x900] sm:$0xff] %vm305, 0.0
        %595 = vst.msk [vmem:[#allocation2 + $0x908] sm:$0xff] %vm305, 0.0
        %596 = vst.msk [vmem:[#allocation2 + $0x910] sm:$0xff] %vm305, 0.0
        %597 = vst.msk [vmem:[#allocation2 + $0x918] sm:$0xff] %vm305, 0.0
        %598 = vst.msk [vmem:[#allocation2 + $0x920] sm:$0xff] %vm305, 0.0
        %599 = vst.msk [vmem:[#allocation2 + $0x928] sm:$0xff] %vm305, 0.0
        %600 = vst.msk [vmem:[#allocation2 + $0x930] sm:$0xff] %vm305, 0.0
        %601 = vst.msk [vmem:[#allocation2 + $0x938] sm:$0xff] %vm305, 0.0
        %602 = vst.msk [vmem:[#allocation2 + $0x940] sm:$0xff] %vm305, 0.0
        %603 = vst.msk [vmem:[#allocation2 + $0x948] sm:$0xff] %vm305, 0.0
        %604 = vst.msk [vmem:[#allocation2 + $0x950] sm:$0xff] %vm305, 0.0
        %605 = vst.msk [vmem:[#allocation2 + $0x958] sm:$0xff] %vm305, 0.0
        %606 = vst.msk [vmem:[#allocation2 + $0x960] sm:$0xff] %vm305, 0.0
        %607 = vst.msk [vmem:[#allocation2 + $0x968] sm:$0xff] %vm305, 0.0
        %608 = vst.msk [vmem:[#allocation2 + $0x970] sm:$0xff] %vm305, 0.0
        %609 = vst.msk [vmem:[#allocation2 + $0x978] sm:$0xff] %vm305, 0.0
        %610 = vst.msk [vmem:[#allocation2 + $0x980] sm:$0xff] %vm305, 0.0
        %611 = vst.msk [vmem:[#allocation2 + $0x988] sm:$0xff] %vm305, 0.0
        %612 = vst.msk [vmem:[#allocation2 + $0x990] sm:$0xff] %vm305, 0.0
        %613 = vst.msk [vmem:[#allocation2 + $0x998] sm:$0xff] %vm305, 0.0
        %614 = vst.msk [vmem:[#allocation2 + $0x9a0] sm:$0xff] %vm305, 0.0
        %615 = vst.msk [vmem:[#allocation2 + $0x9a8] sm:$0xff] %vm305, 0.0
        %616 = vst.msk [vmem:[#allocation2 + $0x9b0] sm:$0xff] %vm305, 0.0
        %617 = vst.msk [vmem:[#allocation2 + $0x9b8] sm:$0xff] %vm305, 0.0
        %618 = vst.msk [vmem:[#allocation2 + $0x9c0] sm:$0xff] %vm305, 0.0
        %619 = vst.msk [vmem:[#allocation2 + $0x9c8] sm:$0xff] %vm305, 0.0
        %620 = vst.msk [vmem:[#allocation2 + $0x9d0] sm:$0xff] %vm305, 0.0
        %621 = vst.msk [vmem:[#allocation2 + $0x9d8] sm:$0xff] %vm305, 0.0
        %622 = vst.msk [vmem:[#allocation2 + $0x9e0] sm:$0xff] %vm305, 0.0
        %623 = vst.msk [vmem:[#allocation2 + $0x9e8] sm:$0xff] %vm305, 0.0
        %624 = vst.msk [vmem:[#allocation2 + $0x9f0] sm:$0xff] %vm305, 0.0
        %625 = vst.msk [vmem:[#allocation2 + $0x9f8] sm:$0xff] %vm305, 0.0
        %626 = vst.msk [vmem:[#allocation2 + $0xa00] sm:$0xff] %vm305, 0.0
        %627 = vst.msk [vmem:[#allocation2 + $0xa08] sm:$0xff] %vm305, 0.0
        %628 = vst.msk [vmem:[#allocation2 + $0xa10] sm:$0xff] %vm305, 0.0
        %629 = vst.msk [vmem:[#allocation2 + $0xa18] sm:$0xff] %vm305, 0.0
        %630 = vst.msk [vmem:[#allocation2 + $0xa20] sm:$0xff] %vm305, 0.0
        %631 = vst.msk [vmem:[#allocation2 + $0xa28] sm:$0xff] %vm305, 0.0
        %632 = vst.msk [vmem:[#allocation2 + $0xa30] sm:$0xff] %vm305, 0.0
        %633 = vst.msk [vmem:[#allocation2 + $0xa38] sm:$0xff] %vm305, 0.0
        %634 = vst.msk [vmem:[#allocation2 + $0xa40] sm:$0xff] %vm305, 0.0
        %635 = vst.msk [vmem:[#allocation2 + $0xa48] sm:$0xff] %vm305, 0.0
        %636 = vst.msk [vmem:[#allocation2 + $0xa50] sm:$0xff] %vm305, 0.0
        %637 = vst.msk [vmem:[#allocation2 + $0xa58] sm:$0xff] %vm305, 0.0
        %638 = vst.msk [vmem:[#allocation2 + $0xa60] sm:$0xff] %vm305, 0.0
        %639 = vst.msk [vmem:[#allocation2 + $0xa68] sm:$0xff] %vm305, 0.0
        %640 = vst.msk [vmem:[#allocation2 + $0xa70] sm:$0xff] %vm305, 0.0
        %641 = vst.msk [vmem:[#allocation2 + $0xa78] sm:$0xff] %vm305, 0.0
        %642 = vst.msk [vmem:[#allocation2 + $0xa80] sm:$0xff] %vm305, 0.0
        %643 = vst.msk [vmem:[#allocation2 + $0xa88] sm:$0xff] %vm305, 0.0
        %644 = vst.msk [vmem:[#allocation2 + $0xa90] sm:$0xff] %vm305, 0.0
        %645 = vst.msk [vmem:[#allocation2 + $0xa98] sm:$0xff] %vm305, 0.0
        %646 = vst.msk [vmem:[#allocation2 + $0xaa0] sm:$0xff] %vm305, 0.0
        %647 = vst.msk [vmem:[#allocation2 + $0xaa8] sm:$0xff] %vm305, 0.0
        %648 = vst.msk [vmem:[#allocation2 + $0xab0] sm:$0xff] %vm305, 0.0
        %649 = vst.msk [vmem:[#allocation2 + $0xab8] sm:$0xff] %vm305, 0.0
        %650 = vst.msk [vmem:[#allocation2 + $0xac0] sm:$0xff] %vm305, 0.0
        %651 = vst.msk [vmem:[#allocation2 + $0xac8] sm:$0xff] %vm305, 0.0
        %652 = vst.msk [vmem:[#allocation2 + $0xad0] sm:$0xff] %vm305, 0.0
        %653 = vst.msk [vmem:[#allocation2 + $0xad8] sm:$0xff] %vm305, 0.0
        %654 = vst.msk [vmem:[#allocation2 + $0xae0] sm:$0xff] %vm305, 0.0
        %655 = vst.msk [vmem:[#allocation2 + $0xae8] sm:$0xff] %vm305, 0.0
        %656 = vst.msk [vmem:[#allocation2 + $0xaf0] sm:$0xff] %vm305, 0.0
        %657 = vst.msk [vmem:[#allocation2 + $0xaf8] sm:$0xff] %vm305, 0.0
        %658 = vst.msk [vmem:[#allocation2 + $0xb00] sm:$0xff] %vm305, 0.0
        %659 = vst.msk [vmem:[#allocation2 + $0xb08] sm:$0xff] %vm305, 0.0
        %660 = vst.msk [vmem:[#allocation2 + $0xb10] sm:$0xff] %vm305, 0.0
        %661 = vst.msk [vmem:[#allocation2 + $0xb18] sm:$0xff] %vm305, 0.0
        %662 = vst.msk [vmem:[#allocation2 + $0xb20] sm:$0xff] %vm305, 0.0
        %663 = vst.msk [vmem:[#allocation2 + $0xb28] sm:$0xff] %vm305, 0.0
        %664 = vst.msk [vmem:[#allocation2 + $0xb30] sm:$0xff] %vm305, 0.0
        %665 = vst.msk [vmem:[#allocation2 + $0xb38] sm:$0xff] %vm305, 0.0
        %666 = vst.msk [vmem:[#allocation2 + $0xb40] sm:$0xff] %vm305, 0.0
        %667 = vst.msk [vmem:[#allocation2 + $0xb48] sm:$0xff] %vm305, 0.0
        %668 = vst.msk [vmem:[#allocation2 + $0xb50] sm:$0xff] %vm305, 0.0
        %669 = vst.msk [vmem:[#allocation2 + $0xb58] sm:$0xff] %vm305, 0.0
        %670 = vst.msk [vmem:[#allocation2 + $0xb60] sm:$0xff] %vm305, 0.0
        %671 = vst.msk [vmem:[#allocation2 + $0xb68] sm:$0xff] %vm305, 0.0
        %672 = vst.msk [vmem:[#allocation2 + $0xb70] sm:$0xff] %vm305, 0.0
        %673 = vst.msk [vmem:[#allocation2 + $0xb78] sm:$0xff] %vm305, 0.0
        %674 = vst.msk [vmem:[#allocation2 + $0xb80] sm:$0xff] %vm305, 0.0
        %675 = vst.msk [vmem:[#allocation2 + $0xb88] sm:$0xff] %vm305, 0.0
        %676 = vst.msk [vmem:[#allocation2 + $0xb90] sm:$0xff] %vm305, 0.0
        %677 = vst.msk [vmem:[#allocation2 + $0xb98] sm:$0xff] %vm305, 0.0
        %678 = vst.msk [vmem:[#allocation2 + $0xba0] sm:$0xff] %vm305, 0.0
        %679 = vst.msk [vmem:[#allocation2 + $0xba8] sm:$0xff] %vm305, 0.0
        %680 = vst.msk [vmem:[#allocation2 + $0xbb0] sm:$0xff] %vm305, 0.0
        %681 = vst.msk [vmem:[#allocation2 + $0xbb8] sm:$0xff] %vm305, 0.0
        %682 = vst.msk [vmem:[#allocation2 + $0xbc0] sm:$0xff] %vm305, 0.0
        %683 = vst.msk [vmem:[#allocation2 + $0xbc8] sm:$0xff] %vm305, 0.0
        %684 = vst.msk [vmem:[#allocation2 + $0xbd0] sm:$0xff] %vm305, 0.0
        %685 = vst.msk [vmem:[#allocation2 + $0xbd8] sm:$0xff] %vm305, 0.0
        %686 = vst.msk [vmem:[#allocation2 + $0xbe0] sm:$0xff] %vm305, 0.0
        %687 = vst.msk [vmem:[#allocation2 + $0xbe8] sm:$0xff] %vm305, 0.0
        %688 = vst.msk [vmem:[#allocation2 + $0xbf0] sm:$0xff] %vm305, 0.0
        %689 = vst.msk [vmem:[#allocation2 + $0xbf8] sm:$0xff] %vm305, 0.0
        %690 = vst.msk [vmem:[#allocation2 + $0xc00] sm:$0xff] %vm305, 0.0
        %691 = vst.msk [vmem:[#allocation2 + $0xc08] sm:$0xff] %vm305, 0.0
        %692 = vst.msk [vmem:[#allocation2 + $0xc10] sm:$0xff] %vm305, 0.0
        %693 = vst.msk [vmem:[#allocation2 + $0xc18] sm:$0xff] %vm305, 0.0
        %694 = vst.msk [vmem:[#allocation2 + $0xc20] sm:$0xff] %vm305, 0.0
        %695 = vst.msk [vmem:[#allocation2 + $0xc28] sm:$0xff] %vm305, 0.0
        %696 = vst.msk [vmem:[#allocation2 + $0xc30] sm:$0xff] %vm305, 0.0
        %697 = vst.msk [vmem:[#allocation2 + $0xc38] sm:$0xff] %vm305, 0.0
        %698 = vst.msk [vmem:[#allocation2 + $0xc40] sm:$0xff] %vm305, 0.0
        %699 = vst.msk [vmem:[#allocation2 + $0xc48] sm:$0xff] %vm305, 0.0
        %700 = vst.msk [vmem:[#allocation2 + $0xc50] sm:$0xff] %vm305, 0.0
        %701 = vst.msk [vmem:[#allocation2 + $0xc58] sm:$0xff] %vm305, 0.0
        %702 = vst.msk [vmem:[#allocation2 + $0xc60] sm:$0xff] %vm305, 0.0
        %703 = vst.msk [vmem:[#allocation2 + $0xc68] sm:$0xff] %vm305, 0.0
        %704 = vst.msk [vmem:[#allocation2 + $0xc70] sm:$0xff] %vm305, 0.0
        %705 = vst.msk [vmem:[#allocation2 + $0xc78] sm:$0xff] %vm305, 0.0
        %706 = vst.msk [vmem:[#allocation2 + $0xc80] sm:$0xff] %vm305, 0.0
        %707 = vst.msk [vmem:[#allocation2 + $0xc88] sm:$0xff] %vm305, 0.0
        %708 = vst.msk [vmem:[#allocation2 + $0xc90] sm:$0xff] %vm305, 0.0
        %709 = vst.msk [vmem:[#allocation2 + $0xc98] sm:$0xff] %vm305, 0.0
        %710 = vst.msk [vmem:[#allocation2 + $0xca0] sm:$0xff] %vm305, 0.0
        %711 = vst.msk [vmem:[#allocation2 + $0xca8] sm:$0xff] %vm305, 0.0
        %712 = vst.msk [vmem:[#allocation2 + $0xcb0] sm:$0xff] %vm305, 0.0
        %713 = vst.msk [vmem:[#allocation2 + $0xcb8] sm:$0xff] %vm305, 0.0
        %714 = vst.msk [vmem:[#allocation2 + $0xcc0] sm:$0xff] %vm305, 0.0
        %715 = vst.msk [vmem:[#allocation2 + $0xcc8] sm:$0xff] %vm305, 0.0
        %716 = vst.msk [vmem:[#allocation2 + $0xcd0] sm:$0xff] %vm305, 0.0
        %717 = vst.msk [vmem:[#allocation2 + $0xcd8] sm:$0xff] %vm305, 0.0
        %718 = vst.msk [vmem:[#allocation2 + $0xce0] sm:$0xff] %vm305, 0.0
        %719 = vst.msk [vmem:[#allocation2 + $0xce8] sm:$0xff] %vm305, 0.0
        %720 = vst.msk [vmem:[#allocation2 + $0xcf0] sm:$0xff] %vm305, 0.0
        %721 = vst.msk [vmem:[#allocation2 + $0xcf8] sm:$0xff] %vm305, 0.0
        %722 = vst.msk [vmem:[#allocation2 + $0xd00] sm:$0xff] %vm305, 0.0
        %723 = vst.msk [vmem:[#allocation2 + $0xd08] sm:$0xff] %vm305, 0.0
        %724 = vst.msk [vmem:[#allocation2 + $0xd10] sm:$0xff] %vm305, 0.0
        %725 = vst.msk [vmem:[#allocation2 + $0xd18] sm:$0xff] %vm305, 0.0
        %726 = vst.msk [vmem:[#allocation2 + $0xd20] sm:$0xff] %vm305, 0.0
        %727 = vst.msk [vmem:[#allocation2 + $0xd28] sm:$0xff] %vm305, 0.0
        %728 = vst.msk [vmem:[#allocation2 + $0xd30] sm:$0xff] %vm305, 0.0
        %729 = vst.msk [vmem:[#allocation2 + $0xd38] sm:$0xff] %vm305, 0.0
        %730 = vst.msk [vmem:[#allocation2 + $0xd40] sm:$0xff] %vm305, 0.0
        %731 = vst.msk [vmem:[#allocation2 + $0xd48] sm:$0xff] %vm305, 0.0
        %732 = vst.msk [vmem:[#allocation2 + $0xd50] sm:$0xff] %vm305, 0.0
        %733 = vst.msk [vmem:[#allocation2 + $0xd58] sm:$0xff] %vm305, 0.0
        %734 = vst.msk [vmem:[#allocation2 + $0xd60] sm:$0xff] %vm305, 0.0
        %735 = vst.msk [vmem:[#allocation2 + $0xd68] sm:$0xff] %vm305, 0.0
        %736 = vst.msk [vmem:[#allocation2 + $0xd70] sm:$0xff] %vm305, 0.0
        %737 = vst.msk [vmem:[#allocation2 + $0xd78] sm:$0xff] %vm305, 0.0
        %738 = vst.msk [vmem:[#allocation2 + $0xd80] sm:$0xff] %vm305, 0.0
        %739 = vst.msk [vmem:[#allocation2 + $0xd88] sm:$0xff] %vm305, 0.0
        %740 = vst.msk [vmem:[#allocation2 + $0xd90] sm:$0xff] %vm305, 0.0
        %741 = vst.msk [vmem:[#allocation2 + $0xd98] sm:$0xff] %vm305, 0.0
        %742 = vst.msk [vmem:[#allocation2 + $0xda0] sm:$0xff] %vm305, 0.0
        %743 = vst.msk [vmem:[#allocation2 + $0xda8] sm:$0xff] %vm305, 0.0
        %744 = vst.msk [vmem:[#allocation2 + $0xdb0] sm:$0xff] %vm305, 0.0
        %745 = vst.msk [vmem:[#allocation2 + $0xdb8] sm:$0xff] %vm305, 0.0
        %746 = vst.msk [vmem:[#allocation2 + $0xdc0] sm:$0xff] %vm305, 0.0
        %747 = vst.msk [vmem:[#allocation2 + $0xdc8] sm:$0xff] %vm305, 0.0
        %748 = vst.msk [vmem:[#allocation2 + $0xdd0] sm:$0xff] %vm305, 0.0
        %749 = vst.msk [vmem:[#allocation2 + $0xdd8] sm:$0xff] %vm305, 0.0
        %750 = vst.msk [vmem:[#allocation2 + $0xde0] sm:$0xff] %vm305, 0.0
        %751 = vst.msk [vmem:[#allocation2 + $0xde8] sm:$0xff] %vm305, 0.0
        %752 = vst.msk [vmem:[#allocation2 + $0xdf0] sm:$0xff] %vm305, 0.0
        %753 = vst.msk [vmem:[#allocation2 + $0xdf8] sm:$0xff] %vm305, 0.0
        %754 = vst.msk [vmem:[#allocation2 + $0xe00] sm:$0xff] %vm305, 0.0
        %755 = vst.msk [vmem:[#allocation2 + $0xe08] sm:$0xff] %vm305, 0.0
        %756 = vst.msk [vmem:[#allocation2 + $0xe10] sm:$0xff] %vm305, 0.0
        %757 = vst.msk [vmem:[#allocation2 + $0xe18] sm:$0xff] %vm305, 0.0
        %758 = vst.msk [vmem:[#allocation2 + $0xe20] sm:$0xff] %vm305, 0.0
        %759 = vst.msk [vmem:[#allocation2 + $0xe28] sm:$0xff] %vm305, 0.0
        %760 = vst.msk [vmem:[#allocation2 + $0xe30] sm:$0xff] %vm305, 0.0
        %761 = vst.msk [vmem:[#allocation2 + $0xe38] sm:$0xff] %vm305, 0.0
        %762 = vst.msk [vmem:[#allocation2 + $0xe40] sm:$0xff] %vm305, 0.0
        %763 = vst.msk [vmem:[#allocation2 + $0xe48] sm:$0xff] %vm305, 0.0
        %764 = vst.msk [vmem:[#allocation2 + $0xe50] sm:$0xff] %vm305, 0.0
        %765 = vst.msk [vmem:[#allocation2 + $0xe58] sm:$0xff] %vm305, 0.0
        %766 = vst.msk [vmem:[#allocation2 + $0xe60] sm:$0xff] %vm305, 0.0
        %767 = vst.msk [vmem:[#allocation2 + $0xe68] sm:$0xff] %vm305, 0.0
        %768 = vst.msk [vmem:[#allocation2 + $0xe70] sm:$0xff] %vm305, 0.0
        %769 = vst.msk [vmem:[#allocation2 + $0xe78] sm:$0xff] %vm305, 0.0
        %770 = vst.msk [vmem:[#allocation2 + $0xe80] sm:$0xff] %vm305, 0.0
        %771 = vst.msk [vmem:[#allocation2 + $0xe88] sm:$0xff] %vm305, 0.0
        %772 = vst.msk [vmem:[#allocation2 + $0xe90] sm:$0xff] %vm305, 0.0
        %773 = vst.msk [vmem:[#allocation2 + $0xe98] sm:$0xff] %vm305, 0.0
        %774 = vst.msk [vmem:[#allocation2 + $0xea0] sm:$0xff] %vm305, 0.0
        %775 = vst.msk [vmem:[#allocation2 + $0xea8] sm:$0xff] %vm305, 0.0
        %776 = vst.msk [vmem:[#allocation2 + $0xeb0] sm:$0xff] %vm305, 0.0
        %777 = vst.msk [vmem:[#allocation2 + $0xeb8] sm:$0xff] %vm305, 0.0
        %778 = vst.msk [vmem:[#allocation2 + $0xec0] sm:$0xff] %vm305, 0.0
        %779 = vst.msk [vmem:[#allocation2 + $0xec8] sm:$0xff] %vm305, 0.0
        %780 = vst.msk [vmem:[#allocation2 + $0xed0] sm:$0xff] %vm305, 0.0
        %781 = vst.msk [vmem:[#allocation2 + $0xed8] sm:$0xff] %vm305, 0.0
        %782 = vst.msk [vmem:[#allocation2 + $0xee0] sm:$0xff] %vm305, 0.0
        %783 = vst.msk [vmem:[#allocation2 + $0xee8] sm:$0xff] %vm305, 0.0
        %784 = vst.msk [vmem:[#allocation2 + $0xef0] sm:$0xff] %vm305, 0.0
        %785 = vst.msk [vmem:[#allocation2 + $0xef8] sm:$0xff] %vm305, 0.0
        %786 = vst.msk [vmem:[#allocation2 + $0xf00] sm:$0xff] %vm305, 0.0
        %787 = vst.msk [vmem:[#allocation2 + $0xf08] sm:$0xff] %vm305, 0.0
        %788 = vst.msk [vmem:[#allocation2 + $0xf10] sm:$0xff] %vm305, 0.0
        %789 = vst.msk [vmem:[#allocation2 + $0xf18] sm:$0xff] %vm305, 0.0
        %790 = vst.msk [vmem:[#allocation2 + $0xf20] sm:$0xff] %vm305, 0.0
        %791 = vst.msk [vmem:[#allocation2 + $0xf28] sm:$0xff] %vm305, 0.0
        %792 = vst.msk [vmem:[#allocation2 + $0xf30] sm:$0xff] %vm305, 0.0
        %793 = vst.msk [vmem:[#allocation2 + $0xf38] sm:$0xff] %vm305, 0.0
        %794 = vst.msk [vmem:[#allocation2 + $0xf40] sm:$0xff] %vm305, 0.0
        %795 = vst.msk [vmem:[#allocation2 + $0xf48] sm:$0xff] %vm305, 0.0
        %796 = vst.msk [vmem:[#allocation2 + $0xf50] sm:$0xff] %vm305, 0.0
        %797 = vst.msk [vmem:[#allocation2 + $0xf58] sm:$0xff] %vm305, 0.0
        %798 = vst.msk [vmem:[#allocation2 + $0xf60] sm:$0xff] %vm305, 0.0
        %799 = vst.msk [vmem:[#allocation2 + $0xf68] sm:$0xff] %vm305, 0.0
        %800 = vst.msk [vmem:[#allocation2 + $0xf70] sm:$0xff] %vm305, 0.0
        %801 = vst.msk [vmem:[#allocation2 + $0xf78] sm:$0xff] %vm305, 0.0
        %802 = vst.msk [vmem:[#allocation2 + $0xf80] sm:$0xff] %vm305, 0.0
        %803 = vst.msk [vmem:[#allocation2 + $0xf88] sm:$0xff] %vm305, 0.0
        %804 = vst.msk [vmem:[#allocation2 + $0xf90] sm:$0xff] %vm305, 0.0
        %805 = vst.msk [vmem:[#allocation2 + $0xf98] sm:$0xff] %vm305, 0.0
        %806 = vst.msk [vmem:[#allocation2 + $0xfa0] sm:$0xff] %vm305, 0.0
        %807 = vst.msk [vmem:[#allocation2 + $0xfa8] sm:$0xff] %vm305, 0.0
        %808 = vst.msk [vmem:[#allocation2 + $0xfb0] sm:$0xff] %vm305, 0.0
        %809 = vst.msk [vmem:[#allocation2 + $0xfb8] sm:$0xff] %vm305, 0.0
        %810 = vst.msk [vmem:[#allocation2 + $0xfc0] sm:$0xff] %vm305, 0.0
        %811 = vst.msk [vmem:[#allocation2 + $0xfc8] sm:$0xff] %vm305, 0.0
        %812 = vst.msk [vmem:[#allocation2 + $0xfd0] sm:$0xff] %vm305, 0.0
        %813 = vst.msk [vmem:[#allocation2 + $0xfd8] sm:$0xff] %vm305, 0.0
        %814 = vst.msk [vmem:[#allocation2 + $0xfe0] sm:$0xff] %vm305, 0.0
        %815 = vst.msk [vmem:[#allocation2 + $0xfe8] sm:$0xff] %vm305, 0.0
        %816 = vst.msk [vmem:[#allocation2 + $0xff0] sm:$0xff] %vm305, 0.0
        %817 = vst.msk [vmem:[#allocation2 + $0xff8] sm:$0xff] %vm305, 0.0
      $region40: #{tpu_custom_call.1} parent=35 // pred_fallthru
        _
      %v818 = vld [vmem:[#allocation2] sm:$0xff]
      %v819 = vld [vmem:[#allocation2 + $0x8] sm:$0xff]
      %v820 = vld [vmem:[#allocation2 + $0x10] sm:$0xff]
      %v821 = vld [vmem:[#allocation2 + $0x18] sm:$0xff]
      %v822 = vld [vmem:[#allocation2 + $0x20] sm:$0xff]
      %v823 = vld [vmem:[#allocation2 + $0x28] sm:$0xff]
      %v824 = vld [vmem:[#allocation2 + $0x30] sm:$0xff]
      %v825 = vld [vmem:[#allocation2 + $0x38] sm:$0xff]
      %v826 = vld [vmem:[#allocation2 + $0x40] sm:$0xff]
      %v827 = vld [vmem:[#allocation2 + $0x48] sm:$0xff]
      %v828 = vld [vmem:[#allocation2 + $0x50] sm:$0xff]
      %v829 = vld [vmem:[#allocation2 + $0x58] sm:$0xff]
      %v830 = vld [vmem:[#allocation2 + $0x60] sm:$0xff]
      %v831 = vld [vmem:[#allocation2 + $0x68] sm:$0xff]
      %v832 = vld [vmem:[#allocation2 + $0x70] sm:$0xff]
      %v833 = vld [vmem:[#allocation2 + $0x78] sm:$0xff]
      %v834 = vld [vmem:[#allocation2 + $0x80] sm:$0xff]
      %v835 = vld [vmem:[#allocation2 + $0x88] sm:$0xff]
      %v836 = vld [vmem:[#allocation2 + $0x90] sm:$0xff]
      %v837 = vld [vmem:[#allocation2 + $0x98] sm:$0xff]
      %v838 = vld [vmem:[#allocation2 + $0xa0] sm:$0xff]
      %v839 = vld [vmem:[#allocation2 + $0xa8] sm:$0xff]
      %v840 = vld [vmem:[#allocation2 + $0xb0] sm:$0xff]
      %v841 = vld [vmem:[#allocation2 + $0xb8] sm:$0xff]
      %v842 = vld [vmem:[#allocation2 + $0xc0] sm:$0xff]
      %v843 = vld [vmem:[#allocation2 + $0xc8] sm:$0xff]
      %v844 = vld [vmem:[#allocation2 + $0xd0] sm:$0xff]
      %v845 = vld [vmem:[#allocation2 + $0xd8] sm:$0xff]
      %v846 = vld [vmem:[#allocation2 + $0xe0] sm:$0xff]
      %v847 = vld [vmem:[#allocation2 + $0xe8] sm:$0xff]
      %v848 = vld [vmem:[#allocation2 + $0xf0] sm:$0xff]
      %v849 = vld [vmem:[#allocation2 + $0xf8] sm:$0xff]
      %v850 = vld [vmem:[#allocation2 + $0x100] sm:$0xff]
      %v851 = vld [vmem:[#allocation2 + $0x108] sm:$0xff]
      %v852 = vld [vmem:[#allocation2 + $0x110] sm:$0xff]
      %v853 = vld [vmem:[#allocation2 + $0x118] sm:$0xff]
      %v854 = vld [vmem:[#allocation2 + $0x120] sm:$0xff]
      %v855 = vld [vmem:[#allocation2 + $0x128] sm:$0xff]
      %v856 = vld [vmem:[#allocation2 + $0x130] sm:$0xff]
      %v857 = vld [vmem:[#allocation2 + $0x138] sm:$0xff]
      %v858 = vld [vmem:[#allocation2 + $0x140] sm:$0xff]
      %v859 = vld [vmem:[#allocation2 + $0x148] sm:$0xff]
      %v860 = vld [vmem:[#allocation2 + $0x150] sm:$0xff]
      %v861 = vld [vmem:[#allocation2 + $0x158] sm:$0xff]
      %v862 = vld [vmem:[#allocation2 + $0x160] sm:$0xff]
      %v863 = vld [vmem:[#allocation2 + $0x168] sm:$0xff]
      %v864 = vld [vmem:[#allocation2 + $0x170] sm:$0xff]
      %v865 = vld [vmem:[#allocation2 + $0x178] sm:$0xff]
      %v866 = vld [vmem:[#allocation2 + $0x180] sm:$0xff]
      %v867 = vld [vmem:[#allocation2 + $0x188] sm:$0xff]
      %v868 = vld [vmem:[#allocation2 + $0x190] sm:$0xff]
      %v869 = vld [vmem:[#allocation2 + $0x198] sm:$0xff]
      %v870 = vld [vmem:[#allocation2 + $0x1a0] sm:$0xff]
      %v871 = vld [vmem:[#allocation2 + $0x1a8] sm:$0xff]
      %v872 = vld [vmem:[#allocation2 + $0x1b0] sm:$0xff]
      %v873 = vld [vmem:[#allocation2 + $0x1b8] sm:$0xff]
      %v874 = vld [vmem:[#allocation2 + $0x1c0] sm:$0xff]
      %v875 = vld [vmem:[#allocation2 + $0x1c8] sm:$0xff]
      %v876 = vld [vmem:[#allocation2 + $0x1d0] sm:$0xff]
      %v877 = vld [vmem:[#allocation2 + $0x1d8] sm:$0xff]
      %v878 = vld [vmem:[#allocation2 + $0x1e0] sm:$0xff]
      %v879 = vld [vmem:[#allocation2 + $0x1e8] sm:$0xff]
      %v880 = vld [vmem:[#allocation2 + $0x1f0] sm:$0xff]
      %v881 = vld [vmem:[#allocation2 + $0x1f8] sm:$0xff]
      %v882 = vld [vmem:[#allocation2 + $0x200] sm:$0xff]
      %v883 = vld [vmem:[#allocation2 + $0x208] sm:$0xff]
      %v884 = vld [vmem:[#allocation2 + $0x210] sm:$0xff]
      %v885 = vld [vmem:[#allocation2 + $0x218] sm:$0xff]
      %v886 = vld [vmem:[#allocation2 + $0x220] sm:$0xff]
      %v887 = vld [vmem:[#allocation2 + $0x228] sm:$0xff]
      %v888 = vld [vmem:[#allocation2 + $0x230] sm:$0xff]
      %v889 = vld [vmem:[#allocation2 + $0x238] sm:$0xff]
      %v890 = vld [vmem:[#allocation2 + $0x240] sm:$0xff]
      %v891 = vld [vmem:[#allocation2 + $0x248] sm:$0xff]
      %v892 = vld [vmem:[#allocation2 + $0x250] sm:$0xff]
      %v893 = vld [vmem:[#allocation2 + $0x258] sm:$0xff]
      %v894 = vld [vmem:[#allocation2 + $0x260] sm:$0xff]
      %v895 = vld [vmem:[#allocation2 + $0x268] sm:$0xff]
      %v896 = vld [vmem:[#allocation2 + $0x270] sm:$0xff]
      %v897 = vld [vmem:[#allocation2 + $0x278] sm:$0xff]
      %v898 = vld [vmem:[#allocation2 + $0x280] sm:$0xff]
      %v899 = vld [vmem:[#allocation2 + $0x288] sm:$0xff]
      %v900 = vld [vmem:[#allocation2 + $0x290] sm:$0xff]
      %v901 = vld [vmem:[#allocation2 + $0x298] sm:$0xff]
      %v902 = vld [vmem:[#allocation2 + $0x2a0] sm:$0xff]
      %v903 = vld [vmem:[#allocation2 + $0x2a8] sm:$0xff]
      %v904 = vld [vmem:[#allocation2 + $0x2b0] sm:$0xff]
      %v905 = vld [vmem:[#allocation2 + $0x2b8] sm:$0xff]
      %v906 = vld [vmem:[#allocation2 + $0x2c0] sm:$0xff]
      %v907 = vld [vmem:[#allocation2 + $0x2c8] sm:$0xff]
      %v908 = vld [vmem:[#allocation2 + $0x2d0] sm:$0xff]
      %v909 = vld [vmem:[#allocation2 + $0x2d8] sm:$0xff]
      %v910 = vld [vmem:[#allocation2 + $0x2e0] sm:$0xff]
      %v911 = vld [vmem:[#allocation2 + $0x2e8] sm:$0xff]
      %v912 = vld [vmem:[#allocation2 + $0x2f0] sm:$0xff]
      %v913 = vld [vmem:[#allocation2 + $0x2f8] sm:$0xff]
      %v914 = vld [vmem:[#allocation2 + $0x300] sm:$0xff]
      %v915 = vld [vmem:[#allocation2 + $0x308] sm:$0xff]
      %v916 = vld [vmem:[#allocation2 + $0x310] sm:$0xff]
      %v917 = vld [vmem:[#allocation2 + $0x318] sm:$0xff]
      %v918 = vld [vmem:[#allocation2 + $0x320] sm:$0xff]
      %v919 = vld [vmem:[#allocation2 + $0x328] sm:$0xff]
      %v920 = vld [vmem:[#allocation2 + $0x330] sm:$0xff]
      %v921 = vld [vmem:[#allocation2 + $0x338] sm:$0xff]
      %v922 = vld [vmem:[#allocation2 + $0x340] sm:$0xff]
      %v923 = vld [vmem:[#allocation2 + $0x348] sm:$0xff]
      %v924 = vld [vmem:[#allocation2 + $0x350] sm:$0xff]
      %v925 = vld [vmem:[#allocation2 + $0x358] sm:$0xff]
      %v926 = vld [vmem:[#allocation2 + $0x360] sm:$0xff]
      %v927 = vld [vmem:[#allocation2 + $0x368] sm:$0xff]
      %v928 = vld [vmem:[#allocation2 + $0x370] sm:$0xff]
      %v929 = vld [vmem:[#allocation2 + $0x378] sm:$0xff]
      %v930 = vld [vmem:[#allocation2 + $0x380] sm:$0xff]
      %v931 = vld [vmem:[#allocation2 + $0x388] sm:$0xff]
      %v932 = vld [vmem:[#allocation2 + $0x390] sm:$0xff]
      %v933 = vld [vmem:[#allocation2 + $0x398] sm:$0xff]
      %v934 = vld [vmem:[#allocation2 + $0x3a0] sm:$0xff]
      %v935 = vld [vmem:[#allocation2 + $0x3a8] sm:$0xff]
      %v936 = vld [vmem:[#allocation2 + $0x3b0] sm:$0xff]
      %v937 = vld [vmem:[#allocation2 + $0x3b8] sm:$0xff]
      %v938 = vld [vmem:[#allocation2 + $0x3c0] sm:$0xff]
      %v939 = vld [vmem:[#allocation2 + $0x3c8] sm:$0xff]
      %v940 = vld [vmem:[#allocation2 + $0x3d0] sm:$0xff]
      %v941 = vld [vmem:[#allocation2 + $0x3d8] sm:$0xff]
      %v942 = vld [vmem:[#allocation2 + $0x3e0] sm:$0xff]
      %v943 = vld [vmem:[#allocation2 + $0x3e8] sm:$0xff]
      %v944 = vld [vmem:[#allocation2 + $0x3f0] sm:$0xff]
      %v945 = vld [vmem:[#allocation2 + $0x3f8] sm:$0xff]
      %v946 = vld [vmem:[#allocation2 + $0x400] sm:$0xff]
      %v947 = vld [vmem:[#allocation2 + $0x408] sm:$0xff]
      %v948 = vld [vmem:[#allocation2 + $0x410] sm:$0xff]
      %v949 = vld [vmem:[#allocation2 + $0x418] sm:$0xff]
      %v950 = vld [vmem:[#allocation2 + $0x420] sm:$0xff]
      %v951 = vld [vmem:[#allocation2 + $0x428] sm:$0xff]
      %v952 = vld [vmem:[#allocation2 + $0x430] sm:$0xff]
      %v953 = vld [vmem:[#allocation2 + $0x438] sm:$0xff]
      %v954 = vld [vmem:[#allocation2 + $0x440] sm:$0xff]
      %v955 = vld [vmem:[#allocation2 + $0x448] sm:$0xff]
      %v956 = vld [vmem:[#allocation2 + $0x450] sm:$0xff]
      %v957 = vld [vmem:[#allocation2 + $0x458] sm:$0xff]
      %v958 = vld [vmem:[#allocation2 + $0x460] sm:$0xff]
      %v959 = vld [vmem:[#allocation2 + $0x468] sm:$0xff]
      %v960 = vld [vmem:[#allocation2 + $0x470] sm:$0xff]
      %v961 = vld [vmem:[#allocation2 + $0x478] sm:$0xff]
      %v962 = vld [vmem:[#allocation2 + $0x480] sm:$0xff]
      %v963 = vld [vmem:[#allocation2 + $0x488] sm:$0xff]
      %v964 = vld [vmem:[#allocation2 + $0x490] sm:$0xff]
      %v965 = vld [vmem:[#allocation2 + $0x498] sm:$0xff]
      %v966 = vld [vmem:[#allocation2 + $0x4a0] sm:$0xff]
      %v967 = vld [vmem:[#allocation2 + $0x4a8] sm:$0xff]
      %v968 = vld [vmem:[#allocation2 + $0x4b0] sm:$0xff]
      %v969 = vld [vmem:[#allocation2 + $0x4b8] sm:$0xff]
      %v970 = vld [vmem:[#allocation2 + $0x4c0] sm:$0xff]
      %v971 = vld [vmem:[#allocation2 + $0x4c8] sm:$0xff]
      %v972 = vld [vmem:[#allocation2 + $0x4d0] sm:$0xff]
      %v973 = vld [vmem:[#allocation2 + $0x4d8] sm:$0xff]
      %v974 = vld [vmem:[#allocation2 + $0x4e0] sm:$0xff]
      %v975 = vld [vmem:[#allocation2 + $0x4e8] sm:$0xff]
      %v976 = vld [vmem:[#allocation2 + $0x4f0] sm:$0xff]
      %v977 = vld [vmem:[#allocation2 + $0x4f8] sm:$0xff]
      %v978 = vld [vmem:[#allocation2 + $0x500] sm:$0xff]
      %v979 = vld [vmem:[#allocation2 + $0x508] sm:$0xff]
      %v980 = vld [vmem:[#allocation2 + $0x510] sm:$0xff]
      %v981 = vld [vmem:[#allocation2 + $0x518] sm:$0xff]
      %v982 = vld [vmem:[#allocation2 + $0x520] sm:$0xff]
      %v983 = vld [vmem:[#allocation2 + $0x528] sm:$0xff]
      %v984 = vld [vmem:[#allocation2 + $0x530] sm:$0xff]
      %v985 = vld [vmem:[#allocation2 + $0x538] sm:$0xff]
      %v986 = vld [vmem:[#allocation2 + $0x540] sm:$0xff]
      %v987 = vld [vmem:[#allocation2 + $0x548] sm:$0xff]
      %v988 = vld [vmem:[#allocation2 + $0x550] sm:$0xff]
      %v989 = vld [vmem:[#allocation2 + $0x558] sm:$0xff]
      %v990 = vld [vmem:[#allocation2 + $0x560] sm:$0xff]
      %v991 = vld [vmem:[#allocation2 + $0x568] sm:$0xff]
      %v992 = vld [vmem:[#allocation2 + $0x570] sm:$0xff]
      %v993 = vld [vmem:[#allocation2 + $0x578] sm:$0xff]
      %v994 = vld [vmem:[#allocation2 + $0x580] sm:$0xff]
      %v995 = vld [vmem:[#allocation2 + $0x588] sm:$0xff]
      %v996 = vld [vmem:[#allocation2 + $0x590] sm:$0xff]
      %v997 = vld [vmem:[#allocation2 + $0x598] sm:$0xff]
      %v998 = vld [vmem:[#allocation2 + $0x5a0] sm:$0xff]
      %v999 = vld [vmem:[#allocation2 + $0x5a8] sm:$0xff]
      %v1000 = vld [vmem:[#allocation2 + $0x5b0] sm:$0xff]
      %v1001 = vld [vmem:[#allocation2 + $0x5b8] sm:$0xff]
      %v1002 = vld [vmem:[#allocation2 + $0x5c0] sm:$0xff]
      %v1003 = vld [vmem:[#allocation2 + $0x5c8] sm:$0xff]
      %v1004 = vld [vmem:[#allocation2 + $0x5d0] sm:$0xff]
      %v1005 = vld [vmem:[#allocation2 + $0x5d8] sm:$0xff]
      %v1006 = vld [vmem:[#allocation2 + $0x5e0] sm:$0xff]
      %v1007 = vld [vmem:[#allocation2 + $0x5e8] sm:$0xff]
      %v1008 = vld [vmem:[#allocation2 + $0x5f0] sm:$0xff]
      %v1009 = vld [vmem:[#allocation2 + $0x5f8] sm:$0xff]
      %v1010 = vld [vmem:[#allocation2 + $0x600] sm:$0xff]
      %v1011 = vld [vmem:[#allocation2 + $0x608] sm:$0xff]
      %v1012 = vld [vmem:[#allocation2 + $0x610] sm:$0xff]
      %v1013 = vld [vmem:[#allocation2 + $0x618] sm:$0xff]
      %v1014 = vld [vmem:[#allocation2 + $0x620] sm:$0xff]
      %v1015 = vld [vmem:[#allocation2 + $0x628] sm:$0xff]
      %v1016 = vld [vmem:[#allocation2 + $0x630] sm:$0xff]
      %v1017 = vld [vmem:[#allocation2 + $0x638] sm:$0xff]
      %v1018 = vld [vmem:[#allocation2 + $0x640] sm:$0xff]
      %v1019 = vld [vmem:[#allocation2 + $0x648] sm:$0xff]
      %v1020 = vld [vmem:[#allocation2 + $0x650] sm:$0xff]
      %v1021 = vld [vmem:[#allocation2 + $0x658] sm:$0xff]
      %v1022 = vld [vmem:[#allocation2 + $0x660] sm:$0xff]
      %v1023 = vld [vmem:[#allocation2 + $0x668] sm:$0xff]
      %v1024 = vld [vmem:[#allocation2 + $0x670] sm:$0xff]
      %v1025 = vld [vmem:[#allocation2 + $0x678] sm:$0xff]
      %v1026 = vld [vmem:[#allocation2 + $0x680] sm:$0xff]
      %v1027 = vld [vmem:[#allocation2 + $0x688] sm:$0xff]
      %v1028 = vld [vmem:[#allocation2 + $0x690] sm:$0xff]
      %v1029 = vld [vmem:[#allocation2 + $0x698] sm:$0xff]
      %v1030 = vld [vmem:[#allocation2 + $0x6a0] sm:$0xff]
      %v1031 = vld [vmem:[#allocation2 + $0x6a8] sm:$0xff]
      %v1032 = vld [vmem:[#allocation2 + $0x6b0] sm:$0xff]
      %v1033 = vld [vmem:[#allocation2 + $0x6b8] sm:$0xff]
      %v1034 = vld [vmem:[#allocation2 + $0x6c0] sm:$0xff]
      %v1035 = vld [vmem:[#allocation2 + $0x6c8] sm:$0xff]
      %v1036 = vld [vmem:[#allocation2 + $0x6d0] sm:$0xff]
      %v1037 = vld [vmem:[#allocation2 + $0x6d8] sm:$0xff]
      %v1038 = vld [vmem:[#allocation2 + $0x6e0] sm:$0xff]
      %v1039 = vld [vmem:[#allocation2 + $0x6e8] sm:$0xff]
      %v1040 = vld [vmem:[#allocation2 + $0x6f0] sm:$0xff]
      %v1041 = vld [vmem:[#allocation2 + $0x6f8] sm:$0xff]
      %v1042 = vld [vmem:[#allocation2 + $0x700] sm:$0xff]
      %v1043 = vld [vmem:[#allocation2 + $0x708] sm:$0xff]
      %v1044 = vld [vmem:[#allocation2 + $0x710] sm:$0xff]
      %v1045 = vld [vmem:[#allocation2 + $0x718] sm:$0xff]
      %v1046 = vld [vmem:[#allocation2 + $0x720] sm:$0xff]
      %v1047 = vld [vmem:[#allocation2 + $0x728] sm:$0xff]
      %v1048 = vld [vmem:[#allocation2 + $0x730] sm:$0xff]
      %v1049 = vld [vmem:[#allocation2 + $0x738] sm:$0xff]
      %v1050 = vld [vmem:[#allocation2 + $0x740] sm:$0xff]
      %v1051 = vld [vmem:[#allocation2 + $0x748] sm:$0xff]
      %v1052 = vld [vmem:[#allocation2 + $0x750] sm:$0xff]
      %v1053 = vld [vmem:[#allocation2 + $0x758] sm:$0xff]
      %v1054 = vld [vmem:[#allocation2 + $0x760] sm:$0xff]
      %v1055 = vld [vmem:[#allocation2 + $0x768] sm:$0xff]
      %v1056 = vld [vmem:[#allocation2 + $0x770] sm:$0xff]
      %v1057 = vld [vmem:[#allocation2 + $0x778] sm:$0xff]
      %v1058 = vld [vmem:[#allocation2 + $0x780] sm:$0xff]
      %v1059 = vld [vmem:[#allocation2 + $0x788] sm:$0xff]
      %v1060 = vld [vmem:[#allocation2 + $0x790] sm:$0xff]
      %v1061 = vld [vmem:[#allocation2 + $0x798] sm:$0xff]
      %v1062 = vld [vmem:[#allocation2 + $0x7a0] sm:$0xff]
      %v1063 = vld [vmem:[#allocation2 + $0x7a8] sm:$0xff]
      %v1064 = vld [vmem:[#allocation2 + $0x7b0] sm:$0xff]
      %v1065 = vld [vmem:[#allocation2 + $0x7b8] sm:$0xff]
      %v1066 = vld [vmem:[#allocation2 + $0x7c0] sm:$0xff]
      %v1067 = vld [vmem:[#allocation2 + $0x7c8] sm:$0xff]
      %v1068 = vld [vmem:[#allocation2 + $0x7d0] sm:$0xff]
      %v1069 = vld [vmem:[#allocation2 + $0x7d8] sm:$0xff]
      %v1070 = vld [vmem:[#allocation2 + $0x7e0] sm:$0xff]
      %v1071 = vld [vmem:[#allocation2 + $0x7e8] sm:$0xff]
      %v1072 = vld [vmem:[#allocation2 + $0x7f0] sm:$0xff]
      %v1073 = vld [vmem:[#allocation2 + $0x7f8] sm:$0xff]
      %v1074 = vld [vmem:[#allocation2 + $0x800] sm:$0xff]
      %v1075 = vld [vmem:[#allocation2 + $0x808] sm:$0xff]
      %v1076 = vld [vmem:[#allocation2 + $0x810] sm:$0xff]
      %v1077 = vld [vmem:[#allocation2 + $0x818] sm:$0xff]
      %v1078 = vld [vmem:[#allocation2 + $0x820] sm:$0xff]
      %v1079 = vld [vmem:[#allocation2 + $0x828] sm:$0xff]
      %v1080 = vld [vmem:[#allocation2 + $0x830] sm:$0xff]
      %v1081 = vld [vmem:[#allocation2 + $0x838] sm:$0xff]
      %v1082 = vld [vmem:[#allocation2 + $0x840] sm:$0xff]
      %v1083 = vld [vmem:[#allocation2 + $0x848] sm:$0xff]
      %v1084 = vld [vmem:[#allocation2 + $0x850] sm:$0xff]
      %v1085 = vld [vmem:[#allocation2 + $0x858] sm:$0xff]
      %v1086 = vld [vmem:[#allocation2 + $0x860] sm:$0xff]
      %v1087 = vld [vmem:[#allocation2 + $0x868] sm:$0xff]
      %v1088 = vld [vmem:[#allocation2 + $0x870] sm:$0xff]
      %v1089 = vld [vmem:[#allocation2 + $0x878] sm:$0xff]
      %v1090 = vld [vmem:[#allocation2 + $0x880] sm:$0xff]
      %v1091 = vld [vmem:[#allocation2 + $0x888] sm:$0xff]
      %v1092 = vld [vmem:[#allocation2 + $0x890] sm:$0xff]
      %v1093 = vld [vmem:[#allocation2 + $0x898] sm:$0xff]
      %v1094 = vld [vmem:[#allocation2 + $0x8a0] sm:$0xff]
      %v1095 = vld [vmem:[#allocation2 + $0x8a8] sm:$0xff]
      %v1096 = vld [vmem:[#allocation2 + $0x8b0] sm:$0xff]
      %v1097 = vld [vmem:[#allocation2 + $0x8b8] sm:$0xff]
      %v1098 = vld [vmem:[#allocation2 + $0x8c0] sm:$0xff]
      %v1099 = vld [vmem:[#allocation2 + $0x8c8] sm:$0xff]
      %v1100 = vld [vmem:[#allocation2 + $0x8d0] sm:$0xff]
      %v1101 = vld [vmem:[#allocation2 + $0x8d8] sm:$0xff]
      %v1102 = vld [vmem:[#allocation2 + $0x8e0] sm:$0xff]
      %v1103 = vld [vmem:[#allocation2 + $0x8e8] sm:$0xff]
      %v1104 = vld [vmem:[#allocation2 + $0x8f0] sm:$0xff]
      %v1105 = vld [vmem:[#allocation2 + $0x8f8] sm:$0xff]
      %v1106 = vld [vmem:[#allocation2 + $0x900] sm:$0xff]
      %v1107 = vld [vmem:[#allocation2 + $0x908] sm:$0xff]
      %v1108 = vld [vmem:[#allocation2 + $0x910] sm:$0xff]
      %v1109 = vld [vmem:[#allocation2 + $0x918] sm:$0xff]
      %v1110 = vld [vmem:[#allocation2 + $0x920] sm:$0xff]
      %v1111 = vld [vmem:[#allocation2 + $0x928] sm:$0xff]
      %v1112 = vld [vmem:[#allocation2 + $0x930] sm:$0xff]
      %v1113 = vld [vmem:[#allocation2 + $0x938] sm:$0xff]
      %v1114 = vld [vmem:[#allocation2 + $0x940] sm:$0xff]
      %v1115 = vld [vmem:[#allocation2 + $0x948] sm:$0xff]
      %v1116 = vld [vmem:[#allocation2 + $0x950] sm:$0xff]
      %v1117 = vld [vmem:[#allocation2 + $0x958] sm:$0xff]
      %v1118 = vld [vmem:[#allocation2 + $0x960] sm:$0xff]
      %v1119 = vld [vmem:[#allocation2 + $0x968] sm:$0xff]
      %v1120 = vld [vmem:[#allocation2 + $0x970] sm:$0xff]
      %v1121 = vld [vmem:[#allocation2 + $0x978] sm:$0xff]
      %v1122 = vld [vmem:[#allocation2 + $0x980] sm:$0xff]
      %v1123 = vld [vmem:[#allocation2 + $0x988] sm:$0xff]
      %v1124 = vld [vmem:[#allocation2 + $0x990] sm:$0xff]
      %v1125 = vld [vmem:[#allocation2 + $0x998] sm:$0xff]
      %v1126 = vld [vmem:[#allocation2 + $0x9a0] sm:$0xff]
      %v1127 = vld [vmem:[#allocation2 + $0x9a8] sm:$0xff]
      %v1128 = vld [vmem:[#allocation2 + $0x9b0] sm:$0xff]
      %v1129 = vld [vmem:[#allocation2 + $0x9b8] sm:$0xff]
      %v1130 = vld [vmem:[#allocation2 + $0x9c0] sm:$0xff]
      %v1131 = vld [vmem:[#allocation2 + $0x9c8] sm:$0xff]
      %v1132 = vld [vmem:[#allocation2 + $0x9d0] sm:$0xff]
      %v1133 = vld [vmem:[#allocation2 + $0x9d8] sm:$0xff]
      %v1134 = vld [vmem:[#allocation2 + $0x9e0] sm:$0xff]
      %v1135 = vld [vmem:[#allocation2 + $0x9e8] sm:$0xff]
      %v1136 = vld [vmem:[#allocation2 + $0x9f0] sm:$0xff]
      %v1137 = vld [vmem:[#allocation2 + $0x9f8] sm:$0xff]
      %v1138 = vld [vmem:[#allocation2 + $0xa00] sm:$0xff]
      %v1139 = vld [vmem:[#allocation2 + $0xa08] sm:$0xff]
      %v1140 = vld [vmem:[#allocation2 + $0xa10] sm:$0xff]
      %v1141 = vld [vmem:[#allocation2 + $0xa18] sm:$0xff]
      %v1142 = vld [vmem:[#allocation2 + $0xa20] sm:$0xff]
      %v1143 = vld [vmem:[#allocation2 + $0xa28] sm:$0xff]
      %v1144 = vld [vmem:[#allocation2 + $0xa30] sm:$0xff]
      %v1145 = vld [vmem:[#allocation2 + $0xa38] sm:$0xff]
      %v1146 = vld [vmem:[#allocation2 + $0xa40] sm:$0xff]
      %v1147 = vld [vmem:[#allocation2 + $0xa48] sm:$0xff]
      %v1148 = vld [vmem:[#allocation2 + $0xa50] sm:$0xff]
      %v1149 = vld [vmem:[#allocation2 + $0xa58] sm:$0xff]
      %v1150 = vld [vmem:[#allocation2 + $0xa60] sm:$0xff]
      %v1151 = vld [vmem:[#allocation2 + $0xa68] sm:$0xff]
      %v1152 = vld [vmem:[#allocation2 + $0xa70] sm:$0xff]
      %v1153 = vld [vmem:[#allocation2 + $0xa78] sm:$0xff]
      %v1154 = vld [vmem:[#allocation2 + $0xa80] sm:$0xff]
      %v1155 = vld [vmem:[#allocation2 + $0xa88] sm:$0xff]
      %v1156 = vld [vmem:[#allocation2 + $0xa90] sm:$0xff]
      %v1157 = vld [vmem:[#allocation2 + $0xa98] sm:$0xff]
      %v1158 = vld [vmem:[#allocation2 + $0xaa0] sm:$0xff]
      %v1159 = vld [vmem:[#allocation2 + $0xaa8] sm:$0xff]
      %v1160 = vld [vmem:[#allocation2 + $0xab0] sm:$0xff]
      %v1161 = vld [vmem:[#allocation2 + $0xab8] sm:$0xff]
      %v1162 = vld [vmem:[#allocation2 + $0xac0] sm:$0xff]
      %v1163 = vld [vmem:[#allocation2 + $0xac8] sm:$0xff]
      %v1164 = vld [vmem:[#allocation2 + $0xad0] sm:$0xff]
      %v1165 = vld [vmem:[#allocation2 + $0xad8] sm:$0xff]
      %v1166 = vld [vmem:[#allocation2 + $0xae0] sm:$0xff]
      %v1167 = vld [vmem:[#allocation2 + $0xae8] sm:$0xff]
      %v1168 = vld [vmem:[#allocation2 + $0xaf0] sm:$0xff]
      %v1169 = vld [vmem:[#allocation2 + $0xaf8] sm:$0xff]
      %v1170 = vld [vmem:[#allocation2 + $0xb00] sm:$0xff]
      %v1171 = vld [vmem:[#allocation2 + $0xb08] sm:$0xff]
      %v1172 = vld [vmem:[#allocation2 + $0xb10] sm:$0xff]
      %v1173 = vld [vmem:[#allocation2 + $0xb18] sm:$0xff]
      %v1174 = vld [vmem:[#allocation2 + $0xb20] sm:$0xff]
      %v1175 = vld [vmem:[#allocation2 + $0xb28] sm:$0xff]
      %v1176 = vld [vmem:[#allocation2 + $0xb30] sm:$0xff]
      %v1177 = vld [vmem:[#allocation2 + $0xb38] sm:$0xff]
      %v1178 = vld [vmem:[#allocation2 + $0xb40] sm:$0xff]
      %v1179 = vld [vmem:[#allocation2 + $0xb48] sm:$0xff]
      %v1180 = vld [vmem:[#allocation2 + $0xb50] sm:$0xff]
      %v1181 = vld [vmem:[#allocation2 + $0xb58] sm:$0xff]
      %v1182 = vld [vmem:[#allocation2 + $0xb60] sm:$0xff]
      %v1183 = vld [vmem:[#allocation2 + $0xb68] sm:$0xff]
      %v1184 = vld [vmem:[#allocation2 + $0xb70] sm:$0xff]
      %v1185 = vld [vmem:[#allocation2 + $0xb78] sm:$0xff]
      %v1186 = vld [vmem:[#allocation2 + $0xb80] sm:$0xff]
      %v1187 = vld [vmem:[#allocation2 + $0xb88] sm:$0xff]
      %v1188 = vld [vmem:[#allocation2 + $0xb90] sm:$0xff]
      %v1189 = vld [vmem:[#allocation2 + $0xb98] sm:$0xff]
      %v1190 = vld [vmem:[#allocation2 + $0xba0] sm:$0xff]
      %v1191 = vld [vmem:[#allocation2 + $0xba8] sm:$0xff]
      %v1192 = vld [vmem:[#allocation2 + $0xbb0] sm:$0xff]
      %v1193 = vld [vmem:[#allocation2 + $0xbb8] sm:$0xff]
      %v1194 = vld [vmem:[#allocation2 + $0xbc0] sm:$0xff]
      %v1195 = vld [vmem:[#allocation2 + $0xbc8] sm:$0xff]
      %v1196 = vld [vmem:[#allocation2 + $0xbd0] sm:$0xff]
      %v1197 = vld [vmem:[#allocation2 + $0xbd8] sm:$0xff]
      %v1198 = vld [vmem:[#allocation2 + $0xbe0] sm:$0xff]
      %v1199 = vld [vmem:[#allocation2 + $0xbe8] sm:$0xff]
      %v1200 = vld [vmem:[#allocation2 + $0xbf0] sm:$0xff]
      %v1201 = vld [vmem:[#allocation2 + $0xbf8] sm:$0xff]
      %v1202 = vld [vmem:[#allocation2 + $0xc00] sm:$0xff]
      %v1203 = vld [vmem:[#allocation2 + $0xc08] sm:$0xff]
      %v1204 = vld [vmem:[#allocation2 + $0xc10] sm:$0xff]
      %v1205 = vld [vmem:[#allocation2 + $0xc18] sm:$0xff]
      %v1206 = vld [vmem:[#allocation2 + $0xc20] sm:$0xff]
      %v1207 = vld [vmem:[#allocation2 + $0xc28] sm:$0xff]
      %v1208 = vld [vmem:[#allocation2 + $0xc30] sm:$0xff]
      %v1209 = vld [vmem:[#allocation2 + $0xc38] sm:$0xff]
      %v1210 = vld [vmem:[#allocation2 + $0xc40] sm:$0xff]
      %v1211 = vld [vmem:[#allocation2 + $0xc48] sm:$0xff]
      %v1212 = vld [vmem:[#allocation2 + $0xc50] sm:$0xff]
      %v1213 = vld [vmem:[#allocation2 + $0xc58] sm:$0xff]
      %v1214 = vld [vmem:[#allocation2 + $0xc60] sm:$0xff]
      %v1215 = vld [vmem:[#allocation2 + $0xc68] sm:$0xff]
      %v1216 = vld [vmem:[#allocation2 + $0xc70] sm:$0xff]
      %v1217 = vld [vmem:[#allocation2 + $0xc78] sm:$0xff]
      %v1218 = vld [vmem:[#allocation2 + $0xc80] sm:$0xff]
      %v1219 = vld [vmem:[#allocation2 + $0xc88] sm:$0xff]
      %v1220 = vld [vmem:[#allocation2 + $0xc90] sm:$0xff]
      %v1221 = vld [vmem:[#allocation2 + $0xc98] sm:$0xff]
      %v1222 = vld [vmem:[#allocation2 + $0xca0] sm:$0xff]
      %v1223 = vld [vmem:[#allocation2 + $0xca8] sm:$0xff]
      %v1224 = vld [vmem:[#allocation2 + $0xcb0] sm:$0xff]
      %v1225 = vld [vmem:[#allocation2 + $0xcb8] sm:$0xff]
      %v1226 = vld [vmem:[#allocation2 + $0xcc0] sm:$0xff]
      %v1227 = vld [vmem:[#allocation2 + $0xcc8] sm:$0xff]
      %v1228 = vld [vmem:[#allocation2 + $0xcd0] sm:$0xff]
      %v1229 = vld [vmem:[#allocation2 + $0xcd8] sm:$0xff]
      %v1230 = vld [vmem:[#allocation2 + $0xce0] sm:$0xff]
      %v1231 = vld [vmem:[#allocation2 + $0xce8] sm:$0xff]
      %v1232 = vld [vmem:[#allocation2 + $0xcf0] sm:$0xff]
      %v1233 = vld [vmem:[#allocation2 + $0xcf8] sm:$0xff]
      %v1234 = vld [vmem:[#allocation2 + $0xd00] sm:$0xff]
      %v1235 = vld [vmem:[#allocation2 + $0xd08] sm:$0xff]
      %v1236 = vld [vmem:[#allocation2 + $0xd10] sm:$0xff]
      %v1237 = vld [vmem:[#allocation2 + $0xd18] sm:$0xff]
      %v1238 = vld [vmem:[#allocation2 + $0xd20] sm:$0xff]
      %v1239 = vld [vmem:[#allocation2 + $0xd28] sm:$0xff]
      %v1240 = vld [vmem:[#allocation2 + $0xd30] sm:$0xff]
      %v1241 = vld [vmem:[#allocation2 + $0xd38] sm:$0xff]
      %v1242 = vld [vmem:[#allocation2 + $0xd40] sm:$0xff]
      %v1243 = vld [vmem:[#allocation2 + $0xd48] sm:$0xff]
      %v1244 = vld [vmem:[#allocation2 + $0xd50] sm:$0xff]
      %v1245 = vld [vmem:[#allocation2 + $0xd58] sm:$0xff]
      %v1246 = vld [vmem:[#allocation2 + $0xd60] sm:$0xff]
      %v1247 = vld [vmem:[#allocation2 + $0xd68] sm:$0xff]
      %v1248 = vld [vmem:[#allocation2 + $0xd70] sm:$0xff]
      %v1249 = vld [vmem:[#allocation2 + $0xd78] sm:$0xff]
      %v1250 = vld [vmem:[#allocation2 + $0xd80] sm:$0xff]
      %v1251 = vld [vmem:[#allocation2 + $0xd88] sm:$0xff]
      %v1252 = vld [vmem:[#allocation2 + $0xd90] sm:$0xff]
      %v1253 = vld [vmem:[#allocation2 + $0xd98] sm:$0xff]
      %v1254 = vld [vmem:[#allocation2 + $0xda0] sm:$0xff]
      %v1255 = vld [vmem:[#allocation2 + $0xda8] sm:$0xff]
      %v1256 = vld [vmem:[#allocation2 + $0xdb0] sm:$0xff]
      %v1257 = vld [vmem:[#allocation2 + $0xdb8] sm:$0xff]
      %v1258 = vld [vmem:[#allocation2 + $0xdc0] sm:$0xff]
      %v1259 = vld [vmem:[#allocation2 + $0xdc8] sm:$0xff]
      %v1260 = vld [vmem:[#allocation2 + $0xdd0] sm:$0xff]
      %v1261 = vld [vmem:[#allocation2 + $0xdd8] sm:$0xff]
      %v1262 = vld [vmem:[#allocation2 + $0xde0] sm:$0xff]
      %v1263 = vld [vmem:[#allocation2 + $0xde8] sm:$0xff]
      %v1264 = vld [vmem:[#allocation2 + $0xdf0] sm:$0xff]
      %v1265 = vld [vmem:[#allocation2 + $0xdf8] sm:$0xff]
      %v1266 = vld [vmem:[#allocation2 + $0xe00] sm:$0xff]
      %v1267 = vld [vmem:[#allocation2 + $0xe08] sm:$0xff]
      %v1268 = vld [vmem:[#allocation2 + $0xe10] sm:$0xff]
      %v1269 = vld [vmem:[#allocation2 + $0xe18] sm:$0xff]
      %v1270 = vld [vmem:[#allocation2 + $0xe20] sm:$0xff]
      %v1271 = vld [vmem:[#allocation2 + $0xe28] sm:$0xff]
      %v1272 = vld [vmem:[#allocation2 + $0xe30] sm:$0xff]
      %v1273 = vld [vmem:[#allocation2 + $0xe38] sm:$0xff]
      %v1274 = vld [vmem:[#allocation2 + $0xe40] sm:$0xff]
      %v1275 = vld [vmem:[#allocation2 + $0xe48] sm:$0xff]
      %v1276 = vld [vmem:[#allocation2 + $0xe50] sm:$0xff]
      %v1277 = vld [vmem:[#allocation2 + $0xe58] sm:$0xff]
      %v1278 = vld [vmem:[#allocation2 + $0xe60] sm:$0xff]
      %v1279 = vld [vmem:[#allocation2 + $0xe68] sm:$0xff]
      %v1280 = vld [vmem:[#allocation2 + $0xe70] sm:$0xff]
      %v1281 = vld [vmem:[#allocation2 + $0xe78] sm:$0xff]
      %v1282 = vld [vmem:[#allocation2 + $0xe80] sm:$0xff]
      %v1283 = vld [vmem:[#allocation2 + $0xe88] sm:$0xff]
      %v1284 = vld [vmem:[#allocation2 + $0xe90] sm:$0xff]
      %v1285 = vld [vmem:[#allocation2 + $0xe98] sm:$0xff]
      %v1286 = vld [vmem:[#allocation2 + $0xea0] sm:$0xff]
      %v1287 = vld [vmem:[#allocation2 + $0xea8] sm:$0xff]
      %v1288 = vld [vmem:[#allocation2 + $0xeb0] sm:$0xff]
      %v1289 = vld [vmem:[#allocation2 + $0xeb8] sm:$0xff]
      %v1290 = vld [vmem:[#allocation2 + $0xec0] sm:$0xff]
      %v1291 = vld [vmem:[#allocation2 + $0xec8] sm:$0xff]
      %v1292 = vld [vmem:[#allocation2 + $0xed0] sm:$0xff]
      %v1293 = vld [vmem:[#allocation2 + $0xed8] sm:$0xff]
      %v1294 = vld [vmem:[#allocation2 + $0xee0] sm:$0xff]
      %v1295 = vld [vmem:[#allocation2 + $0xee8] sm:$0xff]
      %v1296 = vld [vmem:[#allocation2 + $0xef0] sm:$0xff]
      %v1297 = vld [vmem:[#allocation2 + $0xef8] sm:$0xff]
      %v1298 = vld [vmem:[#allocation2 + $0xf00] sm:$0xff]
      %v1299 = vld [vmem:[#allocation2 + $0xf08] sm:$0xff]
      %v1300 = vld [vmem:[#allocation2 + $0xf10] sm:$0xff]
      %v1301 = vld [vmem:[#allocation2 + $0xf18] sm:$0xff]
      %v1302 = vld [vmem:[#allocation2 + $0xf20] sm:$0xff]
      %v1303 = vld [vmem:[#allocation2 + $0xf28] sm:$0xff]
      %v1304 = vld [vmem:[#allocation2 + $0xf30] sm:$0xff]
      %v1305 = vld [vmem:[#allocation2 + $0xf38] sm:$0xff]
      %v1306 = vld [vmem:[#allocation2 + $0xf40] sm:$0xff]
      %v1307 = vld [vmem:[#allocation2 + $0xf48] sm:$0xff]
      %v1308 = vld [vmem:[#allocation2 + $0xf50] sm:$0xff]
      %v1309 = vld [vmem:[#allocation2 + $0xf58] sm:$0xff]
      %v1310 = vld [vmem:[#allocation2 + $0xf60] sm:$0xff]
      %v1311 = vld [vmem:[#allocation2 + $0xf68] sm:$0xff]
      %v1312 = vld [vmem:[#allocation2 + $0xf70] sm:$0xff]
      %v1313 = vld [vmem:[#allocation2 + $0xf78] sm:$0xff]
      %v1314 = vld [vmem:[#allocation2 + $0xf80] sm:$0xff]
      %v1315 = vld [vmem:[#allocation2 + $0xf88] sm:$0xff]
      %v1316 = vld [vmem:[#allocation2 + $0xf90] sm:$0xff]
      %v1317 = vld [vmem:[#allocation2 + $0xf98] sm:$0xff]
      %v1318 = vld [vmem:[#allocation2 + $0xfa0] sm:$0xff]
      %v1319 = vld [vmem:[#allocation2 + $0xfa8] sm:$0xff]
      %v1320 = vld [vmem:[#allocation2 + $0xfb0] sm:$0xff]
      %v1321 = vld [vmem:[#allocation2 + $0xfb8] sm:$0xff]
      %v1322 = vld [vmem:[#allocation2 + $0xfc0] sm:$0xff]
      %v1323 = vld [vmem:[#allocation2 + $0xfc8] sm:$0xff]
      %v1324 = vld [vmem:[#allocation2 + $0xfd0] sm:$0xff]
      %v1325 = vld [vmem:[#allocation2 + $0xfd8] sm:$0xff]
      %v1326 = vld [vmem:[#allocation2 + $0xfe0] sm:$0xff]
      %v1327 = vld [vmem:[#allocation2 + $0xfe8] sm:$0xff]
      %v1328 = vld [vmem:[#allocation2 + $0xff0] sm:$0xff]
      %v1329 = vld [vmem:[#allocation2 + $0xff8] sm:$0xff]
      %v1330 = vld [vmem:[%s274] sm:$0xf]
      %v1331 = vld [vmem:[%s274 + $0x4] sm:$0xf]
      %v1332 = vld [vmem:[%s274 + $0x8] sm:$0xf]
      %v1333 = vld [vmem:[%s274 + $0xc] sm:$0xf]
      %v1334 = vld [vmem:[%s274 + $0x10] sm:$0xf]
      %v1335 = vld [vmem:[%s274 + $0x14] sm:$0xf]
      %v1336 = vld [vmem:[%s274 + $0x18] sm:$0xf]
      %v1337 = vld [vmem:[%s274 + $0x1c] sm:$0xf]
      %v1338 = vld [vmem:[%s274 + $0x20] sm:$0xf]
      %v1339 = vld [vmem:[%s274 + $0x24] sm:$0xf]
      %v1340 = vld [vmem:[%s274 + $0x28] sm:$0xf]
      %v1341 = vld [vmem:[%s274 + $0x2c] sm:$0xf]
      %v1342 = vld [vmem:[%s274 + $0x30] sm:$0xf]
      %v1343 = vld [vmem:[%s274 + $0x34] sm:$0xf]
      %v1344 = vld [vmem:[%s274 + $0x38] sm:$0xf]
      %v1345 = vld [vmem:[%s274 + $0x3c] sm:$0xf]
      %v1346 = vld [vmem:[%s274 + $0x40] sm:$0xf]
      %v1347 = vld [vmem:[%s274 + $0x44] sm:$0xf]
      %v1348 = vld [vmem:[%s274 + $0x48] sm:$0xf]
      %v1349 = vld [vmem:[%s274 + $0x4c] sm:$0xf]
      %v1350 = vld [vmem:[%s274 + $0x50] sm:$0xf]
      %v1351 = vld [vmem:[%s274 + $0x54] sm:$0xf]
      %v1352 = vld [vmem:[%s274 + $0x58] sm:$0xf]
      %v1353 = vld [vmem:[%s274 + $0x5c] sm:$0xf]
      %v1354 = vld [vmem:[%s274 + $0x60] sm:$0xf]
      %v1355 = vld [vmem:[%s274 + $0x64] sm:$0xf]
      %v1356 = vld [vmem:[%s274 + $0x68] sm:$0xf]
      %v1357 = vld [vmem:[%s274 + $0x6c] sm:$0xf]
      %v1358 = vld [vmem:[%s274 + $0x70] sm:$0xf]
      %v1359 = vld [vmem:[%s274 + $0x74] sm:$0xf]
      %v1360 = vld [vmem:[%s274 + $0x78] sm:$0xf]
      %v1361 = vld [vmem:[%s274 + $0x7c] sm:$0xf]
      %v1362 = vld [vmem:[%s274 + $0x80] sm:$0xf]
      %v1363 = vld [vmem:[%s274 + $0x84] sm:$0xf]
      %v1364 = vld [vmem:[%s274 + $0x88] sm:$0xf]
      %v1365 = vld [vmem:[%s274 + $0x8c] sm:$0xf]
      %v1366 = vld [vmem:[%s274 + $0x90] sm:$0xf]
      %v1367 = vld [vmem:[%s274 + $0x94] sm:$0xf]
      %v1368 = vld [vmem:[%s274 + $0x98] sm:$0xf]
      %v1369 = vld [vmem:[%s274 + $0x9c] sm:$0xf]
      %v1370 = vld [vmem:[%s274 + $0xa0] sm:$0xf]
      %v1371 = vld [vmem:[%s274 + $0xa4] sm:$0xf]
      %v1372 = vld [vmem:[%s274 + $0xa8] sm:$0xf]
      %v1373 = vld [vmem:[%s274 + $0xac] sm:$0xf]
      %v1374 = vld [vmem:[%s274 + $0xb0] sm:$0xf]
      %v1375 = vld [vmem:[%s274 + $0xb4] sm:$0xf]
      %v1376 = vld [vmem:[%s274 + $0xb8] sm:$0xf]
      %v1377 = vld [vmem:[%s274 + $0xbc] sm:$0xf]
      %v1378 = vld [vmem:[%s274 + $0xc0] sm:$0xf]
      %v1379 = vld [vmem:[%s274 + $0xc4] sm:$0xf]
      %v1380 = vld [vmem:[%s274 + $0xc8] sm:$0xf]
      %v1381 = vld [vmem:[%s274 + $0xcc] sm:$0xf]
      %v1382 = vld [vmem:[%s274 + $0xd0] sm:$0xf]
      %v1383 = vld [vmem:[%s274 + $0xd4] sm:$0xf]
      %v1384 = vld [vmem:[%s274 + $0xd8] sm:$0xf]
      %v1385 = vld [vmem:[%s274 + $0xdc] sm:$0xf]
      %v1386 = vld [vmem:[%s274 + $0xe0] sm:$0xf]
      %v1387 = vld [vmem:[%s274 + $0xe4] sm:$0xf]
      %v1388 = vld [vmem:[%s274 + $0xe8] sm:$0xf]
      %v1389 = vld [vmem:[%s274 + $0xec] sm:$0xf]
      %v1390 = vld [vmem:[%s274 + $0xf0] sm:$0xf]
      %v1391 = vld [vmem:[%s274 + $0xf4] sm:$0xf]
      %v1392 = vld [vmem:[%s274 + $0xf8] sm:$0xf]
      %v1393 = vld [vmem:[%s274 + $0xfc] sm:$0xf]
      %v1394 = vld [vmem:[%s274 + $0x100] sm:$0xf]
      %v1395 = vld [vmem:[%s274 + $0x104] sm:$0xf]
      %v1396 = vld [vmem:[%s274 + $0x108] sm:$0xf]
      %v1397 = vld [vmem:[%s274 + $0x10c] sm:$0xf]
      %v1398 = vld [vmem:[%s274 + $0x110] sm:$0xf]
      %v1399 = vld [vmem:[%s274 + $0x114] sm:$0xf]
      %v1400 = vld [vmem:[%s274 + $0x118] sm:$0xf]
      %v1401 = vld [vmem:[%s274 + $0x11c] sm:$0xf]
      %v1402 = vld [vmem:[%s274 + $0x120] sm:$0xf]
      %v1403 = vld [vmem:[%s274 + $0x124] sm:$0xf]
      %v1404 = vld [vmem:[%s274 + $0x128] sm:$0xf]
      %v1405 = vld [vmem:[%s274 + $0x12c] sm:$0xf]
      %v1406 = vld [vmem:[%s274 + $0x130] sm:$0xf]
      %v1407 = vld [vmem:[%s274 + $0x134] sm:$0xf]
      %v1408 = vld [vmem:[%s274 + $0x138] sm:$0xf]
      %v1409 = vld [vmem:[%s274 + $0x13c] sm:$0xf]
      %v1410 = vld [vmem:[%s274 + $0x140] sm:$0xf]
      %v1411 = vld [vmem:[%s274 + $0x144] sm:$0xf]
      %v1412 = vld [vmem:[%s274 + $0x148] sm:$0xf]
      %v1413 = vld [vmem:[%s274 + $0x14c] sm:$0xf]
      %v1414 = vld [vmem:[%s274 + $0x150] sm:$0xf]
      %v1415 = vld [vmem:[%s274 + $0x154] sm:$0xf]
      %v1416 = vld [vmem:[%s274 + $0x158] sm:$0xf]
      %v1417 = vld [vmem:[%s274 + $0x15c] sm:$0xf]
      %v1418 = vld [vmem:[%s274 + $0x160] sm:$0xf]
      %v1419 = vld [vmem:[%s274 + $0x164] sm:$0xf]
      %v1420 = vld [vmem:[%s274 + $0x168] sm:$0xf]
      %v1421 = vld [vmem:[%s274 + $0x16c] sm:$0xf]
      %v1422 = vld [vmem:[%s274 + $0x170] sm:$0xf]
      %v1423 = vld [vmem:[%s274 + $0x174] sm:$0xf]
      %v1424 = vld [vmem:[%s274 + $0x178] sm:$0xf]
      %v1425 = vld [vmem:[%s274 + $0x17c] sm:$0xf]
      %v1426 = vld [vmem:[%s274 + $0x180] sm:$0xf]
      %v1427 = vld [vmem:[%s274 + $0x184] sm:$0xf]
      %v1428 = vld [vmem:[%s274 + $0x188] sm:$0xf]
      %v1429 = vld [vmem:[%s274 + $0x18c] sm:$0xf]
      %v1430 = vld [vmem:[%s274 + $0x190] sm:$0xf]
      %v1431 = vld [vmem:[%s274 + $0x194] sm:$0xf]
      %v1432 = vld [vmem:[%s274 + $0x198] sm:$0xf]
      %v1433 = vld [vmem:[%s274 + $0x19c] sm:$0xf]
      %v1434 = vld [vmem:[%s274 + $0x1a0] sm:$0xf]
      %v1435 = vld [vmem:[%s274 + $0x1a4] sm:$0xf]
      %v1436 = vld [vmem:[%s274 + $0x1a8] sm:$0xf]
      %v1437 = vld [vmem:[%s274 + $0x1ac] sm:$0xf]
      %v1438 = vld [vmem:[%s274 + $0x1b0] sm:$0xf]
      %v1439 = vld [vmem:[%s274 + $0x1b4] sm:$0xf]
      %v1440 = vld [vmem:[%s274 + $0x1b8] sm:$0xf]
      %v1441 = vld [vmem:[%s274 + $0x1bc] sm:$0xf]
      %v1442 = vld [vmem:[%s274 + $0x1c0] sm:$0xf]
      %v1443 = vld [vmem:[%s274 + $0x1c4] sm:$0xf]
      %v1444 = vld [vmem:[%s274 + $0x1c8] sm:$0xf]
      %v1445 = vld [vmem:[%s274 + $0x1cc] sm:$0xf]
      %v1446 = vld [vmem:[%s274 + $0x1d0] sm:$0xf]
      %v1447 = vld [vmem:[%s274 + $0x1d4] sm:$0xf]
      %v1448 = vld [vmem:[%s274 + $0x1d8] sm:$0xf]
      %v1449 = vld [vmem:[%s274 + $0x1dc] sm:$0xf]
      %v1450 = vld [vmem:[%s274 + $0x1e0] sm:$0xf]
      %v1451 = vld [vmem:[%s274 + $0x1e4] sm:$0xf]
      %v1452 = vld [vmem:[%s274 + $0x1e8] sm:$0xf]
      %v1453 = vld [vmem:[%s274 + $0x1ec] sm:$0xf]
      %v1454 = vld [vmem:[%s274 + $0x1f0] sm:$0xf]
      %v1455 = vld [vmem:[%s274 + $0x1f4] sm:$0xf]
      %v1456 = vld [vmem:[%s274 + $0x1f8] sm:$0xf]
      %v1457 = vld [vmem:[%s274 + $0x1fc] sm:$0xf]
      %v1458 = vld [vmem:[%s274 + $0x200] sm:$0xf]
      %v1459 = vld [vmem:[%s274 + $0x204] sm:$0xf]
      %v1460 = vld [vmem:[%s274 + $0x208] sm:$0xf]
      %v1461 = vld [vmem:[%s274 + $0x20c] sm:$0xf]
      %v1462 = vld [vmem:[%s274 + $0x210] sm:$0xf]
      %v1463 = vld [vmem:[%s274 + $0x214] sm:$0xf]
      %v1464 = vld [vmem:[%s274 + $0x218] sm:$0xf]
      %v1465 = vld [vmem:[%s274 + $0x21c] sm:$0xf]
      %v1466 = vld [vmem:[%s274 + $0x220] sm:$0xf]
      %v1467 = vld [vmem:[%s274 + $0x224] sm:$0xf]
      %v1468 = vld [vmem:[%s274 + $0x228] sm:$0xf]
      %v1469 = vld [vmem:[%s274 + $0x22c] sm:$0xf]
      %v1470 = vld [vmem:[%s274 + $0x230] sm:$0xf]
      %v1471 = vld [vmem:[%s274 + $0x234] sm:$0xf]
      %v1472 = vld [vmem:[%s274 + $0x238] sm:$0xf]
      %v1473 = vld [vmem:[%s274 + $0x23c] sm:$0xf]
      %v1474 = vld [vmem:[%s274 + $0x240] sm:$0xf]
      %v1475 = vld [vmem:[%s274 + $0x244] sm:$0xf]
      %v1476 = vld [vmem:[%s274 + $0x248] sm:$0xf]
      %v1477 = vld [vmem:[%s274 + $0x24c] sm:$0xf]
      %v1478 = vld [vmem:[%s274 + $0x250] sm:$0xf]
      %v1479 = vld [vmem:[%s274 + $0x254] sm:$0xf]
      %v1480 = vld [vmem:[%s274 + $0x258] sm:$0xf]
      %v1481 = vld [vmem:[%s274 + $0x25c] sm:$0xf]
      %v1482 = vld [vmem:[%s274 + $0x260] sm:$0xf]
      %v1483 = vld [vmem:[%s274 + $0x264] sm:$0xf]
      %v1484 = vld [vmem:[%s274 + $0x268] sm:$0xf]
      %v1485 = vld [vmem:[%s274 + $0x26c] sm:$0xf]
      %v1486 = vld [vmem:[%s274 + $0x270] sm:$0xf]
      %v1487 = vld [vmem:[%s274 + $0x274] sm:$0xf]
      %v1488 = vld [vmem:[%s274 + $0x278] sm:$0xf]
      %v1489 = vld [vmem:[%s274 + $0x27c] sm:$0xf]
      %v1490 = vld [vmem:[%s274 + $0x280] sm:$0xf]
      %v1491 = vld [vmem:[%s274 + $0x284] sm:$0xf]
      %v1492 = vld [vmem:[%s274 + $0x288] sm:$0xf]
      %v1493 = vld [vmem:[%s274 + $0x28c] sm:$0xf]
      %v1494 = vld [vmem:[%s274 + $0x290] sm:$0xf]
      %v1495 = vld [vmem:[%s274 + $0x294] sm:$0xf]
      %v1496 = vld [vmem:[%s274 + $0x298] sm:$0xf]
      %v1497 = vld [vmem:[%s274 + $0x29c] sm:$0xf]
      %v1498 = vld [vmem:[%s274 + $0x2a0] sm:$0xf]
      %v1499 = vld [vmem:[%s274 + $0x2a4] sm:$0xf]
      %v1500 = vld [vmem:[%s274 + $0x2a8] sm:$0xf]
      %v1501 = vld [vmem:[%s274 + $0x2ac] sm:$0xf]
      %v1502 = vld [vmem:[%s274 + $0x2b0] sm:$0xf]
      %v1503 = vld [vmem:[%s274 + $0x2b4] sm:$0xf]
      %v1504 = vld [vmem:[%s274 + $0x2b8] sm:$0xf]
      %v1505 = vld [vmem:[%s274 + $0x2bc] sm:$0xf]
      %v1506 = vld [vmem:[%s274 + $0x2c0] sm:$0xf]
      %v1507 = vld [vmem:[%s274 + $0x2c4] sm:$0xf]
      %v1508 = vld [vmem:[%s274 + $0x2c8] sm:$0xf]
      %v1509 = vld [vmem:[%s274 + $0x2cc] sm:$0xf]
      %v1510 = vld [vmem:[%s274 + $0x2d0] sm:$0xf]
      %v1511 = vld [vmem:[%s274 + $0x2d4] sm:$0xf]
      %v1512 = vld [vmem:[%s274 + $0x2d8] sm:$0xf]
      %v1513 = vld [vmem:[%s274 + $0x2dc] sm:$0xf]
      %v1514 = vld [vmem:[%s274 + $0x2e0] sm:$0xf]
      %v1515 = vld [vmem:[%s274 + $0x2e4] sm:$0xf]
      %v1516 = vld [vmem:[%s274 + $0x2e8] sm:$0xf]
      %v1517 = vld [vmem:[%s274 + $0x2ec] sm:$0xf]
      %v1518 = vld [vmem:[%s274 + $0x2f0] sm:$0xf]
      %v1519 = vld [vmem:[%s274 + $0x2f4] sm:$0xf]
      %v1520 = vld [vmem:[%s274 + $0x2f8] sm:$0xf]
      %v1521 = vld [vmem:[%s274 + $0x2fc] sm:$0xf]
      %v1522 = vld [vmem:[%s274 + $0x300] sm:$0xf]
      %v1523 = vld [vmem:[%s274 + $0x304] sm:$0xf]
      %v1524 = vld [vmem:[%s274 + $0x308] sm:$0xf]
      %v1525 = vld [vmem:[%s274 + $0x30c] sm:$0xf]
      %v1526 = vld [vmem:[%s274 + $0x310] sm:$0xf]
      %v1527 = vld [vmem:[%s274 + $0x314] sm:$0xf]
      %v1528 = vld [vmem:[%s274 + $0x318] sm:$0xf]
      %v1529 = vld [vmem:[%s274 + $0x31c] sm:$0xf]
      %v1530 = vld [vmem:[%s274 + $0x320] sm:$0xf]
      %v1531 = vld [vmem:[%s274 + $0x324] sm:$0xf]
      %v1532 = vld [vmem:[%s274 + $0x328] sm:$0xf]
      %v1533 = vld [vmem:[%s274 + $0x32c] sm:$0xf]
      %v1534 = vld [vmem:[%s274 + $0x330] sm:$0xf]
      %v1535 = vld [vmem:[%s274 + $0x334] sm:$0xf]
      %v1536 = vld [vmem:[%s274 + $0x338] sm:$0xf]
      %v1537 = vld [vmem:[%s274 + $0x33c] sm:$0xf]
      %v1538 = vld [vmem:[%s274 + $0x340] sm:$0xf]
      %v1539 = vld [vmem:[%s274 + $0x344] sm:$0xf]
      %v1540 = vld [vmem:[%s274 + $0x348] sm:$0xf]
      %v1541 = vld [vmem:[%s274 + $0x34c] sm:$0xf]
      %v1542 = vld [vmem:[%s274 + $0x350] sm:$0xf]
      %v1543 = vld [vmem:[%s274 + $0x354] sm:$0xf]
      %v1544 = vld [vmem:[%s274 + $0x358] sm:$0xf]
      %v1545 = vld [vmem:[%s274 + $0x35c] sm:$0xf]
      %v1546 = vld [vmem:[%s274 + $0x360] sm:$0xf]
      %v1547 = vld [vmem:[%s274 + $0x364] sm:$0xf]
      %v1548 = vld [vmem:[%s274 + $0x368] sm:$0xf]
      %v1549 = vld [vmem:[%s274 + $0x36c] sm:$0xf]
      %v1550 = vld [vmem:[%s274 + $0x370] sm:$0xf]
      %v1551 = vld [vmem:[%s274 + $0x374] sm:$0xf]
      %v1552 = vld [vmem:[%s274 + $0x378] sm:$0xf]
      %v1553 = vld [vmem:[%s274 + $0x37c] sm:$0xf]
      %v1554 = vld [vmem:[%s274 + $0x380] sm:$0xf]
      %v1555 = vld [vmem:[%s274 + $0x384] sm:$0xf]
      %v1556 = vld [vmem:[%s274 + $0x388] sm:$0xf]
      %v1557 = vld [vmem:[%s274 + $0x38c] sm:$0xf]
      %v1558 = vld [vmem:[%s274 + $0x390] sm:$0xf]
      %v1559 = vld [vmem:[%s274 + $0x394] sm:$0xf]
      %v1560 = vld [vmem:[%s274 + $0x398] sm:$0xf]
      %v1561 = vld [vmem:[%s274 + $0x39c] sm:$0xf]
      %v1562 = vld [vmem:[%s274 + $0x3a0] sm:$0xf]
      %v1563 = vld [vmem:[%s274 + $0x3a4] sm:$0xf]
      %v1564 = vld [vmem:[%s274 + $0x3a8] sm:$0xf]
      %v1565 = vld [vmem:[%s274 + $0x3ac] sm:$0xf]
      %v1566 = vld [vmem:[%s274 + $0x3b0] sm:$0xf]
      %v1567 = vld [vmem:[%s274 + $0x3b4] sm:$0xf]
      %v1568 = vld [vmem:[%s274 + $0x3b8] sm:$0xf]
      %v1569 = vld [vmem:[%s274 + $0x3bc] sm:$0xf]
      %v1570 = vld [vmem:[%s274 + $0x3c0] sm:$0xf]
      %v1571 = vld [vmem:[%s274 + $0x3c4] sm:$0xf]
      %v1572 = vld [vmem:[%s274 + $0x3c8] sm:$0xf]
      %v1573 = vld [vmem:[%s274 + $0x3cc] sm:$0xf]
      %v1574 = vld [vmem:[%s274 + $0x3d0] sm:$0xf]
      %v1575 = vld [vmem:[%s274 + $0x3d4] sm:$0xf]
      %v1576 = vld [vmem:[%s274 + $0x3d8] sm:$0xf]
      %v1577 = vld [vmem:[%s274 + $0x3dc] sm:$0xf]
      %v1578 = vld [vmem:[%s274 + $0x3e0] sm:$0xf]
      %v1579 = vld [vmem:[%s274 + $0x3e4] sm:$0xf]
      %v1580 = vld [vmem:[%s274 + $0x3e8] sm:$0xf]
      %v1581 = vld [vmem:[%s274 + $0x3ec] sm:$0xf]
      %v1582 = vld [vmem:[%s274 + $0x3f0] sm:$0xf]
      %v1583 = vld [vmem:[%s274 + $0x3f4] sm:$0xf]
      %v1584 = vld [vmem:[%s274 + $0x3f8] sm:$0xf]
      %v1585 = vld [vmem:[%s274 + $0x3fc] sm:$0xf]
      %v1586 = vld [vmem:[%s274 + $0x400] sm:$0xf]
      %v1587 = vld [vmem:[%s274 + $0x404] sm:$0xf]
      %v1588 = vld [vmem:[%s274 + $0x408] sm:$0xf]
      %v1589 = vld [vmem:[%s274 + $0x40c] sm:$0xf]
      %v1590 = vld [vmem:[%s274 + $0x410] sm:$0xf]
      %v1591 = vld [vmem:[%s274 + $0x414] sm:$0xf]
      %v1592 = vld [vmem:[%s274 + $0x418] sm:$0xf]
      %v1593 = vld [vmem:[%s274 + $0x41c] sm:$0xf]
      %v1594 = vld [vmem:[%s274 + $0x420] sm:$0xf]
      %v1595 = vld [vmem:[%s274 + $0x424] sm:$0xf]
      %v1596 = vld [vmem:[%s274 + $0x428] sm:$0xf]
      %v1597 = vld [vmem:[%s274 + $0x42c] sm:$0xf]
      %v1598 = vld [vmem:[%s274 + $0x430] sm:$0xf]
      %v1599 = vld [vmem:[%s274 + $0x434] sm:$0xf]
      %v1600 = vld [vmem:[%s274 + $0x438] sm:$0xf]
      %v1601 = vld [vmem:[%s274 + $0x43c] sm:$0xf]
      %v1602 = vld [vmem:[%s274 + $0x440] sm:$0xf]
      %v1603 = vld [vmem:[%s274 + $0x444] sm:$0xf]
      %v1604 = vld [vmem:[%s274 + $0x448] sm:$0xf]
      %v1605 = vld [vmem:[%s274 + $0x44c] sm:$0xf]
      %v1606 = vld [vmem:[%s274 + $0x450] sm:$0xf]
      %v1607 = vld [vmem:[%s274 + $0x454] sm:$0xf]
      %v1608 = vld [vmem:[%s274 + $0x458] sm:$0xf]
      %v1609 = vld [vmem:[%s274 + $0x45c] sm:$0xf]
      %v1610 = vld [vmem:[%s274 + $0x460] sm:$0xf]
      %v1611 = vld [vmem:[%s274 + $0x464] sm:$0xf]
      %v1612 = vld [vmem:[%s274 + $0x468] sm:$0xf]
      %v1613 = vld [vmem:[%s274 + $0x46c] sm:$0xf]
      %v1614 = vld [vmem:[%s274 + $0x470] sm:$0xf]
      %v1615 = vld [vmem:[%s274 + $0x474] sm:$0xf]
      %v1616 = vld [vmem:[%s274 + $0x478] sm:$0xf]
      %v1617 = vld [vmem:[%s274 + $0x47c] sm:$0xf]
      %v1618 = vld [vmem:[%s274 + $0x480] sm:$0xf]
      %v1619 = vld [vmem:[%s274 + $0x484] sm:$0xf]
      %v1620 = vld [vmem:[%s274 + $0x488] sm:$0xf]
      %v1621 = vld [vmem:[%s274 + $0x48c] sm:$0xf]
      %v1622 = vld [vmem:[%s274 + $0x490] sm:$0xf]
      %v1623 = vld [vmem:[%s274 + $0x494] sm:$0xf]
      %v1624 = vld [vmem:[%s274 + $0x498] sm:$0xf]
      %v1625 = vld [vmem:[%s274 + $0x49c] sm:$0xf]
      %v1626 = vld [vmem:[%s274 + $0x4a0] sm:$0xf]
      %v1627 = vld [vmem:[%s274 + $0x4a4] sm:$0xf]
      %v1628 = vld [vmem:[%s274 + $0x4a8] sm:$0xf]
      %v1629 = vld [vmem:[%s274 + $0x4ac] sm:$0xf]
      %v1630 = vld [vmem:[%s274 + $0x4b0] sm:$0xf]
      %v1631 = vld [vmem:[%s274 + $0x4b4] sm:$0xf]
      %v1632 = vld [vmem:[%s274 + $0x4b8] sm:$0xf]
      %v1633 = vld [vmem:[%s274 + $0x4bc] sm:$0xf]
      %v1634 = vld [vmem:[%s274 + $0x4c0] sm:$0xf]
      %v1635 = vld [vmem:[%s274 + $0x4c4] sm:$0xf]
      %v1636 = vld [vmem:[%s274 + $0x4c8] sm:$0xf]
      %v1637 = vld [vmem:[%s274 + $0x4cc] sm:$0xf]
      %v1638 = vld [vmem:[%s274 + $0x4d0] sm:$0xf]
      %v1639 = vld [vmem:[%s274 + $0x4d4] sm:$0xf]
      %v1640 = vld [vmem:[%s274 + $0x4d8] sm:$0xf]
      %v1641 = vld [vmem:[%s274 + $0x4dc] sm:$0xf]
      %v1642 = vld [vmem:[%s274 + $0x4e0] sm:$0xf]
      %v1643 = vld [vmem:[%s274 + $0x4e4] sm:$0xf]
      %v1644 = vld [vmem:[%s274 + $0x4e8] sm:$0xf]
      %v1645 = vld [vmem:[%s274 + $0x4ec] sm:$0xf]
      %v1646 = vld [vmem:[%s274 + $0x4f0] sm:$0xf]
      %v1647 = vld [vmem:[%s274 + $0x4f4] sm:$0xf]
      %v1648 = vld [vmem:[%s274 + $0x4f8] sm:$0xf]
      %v1649 = vld [vmem:[%s274 + $0x4fc] sm:$0xf]
      %v1650 = vld [vmem:[%s274 + $0x500] sm:$0xf]
      %v1651 = vld [vmem:[%s274 + $0x504] sm:$0xf]
      %v1652 = vld [vmem:[%s274 + $0x508] sm:$0xf]
      %v1653 = vld [vmem:[%s274 + $0x50c] sm:$0xf]
      %v1654 = vld [vmem:[%s274 + $0x510] sm:$0xf]
      %v1655 = vld [vmem:[%s274 + $0x514] sm:$0xf]
      %v1656 = vld [vmem:[%s274 + $0x518] sm:$0xf]
      %v1657 = vld [vmem:[%s274 + $0x51c] sm:$0xf]
      %v1658 = vld [vmem:[%s274 + $0x520] sm:$0xf]
      %v1659 = vld [vmem:[%s274 + $0x524] sm:$0xf]
      %v1660 = vld [vmem:[%s274 + $0x528] sm:$0xf]
      %v1661 = vld [vmem:[%s274 + $0x52c] sm:$0xf]
      %v1662 = vld [vmem:[%s274 + $0x530] sm:$0xf]
      %v1663 = vld [vmem:[%s274 + $0x534] sm:$0xf]
      %v1664 = vld [vmem:[%s274 + $0x538] sm:$0xf]
      %v1665 = vld [vmem:[%s274 + $0x53c] sm:$0xf]
      %v1666 = vld [vmem:[%s274 + $0x540] sm:$0xf]
      %v1667 = vld [vmem:[%s274 + $0x544] sm:$0xf]
      %v1668 = vld [vmem:[%s274 + $0x548] sm:$0xf]
      %v1669 = vld [vmem:[%s274 + $0x54c] sm:$0xf]
      %v1670 = vld [vmem:[%s274 + $0x550] sm:$0xf]
      %v1671 = vld [vmem:[%s274 + $0x554] sm:$0xf]
      %v1672 = vld [vmem:[%s274 + $0x558] sm:$0xf]
      %v1673 = vld [vmem:[%s274 + $0x55c] sm:$0xf]
      %v1674 = vld [vmem:[%s274 + $0x560] sm:$0xf]
      %v1675 = vld [vmem:[%s274 + $0x564] sm:$0xf]
      %v1676 = vld [vmem:[%s274 + $0x568] sm:$0xf]
      %v1677 = vld [vmem:[%s274 + $0x56c] sm:$0xf]
      %v1678 = vld [vmem:[%s274 + $0x570] sm:$0xf]
      %v1679 = vld [vmem:[%s274 + $0x574] sm:$0xf]
      %v1680 = vld [vmem:[%s274 + $0x578] sm:$0xf]
      %v1681 = vld [vmem:[%s274 + $0x57c] sm:$0xf]
      %v1682 = vld [vmem:[%s274 + $0x580] sm:$0xf]
      %v1683 = vld [vmem:[%s274 + $0x584] sm:$0xf]
      %v1684 = vld [vmem:[%s274 + $0x588] sm:$0xf]
      %v1685 = vld [vmem:[%s274 + $0x58c] sm:$0xf]
      %v1686 = vld [vmem:[%s274 + $0x590] sm:$0xf]
      %v1687 = vld [vmem:[%s274 + $0x594] sm:$0xf]
      %v1688 = vld [vmem:[%s274 + $0x598] sm:$0xf]
      %v1689 = vld [vmem:[%s274 + $0x59c] sm:$0xf]
      %v1690 = vld [vmem:[%s274 + $0x5a0] sm:$0xf]
      %v1691 = vld [vmem:[%s274 + $0x5a4] sm:$0xf]
      %v1692 = vld [vmem:[%s274 + $0x5a8] sm:$0xf]
      %v1693 = vld [vmem:[%s274 + $0x5ac] sm:$0xf]
      %v1694 = vld [vmem:[%s274 + $0x5b0] sm:$0xf]
      %v1695 = vld [vmem:[%s274 + $0x5b4] sm:$0xf]
      %v1696 = vld [vmem:[%s274 + $0x5b8] sm:$0xf]
      %v1697 = vld [vmem:[%s274 + $0x5bc] sm:$0xf]
      %v1698 = vld [vmem:[%s274 + $0x5c0] sm:$0xf]
      %v1699 = vld [vmem:[%s274 + $0x5c4] sm:$0xf]
      %v1700 = vld [vmem:[%s274 + $0x5c8] sm:$0xf]
      %v1701 = vld [vmem:[%s274 + $0x5cc] sm:$0xf]
      %v1702 = vld [vmem:[%s274 + $0x5d0] sm:$0xf]
      %v1703 = vld [vmem:[%s274 + $0x5d4] sm:$0xf]
      %v1704 = vld [vmem:[%s274 + $0x5d8] sm:$0xf]
      %v1705 = vld [vmem:[%s274 + $0x5dc] sm:$0xf]
      %v1706 = vld [vmem:[%s274 + $0x5e0] sm:$0xf]
      %v1707 = vld [vmem:[%s274 + $0x5e4] sm:$0xf]
      %v1708 = vld [vmem:[%s274 + $0x5e8] sm:$0xf]
      %v1709 = vld [vmem:[%s274 + $0x5ec] sm:$0xf]
      %v1710 = vld [vmem:[%s274 + $0x5f0] sm:$0xf]
      %v1711 = vld [vmem:[%s274 + $0x5f4] sm:$0xf]
      %v1712 = vld [vmem:[%s274 + $0x5f8] sm:$0xf]
      %v1713 = vld [vmem:[%s274 + $0x5fc] sm:$0xf]
      %v1714 = vld [vmem:[%s274 + $0x600] sm:$0xf]
      %v1715 = vld [vmem:[%s274 + $0x604] sm:$0xf]
      %v1716 = vld [vmem:[%s274 + $0x608] sm:$0xf]
      %v1717 = vld [vmem:[%s274 + $0x60c] sm:$0xf]
      %v1718 = vld [vmem:[%s274 + $0x610] sm:$0xf]
      %v1719 = vld [vmem:[%s274 + $0x614] sm:$0xf]
      %v1720 = vld [vmem:[%s274 + $0x618] sm:$0xf]
      %v1721 = vld [vmem:[%s274 + $0x61c] sm:$0xf]
      %v1722 = vld [vmem:[%s274 + $0x620] sm:$0xf]
      %v1723 = vld [vmem:[%s274 + $0x624] sm:$0xf]
      %v1724 = vld [vmem:[%s274 + $0x628] sm:$0xf]
      %v1725 = vld [vmem:[%s274 + $0x62c] sm:$0xf]
      %v1726 = vld [vmem:[%s274 + $0x630] sm:$0xf]
      %v1727 = vld [vmem:[%s274 + $0x634] sm:$0xf]
      %v1728 = vld [vmem:[%s274 + $0x638] sm:$0xf]
      %v1729 = vld [vmem:[%s274 + $0x63c] sm:$0xf]
      %v1730 = vld [vmem:[%s274 + $0x640] sm:$0xf]
      %v1731 = vld [vmem:[%s274 + $0x644] sm:$0xf]
      %v1732 = vld [vmem:[%s274 + $0x648] sm:$0xf]
      %v1733 = vld [vmem:[%s274 + $0x64c] sm:$0xf]
      %v1734 = vld [vmem:[%s274 + $0x650] sm:$0xf]
      %v1735 = vld [vmem:[%s274 + $0x654] sm:$0xf]
      %v1736 = vld [vmem:[%s274 + $0x658] sm:$0xf]
      %v1737 = vld [vmem:[%s274 + $0x65c] sm:$0xf]
      %v1738 = vld [vmem:[%s274 + $0x660] sm:$0xf]
      %v1739 = vld [vmem:[%s274 + $0x664] sm:$0xf]
      %v1740 = vld [vmem:[%s274 + $0x668] sm:$0xf]
      %v1741 = vld [vmem:[%s274 + $0x66c] sm:$0xf]
      %v1742 = vld [vmem:[%s274 + $0x670] sm:$0xf]
      %v1743 = vld [vmem:[%s274 + $0x674] sm:$0xf]
      %v1744 = vld [vmem:[%s274 + $0x678] sm:$0xf]
      %v1745 = vld [vmem:[%s274 + $0x67c] sm:$0xf]
      %v1746 = vld [vmem:[%s274 + $0x680] sm:$0xf]
      %v1747 = vld [vmem:[%s274 + $0x684] sm:$0xf]
      %v1748 = vld [vmem:[%s274 + $0x688] sm:$0xf]
      %v1749 = vld [vmem:[%s274 + $0x68c] sm:$0xf]
      %v1750 = vld [vmem:[%s274 + $0x690] sm:$0xf]
      %v1751 = vld [vmem:[%s274 + $0x694] sm:$0xf]
      %v1752 = vld [vmem:[%s274 + $0x698] sm:$0xf]
      %v1753 = vld [vmem:[%s274 + $0x69c] sm:$0xf]
      %v1754 = vld [vmem:[%s274 + $0x6a0] sm:$0xf]
      %v1755 = vld [vmem:[%s274 + $0x6a4] sm:$0xf]
      %v1756 = vld [vmem:[%s274 + $0x6a8] sm:$0xf]
      %v1757 = vld [vmem:[%s274 + $0x6ac] sm:$0xf]
      %v1758 = vld [vmem:[%s274 + $0x6b0] sm:$0xf]
      %v1759 = vld [vmem:[%s274 + $0x6b4] sm:$0xf]
      %v1760 = vld [vmem:[%s274 + $0x6b8] sm:$0xf]
      %v1761 = vld [vmem:[%s274 + $0x6bc] sm:$0xf]
      %v1762 = vld [vmem:[%s274 + $0x6c0] sm:$0xf]
      %v1763 = vld [vmem:[%s274 + $0x6c4] sm:$0xf]
      %v1764 = vld [vmem:[%s274 + $0x6c8] sm:$0xf]
      %v1765 = vld [vmem:[%s274 + $0x6cc] sm:$0xf]
      %v1766 = vld [vmem:[%s274 + $0x6d0] sm:$0xf]
      %v1767 = vld [vmem:[%s274 + $0x6d4] sm:$0xf]
      %v1768 = vld [vmem:[%s274 + $0x6d8] sm:$0xf]
      %v1769 = vld [vmem:[%s274 + $0x6dc] sm:$0xf]
      %v1770 = vld [vmem:[%s274 + $0x6e0] sm:$0xf]
      %v1771 = vld [vmem:[%s274 + $0x6e4] sm:$0xf]
      %v1772 = vld [vmem:[%s274 + $0x6e8] sm:$0xf]
      %v1773 = vld [vmem:[%s274 + $0x6ec] sm:$0xf]
      %v1774 = vld [vmem:[%s274 + $0x6f0] sm:$0xf]
      %v1775 = vld [vmem:[%s274 + $0x6f4] sm:$0xf]
      %v1776 = vld [vmem:[%s274 + $0x6f8] sm:$0xf]
      %v1777 = vld [vmem:[%s274 + $0x6fc] sm:$0xf]
      %v1778 = vld [vmem:[%s274 + $0x700] sm:$0xf]
      %v1779 = vld [vmem:[%s274 + $0x704] sm:$0xf]
      %v1780 = vld [vmem:[%s274 + $0x708] sm:$0xf]
      %v1781 = vld [vmem:[%s274 + $0x70c] sm:$0xf]
      %v1782 = vld [vmem:[%s274 + $0x710] sm:$0xf]
      %v1783 = vld [vmem:[%s274 + $0x714] sm:$0xf]
      %v1784 = vld [vmem:[%s274 + $0x718] sm:$0xf]
      %v1785 = vld [vmem:[%s274 + $0x71c] sm:$0xf]
      %v1786 = vld [vmem:[%s274 + $0x720] sm:$0xf]
      %v1787 = vld [vmem:[%s274 + $0x724] sm:$0xf]
      %v1788 = vld [vmem:[%s274 + $0x728] sm:$0xf]
      %v1789 = vld [vmem:[%s274 + $0x72c] sm:$0xf]
      %v1790 = vld [vmem:[%s274 + $0x730] sm:$0xf]
      %v1791 = vld [vmem:[%s274 + $0x734] sm:$0xf]
      %v1792 = vld [vmem:[%s274 + $0x738] sm:$0xf]
      %v1793 = vld [vmem:[%s274 + $0x73c] sm:$0xf]
      %v1794 = vld [vmem:[%s274 + $0x740] sm:$0xf]
      %v1795 = vld [vmem:[%s274 + $0x744] sm:$0xf]
      %v1796 = vld [vmem:[%s274 + $0x748] sm:$0xf]
      %v1797 = vld [vmem:[%s274 + $0x74c] sm:$0xf]
      %v1798 = vld [vmem:[%s274 + $0x750] sm:$0xf]
      %v1799 = vld [vmem:[%s274 + $0x754] sm:$0xf]
      %v1800 = vld [vmem:[%s274 + $0x758] sm:$0xf]
      %v1801 = vld [vmem:[%s274 + $0x75c] sm:$0xf]
      %v1802 = vld [vmem:[%s274 + $0x760] sm:$0xf]
      %v1803 = vld [vmem:[%s274 + $0x764] sm:$0xf]
      %v1804 = vld [vmem:[%s274 + $0x768] sm:$0xf]
      %v1805 = vld [vmem:[%s274 + $0x76c] sm:$0xf]
      %v1806 = vld [vmem:[%s274 + $0x770] sm:$0xf]
      %v1807 = vld [vmem:[%s274 + $0x774] sm:$0xf]
      %v1808 = vld [vmem:[%s274 + $0x778] sm:$0xf]
      %v1809 = vld [vmem:[%s274 + $0x77c] sm:$0xf]
      %v1810 = vld [vmem:[%s274 + $0x780] sm:$0xf]
      %v1811 = vld [vmem:[%s274 + $0x784] sm:$0xf]
      %v1812 = vld [vmem:[%s274 + $0x788] sm:$0xf]
      %v1813 = vld [vmem:[%s274 + $0x78c] sm:$0xf]
      %v1814 = vld [vmem:[%s274 + $0x790] sm:$0xf]
      %v1815 = vld [vmem:[%s274 + $0x794] sm:$0xf]
      %v1816 = vld [vmem:[%s274 + $0x798] sm:$0xf]
      %v1817 = vld [vmem:[%s274 + $0x79c] sm:$0xf]
      %v1818 = vld [vmem:[%s274 + $0x7a0] sm:$0xf]
      %v1819 = vld [vmem:[%s274 + $0x7a4] sm:$0xf]
      %v1820 = vld [vmem:[%s274 + $0x7a8] sm:$0xf]
      %v1821 = vld [vmem:[%s274 + $0x7ac] sm:$0xf]
      %v1822 = vld [vmem:[%s274 + $0x7b0] sm:$0xf]
      %v1823 = vld [vmem:[%s274 + $0x7b4] sm:$0xf]
      %v1824 = vld [vmem:[%s274 + $0x7b8] sm:$0xf]
      %v1825 = vld [vmem:[%s274 + $0x7bc] sm:$0xf]
      %v1826 = vld [vmem:[%s274 + $0x7c0] sm:$0xf]
      %v1827 = vld [vmem:[%s274 + $0x7c4] sm:$0xf]
      %v1828 = vld [vmem:[%s274 + $0x7c8] sm:$0xf]
      %v1829 = vld [vmem:[%s274 + $0x7cc] sm:$0xf]
      %v1830 = vld [vmem:[%s274 + $0x7d0] sm:$0xf]
      %v1831 = vld [vmem:[%s274 + $0x7d4] sm:$0xf]
      %v1832 = vld [vmem:[%s274 + $0x7d8] sm:$0xf]
      %v1833 = vld [vmem:[%s274 + $0x7dc] sm:$0xf]
      %v1834 = vld [vmem:[%s274 + $0x7e0] sm:$0xf]
      %v1835 = vld [vmem:[%s274 + $0x7e4] sm:$0xf]
      %v1836 = vld [vmem:[%s274 + $0x7e8] sm:$0xf]
      %v1837 = vld [vmem:[%s274 + $0x7ec] sm:$0xf]
      %v1838 = vld [vmem:[%s274 + $0x7f0] sm:$0xf]
      %v1839 = vld [vmem:[%s274 + $0x7f4] sm:$0xf]
      %v1840 = vld [vmem:[%s274 + $0x7f8] sm:$0xf]
      %v1841 = vld [vmem:[%s274 + $0x7fc] sm:$0xf]
      %v1842 = vld [vmem:[%s283] sm:$0x3]
      %v1843 = vld [vmem:[%s283 + $0x2] sm:$0x1]
      %v1844 = vunpack.c.0.s8 %v1842
      %v1845 = vunpack.c.0.s8 %v1843
      %v1846 = vcvt.s32.f32 %v1844
      %v1847 = vcvt.s32.f32 %v1845
      %v1848 = vpack.c.bf16 %v1847, %v1846
      %v2361 = vunpack.c.l.b16 %v1330
      %v2362 = vunpack.c.l.b16 %v1331
      %v2363 = vunpack.c.l.b16 %v1332
      %v2364 = vunpack.c.l.b16 %v1333
      %v2365 = vunpack.c.l.b16 %v1334
      %v2366 = vunpack.c.l.b16 %v1335
      %v2367 = vunpack.c.l.b16 %v1336
      %v2368 = vunpack.c.l.b16 %v1337
      %v2369 = vunpack.c.l.b16 %v1338
      %v2370 = vunpack.c.l.b16 %v1339
      %v2371 = vunpack.c.l.b16 %v1340
      %v2372 = vunpack.c.l.b16 %v1341
      %v2373 = vunpack.c.l.b16 %v1342
      %v2374 = vunpack.c.l.b16 %v1343
      %v2375 = vunpack.c.l.b16 %v1344
      %v2376 = vunpack.c.l.b16 %v1345
      %v2377 = vunpack.c.l.b16 %v1346
      %v2378 = vunpack.c.l.b16 %v1347
      %v2379 = vunpack.c.l.b16 %v1348
      %v2380 = vunpack.c.l.b16 %v1349
      %v2381 = vunpack.c.l.b16 %v1350
      %v2382 = vunpack.c.l.b16 %v1351
      %v2383 = vunpack.c.l.b16 %v1352
      %v2384 = vunpack.c.l.b16 %v1353
      %v2385 = vunpack.c.l.b16 %v1354
      %v2386 = vunpack.c.l.b16 %v1355
      %v2387 = vunpack.c.l.b16 %v1356
      %v2388 = vunpack.c.l.b16 %v1357
      %v2389 = vunpack.c.l.b16 %v1358
      %v2390 = vunpack.c.l.b16 %v1359
      %v2391 = vunpack.c.l.b16 %v1360
      %v2392 = vunpack.c.l.b16 %v1361
      %v2393 = vunpack.c.l.b16 %v1362
      %v2394 = vunpack.c.l.b16 %v1363
      %v2395 = vunpack.c.l.b16 %v1364
      %v2396 = vunpack.c.l.b16 %v1365
      %v2397 = vunpack.c.l.b16 %v1366
      %v2398 = vunpack.c.l.b16 %v1367
      %v2399 = vunpack.c.l.b16 %v1368
      %v2400 = vunpack.c.l.b16 %v1369
      %v2401 = vunpack.c.l.b16 %v1370
      %v2402 = vunpack.c.l.b16 %v1371
      %v2403 = vunpack.c.l.b16 %v1372
      %v2404 = vunpack.c.l.b16 %v1373
      %v2405 = vunpack.c.l.b16 %v1374
      %v2406 = vunpack.c.l.b16 %v1375
      %v2407 = vunpack.c.l.b16 %v1376
      %v2408 = vunpack.c.l.b16 %v1377
      %v2409 = vunpack.c.l.b16 %v1378
      %v2410 = vunpack.c.l.b16 %v1379
      %v2411 = vunpack.c.l.b16 %v1380
      %v2412 = vunpack.c.l.b16 %v1381
      %v2413 = vunpack.c.l.b16 %v1382
      %v2414 = vunpack.c.l.b16 %v1383
      %v2415 = vunpack.c.l.b16 %v1384
      %v2416 = vunpack.c.l.b16 %v1385
      %v2417 = vunpack.c.l.b16 %v1386
      %v2418 = vunpack.c.l.b16 %v1387
      %v2419 = vunpack.c.l.b16 %v1388
      %v2420 = vunpack.c.l.b16 %v1389
      %v2421 = vunpack.c.l.b16 %v1390
      %v2422 = vunpack.c.l.b16 %v1391
      %v2423 = vunpack.c.l.b16 %v1392
      %v2424 = vunpack.c.l.b16 %v1393
      %v2425 = vunpack.c.l.b16 %v1394
      %v2426 = vunpack.c.l.b16 %v1395
      %v2427 = vunpack.c.l.b16 %v1396
      %v2428 = vunpack.c.l.b16 %v1397
      %v2429 = vunpack.c.l.b16 %v1398
      %v2430 = vunpack.c.l.b16 %v1399
      %v2431 = vunpack.c.l.b16 %v1400
      %v2432 = vunpack.c.l.b16 %v1401
      %v2433 = vunpack.c.l.b16 %v1402
      %v2434 = vunpack.c.l.b16 %v1403
      %v2435 = vunpack.c.l.b16 %v1404
      %v2436 = vunpack.c.l.b16 %v1405
      %v2437 = vunpack.c.l.b16 %v1406
      %v2438 = vunpack.c.l.b16 %v1407
      %v2439 = vunpack.c.l.b16 %v1408
      %v2440 = vunpack.c.l.b16 %v1409
      %v2441 = vunpack.c.l.b16 %v1410
      %v2442 = vunpack.c.l.b16 %v1411
      %v2443 = vunpack.c.l.b16 %v1412
      %v2444 = vunpack.c.l.b16 %v1413
      %v2445 = vunpack.c.l.b16 %v1414
      %v2446 = vunpack.c.l.b16 %v1415
      %v2447 = vunpack.c.l.b16 %v1416
      %v2448 = vunpack.c.l.b16 %v1417
      %v2449 = vunpack.c.l.b16 %v1418
      %v2450 = vunpack.c.l.b16 %v1419
      %v2451 = vunpack.c.l.b16 %v1420
      %v2452 = vunpack.c.l.b16 %v1421
      %v2453 = vunpack.c.l.b16 %v1422
      %v2454 = vunpack.c.l.b16 %v1423
      %v2455 = vunpack.c.l.b16 %v1424
      %v2456 = vunpack.c.l.b16 %v1425
      %v2457 = vunpack.c.l.b16 %v1426
      %v2458 = vunpack.c.l.b16 %v1427
      %v2459 = vunpack.c.l.b16 %v1428
      %v2460 = vunpack.c.l.b16 %v1429
      %v2461 = vunpack.c.l.b16 %v1430
      %v2462 = vunpack.c.l.b16 %v1431
      %v2463 = vunpack.c.l.b16 %v1432
      %v2464 = vunpack.c.l.b16 %v1433
      %v2465 = vunpack.c.l.b16 %v1434
      %v2466 = vunpack.c.l.b16 %v1435
      %v2467 = vunpack.c.l.b16 %v1436
      %v2468 = vunpack.c.l.b16 %v1437
      %v2469 = vunpack.c.l.b16 %v1438
      %v2470 = vunpack.c.l.b16 %v1439
      %v2471 = vunpack.c.l.b16 %v1440
      %v2472 = vunpack.c.l.b16 %v1441
      %v2473 = vunpack.c.l.b16 %v1442
      %v2474 = vunpack.c.l.b16 %v1443
      %v2475 = vunpack.c.l.b16 %v1444
      %v2476 = vunpack.c.l.b16 %v1445
      %v2477 = vunpack.c.l.b16 %v1446
      %v2478 = vunpack.c.l.b16 %v1447
      %v2479 = vunpack.c.l.b16 %v1448
      %v2480 = vunpack.c.l.b16 %v1449
      %v2481 = vunpack.c.l.b16 %v1450
      %v2482 = vunpack.c.l.b16 %v1451
      %v2483 = vunpack.c.l.b16 %v1452
      %v2484 = vunpack.c.l.b16 %v1453
      %v2485 = vunpack.c.l.b16 %v1454
      %v2486 = vunpack.c.l.b16 %v1455
      %v2487 = vunpack.c.l.b16 %v1456
      %v2488 = vunpack.c.l.b16 %v1457
      %v2489 = vunpack.c.l.b16 %v1458
      %v2490 = vunpack.c.l.b16 %v1459
      %v2491 = vunpack.c.l.b16 %v1460
      %v2492 = vunpack.c.l.b16 %v1461
      %v2493 = vunpack.c.l.b16 %v1462
      %v2494 = vunpack.c.l.b16 %v1463
      %v2495 = vunpack.c.l.b16 %v1464
      %v2496 = vunpack.c.l.b16 %v1465
      %v2497 = vunpack.c.l.b16 %v1466
      %v2498 = vunpack.c.l.b16 %v1467
      %v2499 = vunpack.c.l.b16 %v1468
      %v2500 = vunpack.c.l.b16 %v1469
      %v2501 = vunpack.c.l.b16 %v1470
      %v2502 = vunpack.c.l.b16 %v1471
      %v2503 = vunpack.c.l.b16 %v1472
      %v2504 = vunpack.c.l.b16 %v1473
      %v2505 = vunpack.c.l.b16 %v1474
      %v2506 = vunpack.c.l.b16 %v1475
      %v2507 = vunpack.c.l.b16 %v1476
      %v2508 = vunpack.c.l.b16 %v1477
      %v2509 = vunpack.c.l.b16 %v1478
      %v2510 = vunpack.c.l.b16 %v1479
      %v2511 = vunpack.c.l.b16 %v1480
      %v2512 = vunpack.c.l.b16 %v1481
      %v2513 = vunpack.c.l.b16 %v1482
      %v2514 = vunpack.c.l.b16 %v1483
      %v2515 = vunpack.c.l.b16 %v1484
      %v2516 = vunpack.c.l.b16 %v1485
      %v2517 = vunpack.c.l.b16 %v1486
      %v2518 = vunpack.c.l.b16 %v1487
      %v2519 = vunpack.c.l.b16 %v1488
      %v2520 = vunpack.c.l.b16 %v1489
      %v2521 = vunpack.c.l.b16 %v1490
      %v2522 = vunpack.c.l.b16 %v1491
      %v2523 = vunpack.c.l.b16 %v1492
      %v2524 = vunpack.c.l.b16 %v1493
      %v2525 = vunpack.c.l.b16 %v1494
      %v2526 = vunpack.c.l.b16 %v1495
      %v2527 = vunpack.c.l.b16 %v1496
      %v2528 = vunpack.c.l.b16 %v1497
      %v2529 = vunpack.c.l.b16 %v1498
      %v2530 = vunpack.c.l.b16 %v1499
      %v2531 = vunpack.c.l.b16 %v1500
      %v2532 = vunpack.c.l.b16 %v1501
      %v2533 = vunpack.c.l.b16 %v1502
      %v2534 = vunpack.c.l.b16 %v1503
      %v2535 = vunpack.c.l.b16 %v1504
      %v2536 = vunpack.c.l.b16 %v1505
      %v2537 = vunpack.c.l.b16 %v1506
      %v2538 = vunpack.c.l.b16 %v1507
      %v2539 = vunpack.c.l.b16 %v1508
      %v2540 = vunpack.c.l.b16 %v1509
      %v2541 = vunpack.c.l.b16 %v1510
      %v2542 = vunpack.c.l.b16 %v1511
      %v2543 = vunpack.c.l.b16 %v1512
      %v2544 = vunpack.c.l.b16 %v1513
      %v2545 = vunpack.c.l.b16 %v1514
      %v2546 = vunpack.c.l.b16 %v1515
      %v2547 = vunpack.c.l.b16 %v1516
      %v2548 = vunpack.c.l.b16 %v1517
      %v2549 = vunpack.c.l.b16 %v1518
      %v2550 = vunpack.c.l.b16 %v1519
      %v2551 = vunpack.c.l.b16 %v1520
      %v2552 = vunpack.c.l.b16 %v1521
      %v2553 = vunpack.c.l.b16 %v1522
      %v2554 = vunpack.c.l.b16 %v1523
      %v2555 = vunpack.c.l.b16 %v1524
      %v2556 = vunpack.c.l.b16 %v1525
      %v2557 = vunpack.c.l.b16 %v1526
      %v2558 = vunpack.c.l.b16 %v1527
      %v2559 = vunpack.c.l.b16 %v1528
      %v2560 = vunpack.c.l.b16 %v1529
      %v2561 = vunpack.c.l.b16 %v1530
      %v2562 = vunpack.c.l.b16 %v1531
      %v2563 = vunpack.c.l.b16 %v1532
      %v2564 = vunpack.c.l.b16 %v1533
      %v2565 = vunpack.c.l.b16 %v1534
      %v2566 = vunpack.c.l.b16 %v1535
      %v2567 = vunpack.c.l.b16 %v1536
      %v2568 = vunpack.c.l.b16 %v1537
      %v2569 = vunpack.c.l.b16 %v1538
      %v2570 = vunpack.c.l.b16 %v1539
      %v2571 = vunpack.c.l.b16 %v1540
      %v2572 = vunpack.c.l.b16 %v1541
      %v2573 = vunpack.c.l.b16 %v1542
      %v2574 = vunpack.c.l.b16 %v1543
      %v2575 = vunpack.c.l.b16 %v1544
      %v2576 = vunpack.c.l.b16 %v1545
      %v2577 = vunpack.c.l.b16 %v1546
      %v2578 = vunpack.c.l.b16 %v1547
      %v2579 = vunpack.c.l.b16 %v1548
      %v2580 = vunpack.c.l.b16 %v1549
      %v2581 = vunpack.c.l.b16 %v1550
      %v2582 = vunpack.c.l.b16 %v1551
      %v2583 = vunpack.c.l.b16 %v1552
      %v2584 = vunpack.c.l.b16 %v1553
      %v2585 = vunpack.c.l.b16 %v1554
      %v2586 = vunpack.c.l.b16 %v1555
      %v2587 = vunpack.c.l.b16 %v1556
      %v2588 = vunpack.c.l.b16 %v1557
      %v2589 = vunpack.c.l.b16 %v1558
      %v2590 = vunpack.c.l.b16 %v1559
      %v2591 = vunpack.c.l.b16 %v1560
      %v2592 = vunpack.c.l.b16 %v1561
      %v2593 = vunpack.c.l.b16 %v1562
      %v2594 = vunpack.c.l.b16 %v1563
      %v2595 = vunpack.c.l.b16 %v1564
      %v2596 = vunpack.c.l.b16 %v1565
      %v2597 = vunpack.c.l.b16 %v1566
      %v2598 = vunpack.c.l.b16 %v1567
      %v2599 = vunpack.c.l.b16 %v1568
      %v2600 = vunpack.c.l.b16 %v1569
      %v2601 = vunpack.c.l.b16 %v1570
      %v2602 = vunpack.c.l.b16 %v1571
      %v2603 = vunpack.c.l.b16 %v1572
      %v2604 = vunpack.c.l.b16 %v1573
      %v2605 = vunpack.c.l.b16 %v1574
      %v2606 = vunpack.c.l.b16 %v1575
      %v2607 = vunpack.c.l.b16 %v1576
      %v2608 = vunpack.c.l.b16 %v1577
      %v2609 = vunpack.c.l.b16 %v1578
      %v2610 = vunpack.c.l.b16 %v1579
      %v2611 = vunpack.c.l.b16 %v1580
      %v2612 = vunpack.c.l.b16 %v1581
      %v2613 = vunpack.c.l.b16 %v1582
      %v2614 = vunpack.c.l.b16 %v1583
      %v2615 = vunpack.c.l.b16 %v1584
      %v2616 = vunpack.c.l.b16 %v1585
      %v2617 = vunpack.c.l.b16 %v1586
      %v2618 = vunpack.c.l.b16 %v1587
      %v2619 = vunpack.c.l.b16 %v1588
      %v2620 = vunpack.c.l.b16 %v1589
      %v2621 = vunpack.c.l.b16 %v1590
      %v2622 = vunpack.c.l.b16 %v1591
      %v2623 = vunpack.c.l.b16 %v1592
      %v2624 = vunpack.c.l.b16 %v1593
      %v2625 = vunpack.c.l.b16 %v1594
      %v2626 = vunpack.c.l.b16 %v1595
      %v2627 = vunpack.c.l.b16 %v1596
      %v2628 = vunpack.c.l.b16 %v1597
      %v2629 = vunpack.c.l.b16 %v1598
      %v2630 = vunpack.c.l.b16 %v1599
      %v2631 = vunpack.c.l.b16 %v1600
      %v2632 = vunpack.c.l.b16 %v1601
      %v2633 = vunpack.c.l.b16 %v1602
      %v2634 = vunpack.c.l.b16 %v1603
      %v2635 = vunpack.c.l.b16 %v1604
      %v2636 = vunpack.c.l.b16 %v1605
      %v2637 = vunpack.c.l.b16 %v1606
      %v2638 = vunpack.c.l.b16 %v1607
      %v2639 = vunpack.c.l.b16 %v1608
      %v2640 = vunpack.c.l.b16 %v1609
      %v2641 = vunpack.c.l.b16 %v1610
      %v2642 = vunpack.c.l.b16 %v1611
      %v2643 = vunpack.c.l.b16 %v1612
      %v2644 = vunpack.c.l.b16 %v1613
      %v2645 = vunpack.c.l.b16 %v1614
      %v2646 = vunpack.c.l.b16 %v1615
      %v2647 = vunpack.c.l.b16 %v1616
      %v2648 = vunpack.c.l.b16 %v1617
      %v2649 = vunpack.c.l.b16 %v1618
      %v2650 = vunpack.c.l.b16 %v1619
      %v2651 = vunpack.c.l.b16 %v1620
      %v2652 = vunpack.c.l.b16 %v1621
      %v2653 = vunpack.c.l.b16 %v1622
      %v2654 = vunpack.c.l.b16 %v1623
      %v2655 = vunpack.c.l.b16 %v1624
      %v2656 = vunpack.c.l.b16 %v1625
      %v2657 = vunpack.c.l.b16 %v1626
      %v2658 = vunpack.c.l.b16 %v1627
      %v2659 = vunpack.c.l.b16 %v1628
      %v2660 = vunpack.c.l.b16 %v1629
      %v2661 = vunpack.c.l.b16 %v1630
      %v2662 = vunpack.c.l.b16 %v1631
      %v2663 = vunpack.c.l.b16 %v1632
      %v2664 = vunpack.c.l.b16 %v1633
      %v2665 = vunpack.c.l.b16 %v1634
      %v2666 = vunpack.c.l.b16 %v1635
      %v2667 = vunpack.c.l.b16 %v1636
      %v2668 = vunpack.c.l.b16 %v1637
      %v2669 = vunpack.c.l.b16 %v1638
      %v2670 = vunpack.c.l.b16 %v1639
      %v2671 = vunpack.c.l.b16 %v1640
      %v2672 = vunpack.c.l.b16 %v1641
      %v2673 = vunpack.c.l.b16 %v1642
      %v2674 = vunpack.c.l.b16 %v1643
      %v2675 = vunpack.c.l.b16 %v1644
      %v2676 = vunpack.c.l.b16 %v1645
      %v2677 = vunpack.c.l.b16 %v1646
      %v2678 = vunpack.c.l.b16 %v1647
      %v2679 = vunpack.c.l.b16 %v1648
      %v2680 = vunpack.c.l.b16 %v1649
      %v2681 = vunpack.c.l.b16 %v1650
      %v2682 = vunpack.c.l.b16 %v1651
      %v2683 = vunpack.c.l.b16 %v1652
      %v2684 = vunpack.c.l.b16 %v1653
      %v2685 = vunpack.c.l.b16 %v1654
      %v2686 = vunpack.c.l.b16 %v1655
      %v2687 = vunpack.c.l.b16 %v1656
      %v2688 = vunpack.c.l.b16 %v1657
      %v2689 = vunpack.c.l.b16 %v1658
      %v2690 = vunpack.c.l.b16 %v1659
      %v2691 = vunpack.c.l.b16 %v1660
      %v2692 = vunpack.c.l.b16 %v1661
      %v2693 = vunpack.c.l.b16 %v1662
      %v2694 = vunpack.c.l.b16 %v1663
      %v2695 = vunpack.c.l.b16 %v1664
      %v2696 = vunpack.c.l.b16 %v1665
      %v2697 = vunpack.c.l.b16 %v1666
      %v2698 = vunpack.c.l.b16 %v1667
      %v2699 = vunpack.c.l.b16 %v1668
      %v2700 = vunpack.c.l.b16 %v1669
      %v2701 = vunpack.c.l.b16 %v1670
      %v2702 = vunpack.c.l.b16 %v1671
      %v2703 = vunpack.c.l.b16 %v1672
      %v2704 = vunpack.c.l.b16 %v1673
      %v2705 = vunpack.c.l.b16 %v1674
      %v2706 = vunpack.c.l.b16 %v1675
      %v2707 = vunpack.c.l.b16 %v1676
      %v2708 = vunpack.c.l.b16 %v1677
      %v2709 = vunpack.c.l.b16 %v1678
      %v2710 = vunpack.c.l.b16 %v1679
      %v2711 = vunpack.c.l.b16 %v1680
      %v2712 = vunpack.c.l.b16 %v1681
      %v2713 = vunpack.c.l.b16 %v1682
      %v2714 = vunpack.c.l.b16 %v1683
      %v2715 = vunpack.c.l.b16 %v1684
      %v2716 = vunpack.c.l.b16 %v1685
      %v2717 = vunpack.c.l.b16 %v1686
      %v2718 = vunpack.c.l.b16 %v1687
      %v2719 = vunpack.c.l.b16 %v1688
      %v2720 = vunpack.c.l.b16 %v1689
      %v2721 = vunpack.c.l.b16 %v1690
      %v2722 = vunpack.c.l.b16 %v1691
      %v2723 = vunpack.c.l.b16 %v1692
      %v2724 = vunpack.c.l.b16 %v1693
      %v2725 = vunpack.c.l.b16 %v1694
      %v2726 = vunpack.c.l.b16 %v1695
      %v2727 = vunpack.c.l.b16 %v1696
      %v2728 = vunpack.c.l.b16 %v1697
      %v2729 = vunpack.c.l.b16 %v1698
      %v2730 = vunpack.c.l.b16 %v1699
      %v2731 = vunpack.c.l.b16 %v1700
      %v2732 = vunpack.c.l.b16 %v1701
      %v2733 = vunpack.c.l.b16 %v1702
      %v2734 = vunpack.c.l.b16 %v1703
      %v2735 = vunpack.c.l.b16 %v1704
      %v2736 = vunpack.c.l.b16 %v1705
      %v2737 = vunpack.c.l.b16 %v1706
      %v2738 = vunpack.c.l.b16 %v1707
      %v2739 = vunpack.c.l.b16 %v1708
      %v2740 = vunpack.c.l.b16 %v1709
      %v2741 = vunpack.c.l.b16 %v1710
      %v2742 = vunpack.c.l.b16 %v1711
      %v2743 = vunpack.c.l.b16 %v1712
      %v2744 = vunpack.c.l.b16 %v1713
      %v2745 = vunpack.c.l.b16 %v1714
      %v2746 = vunpack.c.l.b16 %v1715
      %v2747 = vunpack.c.l.b16 %v1716
      %v2748 = vunpack.c.l.b16 %v1717
      %v2749 = vunpack.c.l.b16 %v1718
      %v2750 = vunpack.c.l.b16 %v1719
      %v2751 = vunpack.c.l.b16 %v1720
      %v2752 = vunpack.c.l.b16 %v1721
      %v2753 = vunpack.c.l.b16 %v1722
      %v2754 = vunpack.c.l.b16 %v1723
      %v2755 = vunpack.c.l.b16 %v1724
      %v2756 = vunpack.c.l.b16 %v1725
      %v2757 = vunpack.c.l.b16 %v1726
      %v2758 = vunpack.c.l.b16 %v1727
      %v2759 = vunpack.c.l.b16 %v1728
      %v2760 = vunpack.c.l.b16 %v1729
      %v2761 = vunpack.c.l.b16 %v1730
      %v2762 = vunpack.c.l.b16 %v1731
      %v2763 = vunpack.c.l.b16 %v1732
      %v2764 = vunpack.c.l.b16 %v1733
      %v2765 = vunpack.c.l.b16 %v1734
      %v2766 = vunpack.c.l.b16 %v1735
      %v2767 = vunpack.c.l.b16 %v1736
      %v2768 = vunpack.c.l.b16 %v1737
      %v2769 = vunpack.c.l.b16 %v1738
      %v2770 = vunpack.c.l.b16 %v1739
      %v2771 = vunpack.c.l.b16 %v1740
      %v2772 = vunpack.c.l.b16 %v1741
      %v2773 = vunpack.c.l.b16 %v1742
      %v2774 = vunpack.c.l.b16 %v1743
      %v2775 = vunpack.c.l.b16 %v1744
      %v2776 = vunpack.c.l.b16 %v1745
      %v2777 = vunpack.c.l.b16 %v1746
      %v2778 = vunpack.c.l.b16 %v1747
      %v2779 = vunpack.c.l.b16 %v1748
      %v2780 = vunpack.c.l.b16 %v1749
      %v2781 = vunpack.c.l.b16 %v1750
      %v2782 = vunpack.c.l.b16 %v1751
      %v2783 = vunpack.c.l.b16 %v1752
      %v2784 = vunpack.c.l.b16 %v1753
      %v2785 = vunpack.c.l.b16 %v1754
      %v2786 = vunpack.c.l.b16 %v1755
      %v2787 = vunpack.c.l.b16 %v1756
      %v2788 = vunpack.c.l.b16 %v1757
      %v2789 = vunpack.c.l.b16 %v1758
      %v2790 = vunpack.c.l.b16 %v1759
      %v2791 = vunpack.c.l.b16 %v1760
      %v2792 = vunpack.c.l.b16 %v1761
      %v2793 = vunpack.c.l.b16 %v1762
      %v2794 = vunpack.c.l.b16 %v1763
      %v2795 = vunpack.c.l.b16 %v1764
      %v2796 = vunpack.c.l.b16 %v1765
      %v2797 = vunpack.c.l.b16 %v1766
      %v2798 = vunpack.c.l.b16 %v1767
      %v2799 = vunpack.c.l.b16 %v1768
      %v2800 = vunpack.c.l.b16 %v1769
      %v2801 = vunpack.c.l.b16 %v1770
      %v2802 = vunpack.c.l.b16 %v1771
      %v2803 = vunpack.c.l.b16 %v1772
      %v2804 = vunpack.c.l.b16 %v1773
      %v2805 = vunpack.c.l.b16 %v1774
      %v2806 = vunpack.c.l.b16 %v1775
      %v2807 = vunpack.c.l.b16 %v1776
      %v2808 = vunpack.c.l.b16 %v1777
      %v2809 = vunpack.c.l.b16 %v1778
      %v2810 = vunpack.c.l.b16 %v1779
      %v2811 = vunpack.c.l.b16 %v1780
      %v2812 = vunpack.c.l.b16 %v1781
      %v2813 = vunpack.c.l.b16 %v1782
      %v2814 = vunpack.c.l.b16 %v1783
      %v2815 = vunpack.c.l.b16 %v1784
      %v2816 = vunpack.c.l.b16 %v1785
      %v2817 = vunpack.c.l.b16 %v1786
      %v2818 = vunpack.c.l.b16 %v1787
      %v2819 = vunpack.c.l.b16 %v1788
      %v2820 = vunpack.c.l.b16 %v1789
      %v2821 = vunpack.c.l.b16 %v1790
      %v2822 = vunpack.c.l.b16 %v1791
      %v2823 = vunpack.c.l.b16 %v1792
      %v2824 = vunpack.c.l.b16 %v1793
      %v2825 = vunpack.c.l.b16 %v1794
      %v2826 = vunpack.c.l.b16 %v1795
      %v2827 = vunpack.c.l.b16 %v1796
      %v2828 = vunpack.c.l.b16 %v1797
      %v2829 = vunpack.c.l.b16 %v1798
      %v2830 = vunpack.c.l.b16 %v1799
      %v2831 = vunpack.c.l.b16 %v1800
      %v2832 = vunpack.c.l.b16 %v1801
      %v2833 = vunpack.c.l.b16 %v1802
      %v2834 = vunpack.c.l.b16 %v1803
      %v2835 = vunpack.c.l.b16 %v1804
      %v2836 = vunpack.c.l.b16 %v1805
      %v2837 = vunpack.c.l.b16 %v1806
      %v2838 = vunpack.c.l.b16 %v1807
      %v2839 = vunpack.c.l.b16 %v1808
      %v2840 = vunpack.c.l.b16 %v1809
      %v2841 = vunpack.c.l.b16 %v1810
      %v2842 = vunpack.c.l.b16 %v1811
      %v2843 = vunpack.c.l.b16 %v1812
      %v2844 = vunpack.c.l.b16 %v1813
      %v2845 = vunpack.c.l.b16 %v1814
      %v2846 = vunpack.c.l.b16 %v1815
      %v2847 = vunpack.c.l.b16 %v1816
      %v2848 = vunpack.c.l.b16 %v1817
      %v2849 = vunpack.c.l.b16 %v1818
      %v2850 = vunpack.c.l.b16 %v1819
      %v2851 = vunpack.c.l.b16 %v1820
      %v2852 = vunpack.c.l.b16 %v1821
      %v2853 = vunpack.c.l.b16 %v1822
      %v2854 = vunpack.c.l.b16 %v1823
      %v2855 = vunpack.c.l.b16 %v1824
      %v2856 = vunpack.c.l.b16 %v1825
      %v2857 = vunpack.c.l.b16 %v1826
      %v2858 = vunpack.c.l.b16 %v1827
      %v2859 = vunpack.c.l.b16 %v1828
      %v2860 = vunpack.c.l.b16 %v1829
      %v2861 = vunpack.c.l.b16 %v1830
      %v2862 = vunpack.c.l.b16 %v1831
      %v2863 = vunpack.c.l.b16 %v1832
      %v2864 = vunpack.c.l.b16 %v1833
      %v2865 = vunpack.c.l.b16 %v1834
      %v2866 = vunpack.c.l.b16 %v1835
      %v2867 = vunpack.c.l.b16 %v1836
      %v2868 = vunpack.c.l.b16 %v1837
      %v2869 = vunpack.c.l.b16 %v1838
      %v2870 = vunpack.c.l.b16 %v1839
      %v2871 = vunpack.c.l.b16 %v1840
      %v2872 = vunpack.c.l.b16 %v1841
      %v2873 = vpack.c.b16 %v2362, %v2361
      %v2874 = vpack.c.b16 %v2364, %v2363
      %v2875 = vpack.c.b16 %v2366, %v2365
      %v2876 = vpack.c.b16 %v2368, %v2367
      %v2877 = vpack.c.b16 %v2370, %v2369
      %v2878 = vpack.c.b16 %v2372, %v2371
      %v2879 = vpack.c.b16 %v2374, %v2373
      %v2880 = vpack.c.b16 %v2376, %v2375
      %v2881 = vpack.c.b16 %v2378, %v2377
      %v2882 = vpack.c.b16 %v2380, %v2379
      %v2883 = vpack.c.b16 %v2382, %v2381
      %v2884 = vpack.c.b16 %v2384, %v2383
      %v2885 = vpack.c.b16 %v2386, %v2385
      %v2886 = vpack.c.b16 %v2388, %v2387
      %v2887 = vpack.c.b16 %v2390, %v2389
      %v2888 = vpack.c.b16 %v2392, %v2391
      %v2889 = vpack.c.b16 %v2394, %v2393
      %v2890 = vpack.c.b16 %v2396, %v2395
      %v2891 = vpack.c.b16 %v2398, %v2397
      %v2892 = vpack.c.b16 %v2400, %v2399
      %v2893 = vpack.c.b16 %v2402, %v2401
      %v2894 = vpack.c.b16 %v2404, %v2403
      %v2895 = vpack.c.b16 %v2406, %v2405
      %v2896 = vpack.c.b16 %v2408, %v2407
      %v2897 = vpack.c.b16 %v2410, %v2409
      %v2898 = vpack.c.b16 %v2412, %v2411
      %v2899 = vpack.c.b16 %v2414, %v2413
      %v2900 = vpack.c.b16 %v2416, %v2415
      %v2901 = vpack.c.b16 %v2418, %v2417
      %v2902 = vpack.c.b16 %v2420, %v2419
      %v2903 = vpack.c.b16 %v2422, %v2421
      %v2904 = vpack.c.b16 %v2424, %v2423
      %v2905 = vpack.c.b16 %v2426, %v2425
      %v2906 = vpack.c.b16 %v2428, %v2427
      %v2907 = vpack.c.b16 %v2430, %v2429
      %v2908 = vpack.c.b16 %v2432, %v2431
      %v2909 = vpack.c.b16 %v2434, %v2433
      %v2910 = vpack.c.b16 %v2436, %v2435
      %v2911 = vpack.c.b16 %v2438, %v2437
      %v2912 = vpack.c.b16 %v2440, %v2439
      %v2913 = vpack.c.b16 %v2442, %v2441
      %v2914 = vpack.c.b16 %v2444, %v2443
      %v2915 = vpack.c.b16 %v2446, %v2445
      %v2916 = vpack.c.b16 %v2448, %v2447
      %v2917 = vpack.c.b16 %v2450, %v2449
      %v2918 = vpack.c.b16 %v2452, %v2451
      %v2919 = vpack.c.b16 %v2454, %v2453
      %v2920 = vpack.c.b16 %v2456, %v2455
      %v2921 = vpack.c.b16 %v2458, %v2457
      %v2922 = vpack.c.b16 %v2460, %v2459
      %v2923 = vpack.c.b16 %v2462, %v2461
      %v2924 = vpack.c.b16 %v2464, %v2463
      %v2925 = vpack.c.b16 %v2466, %v2465
      %v2926 = vpack.c.b16 %v2468, %v2467
      %v2927 = vpack.c.b16 %v2470, %v2469
      %v2928 = vpack.c.b16 %v2472, %v2471
      %v2929 = vpack.c.b16 %v2474, %v2473
      %v2930 = vpack.c.b16 %v2476, %v2475
      %v2931 = vpack.c.b16 %v2478, %v2477
      %v2932 = vpack.c.b16 %v2480, %v2479
      %v2933 = vpack.c.b16 %v2482, %v2481
      %v2934 = vpack.c.b16 %v2484, %v2483
      %v2935 = vpack.c.b16 %v2486, %v2485
      %v2936 = vpack.c.b16 %v2488, %v2487
      %v2937 = vpack.c.b16 %v2490, %v2489
      %v2938 = vpack.c.b16 %v2492, %v2491
      %v2939 = vpack.c.b16 %v2494, %v2493
      %v2940 = vpack.c.b16 %v2496, %v2495
      %v2941 = vpack.c.b16 %v2498, %v2497
      %v2942 = vpack.c.b16 %v2500, %v2499
      %v2943 = vpack.c.b16 %v2502, %v2501
      %v2944 = vpack.c.b16 %v2504, %v2503
      %v2945 = vpack.c.b16 %v2506, %v2505
      %v2946 = vpack.c.b16 %v2508, %v2507
      %v2947 = vpack.c.b16 %v2510, %v2509
      %v2948 = vpack.c.b16 %v2512, %v2511
      %v2949 = vpack.c.b16 %v2514, %v2513
      %v2950 = vpack.c.b16 %v2516, %v2515
      %v2951 = vpack.c.b16 %v2518, %v2517
      %v2952 = vpack.c.b16 %v2520, %v2519
      %v2953 = vpack.c.b16 %v2522, %v2521
      %v2954 = vpack.c.b16 %v2524, %v2523
      %v2955 = vpack.c.b16 %v2526, %v2525
      %v2956 = vpack.c.b16 %v2528, %v2527
      %v2957 = vpack.c.b16 %v2530, %v2529
      %v2958 = vpack.c.b16 %v2532, %v2531
      %v2959 = vpack.c.b16 %v2534, %v2533
      %v2960 = vpack.c.b16 %v2536, %v2535
      %v2961 = vpack.c.b16 %v2538, %v2537
      %v2962 = vpack.c.b16 %v2540, %v2539
      %v2963 = vpack.c.b16 %v2542, %v2541
      %v2964 = vpack.c.b16 %v2544, %v2543
      %v2965 = vpack.c.b16 %v2546, %v2545
      %v2966 = vpack.c.b16 %v2548, %v2547
      %v2967 = vpack.c.b16 %v2550, %v2549
      %v2968 = vpack.c.b16 %v2552, %v2551
      %v2969 = vpack.c.b16 %v2554, %v2553
      %v2970 = vpack.c.b16 %v2556, %v2555
      %v2971 = vpack.c.b16 %v2558, %v2557
      %v2972 = vpack.c.b16 %v2560, %v2559
      %v2973 = vpack.c.b16 %v2562, %v2561
      %v2974 = vpack.c.b16 %v2564, %v2563
      %v2975 = vpack.c.b16 %v2566, %v2565
      %v2976 = vpack.c.b16 %v2568, %v2567
      %v2977 = vpack.c.b16 %v2570, %v2569
      %v2978 = vpack.c.b16 %v2572, %v2571
      %v2979 = vpack.c.b16 %v2574, %v2573
      %v2980 = vpack.c.b16 %v2576, %v2575
      %v2981 = vpack.c.b16 %v2578, %v2577
      %v2982 = vpack.c.b16 %v2580, %v2579
      %v2983 = vpack.c.b16 %v2582, %v2581
      %v2984 = vpack.c.b16 %v2584, %v2583
      %v2985 = vpack.c.b16 %v2586, %v2585
      %v2986 = vpack.c.b16 %v2588, %v2587
      %v2987 = vpack.c.b16 %v2590, %v2589
      %v2988 = vpack.c.b16 %v2592, %v2591
      %v2989 = vpack.c.b16 %v2594, %v2593
      %v2990 = vpack.c.b16 %v2596, %v2595
      %v2991 = vpack.c.b16 %v2598, %v2597
      %v2992 = vpack.c.b16 %v2600, %v2599
      %v2993 = vpack.c.b16 %v2602, %v2601
      %v2994 = vpack.c.b16 %v2604, %v2603
      %v2995 = vpack.c.b16 %v2606, %v2605
      %v2996 = vpack.c.b16 %v2608, %v2607
      %v2997 = vpack.c.b16 %v2610, %v2609
      %v2998 = vpack.c.b16 %v2612, %v2611
      %v2999 = vpack.c.b16 %v2614, %v2613
      %v3000 = vpack.c.b16 %v2616, %v2615
      %v3001 = vpack.c.b16 %v2618, %v2617
      %v3002 = vpack.c.b16 %v2620, %v2619
      %v3003 = vpack.c.b16 %v2622, %v2621
      %v3004 = vpack.c.b16 %v2624, %v2623
      %v3005 = vpack.c.b16 %v2626, %v2625
      %v3006 = vpack.c.b16 %v2628, %v2627
      %v3007 = vpack.c.b16 %v2630, %v2629
      %v3008 = vpack.c.b16 %v2632, %v2631
      %v3009 = vpack.c.b16 %v2634, %v2633
      %v3010 = vpack.c.b16 %v2636, %v2635
      %v3011 = vpack.c.b16 %v2638, %v2637
      %v3012 = vpack.c.b16 %v2640, %v2639
      %v3013 = vpack.c.b16 %v2642, %v2641
      %v3014 = vpack.c.b16 %v2644, %v2643
      %v3015 = vpack.c.b16 %v2646, %v2645
      %v3016 = vpack.c.b16 %v2648, %v2647
      %v3017 = vpack.c.b16 %v2650, %v2649
      %v3018 = vpack.c.b16 %v2652, %v2651
      %v3019 = vpack.c.b16 %v2654, %v2653
      %v3020 = vpack.c.b16 %v2656, %v2655
      %v3021 = vpack.c.b16 %v2658, %v2657
      %v3022 = vpack.c.b16 %v2660, %v2659
      %v3023 = vpack.c.b16 %v2662, %v2661
      %v3024 = vpack.c.b16 %v2664, %v2663
      %v3025 = vpack.c.b16 %v2666, %v2665
      %v3026 = vpack.c.b16 %v2668, %v2667
      %v3027 = vpack.c.b16 %v2670, %v2669
      %v3028 = vpack.c.b16 %v2672, %v2671
      %v3029 = vpack.c.b16 %v2674, %v2673
      %v3030 = vpack.c.b16 %v2676, %v2675
      %v3031 = vpack.c.b16 %v2678, %v2677
      %v3032 = vpack.c.b16 %v2680, %v2679
      %v3033 = vpack.c.b16 %v2682, %v2681
      %v3034 = vpack.c.b16 %v2684, %v2683
      %v3035 = vpack.c.b16 %v2686, %v2685
      %v3036 = vpack.c.b16 %v2688, %v2687
      %v3037 = vpack.c.b16 %v2690, %v2689
      %v3038 = vpack.c.b16 %v2692, %v2691
      %v3039 = vpack.c.b16 %v2694, %v2693
      %v3040 = vpack.c.b16 %v2696, %v2695
      %v3041 = vpack.c.b16 %v2698, %v2697
      %v3042 = vpack.c.b16 %v2700, %v2699
      %v3043 = vpack.c.b16 %v2702, %v2701
      %v3044 = vpack.c.b16 %v2704, %v2703
      %v3045 = vpack.c.b16 %v2706, %v2705
      %v3046 = vpack.c.b16 %v2708, %v2707
      %v3047 = vpack.c.b16 %v2710, %v2709
      %v3048 = vpack.c.b16 %v2712, %v2711
      %v3049 = vpack.c.b16 %v2714, %v2713
      %v3050 = vpack.c.b16 %v2716, %v2715
      %v3051 = vpack.c.b16 %v2718, %v2717
      %v3052 = vpack.c.b16 %v2720, %v2719
      %v3053 = vpack.c.b16 %v2722, %v2721
      %v3054 = vpack.c.b16 %v2724, %v2723
      %v3055 = vpack.c.b16 %v2726, %v2725
      %v3056 = vpack.c.b16 %v2728, %v2727
      %v3057 = vpack.c.b16 %v2730, %v2729
      %v3058 = vpack.c.b16 %v2732, %v2731
      %v3059 = vpack.c.b16 %v2734, %v2733
      %v3060 = vpack.c.b16 %v2736, %v2735
      %v3061 = vpack.c.b16 %v2738, %v2737
      %v3062 = vpack.c.b16 %v2740, %v2739
      %v3063 = vpack.c.b16 %v2742, %v2741
      %v3064 = vpack.c.b16 %v2744, %v2743
      %v3065 = vpack.c.b16 %v2746, %v2745
      %v3066 = vpack.c.b16 %v2748, %v2747
      %v3067 = vpack.c.b16 %v2750, %v2749
      %v3068 = vpack.c.b16 %v2752, %v2751
      %v3069 = vpack.c.b16 %v2754, %v2753
      %v3070 = vpack.c.b16 %v2756, %v2755
      %v3071 = vpack.c.b16 %v2758, %v2757
      %v3072 = vpack.c.b16 %v2760, %v2759
      %v3073 = vpack.c.b16 %v2762, %v2761
      %v3074 = vpack.c.b16 %v2764, %v2763
      %v3075 = vpack.c.b16 %v2766, %v2765
      %v3076 = vpack.c.b16 %v2768, %v2767
      %v3077 = vpack.c.b16 %v2770, %v2769
      %v3078 = vpack.c.b16 %v2772, %v2771
      %v3079 = vpack.c.b16 %v2774, %v2773
      %v3080 = vpack.c.b16 %v2776, %v2775
      %v3081 = vpack.c.b16 %v2778, %v2777
      %v3082 = vpack.c.b16 %v2780, %v2779
      %v3083 = vpack.c.b16 %v2782, %v2781
      %v3084 = vpack.c.b16 %v2784, %v2783
      %v3085 = vpack.c.b16 %v2786, %v2785
      %v3086 = vpack.c.b16 %v2788, %v2787
      %v3087 = vpack.c.b16 %v2790, %v2789
      %v3088 = vpack.c.b16 %v2792, %v2791
      %v3089 = vpack.c.b16 %v2794, %v2793
      %v3090 = vpack.c.b16 %v2796, %v2795
      %v3091 = vpack.c.b16 %v2798, %v2797
      %v3092 = vpack.c.b16 %v2800, %v2799
      %v3093 = vpack.c.b16 %v2802, %v2801
      %v3094 = vpack.c.b16 %v2804, %v2803
      %v3095 = vpack.c.b16 %v2806, %v2805
      %v3096 = vpack.c.b16 %v2808, %v2807
      %v3097 = vpack.c.b16 %v2810, %v2809
      %v3098 = vpack.c.b16 %v2812, %v2811
      %v3099 = vpack.c.b16 %v2814, %v2813
      %v3100 = vpack.c.b16 %v2816, %v2815
      %v3101 = vpack.c.b16 %v2818, %v2817
      %v3102 = vpack.c.b16 %v2820, %v2819
      %v3103 = vpack.c.b16 %v2822, %v2821
      %v3104 = vpack.c.b16 %v2824, %v2823
      %v3105 = vpack.c.b16 %v2826, %v2825
      %v3106 = vpack.c.b16 %v2828, %v2827
      %v3107 = vpack.c.b16 %v2830, %v2829
      %v3108 = vpack.c.b16 %v2832, %v2831
      %v3109 = vpack.c.b16 %v2834, %v2833
      %v3110 = vpack.c.b16 %v2836, %v2835
      %v3111 = vpack.c.b16 %v2838, %v2837
      %v3112 = vpack.c.b16 %v2840, %v2839
      %v3113 = vpack.c.b16 %v2842, %v2841
      %v3114 = vpack.c.b16 %v2844, %v2843
      %v3115 = vpack.c.b16 %v2846, %v2845
      %v3116 = vpack.c.b16 %v2848, %v2847
      %v3117 = vpack.c.b16 %v2850, %v2849
      %v3118 = vpack.c.b16 %v2852, %v2851
      %v3119 = vpack.c.b16 %v2854, %v2853
      %v3120 = vpack.c.b16 %v2856, %v2855
      %v3121 = vpack.c.b16 %v2858, %v2857
      %v3122 = vpack.c.b16 %v2860, %v2859
      %v3123 = vpack.c.b16 %v2862, %v2861
      %v3124 = vpack.c.b16 %v2864, %v2863
      %v3125 = vpack.c.b16 %v2866, %v2865
      %v3126 = vpack.c.b16 %v2868, %v2867
      %v3127 = vpack.c.b16 %v2870, %v2869
      %v3128 = vpack.c.b16 %v2872, %v2871
      %vm3129 = vcmask 72704
      %v3131 = vsel %vm3129, %v2873, 0
      %v3134 = vsel %vm3129, %v2874, 0
      %v3137 = vsel %vm3129, %v2875, 0
      %v3140 = vsel %vm3129, %v2876, 0
      %v3143 = vsel %vm3129, %v2877, 0
      %v3146 = vsel %vm3129, %v2878, 0
      %v3149 = vsel %vm3129, %v2879, 0
      %v3152 = vsel %vm3129, %v2880, 0
      %v3155 = vsel %vm3129, %v2881, 0
      %v3158 = vsel %vm3129, %v2882, 0
      %v3161 = vsel %vm3129, %v2883, 0
      %v3164 = vsel %vm3129, %v2884, 0
      %v3167 = vsel %vm3129, %v2885, 0
      %v3170 = vsel %vm3129, %v2886, 0
      %v3173 = vsel %vm3129, %v2887, 0
      %v3176 = vsel %vm3129, %v2888, 0
      %v3179 = vsel %vm3129, %v2889, 0
      %v3182 = vsel %vm3129, %v2890, 0
      %v3185 = vsel %vm3129, %v2891, 0
      %v3188 = vsel %vm3129, %v2892, 0
      %v3191 = vsel %vm3129, %v2893, 0
      %v3194 = vsel %vm3129, %v2894, 0
      %v3197 = vsel %vm3129, %v2895, 0
      %v3200 = vsel %vm3129, %v2896, 0
      %v3203 = vsel %vm3129, %v2897, 0
      %v3206 = vsel %vm3129, %v2898, 0
      %v3209 = vsel %vm3129, %v2899, 0
      %v3212 = vsel %vm3129, %v2900, 0
      %v3215 = vsel %vm3129, %v2901, 0
      %v3218 = vsel %vm3129, %v2902, 0
      %v3221 = vsel %vm3129, %v2903, 0
      %v3224 = vsel %vm3129, %v2904, 0
      %v3227 = vsel %vm3129, %v2905, 0
      %v3230 = vsel %vm3129, %v2906, 0
      %v3233 = vsel %vm3129, %v2907, 0
      %v3236 = vsel %vm3129, %v2908, 0
      %v3239 = vsel %vm3129, %v2909, 0
      %v3242 = vsel %vm3129, %v2910, 0
      %v3245 = vsel %vm3129, %v2911, 0
      %v3248 = vsel %vm3129, %v2912, 0
      %v3251 = vsel %vm3129, %v2913, 0
      %v3254 = vsel %vm3129, %v2914, 0
      %v3257 = vsel %vm3129, %v2915, 0
      %v3260 = vsel %vm3129, %v2916, 0
      %v3263 = vsel %vm3129, %v2917, 0
      %v3266 = vsel %vm3129, %v2918, 0
      %v3269 = vsel %vm3129, %v2919, 0
      %v3272 = vsel %vm3129, %v2920, 0
      %v3275 = vsel %vm3129, %v2921, 0
      %v3278 = vsel %vm3129, %v2922, 0
      %v3281 = vsel %vm3129, %v2923, 0
      %v3284 = vsel %vm3129, %v2924, 0
      %v3287 = vsel %vm3129, %v2925, 0
      %v3290 = vsel %vm3129, %v2926, 0
      %v3293 = vsel %vm3129, %v2927, 0
      %v3296 = vsel %vm3129, %v2928, 0
      %v3299 = vsel %vm3129, %v2929, 0
      %v3302 = vsel %vm3129, %v2930, 0
      %v3305 = vsel %vm3129, %v2931, 0
      %v3308 = vsel %vm3129, %v2932, 0
      %v3311 = vsel %vm3129, %v2933, 0
      %v3314 = vsel %vm3129, %v2934, 0
      %v3317 = vsel %vm3129, %v2935, 0
      %v3320 = vsel %vm3129, %v2936, 0
      %v3323 = vsel %vm3129, %v2937, 0
      %v3326 = vsel %vm3129, %v2938, 0
      %v3329 = vsel %vm3129, %v2939, 0
      %v3332 = vsel %vm3129, %v2940, 0
      %v3335 = vsel %vm3129, %v2941, 0
      %v3338 = vsel %vm3129, %v2942, 0
      %v3341 = vsel %vm3129, %v2943, 0
      %v3344 = vsel %vm3129, %v2944, 0
      %v3347 = vsel %vm3129, %v2945, 0
      %v3350 = vsel %vm3129, %v2946, 0
      %v3353 = vsel %vm3129, %v2947, 0
      %v3356 = vsel %vm3129, %v2948, 0
      %v3359 = vsel %vm3129, %v2949, 0
      %v3362 = vsel %vm3129, %v2950, 0
      %v3365 = vsel %vm3129, %v2951, 0
      %v3368 = vsel %vm3129, %v2952, 0
      %v3371 = vsel %vm3129, %v2953, 0
      %v3374 = vsel %vm3129, %v2954, 0
      %v3377 = vsel %vm3129, %v2955, 0
      %v3380 = vsel %vm3129, %v2956, 0
      %v3383 = vsel %vm3129, %v2957, 0
      %v3386 = vsel %vm3129, %v2958, 0
      %v3389 = vsel %vm3129, %v2959, 0
      %v3392 = vsel %vm3129, %v2960, 0
      %v3395 = vsel %vm3129, %v2961, 0
      %v3398 = vsel %vm3129, %v2962, 0
      %v3401 = vsel %vm3129, %v2963, 0
      %v3404 = vsel %vm3129, %v2964, 0
      %v3407 = vsel %vm3129, %v2965, 0
      %v3410 = vsel %vm3129, %v2966, 0
      %v3413 = vsel %vm3129, %v2967, 0
      %v3416 = vsel %vm3129, %v2968, 0
      %v3419 = vsel %vm3129, %v2969, 0
      %v3422 = vsel %vm3129, %v2970, 0
      %v3425 = vsel %vm3129, %v2971, 0
      %v3428 = vsel %vm3129, %v2972, 0
      %v3431 = vsel %vm3129, %v2973, 0
      %v3434 = vsel %vm3129, %v2974, 0
      %v3437 = vsel %vm3129, %v2975, 0
      %v3440 = vsel %vm3129, %v2976, 0
      %v3443 = vsel %vm3129, %v2977, 0
      %v3446 = vsel %vm3129, %v2978, 0
      %v3449 = vsel %vm3129, %v2979, 0
      %v3452 = vsel %vm3129, %v2980, 0
      %v3455 = vsel %vm3129, %v2981, 0
      %v3458 = vsel %vm3129, %v2982, 0
      %v3461 = vsel %vm3129, %v2983, 0
      %v3464 = vsel %vm3129, %v2984, 0
      %v3467 = vsel %vm3129, %v2985, 0
      %v3470 = vsel %vm3129, %v2986, 0
      %v3473 = vsel %vm3129, %v2987, 0
      %v3476 = vsel %vm3129, %v2988, 0
      %v3479 = vsel %vm3129, %v2989, 0
      %v3482 = vsel %vm3129, %v2990, 0
      %v3485 = vsel %vm3129, %v2991, 0
      %v3488 = vsel %vm3129, %v2992, 0
      %v3491 = vsel %vm3129, %v2993, 0
      %v3494 = vsel %vm3129, %v2994, 0
      %v3497 = vsel %vm3129, %v2995, 0
      %v3500 = vsel %vm3129, %v2996, 0
      %v3503 = vsel %vm3129, %v2997, 0
      %v3506 = vsel %vm3129, %v2998, 0
      %v3509 = vsel %vm3129, %v2999, 0
      %v3512 = vsel %vm3129, %v3000, 0
      %v3515 = vsel %vm3129, %v3001, 0
      %v3518 = vsel %vm3129, %v3002, 0
      %v3521 = vsel %vm3129, %v3003, 0
      %v3524 = vsel %vm3129, %v3004, 0
      %v3527 = vsel %vm3129, %v3005, 0
      %v3530 = vsel %vm3129, %v3006, 0
      %v3533 = vsel %vm3129, %v3007, 0
      %v3536 = vsel %vm3129, %v3008, 0
      %v3539 = vsel %vm3129, %v3009, 0
      %v3542 = vsel %vm3129, %v3010, 0
      %v3545 = vsel %vm3129, %v3011, 0
      %v3548 = vsel %vm3129, %v3012, 0
      %v3551 = vsel %vm3129, %v3013, 0
      %v3554 = vsel %vm3129, %v3014, 0
      %v3557 = vsel %vm3129, %v3015, 0
      %v3560 = vsel %vm3129, %v3016, 0
      %v3563 = vsel %vm3129, %v3017, 0
      %v3566 = vsel %vm3129, %v3018, 0
      %v3569 = vsel %vm3129, %v3019, 0
      %v3572 = vsel %vm3129, %v3020, 0
      %v3575 = vsel %vm3129, %v3021, 0
      %v3578 = vsel %vm3129, %v3022, 0
      %v3581 = vsel %vm3129, %v3023, 0
      %v3584 = vsel %vm3129, %v3024, 0
      %v3587 = vsel %vm3129, %v3025, 0
      %v3590 = vsel %vm3129, %v3026, 0
      %v3593 = vsel %vm3129, %v3027, 0
      %v3596 = vsel %vm3129, %v3028, 0
      %v3599 = vsel %vm3129, %v3029, 0
      %v3602 = vsel %vm3129, %v3030, 0
      %v3605 = vsel %vm3129, %v3031, 0
      %v3608 = vsel %vm3129, %v3032, 0
      %v3611 = vsel %vm3129, %v3033, 0
      %v3614 = vsel %vm3129, %v3034, 0
      %v3617 = vsel %vm3129, %v3035, 0
      %v3620 = vsel %vm3129, %v3036, 0
      %v3623 = vsel %vm3129, %v3037, 0
      %v3626 = vsel %vm3129, %v3038, 0
      %v3629 = vsel %vm3129, %v3039, 0
      %v3632 = vsel %vm3129, %v3040, 0
      %v3635 = vsel %vm3129, %v3041, 0
      %v3638 = vsel %vm3129, %v3042, 0
      %v3641 = vsel %vm3129, %v3043, 0
      %v3644 = vsel %vm3129, %v3044, 0
      %v3647 = vsel %vm3129, %v3045, 0
      %v3650 = vsel %vm3129, %v3046, 0
      %v3653 = vsel %vm3129, %v3047, 0
      %v3656 = vsel %vm3129, %v3048, 0
      %v3659 = vsel %vm3129, %v3049, 0
      %v3662 = vsel %vm3129, %v3050, 0
      %v3665 = vsel %vm3129, %v3051, 0
      %v3668 = vsel %vm3129, %v3052, 0
      %v3671 = vsel %vm3129, %v3053, 0
      %v3674 = vsel %vm3129, %v3054, 0
      %v3677 = vsel %vm3129, %v3055, 0
      %v3680 = vsel %vm3129, %v3056, 0
      %v3683 = vsel %vm3129, %v3057, 0
      %v3686 = vsel %vm3129, %v3058, 0
      %v3689 = vsel %vm3129, %v3059, 0
      %v3692 = vsel %vm3129, %v3060, 0
      %v3695 = vsel %vm3129, %v3061, 0
      %v3698 = vsel %vm3129, %v3062, 0
      %v3701 = vsel %vm3129, %v3063, 0
      %v3704 = vsel %vm3129, %v3064, 0
      %v3707 = vsel %vm3129, %v3065, 0
      %v3710 = vsel %vm3129, %v3066, 0
      %v3713 = vsel %vm3129, %v3067, 0
      %v3716 = vsel %vm3129, %v3068, 0
      %v3719 = vsel %vm3129, %v3069, 0
      %v3722 = vsel %vm3129, %v3070, 0
      %v3725 = vsel %vm3129, %v3071, 0
      %v3728 = vsel %vm3129, %v3072, 0
      %v3731 = vsel %vm3129, %v3073, 0
      %v3734 = vsel %vm3129, %v3074, 0
      %v3737 = vsel %vm3129, %v3075, 0
      %v3740 = vsel %vm3129, %v3076, 0
      %v3743 = vsel %vm3129, %v3077, 0
      %v3746 = vsel %vm3129, %v3078, 0
      %v3749 = vsel %vm3129, %v3079, 0
      %v3752 = vsel %vm3129, %v3080, 0
      %v3755 = vsel %vm3129, %v3081, 0
      %v3758 = vsel %vm3129, %v3082, 0
      %v3761 = vsel %vm3129, %v3083, 0
      %v3764 = vsel %vm3129, %v3084, 0
      %v3767 = vsel %vm3129, %v3085, 0
      %v3770 = vsel %vm3129, %v3086, 0
      %v3773 = vsel %vm3129, %v3087, 0
      %v3776 = vsel %vm3129, %v3088, 0
      %v3779 = vsel %vm3129, %v3089, 0
      %v3782 = vsel %vm3129, %v3090, 0
      %v3785 = vsel %vm3129, %v3091, 0
      %v3788 = vsel %vm3129, %v3092, 0
      %v3791 = vsel %vm3129, %v3093, 0
      %v3794 = vsel %vm3129, %v3094, 0
      %v3797 = vsel %vm3129, %v3095, 0
      %v3800 = vsel %vm3129, %v3096, 0
      %v3803 = vsel %vm3129, %v3097, 0
      %v3806 = vsel %vm3129, %v3098, 0
      %v3809 = vsel %vm3129, %v3099, 0
      %v3812 = vsel %vm3129, %v3100, 0
      %v3815 = vsel %vm3129, %v3101, 0
      %v3818 = vsel %vm3129, %v3102, 0
      %v3821 = vsel %vm3129, %v3103, 0
      %v3824 = vsel %vm3129, %v3104, 0
      %v3827 = vsel %vm3129, %v3105, 0
      %v3830 = vsel %vm3129, %v3106, 0
      %v3833 = vsel %vm3129, %v3107, 0
      %v3836 = vsel %vm3129, %v3108, 0
      %v3839 = vsel %vm3129, %v3109, 0
      %v3842 = vsel %vm3129, %v3110, 0
      %v3845 = vsel %vm3129, %v3111, 0
      %v3848 = vsel %vm3129, %v3112, 0
      %v3851 = vsel %vm3129, %v3113, 0
      %v3854 = vsel %vm3129, %v3114, 0
      %v3857 = vsel %vm3129, %v3115, 0
      %v3860 = vsel %vm3129, %v3116, 0
      %v3863 = vsel %vm3129, %v3117, 0
      %v3866 = vsel %vm3129, %v3118, 0
      %v3869 = vsel %vm3129, %v3119, 0
      %v3872 = vsel %vm3129, %v3120, 0
      %v3875 = vsel %vm3129, %v3121, 0
      %v3878 = vsel %vm3129, %v3122, 0
      %v3881 = vsel %vm3129, %v3123, 0
      %v3884 = vsel %vm3129, %v3124, 0
      %v3887 = vsel %vm3129, %v3125, 0
      %v3890 = vsel %vm3129, %v3126, 0
      %v3893 = vsel %vm3129, %v3127, 0
      %v3896 = vsel %vm3129, %v3128, 0
      %vm3898 = vcmask 1043456
      %vm3899 = vcmask 1044480
      %v3900 = vsel %vm3898, 4294967295, 65535
      %v3901 = vsel %vm3899, %v3900, 0
      %v3903 = vand.u32 %v1848, %v3901
      %3905 = vmatpush.bf16.msra.mxu0 0
      %3906 = vmatpush.bf16.msra.mxu0 0
      %3907 = vmatpush.bf16.msra.mxu0 0
      %3908 = vmatpush.bf16.msra.mxu0 0
      %3909 = vmatpush.bf16.msra.mxu0 0
      %3910 = vmatpush.bf16.msra.mxu0 0
      %3911 = vmatpush.bf16.msra.mxu0 0
      %3912 = vmatpush.bf16.msra.mxu0 %v3903
      %3913 = vmatmul.bf16.gmra.mxu0 %v3131
      %v3914 = vpop.f32.mrf.mxu0
      %v3915 = vadd.f32 0.0, %v3914
      %v3916 = vpop.f32.mrf.mxu0
      %v3917 = vadd.f32 0.0, %v3916
      %3918 = vmatmul.bf16.gmra.mxu0 %v3134
      %v3919 = vpop.f32.mrf.mxu0
      %v3920 = vadd.f32 0.0, %v3919
      %v3921 = vpop.f32.mrf.mxu0
      %v3922 = vadd.f32 0.0, %v3921
      %3923 = vmatmul.bf16.gmra.mxu0 %v3137
      %v3924 = vpop.f32.mrf.mxu0
      %v3925 = vadd.f32 0.0, %v3924
      %v3926 = vpop.f32.mrf.mxu0
      %v3927 = vadd.f32 0.0, %v3926
      %3928 = vmatmul.bf16.gmra.mxu0 %v3140
      %v3929 = vpop.f32.mrf.mxu0
      %v3930 = vadd.f32 0.0, %v3929
      %v3931 = vpop.f32.mrf.mxu0
      %v3932 = vadd.f32 0.0, %v3931
      %3933 = vmatmul.bf16.gmra.mxu0 %v3143
      %v3934 = vpop.f32.mrf.mxu0
      %v3935 = vadd.f32 0.0, %v3934
      %v3936 = vpop.f32.mrf.mxu0
      %v3937 = vadd.f32 0.0, %v3936
      %3938 = vmatmul.bf16.gmra.mxu0 %v3146
      %v3939 = vpop.f32.mrf.mxu0
      %v3940 = vadd.f32 0.0, %v3939
      %v3941 = vpop.f32.mrf.mxu0
      %v3942 = vadd.f32 0.0, %v3941
      %3943 = vmatmul.bf16.gmra.mxu0 %v3149
      %v3944 = vpop.f32.mrf.mxu0
      %v3945 = vadd.f32 0.0, %v3944
      %v3946 = vpop.f32.mrf.mxu0
      %v3947 = vadd.f32 0.0, %v3946
      %3948 = vmatmul.bf16.gmra.mxu0 %v3152
      %v3949 = vpop.f32.mrf.mxu0
      %v3950 = vadd.f32 0.0, %v3949
      %v3951 = vpop.f32.mrf.mxu0
      %v3952 = vadd.f32 0.0, %v3951
      %3953 = vmatmul.bf16.gmra.mxu0 %v3155
      %v3954 = vpop.f32.mrf.mxu0
      %v3955 = vadd.f32 0.0, %v3954
      %v3956 = vpop.f32.mrf.mxu0
      %v3957 = vadd.f32 0.0, %v3956
      %3958 = vmatmul.bf16.gmra.mxu0 %v3158
      %v3959 = vpop.f32.mrf.mxu0
      %v3960 = vadd.f32 0.0, %v3959
      %v3961 = vpop.f32.mrf.mxu0
      %v3962 = vadd.f32 0.0, %v3961
      %3963 = vmatmul.bf16.gmra.mxu0 %v3161
      %v3964 = vpop.f32.mrf.mxu0
      %v3965 = vadd.f32 0.0, %v3964
      %v3966 = vpop.f32.mrf.mxu0
      %v3967 = vadd.f32 0.0, %v3966
      %3968 = vmatmul.bf16.gmra.mxu0 %v3164
      %v3969 = vpop.f32.mrf.mxu0
      %v3970 = vadd.f32 0.0, %v3969
      %v3971 = vpop.f32.mrf.mxu0
      %v3972 = vadd.f32 0.0, %v3971
      %3973 = vmatmul.bf16.gmra.mxu0 %v3167
      %v3974 = vpop.f32.mrf.mxu0
      %v3975 = vadd.f32 0.0, %v3974
      %v3976 = vpop.f32.mrf.mxu0
      %v3977 = vadd.f32 0.0, %v3976
      %3978 = vmatmul.bf16.gmra.mxu0 %v3170
      %v3979 = vpop.f32.mrf.mxu0
      %v3980 = vadd.f32 0.0, %v3979
      %v3981 = vpop.f32.mrf.mxu0
      %v3982 = vadd.f32 0.0, %v3981
      %3983 = vmatmul.bf16.gmra.mxu0 %v3173
      %v3984 = vpop.f32.mrf.mxu0
      %v3985 = vadd.f32 0.0, %v3984
      %v3986 = vpop.f32.mrf.mxu0
      %v3987 = vadd.f32 0.0, %v3986
      %3988 = vmatmul.bf16.gmra.mxu0 %v3176
      %v3989 = vpop.f32.mrf.mxu0
      %v3990 = vadd.f32 0.0, %v3989
      %v3991 = vpop.f32.mrf.mxu0
      %v3992 = vadd.f32 0.0, %v3991
      %3993 = vmatmul.bf16.gmra.mxu0 %v3179
      %v3994 = vpop.f32.mrf.mxu0
      %v3995 = vadd.f32 0.0, %v3994
      %v3996 = vpop.f32.mrf.mxu0
      %v3997 = vadd.f32 0.0, %v3996
      %3998 = vmatmul.bf16.gmra.mxu0 %v3182
      %v3999 = vpop.f32.mrf.mxu0
      %v4000 = vadd.f32 0.0, %v3999
      %v4001 = vpop.f32.mrf.mxu0
      %v4002 = vadd.f32 0.0, %v4001
      %4003 = vmatmul.bf16.gmra.mxu0 %v3185
      %v4004 = vpop.f32.mrf.mxu0
      %v4005 = vadd.f32 0.0, %v4004
      %v4006 = vpop.f32.mrf.mxu0
      %v4007 = vadd.f32 0.0, %v4006
      %4008 = vmatmul.bf16.gmra.mxu0 %v3188
      %v4009 = vpop.f32.mrf.mxu0
      %v4010 = vadd.f32 0.0, %v4009
      %v4011 = vpop.f32.mrf.mxu0
      %v4012 = vadd.f32 0.0, %v4011
      %4013 = vmatmul.bf16.gmra.mxu0 %v3191
      %v4014 = vpop.f32.mrf.mxu0
      %v4015 = vadd.f32 0.0, %v4014
      %v4016 = vpop.f32.mrf.mxu0
      %v4017 = vadd.f32 0.0, %v4016
      %4018 = vmatmul.bf16.gmra.mxu0 %v3194
      %v4019 = vpop.f32.mrf.mxu0
      %v4020 = vadd.f32 0.0, %v4019
      %v4021 = vpop.f32.mrf.mxu0
      %v4022 = vadd.f32 0.0, %v4021
      %4023 = vmatmul.bf16.gmra.mxu0 %v3197
      %v4024 = vpop.f32.mrf.mxu0
      %v4025 = vadd.f32 0.0, %v4024
      %v4026 = vpop.f32.mrf.mxu0
      %v4027 = vadd.f32 0.0, %v4026
      %4028 = vmatmul.bf16.gmra.mxu0 %v3200
      %v4029 = vpop.f32.mrf.mxu0
      %v4030 = vadd.f32 0.0, %v4029
      %v4031 = vpop.f32.mrf.mxu0
      %v4032 = vadd.f32 0.0, %v4031
      %4033 = vmatmul.bf16.gmra.mxu0 %v3203
      %v4034 = vpop.f32.mrf.mxu0
      %v4035 = vadd.f32 0.0, %v4034
      %v4036 = vpop.f32.mrf.mxu0
      %v4037 = vadd.f32 0.0, %v4036
      %4038 = vmatmul.bf16.gmra.mxu0 %v3206
      %v4039 = vpop.f32.mrf.mxu0
      %v4040 = vadd.f32 0.0, %v4039
      %v4041 = vpop.f32.mrf.mxu0
      %v4042 = vadd.f32 0.0, %v4041
      %4043 = vmatmul.bf16.gmra.mxu0 %v3209
      %v4044 = vpop.f32.mrf.mxu0
      %v4045 = vadd.f32 0.0, %v4044
      %v4046 = vpop.f32.mrf.mxu0
      %v4047 = vadd.f32 0.0, %v4046
      %4048 = vmatmul.bf16.gmra.mxu0 %v3212
      %v4049 = vpop.f32.mrf.mxu0
      %v4050 = vadd.f32 0.0, %v4049
      %v4051 = vpop.f32.mrf.mxu0
      %v4052 = vadd.f32 0.0, %v4051
      %4053 = vmatmul.bf16.gmra.mxu0 %v3215
      %v4054 = vpop.f32.mrf.mxu0
      %v4055 = vadd.f32 0.0, %v4054
      %v4056 = vpop.f32.mrf.mxu0
      %v4057 = vadd.f32 0.0, %v4056
      %4058 = vmatmul.bf16.gmra.mxu0 %v3218
      %v4059 = vpop.f32.mrf.mxu0
      %v4060 = vadd.f32 0.0, %v4059
      %v4061 = vpop.f32.mrf.mxu0
      %v4062 = vadd.f32 0.0, %v4061
      %4063 = vmatmul.bf16.gmra.mxu0 %v3221
      %v4064 = vpop.f32.mrf.mxu0
      %v4065 = vadd.f32 0.0, %v4064
      %v4066 = vpop.f32.mrf.mxu0
      %v4067 = vadd.f32 0.0, %v4066
      %4068 = vmatmul.bf16.gmra.mxu0 %v3224
      %v4069 = vpop.f32.mrf.mxu0
      %v4070 = vadd.f32 0.0, %v4069
      %v4071 = vpop.f32.mrf.mxu0
      %v4072 = vadd.f32 0.0, %v4071
      %4073 = vmatmul.bf16.gmra.mxu0 %v3227
      %v4074 = vpop.f32.mrf.mxu0
      %v4075 = vadd.f32 0.0, %v4074
      %v4076 = vpop.f32.mrf.mxu0
      %v4077 = vadd.f32 0.0, %v4076
      %4078 = vmatmul.bf16.gmra.mxu0 %v3230
      %v4079 = vpop.f32.mrf.mxu0
      %v4080 = vadd.f32 0.0, %v4079
      %v4081 = vpop.f32.mrf.mxu0
      %v4082 = vadd.f32 0.0, %v4081
      %4083 = vmatmul.bf16.gmra.mxu0 %v3233
      %v4084 = vpop.f32.mrf.mxu0
      %v4085 = vadd.f32 0.0, %v4084
      %v4086 = vpop.f32.mrf.mxu0
      %v4087 = vadd.f32 0.0, %v4086
      %4088 = vmatmul.bf16.gmra.mxu0 %v3236
      %v4089 = vpop.f32.mrf.mxu0
      %v4090 = vadd.f32 0.0, %v4089
      %v4091 = vpop.f32.mrf.mxu0
      %v4092 = vadd.f32 0.0, %v4091
      %4093 = vmatmul.bf16.gmra.mxu0 %v3239
      %v4094 = vpop.f32.mrf.mxu0
      %v4095 = vadd.f32 0.0, %v4094
      %v4096 = vpop.f32.mrf.mxu0
      %v4097 = vadd.f32 0.0, %v4096
      %4098 = vmatmul.bf16.gmra.mxu0 %v3242
      %v4099 = vpop.f32.mrf.mxu0
      %v4100 = vadd.f32 0.0, %v4099
      %v4101 = vpop.f32.mrf.mxu0
      %v4102 = vadd.f32 0.0, %v4101
      %4103 = vmatmul.bf16.gmra.mxu0 %v3245
      %v4104 = vpop.f32.mrf.mxu0
      %v4105 = vadd.f32 0.0, %v4104
      %v4106 = vpop.f32.mrf.mxu0
      %v4107 = vadd.f32 0.0, %v4106
      %4108 = vmatmul.bf16.gmra.mxu0 %v3248
      %v4109 = vpop.f32.mrf.mxu0
      %v4110 = vadd.f32 0.0, %v4109
      %v4111 = vpop.f32.mrf.mxu0
      %v4112 = vadd.f32 0.0, %v4111
      %4113 = vmatmul.bf16.gmra.mxu0 %v3251
      %v4114 = vpop.f32.mrf.mxu0
      %v4115 = vadd.f32 0.0, %v4114
      %v4116 = vpop.f32.mrf.mxu0
      %v4117 = vadd.f32 0.0, %v4116
      %4118 = vmatmul.bf16.gmra.mxu0 %v3254
      %v4119 = vpop.f32.mrf.mxu0
      %v4120 = vadd.f32 0.0, %v4119
      %v4121 = vpop.f32.mrf.mxu0
      %v4122 = vadd.f32 0.0, %v4121
      %4123 = vmatmul.bf16.gmra.mxu0 %v3257
      %v4124 = vpop.f32.mrf.mxu0
      %v4125 = vadd.f32 0.0, %v4124
      %v4126 = vpop.f32.mrf.mxu0
      %v4127 = vadd.f32 0.0, %v4126
      %4128 = vmatmul.bf16.gmra.mxu0 %v3260
      %v4129 = vpop.f32.mrf.mxu0
      %v4130 = vadd.f32 0.0, %v4129
      %v4131 = vpop.f32.mrf.mxu0
      %v4132 = vadd.f32 0.0, %v4131
      %4133 = vmatmul.bf16.gmra.mxu0 %v3263
      %v4134 = vpop.f32.mrf.mxu0
      %v4135 = vadd.f32 0.0, %v4134
      %v4136 = vpop.f32.mrf.mxu0
      %v4137 = vadd.f32 0.0, %v4136
      %4138 = vmatmul.bf16.gmra.mxu0 %v3266
      %v4139 = vpop.f32.mrf.mxu0
      %v4140 = vadd.f32 0.0, %v4139
      %v4141 = vpop.f32.mrf.mxu0
      %v4142 = vadd.f32 0.0, %v4141
      %4143 = vmatmul.bf16.gmra.mxu0 %v3269
      %v4144 = vpop.f32.mrf.mxu0
      %v4145 = vadd.f32 0.0, %v4144
      %v4146 = vpop.f32.mrf.mxu0
      %v4147 = vadd.f32 0.0, %v4146
      %4148 = vmatmul.bf16.gmra.mxu0 %v3272
      %v4149 = vpop.f32.mrf.mxu0
      %v4150 = vadd.f32 0.0, %v4149
      %v4151 = vpop.f32.mrf.mxu0
      %v4152 = vadd.f32 0.0, %v4151
      %4153 = vmatmul.bf16.gmra.mxu0 %v3275
      %v4154 = vpop.f32.mrf.mxu0
      %v4155 = vadd.f32 0.0, %v4154
      %v4156 = vpop.f32.mrf.mxu0
      %v4157 = vadd.f32 0.0, %v4156
      %4158 = vmatmul.bf16.gmra.mxu0 %v3278
      %v4159 = vpop.f32.mrf.mxu0
      %v4160 = vadd.f32 0.0, %v4159
      %v4161 = vpop.f32.mrf.mxu0
      %v4162 = vadd.f32 0.0, %v4161
      %4163 = vmatmul.bf16.gmra.mxu0 %v3281
      %v4164 = vpop.f32.mrf.mxu0
      %v4165 = vadd.f32 0.0, %v4164
      %v4166 = vpop.f32.mrf.mxu0
      %v4167 = vadd.f32 0.0, %v4166
      %4168 = vmatmul.bf16.gmra.mxu0 %v3284
      %v4169 = vpop.f32.mrf.mxu0
      %v4170 = vadd.f32 0.0, %v4169
      %v4171 = vpop.f32.mrf.mxu0
      %v4172 = vadd.f32 0.0, %v4171
      %4173 = vmatmul.bf16.gmra.mxu0 %v3287
      %v4174 = vpop.f32.mrf.mxu0
      %v4175 = vadd.f32 0.0, %v4174
      %v4176 = vpop.f32.mrf.mxu0
      %v4177 = vadd.f32 0.0, %v4176
      %4178 = vmatmul.bf16.gmra.mxu0 %v3290
      %v4179 = vpop.f32.mrf.mxu0
      %v4180 = vadd.f32 0.0, %v4179
      %v4181 = vpop.f32.mrf.mxu0
      %v4182 = vadd.f32 0.0, %v4181
      %4183 = vmatmul.bf16.gmra.mxu0 %v3293
      %v4184 = vpop.f32.mrf.mxu0
      %v4185 = vadd.f32 0.0, %v4184
      %v4186 = vpop.f32.mrf.mxu0
      %v4187 = vadd.f32 0.0, %v4186
      %4188 = vmatmul.bf16.gmra.mxu0 %v3296
      %v4189 = vpop.f32.mrf.mxu0
      %v4190 = vadd.f32 0.0, %v4189
      %v4191 = vpop.f32.mrf.mxu0
      %v4192 = vadd.f32 0.0, %v4191
      %4193 = vmatmul.bf16.gmra.mxu0 %v3299
      %v4194 = vpop.f32.mrf.mxu0
      %v4195 = vadd.f32 0.0, %v4194
      %v4196 = vpop.f32.mrf.mxu0
      %v4197 = vadd.f32 0.0, %v4196
      %4198 = vmatmul.bf16.gmra.mxu0 %v3302
      %v4199 = vpop.f32.mrf.mxu0
      %v4200 = vadd.f32 0.0, %v4199
      %v4201 = vpop.f32.mrf.mxu0
      %v4202 = vadd.f32 0.0, %v4201
      %4203 = vmatmul.bf16.gmra.mxu0 %v3305
      %v4204 = vpop.f32.mrf.mxu0
      %v4205 = vadd.f32 0.0, %v4204
      %v4206 = vpop.f32.mrf.mxu0
      %v4207 = vadd.f32 0.0, %v4206
      %4208 = vmatmul.bf16.gmra.mxu0 %v3308
      %v4209 = vpop.f32.mrf.mxu0
      %v4210 = vadd.f32 0.0, %v4209
      %v4211 = vpop.f32.mrf.mxu0
      %v4212 = vadd.f32 0.0, %v4211
      %4213 = vmatmul.bf16.gmra.mxu0 %v3311
      %v4214 = vpop.f32.mrf.mxu0
      %v4215 = vadd.f32 0.0, %v4214
      %v4216 = vpop.f32.mrf.mxu0
      %v4217 = vadd.f32 0.0, %v4216
      %4218 = vmatmul.bf16.gmra.mxu0 %v3314
      %v4219 = vpop.f32.mrf.mxu0
      %v4220 = vadd.f32 0.0, %v4219
      %v4221 = vpop.f32.mrf.mxu0
      %v4222 = vadd.f32 0.0, %v4221
      %4223 = vmatmul.bf16.gmra.mxu0 %v3317
      %v4224 = vpop.f32.mrf.mxu0
      %v4225 = vadd.f32 0.0, %v4224
      %v4226 = vpop.f32.mrf.mxu0
      %v4227 = vadd.f32 0.0, %v4226
      %4228 = vmatmul.bf16.gmra.mxu0 %v3320
      %v4229 = vpop.f32.mrf.mxu0
      %v4230 = vadd.f32 0.0, %v4229
      %v4231 = vpop.f32.mrf.mxu0
      %v4232 = vadd.f32 0.0, %v4231
      %4233 = vmatmul.bf16.gmra.mxu0 %v3323
      %v4234 = vpop.f32.mrf.mxu0
      %v4235 = vadd.f32 0.0, %v4234
      %v4236 = vpop.f32.mrf.mxu0
      %v4237 = vadd.f32 0.0, %v4236
      %4238 = vmatmul.bf16.gmra.mxu0 %v3326
      %v4239 = vpop.f32.mrf.mxu0
      %v4240 = vadd.f32 0.0, %v4239
      %v4241 = vpop.f32.mrf.mxu0
      %v4242 = vadd.f32 0.0, %v4241
      %4243 = vmatmul.bf16.gmra.mxu0 %v3329
      %v4244 = vpop.f32.mrf.mxu0
      %v4245 = vadd.f32 0.0, %v4244
      %v4246 = vpop.f32.mrf.mxu0
      %v4247 = vadd.f32 0.0, %v4246
      %4248 = vmatmul.bf16.gmra.mxu0 %v3332
      %v4249 = vpop.f32.mrf.mxu0
      %v4250 = vadd.f32 0.0, %v4249
      %v4251 = vpop.f32.mrf.mxu0
      %v4252 = vadd.f32 0.0, %v4251
      %4253 = vmatmul.bf16.gmra.mxu0 %v3335
      %v4254 = vpop.f32.mrf.mxu0
      %v4255 = vadd.f32 0.0, %v4254
      %v4256 = vpop.f32.mrf.mxu0
      %v4257 = vadd.f32 0.0, %v4256
      %4258 = vmatmul.bf16.gmra.mxu0 %v3338
      %v4259 = vpop.f32.mrf.mxu0
      %v4260 = vadd.f32 0.0, %v4259
      %v4261 = vpop.f32.mrf.mxu0
      %v4262 = vadd.f32 0.0, %v4261
      %4263 = vmatmul.bf16.gmra.mxu0 %v3341
      %v4264 = vpop.f32.mrf.mxu0
      %v4265 = vadd.f32 0.0, %v4264
      %v4266 = vpop.f32.mrf.mxu0
      %v4267 = vadd.f32 0.0, %v4266
      %4268 = vmatmul.bf16.gmra.mxu0 %v3344
      %v4269 = vpop.f32.mrf.mxu0
      %v4270 = vadd.f32 0.0, %v4269
      %v4271 = vpop.f32.mrf.mxu0
      %v4272 = vadd.f32 0.0, %v4271
      %4273 = vmatmul.bf16.gmra.mxu0 %v3347
      %v4274 = vpop.f32.mrf.mxu0
      %v4275 = vadd.f32 0.0, %v4274
      %v4276 = vpop.f32.mrf.mxu0
      %v4277 = vadd.f32 0.0, %v4276
      %4278 = vmatmul.bf16.gmra.mxu0 %v3350
      %v4279 = vpop.f32.mrf.mxu0
      %v4280 = vadd.f32 0.0, %v4279
      %v4281 = vpop.f32.mrf.mxu0
      %v4282 = vadd.f32 0.0, %v4281
      %4283 = vmatmul.bf16.gmra.mxu0 %v3353
      %v4284 = vpop.f32.mrf.mxu0
      %v4285 = vadd.f32 0.0, %v4284
      %v4286 = vpop.f32.mrf.mxu0
      %v4287 = vadd.f32 0.0, %v4286
      %4288 = vmatmul.bf16.gmra.mxu0 %v3356
      %v4289 = vpop.f32.mrf.mxu0
      %v4290 = vadd.f32 0.0, %v4289
      %v4291 = vpop.f32.mrf.mxu0
      %v4292 = vadd.f32 0.0, %v4291
      %4293 = vmatmul.bf16.gmra.mxu0 %v3359
      %v4294 = vpop.f32.mrf.mxu0
      %v4295 = vadd.f32 0.0, %v4294
      %v4296 = vpop.f32.mrf.mxu0
      %v4297 = vadd.f32 0.0, %v4296
      %4298 = vmatmul.bf16.gmra.mxu0 %v3362
      %v4299 = vpop.f32.mrf.mxu0
      %v4300 = vadd.f32 0.0, %v4299
      %v4301 = vpop.f32.mrf.mxu0
      %v4302 = vadd.f32 0.0, %v4301
      %4303 = vmatmul.bf16.gmra.mxu0 %v3365
      %v4304 = vpop.f32.mrf.mxu0
      %v4305 = vadd.f32 0.0, %v4304
      %v4306 = vpop.f32.mrf.mxu0
      %v4307 = vadd.f32 0.0, %v4306
      %4308 = vmatmul.bf16.gmra.mxu0 %v3368
      %v4309 = vpop.f32.mrf.mxu0
      %v4310 = vadd.f32 0.0, %v4309
      %v4311 = vpop.f32.mrf.mxu0
      %v4312 = vadd.f32 0.0, %v4311
      %4313 = vmatmul.bf16.gmra.mxu0 %v3371
      %v4314 = vpop.f32.mrf.mxu0
      %v4315 = vadd.f32 0.0, %v4314
      %v4316 = vpop.f32.mrf.mxu0
      %v4317 = vadd.f32 0.0, %v4316
      %4318 = vmatmul.bf16.gmra.mxu0 %v3374
      %v4319 = vpop.f32.mrf.mxu0
      %v4320 = vadd.f32 0.0, %v4319
      %v4321 = vpop.f32.mrf.mxu0
      %v4322 = vadd.f32 0.0, %v4321
      %4323 = vmatmul.bf16.gmra.mxu0 %v3377
      %v4324 = vpop.f32.mrf.mxu0
      %v4325 = vadd.f32 0.0, %v4324
      %v4326 = vpop.f32.mrf.mxu0
      %v4327 = vadd.f32 0.0, %v4326
      %4328 = vmatmul.bf16.gmra.mxu0 %v3380
      %v4329 = vpop.f32.mrf.mxu0
      %v4330 = vadd.f32 0.0, %v4329
      %v4331 = vpop.f32.mrf.mxu0
      %v4332 = vadd.f32 0.0, %v4331
      %4333 = vmatmul.bf16.gmra.mxu0 %v3383
      %v4334 = vpop.f32.mrf.mxu0
      %v4335 = vadd.f32 0.0, %v4334
      %v4336 = vpop.f32.mrf.mxu0
      %v4337 = vadd.f32 0.0, %v4336
      %4338 = vmatmul.bf16.gmra.mxu0 %v3386
      %v4339 = vpop.f32.mrf.mxu0
      %v4340 = vadd.f32 0.0, %v4339
      %v4341 = vpop.f32.mrf.mxu0
      %v4342 = vadd.f32 0.0, %v4341
      %4343 = vmatmul.bf16.gmra.mxu0 %v3389
      %v4344 = vpop.f32.mrf.mxu0
      %v4345 = vadd.f32 0.0, %v4344
      %v4346 = vpop.f32.mrf.mxu0
      %v4347 = vadd.f32 0.0, %v4346
      %4348 = vmatmul.bf16.gmra.mxu0 %v3392
      %v4349 = vpop.f32.mrf.mxu0
      %v4350 = vadd.f32 0.0, %v4349
      %v4351 = vpop.f32.mrf.mxu0
      %v4352 = vadd.f32 0.0, %v4351
      %4353 = vmatmul.bf16.gmra.mxu0 %v3395
      %v4354 = vpop.f32.mrf.mxu0
      %v4355 = vadd.f32 0.0, %v4354
      %v4356 = vpop.f32.mrf.mxu0
      %v4357 = vadd.f32 0.0, %v4356
      %4358 = vmatmul.bf16.gmra.mxu0 %v3398
      %v4359 = vpop.f32.mrf.mxu0
      %v4360 = vadd.f32 0.0, %v4359
      %v4361 = vpop.f32.mrf.mxu0
      %v4362 = vadd.f32 0.0, %v4361
      %4363 = vmatmul.bf16.gmra.mxu0 %v3401
      %v4364 = vpop.f32.mrf.mxu0
      %v4365 = vadd.f32 0.0, %v4364
      %v4366 = vpop.f32.mrf.mxu0
      %v4367 = vadd.f32 0.0, %v4366
      %4368 = vmatmul.bf16.gmra.mxu0 %v3404
      %v4369 = vpop.f32.mrf.mxu0
      %v4370 = vadd.f32 0.0, %v4369
      %v4371 = vpop.f32.mrf.mxu0
      %v4372 = vadd.f32 0.0, %v4371
      %4373 = vmatmul.bf16.gmra.mxu0 %v3407
      %v4374 = vpop.f32.mrf.mxu0
      %v4375 = vadd.f32 0.0, %v4374
      %v4376 = vpop.f32.mrf.mxu0
      %v4377 = vadd.f32 0.0, %v4376
      %4378 = vmatmul.bf16.gmra.mxu0 %v3410
      %v4379 = vpop.f32.mrf.mxu0
      %v4380 = vadd.f32 0.0, %v4379
      %v4381 = vpop.f32.mrf.mxu0
      %v4382 = vadd.f32 0.0, %v4381
      %4383 = vmatmul.bf16.gmra.mxu0 %v3413
      %v4384 = vpop.f32.mrf.mxu0
      %v4385 = vadd.f32 0.0, %v4384
      %v4386 = vpop.f32.mrf.mxu0
      %v4387 = vadd.f32 0.0, %v4386
      %4388 = vmatmul.bf16.gmra.mxu0 %v3416
      %v4389 = vpop.f32.mrf.mxu0
      %v4390 = vadd.f32 0.0, %v4389
      %v4391 = vpop.f32.mrf.mxu0
      %v4392 = vadd.f32 0.0, %v4391
      %4393 = vmatmul.bf16.gmra.mxu0 %v3419
      %v4394 = vpop.f32.mrf.mxu0
      %v4395 = vadd.f32 0.0, %v4394
      %v4396 = vpop.f32.mrf.mxu0
      %v4397 = vadd.f32 0.0, %v4396
      %4398 = vmatmul.bf16.gmra.mxu0 %v3422
      %v4399 = vpop.f32.mrf.mxu0
      %v4400 = vadd.f32 0.0, %v4399
      %v4401 = vpop.f32.mrf.mxu0
      %v4402 = vadd.f32 0.0, %v4401
      %4403 = vmatmul.bf16.gmra.mxu0 %v3425
      %v4404 = vpop.f32.mrf.mxu0
      %v4405 = vadd.f32 0.0, %v4404
      %v4406 = vpop.f32.mrf.mxu0
      %v4407 = vadd.f32 0.0, %v4406
      %4408 = vmatmul.bf16.gmra.mxu0 %v3428
      %v4409 = vpop.f32.mrf.mxu0
      %v4410 = vadd.f32 0.0, %v4409
      %v4411 = vpop.f32.mrf.mxu0
      %v4412 = vadd.f32 0.0, %v4411
      %4413 = vmatmul.bf16.gmra.mxu0 %v3431
      %v4414 = vpop.f32.mrf.mxu0
      %v4415 = vadd.f32 0.0, %v4414
      %v4416 = vpop.f32.mrf.mxu0
      %v4417 = vadd.f32 0.0, %v4416
      %4418 = vmatmul.bf16.gmra.mxu0 %v3434
      %v4419 = vpop.f32.mrf.mxu0
      %v4420 = vadd.f32 0.0, %v4419
      %v4421 = vpop.f32.mrf.mxu0
      %v4422 = vadd.f32 0.0, %v4421
      %4423 = vmatmul.bf16.gmra.mxu0 %v3437
      %v4424 = vpop.f32.mrf.mxu0
      %v4425 = vadd.f32 0.0, %v4424
      %v4426 = vpop.f32.mrf.mxu0
      %v4427 = vadd.f32 0.0, %v4426
      %4428 = vmatmul.bf16.gmra.mxu0 %v3440
      %v4429 = vpop.f32.mrf.mxu0
      %v4430 = vadd.f32 0.0, %v4429
      %v4431 = vpop.f32.mrf.mxu0
      %v4432 = vadd.f32 0.0, %v4431
      %4433 = vmatmul.bf16.gmra.mxu0 %v3443
      %v4434 = vpop.f32.mrf.mxu0
      %v4435 = vadd.f32 0.0, %v4434
      %v4436 = vpop.f32.mrf.mxu0
      %v4437 = vadd.f32 0.0, %v4436
      %4438 = vmatmul.bf16.gmra.mxu0 %v3446
      %v4439 = vpop.f32.mrf.mxu0
      %v4440 = vadd.f32 0.0, %v4439
      %v4441 = vpop.f32.mrf.mxu0
      %v4442 = vadd.f32 0.0, %v4441
      %4443 = vmatmul.bf16.gmra.mxu0 %v3449
      %v4444 = vpop.f32.mrf.mxu0
      %v4445 = vadd.f32 0.0, %v4444
      %v4446 = vpop.f32.mrf.mxu0
      %v4447 = vadd.f32 0.0, %v4446
      %4448 = vmatmul.bf16.gmra.mxu0 %v3452
      %v4449 = vpop.f32.mrf.mxu0
      %v4450 = vadd.f32 0.0, %v4449
      %v4451 = vpop.f32.mrf.mxu0
      %v4452 = vadd.f32 0.0, %v4451
      %4453 = vmatmul.bf16.gmra.mxu0 %v3455
      %v4454 = vpop.f32.mrf.mxu0
      %v4455 = vadd.f32 0.0, %v4454
      %v4456 = vpop.f32.mrf.mxu0
      %v4457 = vadd.f32 0.0, %v4456
      %4458 = vmatmul.bf16.gmra.mxu0 %v3458
      %v4459 = vpop.f32.mrf.mxu0
      %v4460 = vadd.f32 0.0, %v4459
      %v4461 = vpop.f32.mrf.mxu0
      %v4462 = vadd.f32 0.0, %v4461
      %4463 = vmatmul.bf16.gmra.mxu0 %v3461
      %v4464 = vpop.f32.mrf.mxu0
      %v4465 = vadd.f32 0.0, %v4464
      %v4466 = vpop.f32.mrf.mxu0
      %v4467 = vadd.f32 0.0, %v4466
      %4468 = vmatmul.bf16.gmra.mxu0 %v3464
      %v4469 = vpop.f32.mrf.mxu0
      %v4470 = vadd.f32 0.0, %v4469
      %v4471 = vpop.f32.mrf.mxu0
      %v4472 = vadd.f32 0.0, %v4471
      %4473 = vmatmul.bf16.gmra.mxu0 %v3467
      %v4474 = vpop.f32.mrf.mxu0
      %v4475 = vadd.f32 0.0, %v4474
      %v4476 = vpop.f32.mrf.mxu0
      %v4477 = vadd.f32 0.0, %v4476
      %4478 = vmatmul.bf16.gmra.mxu0 %v3470
      %v4479 = vpop.f32.mrf.mxu0
      %v4480 = vadd.f32 0.0, %v4479
      %v4481 = vpop.f32.mrf.mxu0
      %v4482 = vadd.f32 0.0, %v4481
      %4483 = vmatmul.bf16.gmra.mxu0 %v3473
      %v4484 = vpop.f32.mrf.mxu0
      %v4485 = vadd.f32 0.0, %v4484
      %v4486 = vpop.f32.mrf.mxu0
      %v4487 = vadd.f32 0.0, %v4486
      %4488 = vmatmul.bf16.gmra.mxu0 %v3476
      %v4489 = vpop.f32.mrf.mxu0
      %v4490 = vadd.f32 0.0, %v4489
      %v4491 = vpop.f32.mrf.mxu0
      %v4492 = vadd.f32 0.0, %v4491
      %4493 = vmatmul.bf16.gmra.mxu0 %v3479
      %v4494 = vpop.f32.mrf.mxu0
      %v4495 = vadd.f32 0.0, %v4494
      %v4496 = vpop.f32.mrf.mxu0
      %v4497 = vadd.f32 0.0, %v4496
      %4498 = vmatmul.bf16.gmra.mxu0 %v3482
      %v4499 = vpop.f32.mrf.mxu0
      %v4500 = vadd.f32 0.0, %v4499
      %v4501 = vpop.f32.mrf.mxu0
      %v4502 = vadd.f32 0.0, %v4501
      %4503 = vmatmul.bf16.gmra.mxu0 %v3485
      %v4504 = vpop.f32.mrf.mxu0
      %v4505 = vadd.f32 0.0, %v4504
      %v4506 = vpop.f32.mrf.mxu0
      %v4507 = vadd.f32 0.0, %v4506
      %4508 = vmatmul.bf16.gmra.mxu0 %v3488
      %v4509 = vpop.f32.mrf.mxu0
      %v4510 = vadd.f32 0.0, %v4509
      %v4511 = vpop.f32.mrf.mxu0
      %v4512 = vadd.f32 0.0, %v4511
      %4513 = vmatmul.bf16.gmra.mxu0 %v3491
      %v4514 = vpop.f32.mrf.mxu0
      %v4515 = vadd.f32 0.0, %v4514
      %v4516 = vpop.f32.mrf.mxu0
      %v4517 = vadd.f32 0.0, %v4516
      %4518 = vmatmul.bf16.gmra.mxu0 %v3494
      %v4519 = vpop.f32.mrf.mxu0
      %v4520 = vadd.f32 0.0, %v4519
      %v4521 = vpop.f32.mrf.mxu0
      %v4522 = vadd.f32 0.0, %v4521
      %4523 = vmatmul.bf16.gmra.mxu0 %v3497
      %v4524 = vpop.f32.mrf.mxu0
      %v4525 = vadd.f32 0.0, %v4524
      %v4526 = vpop.f32.mrf.mxu0
      %v4527 = vadd.f32 0.0, %v4526
      %4528 = vmatmul.bf16.gmra.mxu0 %v3500
      %v4529 = vpop.f32.mrf.mxu0
      %v4530 = vadd.f32 0.0, %v4529
      %v4531 = vpop.f32.mrf.mxu0
      %v4532 = vadd.f32 0.0, %v4531
      %4533 = vmatmul.bf16.gmra.mxu0 %v3503
      %v4534 = vpop.f32.mrf.mxu0
      %v4535 = vadd.f32 0.0, %v4534
      %v4536 = vpop.f32.mrf.mxu0
      %v4537 = vadd.f32 0.0, %v4536
      %4538 = vmatmul.bf16.gmra.mxu0 %v3506
      %v4539 = vpop.f32.mrf.mxu0
      %v4540 = vadd.f32 0.0, %v4539
      %v4541 = vpop.f32.mrf.mxu0
      %v4542 = vadd.f32 0.0, %v4541
      %4543 = vmatmul.bf16.gmra.mxu0 %v3509
      %v4544 = vpop.f32.mrf.mxu0
      %v4545 = vadd.f32 0.0, %v4544
      %v4546 = vpop.f32.mrf.mxu0
      %v4547 = vadd.f32 0.0, %v4546
      %4548 = vmatmul.bf16.gmra.mxu0 %v3512
      %v4549 = vpop.f32.mrf.mxu0
      %v4550 = vadd.f32 0.0, %v4549
      %v4551 = vpop.f32.mrf.mxu0
      %v4552 = vadd.f32 0.0, %v4551
      %4553 = vmatmul.bf16.gmra.mxu0 %v3515
      %v4554 = vpop.f32.mrf.mxu0
      %v4555 = vadd.f32 0.0, %v4554
      %v4556 = vpop.f32.mrf.mxu0
      %v4557 = vadd.f32 0.0, %v4556
      %4558 = vmatmul.bf16.gmra.mxu0 %v3518
      %v4559 = vpop.f32.mrf.mxu0
      %v4560 = vadd.f32 0.0, %v4559
      %v4561 = vpop.f32.mrf.mxu0
      %v4562 = vadd.f32 0.0, %v4561
      %4563 = vmatmul.bf16.gmra.mxu0 %v3521
      %v4564 = vpop.f32.mrf.mxu0
      %v4565 = vadd.f32 0.0, %v4564
      %v4566 = vpop.f32.mrf.mxu0
      %v4567 = vadd.f32 0.0, %v4566
      %4568 = vmatmul.bf16.gmra.mxu0 %v3524
      %v4569 = vpop.f32.mrf.mxu0
      %v4570 = vadd.f32 0.0, %v4569
      %v4571 = vpop.f32.mrf.mxu0
      %v4572 = vadd.f32 0.0, %v4571
      %4573 = vmatmul.bf16.gmra.mxu0 %v3527
      %v4574 = vpop.f32.mrf.mxu0
      %v4575 = vadd.f32 0.0, %v4574
      %v4576 = vpop.f32.mrf.mxu0
      %v4577 = vadd.f32 0.0, %v4576
      %4578 = vmatmul.bf16.gmra.mxu0 %v3530
      %v4579 = vpop.f32.mrf.mxu0
      %v4580 = vadd.f32 0.0, %v4579
      %v4581 = vpop.f32.mrf.mxu0
      %v4582 = vadd.f32 0.0, %v4581
      %4583 = vmatmul.bf16.gmra.mxu0 %v3533
      %v4584 = vpop.f32.mrf.mxu0
      %v4585 = vadd.f32 0.0, %v4584
      %v4586 = vpop.f32.mrf.mxu0
      %v4587 = vadd.f32 0.0, %v4586
      %4588 = vmatmul.bf16.gmra.mxu0 %v3536
      %v4589 = vpop.f32.mrf.mxu0
      %v4590 = vadd.f32 0.0, %v4589
      %v4591 = vpop.f32.mrf.mxu0
      %v4592 = vadd.f32 0.0, %v4591
      %4593 = vmatmul.bf16.gmra.mxu0 %v3539
      %v4594 = vpop.f32.mrf.mxu0
      %v4595 = vadd.f32 0.0, %v4594
      %v4596 = vpop.f32.mrf.mxu0
      %v4597 = vadd.f32 0.0, %v4596
      %4598 = vmatmul.bf16.gmra.mxu0 %v3542
      %v4599 = vpop.f32.mrf.mxu0
      %v4600 = vadd.f32 0.0, %v4599
      %v4601 = vpop.f32.mrf.mxu0
      %v4602 = vadd.f32 0.0, %v4601
      %4603 = vmatmul.bf16.gmra.mxu0 %v3545
      %v4604 = vpop.f32.mrf.mxu0
      %v4605 = vadd.f32 0.0, %v4604
      %v4606 = vpop.f32.mrf.mxu0
      %v4607 = vadd.f32 0.0, %v4606
      %4608 = vmatmul.bf16.gmra.mxu0 %v3548
      %v4609 = vpop.f32.mrf.mxu0
      %v4610 = vadd.f32 0.0, %v4609
      %v4611 = vpop.f32.mrf.mxu0
      %v4612 = vadd.f32 0.0, %v4611
      %4613 = vmatmul.bf16.gmra.mxu0 %v3551
      %v4614 = vpop.f32.mrf.mxu0
      %v4615 = vadd.f32 0.0, %v4614
      %v4616 = vpop.f32.mrf.mxu0
      %v4617 = vadd.f32 0.0, %v4616
      %4618 = vmatmul.bf16.gmra.mxu0 %v3554
      %v4619 = vpop.f32.mrf.mxu0
      %v4620 = vadd.f32 0.0, %v4619
      %v4621 = vpop.f32.mrf.mxu0
      %v4622 = vadd.f32 0.0, %v4621
      %4623 = vmatmul.bf16.gmra.mxu0 %v3557
      %v4624 = vpop.f32.mrf.mxu0
      %v4625 = vadd.f32 0.0, %v4624
      %v4626 = vpop.f32.mrf.mxu0
      %v4627 = vadd.f32 0.0, %v4626
      %4628 = vmatmul.bf16.gmra.mxu0 %v3560
      %v4629 = vpop.f32.mrf.mxu0
      %v4630 = vadd.f32 0.0, %v4629
      %v4631 = vpop.f32.mrf.mxu0
      %v4632 = vadd.f32 0.0, %v4631
      %4633 = vmatmul.bf16.gmra.mxu0 %v3563
      %v4634 = vpop.f32.mrf.mxu0
      %v4635 = vadd.f32 0.0, %v4634
      %v4636 = vpop.f32.mrf.mxu0
      %v4637 = vadd.f32 0.0, %v4636
      %4638 = vmatmul.bf16.gmra.mxu0 %v3566
      %v4639 = vpop.f32.mrf.mxu0
      %v4640 = vadd.f32 0.0, %v4639
      %v4641 = vpop.f32.mrf.mxu0
      %v4642 = vadd.f32 0.0, %v4641
      %4643 = vmatmul.bf16.gmra.mxu0 %v3569
      %v4644 = vpop.f32.mrf.mxu0
      %v4645 = vadd.f32 0.0, %v4644
      %v4646 = vpop.f32.mrf.mxu0
      %v4647 = vadd.f32 0.0, %v4646
      %4648 = vmatmul.bf16.gmra.mxu0 %v3572
      %v4649 = vpop.f32.mrf.mxu0
      %v4650 = vadd.f32 0.0, %v4649
      %v4651 = vpop.f32.mrf.mxu0
      %v4652 = vadd.f32 0.0, %v4651
      %4653 = vmatmul.bf16.gmra.mxu0 %v3575
      %v4654 = vpop.f32.mrf.mxu0
      %v4655 = vadd.f32 0.0, %v4654
      %v4656 = vpop.f32.mrf.mxu0
      %v4657 = vadd.f32 0.0, %v4656
      %4658 = vmatmul.bf16.gmra.mxu0 %v3578
      %v4659 = vpop.f32.mrf.mxu0
      %v4660 = vadd.f32 0.0, %v4659
      %v4661 = vpop.f32.mrf.mxu0
      %v4662 = vadd.f32 0.0, %v4661
      %4663 = vmatmul.bf16.gmra.mxu0 %v3581
      %v4664 = vpop.f32.mrf.mxu0
      %v4665 = vadd.f32 0.0, %v4664
      %v4666 = vpop.f32.mrf.mxu0
      %v4667 = vadd.f32 0.0, %v4666
      %4668 = vmatmul.bf16.gmra.mxu0 %v3584
      %v4669 = vpop.f32.mrf.mxu0
      %v4670 = vadd.f32 0.0, %v4669
      %v4671 = vpop.f32.mrf.mxu0
      %v4672 = vadd.f32 0.0, %v4671
      %4673 = vmatmul.bf16.gmra.mxu0 %v3587
      %v4674 = vpop.f32.mrf.mxu0
      %v4675 = vadd.f32 0.0, %v4674
      %v4676 = vpop.f32.mrf.mxu0
      %v4677 = vadd.f32 0.0, %v4676
      %4678 = vmatmul.bf16.gmra.mxu0 %v3590
      %v4679 = vpop.f32.mrf.mxu0
      %v4680 = vadd.f32 0.0, %v4679
      %v4681 = vpop.f32.mrf.mxu0
      %v4682 = vadd.f32 0.0, %v4681
      %4683 = vmatmul.bf16.gmra.mxu0 %v3593
      %v4684 = vpop.f32.mrf.mxu0
      %v4685 = vadd.f32 0.0, %v4684
      %v4686 = vpop.f32.mrf.mxu0
      %v4687 = vadd.f32 0.0, %v4686
      %4688 = vmatmul.bf16.gmra.mxu0 %v3596
      %v4689 = vpop.f32.mrf.mxu0
      %v4690 = vadd.f32 0.0, %v4689
      %v4691 = vpop.f32.mrf.mxu0
      %v4692 = vadd.f32 0.0, %v4691
      %4693 = vmatmul.bf16.gmra.mxu0 %v3599
      %v4694 = vpop.f32.mrf.mxu0
      %v4695 = vadd.f32 0.0, %v4694
      %v4696 = vpop.f32.mrf.mxu0
      %v4697 = vadd.f32 0.0, %v4696
      %4698 = vmatmul.bf16.gmra.mxu0 %v3602
      %v4699 = vpop.f32.mrf.mxu0
      %v4700 = vadd.f32 0.0, %v4699
      %v4701 = vpop.f32.mrf.mxu0
      %v4702 = vadd.f32 0.0, %v4701
      %4703 = vmatmul.bf16.gmra.mxu0 %v3605
      %v4704 = vpop.f32.mrf.mxu0
      %v4705 = vadd.f32 0.0, %v4704
      %v4706 = vpop.f32.mrf.mxu0
      %v4707 = vadd.f32 0.0, %v4706
      %4708 = vmatmul.bf16.gmra.mxu0 %v3608
      %v4709 = vpop.f32.mrf.mxu0
      %v4710 = vadd.f32 0.0, %v4709
      %v4711 = vpop.f32.mrf.mxu0
      %v4712 = vadd.f32 0.0, %v4711
      %4713 = vmatmul.bf16.gmra.mxu0 %v3611
      %v4714 = vpop.f32.mrf.mxu0
      %v4715 = vadd.f32 0.0, %v4714
      %v4716 = vpop.f32.mrf.mxu0
      %v4717 = vadd.f32 0.0, %v4716
      %4718 = vmatmul.bf16.gmra.mxu0 %v3614
      %v4719 = vpop.f32.mrf.mxu0
      %v4720 = vadd.f32 0.0, %v4719
      %v4721 = vpop.f32.mrf.mxu0
      %v4722 = vadd.f32 0.0, %v4721
      %4723 = vmatmul.bf16.gmra.mxu0 %v3617
      %v4724 = vpop.f32.mrf.mxu0
      %v4725 = vadd.f32 0.0, %v4724
      %v4726 = vpop.f32.mrf.mxu0
      %v4727 = vadd.f32 0.0, %v4726
      %4728 = vmatmul.bf16.gmra.mxu0 %v3620
      %v4729 = vpop.f32.mrf.mxu0
      %v4730 = vadd.f32 0.0, %v4729
      %v4731 = vpop.f32.mrf.mxu0
      %v4732 = vadd.f32 0.0, %v4731
      %4733 = vmatmul.bf16.gmra.mxu0 %v3623
      %v4734 = vpop.f32.mrf.mxu0
      %v4735 = vadd.f32 0.0, %v4734
      %v4736 = vpop.f32.mrf.mxu0
      %v4737 = vadd.f32 0.0, %v4736
      %4738 = vmatmul.bf16.gmra.mxu0 %v3626
      %v4739 = vpop.f32.mrf.mxu0
      %v4740 = vadd.f32 0.0, %v4739
      %v4741 = vpop.f32.mrf.mxu0
      %v4742 = vadd.f32 0.0, %v4741
      %4743 = vmatmul.bf16.gmra.mxu0 %v3629
      %v4744 = vpop.f32.mrf.mxu0
      %v4745 = vadd.f32 0.0, %v4744
      %v4746 = vpop.f32.mrf.mxu0
      %v4747 = vadd.f32 0.0, %v4746
      %4748 = vmatmul.bf16.gmra.mxu0 %v3632
      %v4749 = vpop.f32.mrf.mxu0
      %v4750 = vadd.f32 0.0, %v4749
      %v4751 = vpop.f32.mrf.mxu0
      %v4752 = vadd.f32 0.0, %v4751
      %4753 = vmatmul.bf16.gmra.mxu0 %v3635
      %v4754 = vpop.f32.mrf.mxu0
      %v4755 = vadd.f32 0.0, %v4754
      %v4756 = vpop.f32.mrf.mxu0
      %v4757 = vadd.f32 0.0, %v4756
      %4758 = vmatmul.bf16.gmra.mxu0 %v3638
      %v4759 = vpop.f32.mrf.mxu0
      %v4760 = vadd.f32 0.0, %v4759
      %v4761 = vpop.f32.mrf.mxu0
      %v4762 = vadd.f32 0.0, %v4761
      %4763 = vmatmul.bf16.gmra.mxu0 %v3641
      %v4764 = vpop.f32.mrf.mxu0
      %v4765 = vadd.f32 0.0, %v4764
      %v4766 = vpop.f32.mrf.mxu0
      %v4767 = vadd.f32 0.0, %v4766
      %4768 = vmatmul.bf16.gmra.mxu0 %v3644
      %v4769 = vpop.f32.mrf.mxu0
      %v4770 = vadd.f32 0.0, %v4769
      %v4771 = vpop.f32.mrf.mxu0
      %v4772 = vadd.f32 0.0, %v4771
      %4773 = vmatmul.bf16.gmra.mxu0 %v3647
      %v4774 = vpop.f32.mrf.mxu0
      %v4775 = vadd.f32 0.0, %v4774
      %v4776 = vpop.f32.mrf.mxu0
      %v4777 = vadd.f32 0.0, %v4776
      %4778 = vmatmul.bf16.gmra.mxu0 %v3650
      %v4779 = vpop.f32.mrf.mxu0
      %v4780 = vadd.f32 0.0, %v4779
      %v4781 = vpop.f32.mrf.mxu0
      %v4782 = vadd.f32 0.0, %v4781
      %4783 = vmatmul.bf16.gmra.mxu0 %v3653
      %v4784 = vpop.f32.mrf.mxu0
      %v4785 = vadd.f32 0.0, %v4784
      %v4786 = vpop.f32.mrf.mxu0
      %v4787 = vadd.f32 0.0, %v4786
      %4788 = vmatmul.bf16.gmra.mxu0 %v3656
      %v4789 = vpop.f32.mrf.mxu0
      %v4790 = vadd.f32 0.0, %v4789
      %v4791 = vpop.f32.mrf.mxu0
      %v4792 = vadd.f32 0.0, %v4791
      %4793 = vmatmul.bf16.gmra.mxu0 %v3659
      %v4794 = vpop.f32.mrf.mxu0
      %v4795 = vadd.f32 0.0, %v4794
      %v4796 = vpop.f32.mrf.mxu0
      %v4797 = vadd.f32 0.0, %v4796
      %4798 = vmatmul.bf16.gmra.mxu0 %v3662
      %v4799 = vpop.f32.mrf.mxu0
      %v4800 = vadd.f32 0.0, %v4799
      %v4801 = vpop.f32.mrf.mxu0
      %v4802 = vadd.f32 0.0, %v4801
      %4803 = vmatmul.bf16.gmra.mxu0 %v3665
      %v4804 = vpop.f32.mrf.mxu0
      %v4805 = vadd.f32 0.0, %v4804
      %v4806 = vpop.f32.mrf.mxu0
      %v4807 = vadd.f32 0.0, %v4806
      %4808 = vmatmul.bf16.gmra.mxu0 %v3668
      %v4809 = vpop.f32.mrf.mxu0
      %v4810 = vadd.f32 0.0, %v4809
      %v4811 = vpop.f32.mrf.mxu0
      %v4812 = vadd.f32 0.0, %v4811
      %4813 = vmatmul.bf16.gmra.mxu0 %v3671
      %v4814 = vpop.f32.mrf.mxu0
      %v4815 = vadd.f32 0.0, %v4814
      %v4816 = vpop.f32.mrf.mxu0
      %v4817 = vadd.f32 0.0, %v4816
      %4818 = vmatmul.bf16.gmra.mxu0 %v3674
      %v4819 = vpop.f32.mrf.mxu0
      %v4820 = vadd.f32 0.0, %v4819
      %v4821 = vpop.f32.mrf.mxu0
      %v4822 = vadd.f32 0.0, %v4821
      %4823 = vmatmul.bf16.gmra.mxu0 %v3677
      %v4824 = vpop.f32.mrf.mxu0
      %v4825 = vadd.f32 0.0, %v4824
      %v4826 = vpop.f32.mrf.mxu0
      %v4827 = vadd.f32 0.0, %v4826
      %4828 = vmatmul.bf16.gmra.mxu0 %v3680
      %v4829 = vpop.f32.mrf.mxu0
      %v4830 = vadd.f32 0.0, %v4829
      %v4831 = vpop.f32.mrf.mxu0
      %v4832 = vadd.f32 0.0, %v4831
      %4833 = vmatmul.bf16.gmra.mxu0 %v3683
      %v4834 = vpop.f32.mrf.mxu0
      %v4835 = vadd.f32 0.0, %v4834
      %v4836 = vpop.f32.mrf.mxu0
      %v4837 = vadd.f32 0.0, %v4836
      %4838 = vmatmul.bf16.gmra.mxu0 %v3686
      %v4839 = vpop.f32.mrf.mxu0
      %v4840 = vadd.f32 0.0, %v4839
      %v4841 = vpop.f32.mrf.mxu0
      %v4842 = vadd.f32 0.0, %v4841
      %4843 = vmatmul.bf16.gmra.mxu0 %v3689
      %v4844 = vpop.f32.mrf.mxu0
      %v4845 = vadd.f32 0.0, %v4844
      %v4846 = vpop.f32.mrf.mxu0
      %v4847 = vadd.f32 0.0, %v4846
      %4848 = vmatmul.bf16.gmra.mxu0 %v3692
      %v4849 = vpop.f32.mrf.mxu0
      %v4850 = vadd.f32 0.0, %v4849
      %v4851 = vpop.f32.mrf.mxu0
      %v4852 = vadd.f32 0.0, %v4851
      %4853 = vmatmul.bf16.gmra.mxu0 %v3695
      %v4854 = vpop.f32.mrf.mxu0
      %v4855 = vadd.f32 0.0, %v4854
      %v4856 = vpop.f32.mrf.mxu0
      %v4857 = vadd.f32 0.0, %v4856
      %4858 = vmatmul.bf16.gmra.mxu0 %v3698
      %v4859 = vpop.f32.mrf.mxu0
      %v4860 = vadd.f32 0.0, %v4859
      %v4861 = vpop.f32.mrf.mxu0
      %v4862 = vadd.f32 0.0, %v4861
      %4863 = vmatmul.bf16.gmra.mxu0 %v3701
      %v4864 = vpop.f32.mrf.mxu0
      %v4865 = vadd.f32 0.0, %v4864
      %v4866 = vpop.f32.mrf.mxu0
      %v4867 = vadd.f32 0.0, %v4866
      %4868 = vmatmul.bf16.gmra.mxu0 %v3704
      %v4869 = vpop.f32.mrf.mxu0
      %v4870 = vadd.f32 0.0, %v4869
      %v4871 = vpop.f32.mrf.mxu0
      %v4872 = vadd.f32 0.0, %v4871
      %4873 = vmatmul.bf16.gmra.mxu0 %v3707
      %v4874 = vpop.f32.mrf.mxu0
      %v4875 = vadd.f32 0.0, %v4874
      %v4876 = vpop.f32.mrf.mxu0
      %v4877 = vadd.f32 0.0, %v4876
      %4878 = vmatmul.bf16.gmra.mxu0 %v3710
      %v4879 = vpop.f32.mrf.mxu0
      %v4880 = vadd.f32 0.0, %v4879
      %v4881 = vpop.f32.mrf.mxu0
      %v4882 = vadd.f32 0.0, %v4881
      %4883 = vmatmul.bf16.gmra.mxu0 %v3713
      %v4884 = vpop.f32.mrf.mxu0
      %v4885 = vadd.f32 0.0, %v4884
      %v4886 = vpop.f32.mrf.mxu0
      %v4887 = vadd.f32 0.0, %v4886
      %4888 = vmatmul.bf16.gmra.mxu0 %v3716
      %v4889 = vpop.f32.mrf.mxu0
      %v4890 = vadd.f32 0.0, %v4889
      %v4891 = vpop.f32.mrf.mxu0
      %v4892 = vadd.f32 0.0, %v4891
      %4893 = vmatmul.bf16.gmra.mxu0 %v3719
      %v4894 = vpop.f32.mrf.mxu0
      %v4895 = vadd.f32 0.0, %v4894
      %v4896 = vpop.f32.mrf.mxu0
      %v4897 = vadd.f32 0.0, %v4896
      %4898 = vmatmul.bf16.gmra.mxu0 %v3722
      %v4899 = vpop.f32.mrf.mxu0
      %v4900 = vadd.f32 0.0, %v4899
      %v4901 = vpop.f32.mrf.mxu0
      %v4902 = vadd.f32 0.0, %v4901
      %4903 = vmatmul.bf16.gmra.mxu0 %v3725
      %v4904 = vpop.f32.mrf.mxu0
      %v4905 = vadd.f32 0.0, %v4904
      %v4906 = vpop.f32.mrf.mxu0
      %v4907 = vadd.f32 0.0, %v4906
      %4908 = vmatmul.bf16.gmra.mxu0 %v3728
      %v4909 = vpop.f32.mrf.mxu0
      %v4910 = vadd.f32 0.0, %v4909
      %v4911 = vpop.f32.mrf.mxu0
      %v4912 = vadd.f32 0.0, %v4911
      %4913 = vmatmul.bf16.gmra.mxu0 %v3731
      %v4914 = vpop.f32.mrf.mxu0
      %v4915 = vadd.f32 0.0, %v4914
      %v4916 = vpop.f32.mrf.mxu0
      %v4917 = vadd.f32 0.0, %v4916
      %4918 = vmatmul.bf16.gmra.mxu0 %v3734
      %v4919 = vpop.f32.mrf.mxu0
      %v4920 = vadd.f32 0.0, %v4919
      %v4921 = vpop.f32.mrf.mxu0
      %v4922 = vadd.f32 0.0, %v4921
      %4923 = vmatmul.bf16.gmra.mxu0 %v3737
      %v4924 = vpop.f32.mrf.mxu0
      %v4925 = vadd.f32 0.0, %v4924
      %v4926 = vpop.f32.mrf.mxu0
      %v4927 = vadd.f32 0.0, %v4926
      %4928 = vmatmul.bf16.gmra.mxu0 %v3740
      %v4929 = vpop.f32.mrf.mxu0
      %v4930 = vadd.f32 0.0, %v4929
      %v4931 = vpop.f32.mrf.mxu0
      %v4932 = vadd.f32 0.0, %v4931
      %4933 = vmatmul.bf16.gmra.mxu0 %v3743
      %v4934 = vpop.f32.mrf.mxu0
      %v4935 = vadd.f32 0.0, %v4934
      %v4936 = vpop.f32.mrf.mxu0
      %v4937 = vadd.f32 0.0, %v4936
      %4938 = vmatmul.bf16.gmra.mxu0 %v3746
      %v4939 = vpop.f32.mrf.mxu0
      %v4940 = vadd.f32 0.0, %v4939
      %v4941 = vpop.f32.mrf.mxu0
      %v4942 = vadd.f32 0.0, %v4941
      %4943 = vmatmul.bf16.gmra.mxu0 %v3749
      %v4944 = vpop.f32.mrf.mxu0
      %v4945 = vadd.f32 0.0, %v4944
      %v4946 = vpop.f32.mrf.mxu0
      %v4947 = vadd.f32 0.0, %v4946
      %4948 = vmatmul.bf16.gmra.mxu0 %v3752
      %v4949 = vpop.f32.mrf.mxu0
      %v4950 = vadd.f32 0.0, %v4949
      %v4951 = vpop.f32.mrf.mxu0
      %v4952 = vadd.f32 0.0, %v4951
      %4953 = vmatmul.bf16.gmra.mxu0 %v3755
      %v4954 = vpop.f32.mrf.mxu0
      %v4955 = vadd.f32 0.0, %v4954
      %v4956 = vpop.f32.mrf.mxu0
      %v4957 = vadd.f32 0.0, %v4956
      %4958 = vmatmul.bf16.gmra.mxu0 %v3758
      %v4959 = vpop.f32.mrf.mxu0
      %v4960 = vadd.f32 0.0, %v4959
      %v4961 = vpop.f32.mrf.mxu0
      %v4962 = vadd.f32 0.0, %v4961
      %4963 = vmatmul.bf16.gmra.mxu0 %v3761
      %v4964 = vpop.f32.mrf.mxu0
      %v4965 = vadd.f32 0.0, %v4964
      %v4966 = vpop.f32.mrf.mxu0
      %v4967 = vadd.f32 0.0, %v4966
      %4968 = vmatmul.bf16.gmra.mxu0 %v3764
      %v4969 = vpop.f32.mrf.mxu0
      %v4970 = vadd.f32 0.0, %v4969
      %v4971 = vpop.f32.mrf.mxu0
      %v4972 = vadd.f32 0.0, %v4971
      %4973 = vmatmul.bf16.gmra.mxu0 %v3767
      %v4974 = vpop.f32.mrf.mxu0
      %v4975 = vadd.f32 0.0, %v4974
      %v4976 = vpop.f32.mrf.mxu0
      %v4977 = vadd.f32 0.0, %v4976
      %4978 = vmatmul.bf16.gmra.mxu0 %v3770
      %v4979 = vpop.f32.mrf.mxu0
      %v4980 = vadd.f32 0.0, %v4979
      %v4981 = vpop.f32.mrf.mxu0
      %v4982 = vadd.f32 0.0, %v4981
      %4983 = vmatmul.bf16.gmra.mxu0 %v3773
      %v4984 = vpop.f32.mrf.mxu0
      %v4985 = vadd.f32 0.0, %v4984
      %v4986 = vpop.f32.mrf.mxu0
      %v4987 = vadd.f32 0.0, %v4986
      %4988 = vmatmul.bf16.gmra.mxu0 %v3776
      %v4989 = vpop.f32.mrf.mxu0
      %v4990 = vadd.f32 0.0, %v4989
      %v4991 = vpop.f32.mrf.mxu0
      %v4992 = vadd.f32 0.0, %v4991
      %4993 = vmatmul.bf16.gmra.mxu0 %v3779
      %v4994 = vpop.f32.mrf.mxu0
      %v4995 = vadd.f32 0.0, %v4994
      %v4996 = vpop.f32.mrf.mxu0
      %v4997 = vadd.f32 0.0, %v4996
      %4998 = vmatmul.bf16.gmra.mxu0 %v3782
      %v4999 = vpop.f32.mrf.mxu0
      %v5000 = vadd.f32 0.0, %v4999
      %v5001 = vpop.f32.mrf.mxu0
      %v5002 = vadd.f32 0.0, %v5001
      %5003 = vmatmul.bf16.gmra.mxu0 %v3785
      %v5004 = vpop.f32.mrf.mxu0
      %v5005 = vadd.f32 0.0, %v5004
      %v5006 = vpop.f32.mrf.mxu0
      %v5007 = vadd.f32 0.0, %v5006
      %5008 = vmatmul.bf16.gmra.mxu0 %v3788
      %v5009 = vpop.f32.mrf.mxu0
      %v5010 = vadd.f32 0.0, %v5009
      %v5011 = vpop.f32.mrf.mxu0
      %v5012 = vadd.f32 0.0, %v5011
      %5013 = vmatmul.bf16.gmra.mxu0 %v3791
      %v5014 = vpop.f32.mrf.mxu0
      %v5015 = vadd.f32 0.0, %v5014
      %v5016 = vpop.f32.mrf.mxu0
      %v5017 = vadd.f32 0.0, %v5016
      %5018 = vmatmul.bf16.gmra.mxu0 %v3794
      %v5019 = vpop.f32.mrf.mxu0
      %v5020 = vadd.f32 0.0, %v5019
      %v5021 = vpop.f32.mrf.mxu0
      %v5022 = vadd.f32 0.0, %v5021
      %5023 = vmatmul.bf16.gmra.mxu0 %v3797
      %v5024 = vpop.f32.mrf.mxu0
      %v5025 = vadd.f32 0.0, %v5024
      %v5026 = vpop.f32.mrf.mxu0
      %v5027 = vadd.f32 0.0, %v5026
      %5028 = vmatmul.bf16.gmra.mxu0 %v3800
      %v5029 = vpop.f32.mrf.mxu0
      %v5030 = vadd.f32 0.0, %v5029
      %v5031 = vpop.f32.mrf.mxu0
      %v5032 = vadd.f32 0.0, %v5031
      %5033 = vmatmul.bf16.gmra.mxu0 %v3803
      %v5034 = vpop.f32.mrf.mxu0
      %v5035 = vadd.f32 0.0, %v5034
      %v5036 = vpop.f32.mrf.mxu0
      %v5037 = vadd.f32 0.0, %v5036
      %5038 = vmatmul.bf16.gmra.mxu0 %v3806
      %v5039 = vpop.f32.mrf.mxu0
      %v5040 = vadd.f32 0.0, %v5039
      %v5041 = vpop.f32.mrf.mxu0
      %v5042 = vadd.f32 0.0, %v5041
      %5043 = vmatmul.bf16.gmra.mxu0 %v3809
      %v5044 = vpop.f32.mrf.mxu0
      %v5045 = vadd.f32 0.0, %v5044
      %v5046 = vpop.f32.mrf.mxu0
      %v5047 = vadd.f32 0.0, %v5046
      %5048 = vmatmul.bf16.gmra.mxu0 %v3812
      %v5049 = vpop.f32.mrf.mxu0
      %v5050 = vadd.f32 0.0, %v5049
      %v5051 = vpop.f32.mrf.mxu0
      %v5052 = vadd.f32 0.0, %v5051
      %5053 = vmatmul.bf16.gmra.mxu0 %v3815
      %v5054 = vpop.f32.mrf.mxu0
      %v5055 = vadd.f32 0.0, %v5054
      %v5056 = vpop.f32.mrf.mxu0
      %v5057 = vadd.f32 0.0, %v5056
      %5058 = vmatmul.bf16.gmra.mxu0 %v3818
      %v5059 = vpop.f32.mrf.mxu0
      %v5060 = vadd.f32 0.0, %v5059
      %v5061 = vpop.f32.mrf.mxu0
      %v5062 = vadd.f32 0.0, %v5061
      %5063 = vmatmul.bf16.gmra.mxu0 %v3821
      %v5064 = vpop.f32.mrf.mxu0
      %v5065 = vadd.f32 0.0, %v5064
      %v5066 = vpop.f32.mrf.mxu0
      %v5067 = vadd.f32 0.0, %v5066
      %5068 = vmatmul.bf16.gmra.mxu0 %v3824
      %v5069 = vpop.f32.mrf.mxu0
      %v5070 = vadd.f32 0.0, %v5069
      %v5071 = vpop.f32.mrf.mxu0
      %v5072 = vadd.f32 0.0, %v5071
      %5073 = vmatmul.bf16.gmra.mxu0 %v3827
      %v5074 = vpop.f32.mrf.mxu0
      %v5075 = vadd.f32 0.0, %v5074
      %v5076 = vpop.f32.mrf.mxu0
      %v5077 = vadd.f32 0.0, %v5076
      %5078 = vmatmul.bf16.gmra.mxu0 %v3830
      %v5079 = vpop.f32.mrf.mxu0
      %v5080 = vadd.f32 0.0, %v5079
      %v5081 = vpop.f32.mrf.mxu0
      %v5082 = vadd.f32 0.0, %v5081
      %5083 = vmatmul.bf16.gmra.mxu0 %v3833
      %v5084 = vpop.f32.mrf.mxu0
      %v5085 = vadd.f32 0.0, %v5084
      %v5086 = vpop.f32.mrf.mxu0
      %v5087 = vadd.f32 0.0, %v5086
      %5088 = vmatmul.bf16.gmra.mxu0 %v3836
      %v5089 = vpop.f32.mrf.mxu0
      %v5090 = vadd.f32 0.0, %v5089
      %v5091 = vpop.f32.mrf.mxu0
      %v5092 = vadd.f32 0.0, %v5091
      %5093 = vmatmul.bf16.gmra.mxu0 %v3839
      %v5094 = vpop.f32.mrf.mxu0
      %v5095 = vadd.f32 0.0, %v5094
      %v5096 = vpop.f32.mrf.mxu0
      %v5097 = vadd.f32 0.0, %v5096
      %5098 = vmatmul.bf16.gmra.mxu0 %v3842
      %v5099 = vpop.f32.mrf.mxu0
      %v5100 = vadd.f32 0.0, %v5099
      %v5101 = vpop.f32.mrf.mxu0
      %v5102 = vadd.f32 0.0, %v5101
      %5103 = vmatmul.bf16.gmra.mxu0 %v3845
      %v5104 = vpop.f32.mrf.mxu0
      %v5105 = vadd.f32 0.0, %v5104
      %v5106 = vpop.f32.mrf.mxu0
      %v5107 = vadd.f32 0.0, %v5106
      %5108 = vmatmul.bf16.gmra.mxu0 %v3848
      %v5109 = vpop.f32.mrf.mxu0
      %v5110 = vadd.f32 0.0, %v5109
      %v5111 = vpop.f32.mrf.mxu0
      %v5112 = vadd.f32 0.0, %v5111
      %5113 = vmatmul.bf16.gmra.mxu0 %v3851
      %v5114 = vpop.f32.mrf.mxu0
      %v5115 = vadd.f32 0.0, %v5114
      %v5116 = vpop.f32.mrf.mxu0
      %v5117 = vadd.f32 0.0, %v5116
      %5118 = vmatmul.bf16.gmra.mxu0 %v3854
      %v5119 = vpop.f32.mrf.mxu0
      %v5120 = vadd.f32 0.0, %v5119
      %v5121 = vpop.f32.mrf.mxu0
      %v5122 = vadd.f32 0.0, %v5121
      %5123 = vmatmul.bf16.gmra.mxu0 %v3857
      %v5124 = vpop.f32.mrf.mxu0
      %v5125 = vadd.f32 0.0, %v5124
      %v5126 = vpop.f32.mrf.mxu0
      %v5127 = vadd.f32 0.0, %v5126
      %5128 = vmatmul.bf16.gmra.mxu0 %v3860
      %v5129 = vpop.f32.mrf.mxu0
      %v5130 = vadd.f32 0.0, %v5129
      %v5131 = vpop.f32.mrf.mxu0
      %v5132 = vadd.f32 0.0, %v5131
      %5133 = vmatmul.bf16.gmra.mxu0 %v3863
      %v5134 = vpop.f32.mrf.mxu0
      %v5135 = vadd.f32 0.0, %v5134
      %v5136 = vpop.f32.mrf.mxu0
      %v5137 = vadd.f32 0.0, %v5136
      %5138 = vmatmul.bf16.gmra.mxu0 %v3866
      %v5139 = vpop.f32.mrf.mxu0
      %v5140 = vadd.f32 0.0, %v5139
      %v5141 = vpop.f32.mrf.mxu0
      %v5142 = vadd.f32 0.0, %v5141
      %5143 = vmatmul.bf16.gmra.mxu0 %v3869
      %v5144 = vpop.f32.mrf.mxu0
      %v5145 = vadd.f32 0.0, %v5144
      %v5146 = vpop.f32.mrf.mxu0
      %v5147 = vadd.f32 0.0, %v5146
      %5148 = vmatmul.bf16.gmra.mxu0 %v3872
      %v5149 = vpop.f32.mrf.mxu0
      %v5150 = vadd.f32 0.0, %v5149
      %v5151 = vpop.f32.mrf.mxu0
      %v5152 = vadd.f32 0.0, %v5151
      %5153 = vmatmul.bf16.gmra.mxu0 %v3875
      %v5154 = vpop.f32.mrf.mxu0
      %v5155 = vadd.f32 0.0, %v5154
      %v5156 = vpop.f32.mrf.mxu0
      %v5157 = vadd.f32 0.0, %v5156
      %5158 = vmatmul.bf16.gmra.mxu0 %v3878
      %v5159 = vpop.f32.mrf.mxu0
      %v5160 = vadd.f32 0.0, %v5159
      %v5161 = vpop.f32.mrf.mxu0
      %v5162 = vadd.f32 0.0, %v5161
      %5163 = vmatmul.bf16.gmra.mxu0 %v3881
      %v5164 = vpop.f32.mrf.mxu0
      %v5165 = vadd.f32 0.0, %v5164
      %v5166 = vpop.f32.mrf.mxu0
      %v5167 = vadd.f32 0.0, %v5166
      %5168 = vmatmul.bf16.gmra.mxu0 %v3884
      %v5169 = vpop.f32.mrf.mxu0
      %v5170 = vadd.f32 0.0, %v5169
      %v5171 = vpop.f32.mrf.mxu0
      %v5172 = vadd.f32 0.0, %v5171
      %5173 = vmatmul.bf16.gmra.mxu0 %v3887
      %v5174 = vpop.f32.mrf.mxu0
      %v5175 = vadd.f32 0.0, %v5174
      %v5176 = vpop.f32.mrf.mxu0
      %v5177 = vadd.f32 0.0, %v5176
      %5178 = vmatmul.bf16.gmra.mxu0 %v3890
      %v5179 = vpop.f32.mrf.mxu0
      %v5180 = vadd.f32 0.0, %v5179
      %v5181 = vpop.f32.mrf.mxu0
      %v5182 = vadd.f32 0.0, %v5181
      %5183 = vmatmul.bf16.gmra.mxu0 %v3893
      %v5184 = vpop.f32.mrf.mxu0
      %v5185 = vadd.f32 0.0, %v5184
      %v5186 = vpop.f32.mrf.mxu0
      %v5187 = vadd.f32 0.0, %v5186
      %5188 = vmatmul.bf16.gmra.mxu0 %v3896
      %v5189 = vpop.f32.mrf.mxu0
      %v5190 = vadd.f32 0.0, %v5189
      %v5191 = vpop.f32.mrf.mxu0
      %v5192 = vadd.f32 0.0, %v5191
      %5193 = vdwg.mxu0
      %v5194 = vadd.f32 %v818, %v3915
      %v5195 = vadd.f32 %v819, %v3917
      %v5196 = vadd.f32 %v820, %v3920
      %v5197 = vadd.f32 %v821, %v3922
      %v5198 = vadd.f32 %v822, %v3925
      %v5199 = vadd.f32 %v823, %v3927
      %v5200 = vadd.f32 %v824, %v3930
      %v5201 = vadd.f32 %v825, %v3932
      %v5202 = vadd.f32 %v826, %v3935
      %v5203 = vadd.f32 %v827, %v3937
      %v5204 = vadd.f32 %v828, %v3940
      %v5205 = vadd.f32 %v829, %v3942
      %v5206 = vadd.f32 %v830, %v3945
      %v5207 = vadd.f32 %v831, %v3947
      %v5208 = vadd.f32 %v832, %v3950
      %v5209 = vadd.f32 %v833, %v3952
      %v5210 = vadd.f32 %v834, %v3955
      %v5211 = vadd.f32 %v835, %v3957
      %v5212 = vadd.f32 %v836, %v3960
      %v5213 = vadd.f32 %v837, %v3962
      %v5214 = vadd.f32 %v838, %v3965
      %v5215 = vadd.f32 %v839, %v3967
      %v5216 = vadd.f32 %v840, %v3970
      %v5217 = vadd.f32 %v841, %v3972
      %v5218 = vadd.f32 %v842, %v3975
      %v5219 = vadd.f32 %v843, %v3977
      %v5220 = vadd.f32 %v844, %v3980
      %v5221 = vadd.f32 %v845, %v3982
      %v5222 = vadd.f32 %v846, %v3985
      %v5223 = vadd.f32 %v847, %v3987
      %v5224 = vadd.f32 %v848, %v3990
      %v5225 = vadd.f32 %v849, %v3992
      %v5226 = vadd.f32 %v850, %v3995
      %v5227 = vadd.f32 %v851, %v3997
      %v5228 = vadd.f32 %v852, %v4000
      %v5229 = vadd.f32 %v853, %v4002
      %v5230 = vadd.f32 %v854, %v4005
      %v5231 = vadd.f32 %v855, %v4007
      %v5232 = vadd.f32 %v856, %v4010
      %v5233 = vadd.f32 %v857, %v4012
      %v5234 = vadd.f32 %v858, %v4015
      %v5235 = vadd.f32 %v859, %v4017
      %v5236 = vadd.f32 %v860, %v4020
      %v5237 = vadd.f32 %v861, %v4022
      %v5238 = vadd.f32 %v862, %v4025
      %v5239 = vadd.f32 %v863, %v4027
      %v5240 = vadd.f32 %v864, %v4030
      %v5241 = vadd.f32 %v865, %v4032
      %v5242 = vadd.f32 %v866, %v4035
      %v5243 = vadd.f32 %v867, %v4037
      %v5244 = vadd.f32 %v868, %v4040
      %v5245 = vadd.f32 %v869, %v4042
      %v5246 = vadd.f32 %v870, %v4045
      %v5247 = vadd.f32 %v871, %v4047
      %v5248 = vadd.f32 %v872, %v4050
      %v5249 = vadd.f32 %v873, %v4052
      %v5250 = vadd.f32 %v874, %v4055
      %v5251 = vadd.f32 %v875, %v4057
      %v5252 = vadd.f32 %v876, %v4060
      %v5253 = vadd.f32 %v877, %v4062
      %v5254 = vadd.f32 %v878, %v4065
      %v5255 = vadd.f32 %v879, %v4067
      %v5256 = vadd.f32 %v880, %v4070
      %v5257 = vadd.f32 %v881, %v4072
      %v5258 = vadd.f32 %v882, %v4075
      %v5259 = vadd.f32 %v883, %v4077
      %v5260 = vadd.f32 %v884, %v4080
      %v5261 = vadd.f32 %v885, %v4082
      %v5262 = vadd.f32 %v886, %v4085
      %v5263 = vadd.f32 %v887, %v4087
      %v5264 = vadd.f32 %v888, %v4090
      %v5265 = vadd.f32 %v889, %v4092
      %v5266 = vadd.f32 %v890, %v4095
      %v5267 = vadd.f32 %v891, %v4097
      %v5268 = vadd.f32 %v892, %v4100
      %v5269 = vadd.f32 %v893, %v4102
      %v5270 = vadd.f32 %v894, %v4105
      %v5271 = vadd.f32 %v895, %v4107
      %v5272 = vadd.f32 %v896, %v4110
      %v5273 = vadd.f32 %v897, %v4112
      %v5274 = vadd.f32 %v898, %v4115
      %v5275 = vadd.f32 %v899, %v4117
      %v5276 = vadd.f32 %v900, %v4120
      %v5277 = vadd.f32 %v901, %v4122
      %v5278 = vadd.f32 %v902, %v4125
      %v5279 = vadd.f32 %v903, %v4127
      %v5280 = vadd.f32 %v904, %v4130
      %v5281 = vadd.f32 %v905, %v4132
      %v5282 = vadd.f32 %v906, %v4135
      %v5283 = vadd.f32 %v907, %v4137
      %v5284 = vadd.f32 %v908, %v4140
      %v5285 = vadd.f32 %v909, %v4142
      %v5286 = vadd.f32 %v910, %v4145
      %v5287 = vadd.f32 %v911, %v4147
      %v5288 = vadd.f32 %v912, %v4150
      %v5289 = vadd.f32 %v913, %v4152
      %v5290 = vadd.f32 %v914, %v4155
      %v5291 = vadd.f32 %v915, %v4157
      %v5292 = vadd.f32 %v916, %v4160
      %v5293 = vadd.f32 %v917, %v4162
      %v5294 = vadd.f32 %v918, %v4165
      %v5295 = vadd.f32 %v919, %v4167
      %v5296 = vadd.f32 %v920, %v4170
      %v5297 = vadd.f32 %v921, %v4172
      %v5298 = vadd.f32 %v922, %v4175
      %v5299 = vadd.f32 %v923, %v4177
      %v5300 = vadd.f32 %v924, %v4180
      %v5301 = vadd.f32 %v925, %v4182
      %v5302 = vadd.f32 %v926, %v4185
      %v5303 = vadd.f32 %v927, %v4187
      %v5304 = vadd.f32 %v928, %v4190
      %v5305 = vadd.f32 %v929, %v4192
      %v5306 = vadd.f32 %v930, %v4195
      %v5307 = vadd.f32 %v931, %v4197
      %v5308 = vadd.f32 %v932, %v4200
      %v5309 = vadd.f32 %v933, %v4202
      %v5310 = vadd.f32 %v934, %v4205
      %v5311 = vadd.f32 %v935, %v4207
      %v5312 = vadd.f32 %v936, %v4210
      %v5313 = vadd.f32 %v937, %v4212
      %v5314 = vadd.f32 %v938, %v4215
      %v5315 = vadd.f32 %v939, %v4217
      %v5316 = vadd.f32 %v940, %v4220
      %v5317 = vadd.f32 %v941, %v4222
      %v5318 = vadd.f32 %v942, %v4225
      %v5319 = vadd.f32 %v943, %v4227
      %v5320 = vadd.f32 %v944, %v4230
      %v5321 = vadd.f32 %v945, %v4232
      %v5322 = vadd.f32 %v946, %v4235
      %v5323 = vadd.f32 %v947, %v4237
      %v5324 = vadd.f32 %v948, %v4240
      %v5325 = vadd.f32 %v949, %v4242
      %v5326 = vadd.f32 %v950, %v4245
      %v5327 = vadd.f32 %v951, %v4247
      %v5328 = vadd.f32 %v952, %v4250
      %v5329 = vadd.f32 %v953, %v4252
      %v5330 = vadd.f32 %v954, %v4255
      %v5331 = vadd.f32 %v955, %v4257
      %v5332 = vadd.f32 %v956, %v4260
      %v5333 = vadd.f32 %v957, %v4262
      %v5334 = vadd.f32 %v958, %v4265
      %v5335 = vadd.f32 %v959, %v4267
      %v5336 = vadd.f32 %v960, %v4270
      %v5337 = vadd.f32 %v961, %v4272
      %v5338 = vadd.f32 %v962, %v4275
      %v5339 = vadd.f32 %v963, %v4277
      %v5340 = vadd.f32 %v964, %v4280
      %v5341 = vadd.f32 %v965, %v4282
      %v5342 = vadd.f32 %v966, %v4285
      %v5343 = vadd.f32 %v967, %v4287
      %v5344 = vadd.f32 %v968, %v4290
      %v5345 = vadd.f32 %v969, %v4292
      %v5346 = vadd.f32 %v970, %v4295
      %v5347 = vadd.f32 %v971, %v4297
      %v5348 = vadd.f32 %v972, %v4300
      %v5349 = vadd.f32 %v973, %v4302
      %v5350 = vadd.f32 %v974, %v4305
      %v5351 = vadd.f32 %v975, %v4307
      %v5352 = vadd.f32 %v976, %v4310
      %v5353 = vadd.f32 %v977, %v4312
      %v5354 = vadd.f32 %v978, %v4315
      %v5355 = vadd.f32 %v979, %v4317
      %v5356 = vadd.f32 %v980, %v4320
      %v5357 = vadd.f32 %v981, %v4322
      %v5358 = vadd.f32 %v982, %v4325
      %v5359 = vadd.f32 %v983, %v4327
      %v5360 = vadd.f32 %v984, %v4330
      %v5361 = vadd.f32 %v985, %v4332
      %v5362 = vadd.f32 %v986, %v4335
      %v5363 = vadd.f32 %v987, %v4337
      %v5364 = vadd.f32 %v988, %v4340
      %v5365 = vadd.f32 %v989, %v4342
      %v5366 = vadd.f32 %v990, %v4345
      %v5367 = vadd.f32 %v991, %v4347
      %v5368 = vadd.f32 %v992, %v4350
      %v5369 = vadd.f32 %v993, %v4352
      %v5370 = vadd.f32 %v994, %v4355
      %v5371 = vadd.f32 %v995, %v4357
      %v5372 = vadd.f32 %v996, %v4360
      %v5373 = vadd.f32 %v997, %v4362
      %v5374 = vadd.f32 %v998, %v4365
      %v5375 = vadd.f32 %v999, %v4367
      %v5376 = vadd.f32 %v1000, %v4370
      %v5377 = vadd.f32 %v1001, %v4372
      %v5378 = vadd.f32 %v1002, %v4375
      %v5379 = vadd.f32 %v1003, %v4377
      %v5380 = vadd.f32 %v1004, %v4380
      %v5381 = vadd.f32 %v1005, %v4382
      %v5382 = vadd.f32 %v1006, %v4385
      %v5383 = vadd.f32 %v1007, %v4387
      %v5384 = vadd.f32 %v1008, %v4390
      %v5385 = vadd.f32 %v1009, %v4392
      %v5386 = vadd.f32 %v1010, %v4395
      %v5387 = vadd.f32 %v1011, %v4397
      %v5388 = vadd.f32 %v1012, %v4400
      %v5389 = vadd.f32 %v1013, %v4402
      %v5390 = vadd.f32 %v1014, %v4405
      %v5391 = vadd.f32 %v1015, %v4407
      %v5392 = vadd.f32 %v1016, %v4410
      %v5393 = vadd.f32 %v1017, %v4412
      %v5394 = vadd.f32 %v1018, %v4415
      %v5395 = vadd.f32 %v1019, %v4417
      %v5396 = vadd.f32 %v1020, %v4420
      %v5397 = vadd.f32 %v1021, %v4422
      %v5398 = vadd.f32 %v1022, %v4425
      %v5399 = vadd.f32 %v1023, %v4427
      %v5400 = vadd.f32 %v1024, %v4430
      %v5401 = vadd.f32 %v1025, %v4432
      %v5402 = vadd.f32 %v1026, %v4435
      %v5403 = vadd.f32 %v1027, %v4437
      %v5404 = vadd.f32 %v1028, %v4440
      %v5405 = vadd.f32 %v1029, %v4442
      %v5406 = vadd.f32 %v1030, %v4445
      %v5407 = vadd.f32 %v1031, %v4447
      %v5408 = vadd.f32 %v1032, %v4450
      %v5409 = vadd.f32 %v1033, %v4452
      %v5410 = vadd.f32 %v1034, %v4455
      %v5411 = vadd.f32 %v1035, %v4457
      %v5412 = vadd.f32 %v1036, %v4460
      %v5413 = vadd.f32 %v1037, %v4462
      %v5414 = vadd.f32 %v1038, %v4465
      %v5415 = vadd.f32 %v1039, %v4467
      %v5416 = vadd.f32 %v1040, %v4470
      %v5417 = vadd.f32 %v1041, %v4472
      %v5418 = vadd.f32 %v1042, %v4475
      %v5419 = vadd.f32 %v1043, %v4477
      %v5420 = vadd.f32 %v1044, %v4480
      %v5421 = vadd.f32 %v1045, %v4482
      %v5422 = vadd.f32 %v1046, %v4485
      %v5423 = vadd.f32 %v1047, %v4487
      %v5424 = vadd.f32 %v1048, %v4490
      %v5425 = vadd.f32 %v1049, %v4492
      %v5426 = vadd.f32 %v1050, %v4495
      %v5427 = vadd.f32 %v1051, %v4497
      %v5428 = vadd.f32 %v1052, %v4500
      %v5429 = vadd.f32 %v1053, %v4502
      %v5430 = vadd.f32 %v1054, %v4505
      %v5431 = vadd.f32 %v1055, %v4507
      %v5432 = vadd.f32 %v1056, %v4510
      %v5433 = vadd.f32 %v1057, %v4512
      %v5434 = vadd.f32 %v1058, %v4515
      %v5435 = vadd.f32 %v1059, %v4517
      %v5436 = vadd.f32 %v1060, %v4520
      %v5437 = vadd.f32 %v1061, %v4522
      %v5438 = vadd.f32 %v1062, %v4525
      %v5439 = vadd.f32 %v1063, %v4527
      %v5440 = vadd.f32 %v1064, %v4530
      %v5441 = vadd.f32 %v1065, %v4532
      %v5442 = vadd.f32 %v1066, %v4535
      %v5443 = vadd.f32 %v1067, %v4537
      %v5444 = vadd.f32 %v1068, %v4540
      %v5445 = vadd.f32 %v1069, %v4542
      %v5446 = vadd.f32 %v1070, %v4545
      %v5447 = vadd.f32 %v1071, %v4547
      %v5448 = vadd.f32 %v1072, %v4550
      %v5449 = vadd.f32 %v1073, %v4552
      %v5450 = vadd.f32 %v1074, %v4555
      %v5451 = vadd.f32 %v1075, %v4557
      %v5452 = vadd.f32 %v1076, %v4560
      %v5453 = vadd.f32 %v1077, %v4562
      %v5454 = vadd.f32 %v1078, %v4565
      %v5455 = vadd.f32 %v1079, %v4567
      %v5456 = vadd.f32 %v1080, %v4570
      %v5457 = vadd.f32 %v1081, %v4572
      %v5458 = vadd.f32 %v1082, %v4575
      %v5459 = vadd.f32 %v1083, %v4577
      %v5460 = vadd.f32 %v1084, %v4580
      %v5461 = vadd.f32 %v1085, %v4582
      %v5462 = vadd.f32 %v1086, %v4585
      %v5463 = vadd.f32 %v1087, %v4587
      %v5464 = vadd.f32 %v1088, %v4590
      %v5465 = vadd.f32 %v1089, %v4592
      %v5466 = vadd.f32 %v1090, %v4595
      %v5467 = vadd.f32 %v1091, %v4597
      %v5468 = vadd.f32 %v1092, %v4600
      %v5469 = vadd.f32 %v1093, %v4602
      %v5470 = vadd.f32 %v1094, %v4605
      %v5471 = vadd.f32 %v1095, %v4607
      %v5472 = vadd.f32 %v1096, %v4610
      %v5473 = vadd.f32 %v1097, %v4612
      %v5474 = vadd.f32 %v1098, %v4615
      %v5475 = vadd.f32 %v1099, %v4617
      %v5476 = vadd.f32 %v1100, %v4620
      %v5477 = vadd.f32 %v1101, %v4622
      %v5478 = vadd.f32 %v1102, %v4625
      %v5479 = vadd.f32 %v1103, %v4627
      %v5480 = vadd.f32 %v1104, %v4630
      %v5481 = vadd.f32 %v1105, %v4632
      %v5482 = vadd.f32 %v1106, %v4635
      %v5483 = vadd.f32 %v1107, %v4637
      %v5484 = vadd.f32 %v1108, %v4640
      %v5485 = vadd.f32 %v1109, %v4642
      %v5486 = vadd.f32 %v1110, %v4645
      %v5487 = vadd.f32 %v1111, %v4647
      %v5488 = vadd.f32 %v1112, %v4650
      %v5489 = vadd.f32 %v1113, %v4652
      %v5490 = vadd.f32 %v1114, %v4655
      %v5491 = vadd.f32 %v1115, %v4657
      %v5492 = vadd.f32 %v1116, %v4660
      %v5493 = vadd.f32 %v1117, %v4662
      %v5494 = vadd.f32 %v1118, %v4665
      %v5495 = vadd.f32 %v1119, %v4667
      %v5496 = vadd.f32 %v1120, %v4670
      %v5497 = vadd.f32 %v1121, %v4672
      %v5498 = vadd.f32 %v1122, %v4675
      %v5499 = vadd.f32 %v1123, %v4677
      %v5500 = vadd.f32 %v1124, %v4680
      %v5501 = vadd.f32 %v1125, %v4682
      %v5502 = vadd.f32 %v1126, %v4685
      %v5503 = vadd.f32 %v1127, %v4687
      %v5504 = vadd.f32 %v1128, %v4690
      %v5505 = vadd.f32 %v1129, %v4692
      %v5506 = vadd.f32 %v1130, %v4695
      %v5507 = vadd.f32 %v1131, %v4697
      %v5508 = vadd.f32 %v1132, %v4700
      %v5509 = vadd.f32 %v1133, %v4702
      %v5510 = vadd.f32 %v1134, %v4705
      %v5511 = vadd.f32 %v1135, %v4707
      %v5512 = vadd.f32 %v1136, %v4710
      %v5513 = vadd.f32 %v1137, %v4712
      %v5514 = vadd.f32 %v1138, %v4715
      %v5515 = vadd.f32 %v1139, %v4717
      %v5516 = vadd.f32 %v1140, %v4720
      %v5517 = vadd.f32 %v1141, %v4722
      %v5518 = vadd.f32 %v1142, %v4725
      %v5519 = vadd.f32 %v1143, %v4727
      %v5520 = vadd.f32 %v1144, %v4730
      %v5521 = vadd.f32 %v1145, %v4732
      %v5522 = vadd.f32 %v1146, %v4735
      %v5523 = vadd.f32 %v1147, %v4737
      %v5524 = vadd.f32 %v1148, %v4740
      %v5525 = vadd.f32 %v1149, %v4742
      %v5526 = vadd.f32 %v1150, %v4745
      %v5527 = vadd.f32 %v1151, %v4747
      %v5528 = vadd.f32 %v1152, %v4750
      %v5529 = vadd.f32 %v1153, %v4752
      %v5530 = vadd.f32 %v1154, %v4755
      %v5531 = vadd.f32 %v1155, %v4757
      %v5532 = vadd.f32 %v1156, %v4760
      %v5533 = vadd.f32 %v1157, %v4762
      %v5534 = vadd.f32 %v1158, %v4765
      %v5535 = vadd.f32 %v1159, %v4767
      %v5536 = vadd.f32 %v1160, %v4770
      %v5537 = vadd.f32 %v1161, %v4772
      %v5538 = vadd.f32 %v1162, %v4775
      %v5539 = vadd.f32 %v1163, %v4777
      %v5540 = vadd.f32 %v1164, %v4780
      %v5541 = vadd.f32 %v1165, %v4782
      %v5542 = vadd.f32 %v1166, %v4785
      %v5543 = vadd.f32 %v1167, %v4787
      %v5544 = vadd.f32 %v1168, %v4790
      %v5545 = vadd.f32 %v1169, %v4792
      %v5546 = vadd.f32 %v1170, %v4795
      %v5547 = vadd.f32 %v1171, %v4797
      %v5548 = vadd.f32 %v1172, %v4800
      %v5549 = vadd.f32 %v1173, %v4802
      %v5550 = vadd.f32 %v1174, %v4805
      %v5551 = vadd.f32 %v1175, %v4807
      %v5552 = vadd.f32 %v1176, %v4810
      %v5553 = vadd.f32 %v1177, %v4812
      %v5554 = vadd.f32 %v1178, %v4815
      %v5555 = vadd.f32 %v1179, %v4817
      %v5556 = vadd.f32 %v1180, %v4820
      %v5557 = vadd.f32 %v1181, %v4822
      %v5558 = vadd.f32 %v1182, %v4825
      %v5559 = vadd.f32 %v1183, %v4827
      %v5560 = vadd.f32 %v1184, %v4830
      %v5561 = vadd.f32 %v1185, %v4832
      %v5562 = vadd.f32 %v1186, %v4835
      %v5563 = vadd.f32 %v1187, %v4837
      %v5564 = vadd.f32 %v1188, %v4840
      %v5565 = vadd.f32 %v1189, %v4842
      %v5566 = vadd.f32 %v1190, %v4845
      %v5567 = vadd.f32 %v1191, %v4847
      %v5568 = vadd.f32 %v1192, %v4850
      %v5569 = vadd.f32 %v1193, %v4852
      %v5570 = vadd.f32 %v1194, %v4855
      %v5571 = vadd.f32 %v1195, %v4857
      %v5572 = vadd.f32 %v1196, %v4860
      %v5573 = vadd.f32 %v1197, %v4862
      %v5574 = vadd.f32 %v1198, %v4865
      %v5575 = vadd.f32 %v1199, %v4867
      %v5576 = vadd.f32 %v1200, %v4870
      %v5577 = vadd.f32 %v1201, %v4872
      %v5578 = vadd.f32 %v1202, %v4875
      %v5579 = vadd.f32 %v1203, %v4877
      %v5580 = vadd.f32 %v1204, %v4880
      %v5581 = vadd.f32 %v1205, %v4882
      %v5582 = vadd.f32 %v1206, %v4885
      %v5583 = vadd.f32 %v1207, %v4887
      %v5584 = vadd.f32 %v1208, %v4890
      %v5585 = vadd.f32 %v1209, %v4892
      %v5586 = vadd.f32 %v1210, %v4895
      %v5587 = vadd.f32 %v1211, %v4897
      %v5588 = vadd.f32 %v1212, %v4900
      %v5589 = vadd.f32 %v1213, %v4902
      %v5590 = vadd.f32 %v1214, %v4905
      %v5591 = vadd.f32 %v1215, %v4907
      %v5592 = vadd.f32 %v1216, %v4910
      %v5593 = vadd.f32 %v1217, %v4912
      %v5594 = vadd.f32 %v1218, %v4915
      %v5595 = vadd.f32 %v1219, %v4917
      %v5596 = vadd.f32 %v1220, %v4920
      %v5597 = vadd.f32 %v1221, %v4922
      %v5598 = vadd.f32 %v1222, %v4925
      %v5599 = vadd.f32 %v1223, %v4927
      %v5600 = vadd.f32 %v1224, %v4930
      %v5601 = vadd.f32 %v1225, %v4932
      %v5602 = vadd.f32 %v1226, %v4935
      %v5603 = vadd.f32 %v1227, %v4937
      %v5604 = vadd.f32 %v1228, %v4940
      %v5605 = vadd.f32 %v1229, %v4942
      %v5606 = vadd.f32 %v1230, %v4945
      %v5607 = vadd.f32 %v1231, %v4947
      %v5608 = vadd.f32 %v1232, %v4950
      %v5609 = vadd.f32 %v1233, %v4952
      %v5610 = vadd.f32 %v1234, %v4955
      %v5611 = vadd.f32 %v1235, %v4957
      %v5612 = vadd.f32 %v1236, %v4960
      %v5613 = vadd.f32 %v1237, %v4962
      %v5614 = vadd.f32 %v1238, %v4965
      %v5615 = vadd.f32 %v1239, %v4967
      %v5616 = vadd.f32 %v1240, %v4970
      %v5617 = vadd.f32 %v1241, %v4972
      %v5618 = vadd.f32 %v1242, %v4975
      %v5619 = vadd.f32 %v1243, %v4977
      %v5620 = vadd.f32 %v1244, %v4980
      %v5621 = vadd.f32 %v1245, %v4982
      %v5622 = vadd.f32 %v1246, %v4985
      %v5623 = vadd.f32 %v1247, %v4987
      %v5624 = vadd.f32 %v1248, %v4990
      %v5625 = vadd.f32 %v1249, %v4992
      %v5626 = vadd.f32 %v1250, %v4995
      %v5627 = vadd.f32 %v1251, %v4997
      %v5628 = vadd.f32 %v1252, %v5000
      %v5629 = vadd.f32 %v1253, %v5002
      %v5630 = vadd.f32 %v1254, %v5005
      %v5631 = vadd.f32 %v1255, %v5007
      %v5632 = vadd.f32 %v1256, %v5010
      %v5633 = vadd.f32 %v1257, %v5012
      %v5634 = vadd.f32 %v1258, %v5015
      %v5635 = vadd.f32 %v1259, %v5017
      %v5636 = vadd.f32 %v1260, %v5020
      %v5637 = vadd.f32 %v1261, %v5022
      %v5638 = vadd.f32 %v1262, %v5025
      %v5639 = vadd.f32 %v1263, %v5027
      %v5640 = vadd.f32 %v1264, %v5030
      %v5641 = vadd.f32 %v1265, %v5032
      %v5642 = vadd.f32 %v1266, %v5035
      %v5643 = vadd.f32 %v1267, %v5037
      %v5644 = vadd.f32 %v1268, %v5040
      %v5645 = vadd.f32 %v1269, %v5042
      %v5646 = vadd.f32 %v1270, %v5045
      %v5647 = vadd.f32 %v1271, %v5047
      %v5648 = vadd.f32 %v1272, %v5050
      %v5649 = vadd.f32 %v1273, %v5052
      %v5650 = vadd.f32 %v1274, %v5055
      %v5651 = vadd.f32 %v1275, %v5057
      %v5652 = vadd.f32 %v1276, %v5060
      %v5653 = vadd.f32 %v1277, %v5062
      %v5654 = vadd.f32 %v1278, %v5065
      %v5655 = vadd.f32 %v1279, %v5067
      %v5656 = vadd.f32 %v1280, %v5070
      %v5657 = vadd.f32 %v1281, %v5072
      %v5658 = vadd.f32 %v1282, %v5075
      %v5659 = vadd.f32 %v1283, %v5077
      %v5660 = vadd.f32 %v1284, %v5080
      %v5661 = vadd.f32 %v1285, %v5082
      %v5662 = vadd.f32 %v1286, %v5085
      %v5663 = vadd.f32 %v1287, %v5087
      %v5664 = vadd.f32 %v1288, %v5090
      %v5665 = vadd.f32 %v1289, %v5092
      %v5666 = vadd.f32 %v1290, %v5095
      %v5667 = vadd.f32 %v1291, %v5097
      %v5668 = vadd.f32 %v1292, %v5100
      %v5669 = vadd.f32 %v1293, %v5102
      %v5670 = vadd.f32 %v1294, %v5105
      %v5671 = vadd.f32 %v1295, %v5107
      %v5672 = vadd.f32 %v1296, %v5110
      %v5673 = vadd.f32 %v1297, %v5112
      %v5674 = vadd.f32 %v1298, %v5115
      %v5675 = vadd.f32 %v1299, %v5117
      %v5676 = vadd.f32 %v1300, %v5120
      %v5677 = vadd.f32 %v1301, %v5122
      %v5678 = vadd.f32 %v1302, %v5125
      %v5679 = vadd.f32 %v1303, %v5127
      %v5680 = vadd.f32 %v1304, %v5130
      %v5681 = vadd.f32 %v1305, %v5132
      %v5682 = vadd.f32 %v1306, %v5135
      %v5683 = vadd.f32 %v1307, %v5137
      %v5684 = vadd.f32 %v1308, %v5140
      %v5685 = vadd.f32 %v1309, %v5142
      %v5686 = vadd.f32 %v1310, %v5145
      %v5687 = vadd.f32 %v1311, %v5147
      %v5688 = vadd.f32 %v1312, %v5150
      %v5689 = vadd.f32 %v1313, %v5152
      %v5690 = vadd.f32 %v1314, %v5155
      %v5691 = vadd.f32 %v1315, %v5157
      %v5692 = vadd.f32 %v1316, %v5160
      %v5693 = vadd.f32 %v1317, %v5162
      %v5694 = vadd.f32 %v1318, %v5165
      %v5695 = vadd.f32 %v1319, %v5167
      %v5696 = vadd.f32 %v1320, %v5170
      %v5697 = vadd.f32 %v1321, %v5172
      %v5698 = vadd.f32 %v1322, %v5175
      %v5699 = vadd.f32 %v1323, %v5177
      %v5700 = vadd.f32 %v1324, %v5180
      %v5701 = vadd.f32 %v1325, %v5182
      %v5702 = vadd.f32 %v1326, %v5185
      %v5703 = vadd.f32 %v1327, %v5187
      %v5704 = vadd.f32 %v1328, %v5190
      %v5705 = vadd.f32 %v1329, %v5192
      %vm5706 = vcmask 523264
      %5707 = vst.msk [vmem:[#allocation2] sm:$0xff] %vm5706, %v5194
      %5708 = vst.msk [vmem:[#allocation2 + $0x8] sm:$0xff] %vm5706, %v5195
      %5709 = vst.msk [vmem:[#allocation2 + $0x10] sm:$0xff] %vm5706, %v5196
      %5710 = vst.msk [vmem:[#allocation2 + $0x18] sm:$0xff] %vm5706, %v5197
      %5711 = vst.msk [vmem:[#allocation2 + $0x20] sm:$0xff] %vm5706, %v5198
      %5712 = vst.msk [vmem:[#allocation2 + $0x28] sm:$0xff] %vm5706, %v5199
      %5713 = vst.msk [vmem:[#allocation2 + $0x30] sm:$0xff] %vm5706, %v5200
      %5714 = vst.msk [vmem:[#allocation2 + $0x38] sm:$0xff] %vm5706, %v5201
      %5715 = vst.msk [vmem:[#allocation2 + $0x40] sm:$0xff] %vm5706, %v5202
      %5716 = vst.msk [vmem:[#allocation2 + $0x48] sm:$0xff] %vm5706, %v5203
      %5717 = vst.msk [vmem:[#allocation2 + $0x50] sm:$0xff] %vm5706, %v5204
      %5718 = vst.msk [vmem:[#allocation2 + $0x58] sm:$0xff] %vm5706, %v5205
      %5719 = vst.msk [vmem:[#allocation2 + $0x60] sm:$0xff] %vm5706, %v5206
      %5720 = vst.msk [vmem:[#allocation2 + $0x68] sm:$0xff] %vm5706, %v5207
      %5721 = vst.msk [vmem:[#allocation2 + $0x70] sm:$0xff] %vm5706, %v5208
      %5722 = vst.msk [vmem:[#allocation2 + $0x78] sm:$0xff] %vm5706, %v5209
      %5723 = vst.msk [vmem:[#allocation2 + $0x80] sm:$0xff] %vm5706, %v5210
      %5724 = vst.msk [vmem:[#allocation2 + $0x88] sm:$0xff] %vm5706, %v5211
      %5725 = vst.msk [vmem:[#allocation2 + $0x90] sm:$0xff] %vm5706, %v5212
      %5726 = vst.msk [vmem:[#allocation2 + $0x98] sm:$0xff] %vm5706, %v5213
      %5727 = vst.msk [vmem:[#allocation2 + $0xa0] sm:$0xff] %vm5706, %v5214
      %5728 = vst.msk [vmem:[#allocation2 + $0xa8] sm:$0xff] %vm5706, %v5215
      %5729 = vst.msk [vmem:[#allocation2 + $0xb0] sm:$0xff] %vm5706, %v5216
      %5730 = vst.msk [vmem:[#allocation2 + $0xb8] sm:$0xff] %vm5706, %v5217
      %5731 = vst.msk [vmem:[#allocation2 + $0xc0] sm:$0xff] %vm5706, %v5218
      %5732 = vst.msk [vmem:[#allocation2 + $0xc8] sm:$0xff] %vm5706, %v5219
      %5733 = vst.msk [vmem:[#allocation2 + $0xd0] sm:$0xff] %vm5706, %v5220
      %5734 = vst.msk [vmem:[#allocation2 + $0xd8] sm:$0xff] %vm5706, %v5221
      %5735 = vst.msk [vmem:[#allocation2 + $0xe0] sm:$0xff] %vm5706, %v5222
      %5736 = vst.msk [vmem:[#allocation2 + $0xe8] sm:$0xff] %vm5706, %v5223
      %5737 = vst.msk [vmem:[#allocation2 + $0xf0] sm:$0xff] %vm5706, %v5224
      %5738 = vst.msk [vmem:[#allocation2 + $0xf8] sm:$0xff] %vm5706, %v5225
      %5739 = vst.msk [vmem:[#allocation2 + $0x100] sm:$0xff] %vm5706, %v5226
      %5740 = vst.msk [vmem:[#allocation2 + $0x108] sm:$0xff] %vm5706, %v5227
      %5741 = vst.msk [vmem:[#allocation2 + $0x110] sm:$0xff] %vm5706, %v5228
      %5742 = vst.msk [vmem:[#allocation2 + $0x118] sm:$0xff] %vm5706, %v5229
      %5743 = vst.msk [vmem:[#allocation2 + $0x120] sm:$0xff] %vm5706, %v5230
      %5744 = vst.msk [vmem:[#allocation2 + $0x128] sm:$0xff] %vm5706, %v5231
      %5745 = vst.msk [vmem:[#allocation2 + $0x130] sm:$0xff] %vm5706, %v5232
      %5746 = vst.msk [vmem:[#allocation2 + $0x138] sm:$0xff] %vm5706, %v5233
      %5747 = vst.msk [vmem:[#allocation2 + $0x140] sm:$0xff] %vm5706, %v5234
      %5748 = vst.msk [vmem:[#allocation2 + $0x148] sm:$0xff] %vm5706, %v5235
      %5749 = vst.msk [vmem:[#allocation2 + $0x150] sm:$0xff] %vm5706, %v5236
      %5750 = vst.msk [vmem:[#allocation2 + $0x158] sm:$0xff] %vm5706, %v5237
      %5751 = vst.msk [vmem:[#allocation2 + $0x160] sm:$0xff] %vm5706, %v5238
      %5752 = vst.msk [vmem:[#allocation2 + $0x168] sm:$0xff] %vm5706, %v5239
      %5753 = vst.msk [vmem:[#allocation2 + $0x170] sm:$0xff] %vm5706, %v5240
      %5754 = vst.msk [vmem:[#allocation2 + $0x178] sm:$0xff] %vm5706, %v5241
      %5755 = vst.msk [vmem:[#allocation2 + $0x180] sm:$0xff] %vm5706, %v5242
      %5756 = vst.msk [vmem:[#allocation2 + $0x188] sm:$0xff] %vm5706, %v5243
      %5757 = vst.msk [vmem:[#allocation2 + $0x190] sm:$0xff] %vm5706, %v5244
      %5758 = vst.msk [vmem:[#allocation2 + $0x198] sm:$0xff] %vm5706, %v5245
      %5759 = vst.msk [vmem:[#allocation2 + $0x1a0] sm:$0xff] %vm5706, %v5246
      %5760 = vst.msk [vmem:[#allocation2 + $0x1a8] sm:$0xff] %vm5706, %v5247
      %5761 = vst.msk [vmem:[#allocation2 + $0x1b0] sm:$0xff] %vm5706, %v5248
      %5762 = vst.msk [vmem:[#allocation2 + $0x1b8] sm:$0xff] %vm5706, %v5249
      %5763 = vst.msk [vmem:[#allocation2 + $0x1c0] sm:$0xff] %vm5706, %v5250
      %5764 = vst.msk [vmem:[#allocation2 + $0x1c8] sm:$0xff] %vm5706, %v5251
      %5765 = vst.msk [vmem:[#allocation2 + $0x1d0] sm:$0xff] %vm5706, %v5252
      %5766 = vst.msk [vmem:[#allocation2 + $0x1d8] sm:$0xff] %vm5706, %v5253
      %5767 = vst.msk [vmem:[#allocation2 + $0x1e0] sm:$0xff] %vm5706, %v5254
      %5768 = vst.msk [vmem:[#allocation2 + $0x1e8] sm:$0xff] %vm5706, %v5255
      %5769 = vst.msk [vmem:[#allocation2 + $0x1f0] sm:$0xff] %vm5706, %v5256
      %5770 = vst.msk [vmem:[#allocation2 + $0x1f8] sm:$0xff] %vm5706, %v5257
      %5771 = vst.msk [vmem:[#allocation2 + $0x200] sm:$0xff] %vm5706, %v5258
      %5772 = vst.msk [vmem:[#allocation2 + $0x208] sm:$0xff] %vm5706, %v5259
      %5773 = vst.msk [vmem:[#allocation2 + $0x210] sm:$0xff] %vm5706, %v5260
      %5774 = vst.msk [vmem:[#allocation2 + $0x218] sm:$0xff] %vm5706, %v5261
      %5775 = vst.msk [vmem:[#allocation2 + $0x220] sm:$0xff] %vm5706, %v5262
      %5776 = vst.msk [vmem:[#allocation2 + $0x228] sm:$0xff] %vm5706, %v5263
      %5777 = vst.msk [vmem:[#allocation2 + $0x230] sm:$0xff] %vm5706, %v5264
      %5778 = vst.msk [vmem:[#allocation2 + $0x238] sm:$0xff] %vm5706, %v5265
      %5779 = vst.msk [vmem:[#allocation2 + $0x240] sm:$0xff] %vm5706, %v5266
      %5780 = vst.msk [vmem:[#allocation2 + $0x248] sm:$0xff] %vm5706, %v5267
      %5781 = vst.msk [vmem:[#allocation2 + $0x250] sm:$0xff] %vm5706, %v5268
      %5782 = vst.msk [vmem:[#allocation2 + $0x258] sm:$0xff] %vm5706, %v5269
      %5783 = vst.msk [vmem:[#allocation2 + $0x260] sm:$0xff] %vm5706, %v5270
      %5784 = vst.msk [vmem:[#allocation2 + $0x268] sm:$0xff] %vm5706, %v5271
      %5785 = vst.msk [vmem:[#allocation2 + $0x270] sm:$0xff] %vm5706, %v5272
      %5786 = vst.msk [vmem:[#allocation2 + $0x278] sm:$0xff] %vm5706, %v5273
      %5787 = vst.msk [vmem:[#allocation2 + $0x280] sm:$0xff] %vm5706, %v5274
      %5788 = vst.msk [vmem:[#allocation2 + $0x288] sm:$0xff] %vm5706, %v5275
      %5789 = vst.msk [vmem:[#allocation2 + $0x290] sm:$0xff] %vm5706, %v5276
      %5790 = vst.msk [vmem:[#allocation2 + $0x298] sm:$0xff] %vm5706, %v5277
      %5791 = vst.msk [vmem:[#allocation2 + $0x2a0] sm:$0xff] %vm5706, %v5278
      %5792 = vst.msk [vmem:[#allocation2 + $0x2a8] sm:$0xff] %vm5706, %v5279
      %5793 = vst.msk [vmem:[#allocation2 + $0x2b0] sm:$0xff] %vm5706, %v5280
      %5794 = vst.msk [vmem:[#allocation2 + $0x2b8] sm:$0xff] %vm5706, %v5281
      %5795 = vst.msk [vmem:[#allocation2 + $0x2c0] sm:$0xff] %vm5706, %v5282
      %5796 = vst.msk [vmem:[#allocation2 + $0x2c8] sm:$0xff] %vm5706, %v5283
      %5797 = vst.msk [vmem:[#allocation2 + $0x2d0] sm:$0xff] %vm5706, %v5284
      %5798 = vst.msk [vmem:[#allocation2 + $0x2d8] sm:$0xff] %vm5706, %v5285
      %5799 = vst.msk [vmem:[#allocation2 + $0x2e0] sm:$0xff] %vm5706, %v5286
      %5800 = vst.msk [vmem:[#allocation2 + $0x2e8] sm:$0xff] %vm5706, %v5287
      %5801 = vst.msk [vmem:[#allocation2 + $0x2f0] sm:$0xff] %vm5706, %v5288
      %5802 = vst.msk [vmem:[#allocation2 + $0x2f8] sm:$0xff] %vm5706, %v5289
      %5803 = vst.msk [vmem:[#allocation2 + $0x300] sm:$0xff] %vm5706, %v5290
      %5804 = vst.msk [vmem:[#allocation2 + $0x308] sm:$0xff] %vm5706, %v5291
      %5805 = vst.msk [vmem:[#allocation2 + $0x310] sm:$0xff] %vm5706, %v5292
      %5806 = vst.msk [vmem:[#allocation2 + $0x318] sm:$0xff] %vm5706, %v5293
      %5807 = vst.msk [vmem:[#allocation2 + $0x320] sm:$0xff] %vm5706, %v5294
      %5808 = vst.msk [vmem:[#allocation2 + $0x328] sm:$0xff] %vm5706, %v5295
      %5809 = vst.msk [vmem:[#allocation2 + $0x330] sm:$0xff] %vm5706, %v5296
      %5810 = vst.msk [vmem:[#allocation2 + $0x338] sm:$0xff] %vm5706, %v5297
      %5811 = vst.msk [vmem:[#allocation2 + $0x340] sm:$0xff] %vm5706, %v5298
      %5812 = vst.msk [vmem:[#allocation2 + $0x348] sm:$0xff] %vm5706, %v5299
      %5813 = vst.msk [vmem:[#allocation2 + $0x350] sm:$0xff] %vm5706, %v5300
      %5814 = vst.msk [vmem:[#allocation2 + $0x358] sm:$0xff] %vm5706, %v5301
      %5815 = vst.msk [vmem:[#allocation2 + $0x360] sm:$0xff] %vm5706, %v5302
      %5816 = vst.msk [vmem:[#allocation2 + $0x368] sm:$0xff] %vm5706, %v5303
      %5817 = vst.msk [vmem:[#allocation2 + $0x370] sm:$0xff] %vm5706, %v5304
      %5818 = vst.msk [vmem:[#allocation2 + $0x378] sm:$0xff] %vm5706, %v5305
      %5819 = vst.msk [vmem:[#allocation2 + $0x380] sm:$0xff] %vm5706, %v5306
      %5820 = vst.msk [vmem:[#allocation2 + $0x388] sm:$0xff] %vm5706, %v5307
      %5821 = vst.msk [vmem:[#allocation2 + $0x390] sm:$0xff] %vm5706, %v5308
      %5822 = vst.msk [vmem:[#allocation2 + $0x398] sm:$0xff] %vm5706, %v5309
      %5823 = vst.msk [vmem:[#allocation2 + $0x3a0] sm:$0xff] %vm5706, %v5310
      %5824 = vst.msk [vmem:[#allocation2 + $0x3a8] sm:$0xff] %vm5706, %v5311
      %5825 = vst.msk [vmem:[#allocation2 + $0x3b0] sm:$0xff] %vm5706, %v5312
      %5826 = vst.msk [vmem:[#allocation2 + $0x3b8] sm:$0xff] %vm5706, %v5313
      %5827 = vst.msk [vmem:[#allocation2 + $0x3c0] sm:$0xff] %vm5706, %v5314
      %5828 = vst.msk [vmem:[#allocation2 + $0x3c8] sm:$0xff] %vm5706, %v5315
      %5829 = vst.msk [vmem:[#allocation2 + $0x3d0] sm:$0xff] %vm5706, %v5316
      %5830 = vst.msk [vmem:[#allocation2 + $0x3d8] sm:$0xff] %vm5706, %v5317
      %5831 = vst.msk [vmem:[#allocation2 + $0x3e0] sm:$0xff] %vm5706, %v5318
      %5832 = vst.msk [vmem:[#allocation2 + $0x3e8] sm:$0xff] %vm5706, %v5319
      %5833 = vst.msk [vmem:[#allocation2 + $0x3f0] sm:$0xff] %vm5706, %v5320
      %5834 = vst.msk [vmem:[#allocation2 + $0x3f8] sm:$0xff] %vm5706, %v5321
      %5835 = vst.msk [vmem:[#allocation2 + $0x400] sm:$0xff] %vm5706, %v5322
      %5836 = vst.msk [vmem:[#allocation2 + $0x408] sm:$0xff] %vm5706, %v5323
      %5837 = vst.msk [vmem:[#allocation2 + $0x410] sm:$0xff] %vm5706, %v5324
      %5838 = vst.msk [vmem:[#allocation2 + $0x418] sm:$0xff] %vm5706, %v5325
      %5839 = vst.msk [vmem:[#allocation2 + $0x420] sm:$0xff] %vm5706, %v5326
      %5840 = vst.msk [vmem:[#allocation2 + $0x428] sm:$0xff] %vm5706, %v5327
      %5841 = vst.msk [vmem:[#allocation2 + $0x430] sm:$0xff] %vm5706, %v5328
      %5842 = vst.msk [vmem:[#allocation2 + $0x438] sm:$0xff] %vm5706, %v5329
      %5843 = vst.msk [vmem:[#allocation2 + $0x440] sm:$0xff] %vm5706, %v5330
      %5844 = vst.msk [vmem:[#allocation2 + $0x448] sm:$0xff] %vm5706, %v5331
      %5845 = vst.msk [vmem:[#allocation2 + $0x450] sm:$0xff] %vm5706, %v5332
      %5846 = vst.msk [vmem:[#allocation2 + $0x458] sm:$0xff] %vm5706, %v5333
      %5847 = vst.msk [vmem:[#allocation2 + $0x460] sm:$0xff] %vm5706, %v5334
      %5848 = vst.msk [vmem:[#allocation2 + $0x468] sm:$0xff] %vm5706, %v5335
      %5849 = vst.msk [vmem:[#allocation2 + $0x470] sm:$0xff] %vm5706, %v5336
      %5850 = vst.msk [vmem:[#allocation2 + $0x478] sm:$0xff] %vm5706, %v5337
      %5851 = vst.msk [vmem:[#allocation2 + $0x480] sm:$0xff] %vm5706, %v5338
      %5852 = vst.msk [vmem:[#allocation2 + $0x488] sm:$0xff] %vm5706, %v5339
      %5853 = vst.msk [vmem:[#allocation2 + $0x490] sm:$0xff] %vm5706, %v5340
      %5854 = vst.msk [vmem:[#allocation2 + $0x498] sm:$0xff] %vm5706, %v5341
      %5855 = vst.msk [vmem:[#allocation2 + $0x4a0] sm:$0xff] %vm5706, %v5342
      %5856 = vst.msk [vmem:[#allocation2 + $0x4a8] sm:$0xff] %vm5706, %v5343
      %5857 = vst.msk [vmem:[#allocation2 + $0x4b0] sm:$0xff] %vm5706, %v5344
      %5858 = vst.msk [vmem:[#allocation2 + $0x4b8] sm:$0xff] %vm5706, %v5345
      %5859 = vst.msk [vmem:[#allocation2 + $0x4c0] sm:$0xff] %vm5706, %v5346
      %5860 = vst.msk [vmem:[#allocation2 + $0x4c8] sm:$0xff] %vm5706, %v5347
      %5861 = vst.msk [vmem:[#allocation2 + $0x4d0] sm:$0xff] %vm5706, %v5348
      %5862 = vst.msk [vmem:[#allocation2 + $0x4d8] sm:$0xff] %vm5706, %v5349
      %5863 = vst.msk [vmem:[#allocation2 + $0x4e0] sm:$0xff] %vm5706, %v5350
      %5864 = vst.msk [vmem:[#allocation2 + $0x4e8] sm:$0xff] %vm5706, %v5351
      %5865 = vst.msk [vmem:[#allocation2 + $0x4f0] sm:$0xff] %vm5706, %v5352
      %5866 = vst.msk [vmem:[#allocation2 + $0x4f8] sm:$0xff] %vm5706, %v5353
      %5867 = vst.msk [vmem:[#allocation2 + $0x500] sm:$0xff] %vm5706, %v5354
      %5868 = vst.msk [vmem:[#allocation2 + $0x508] sm:$0xff] %vm5706, %v5355
      %5869 = vst.msk [vmem:[#allocation2 + $0x510] sm:$0xff] %vm5706, %v5356
      %5870 = vst.msk [vmem:[#allocation2 + $0x518] sm:$0xff] %vm5706, %v5357
      %5871 = vst.msk [vmem:[#allocation2 + $0x520] sm:$0xff] %vm5706, %v5358
      %5872 = vst.msk [vmem:[#allocation2 + $0x528] sm:$0xff] %vm5706, %v5359
      %5873 = vst.msk [vmem:[#allocation2 + $0x530] sm:$0xff] %vm5706, %v5360
      %5874 = vst.msk [vmem:[#allocation2 + $0x538] sm:$0xff] %vm5706, %v5361
      %5875 = vst.msk [vmem:[#allocation2 + $0x540] sm:$0xff] %vm5706, %v5362
      %5876 = vst.msk [vmem:[#allocation2 + $0x548] sm:$0xff] %vm5706, %v5363
      %5877 = vst.msk [vmem:[#allocation2 + $0x550] sm:$0xff] %vm5706, %v5364
      %5878 = vst.msk [vmem:[#allocation2 + $0x558] sm:$0xff] %vm5706, %v5365
      %5879 = vst.msk [vmem:[#allocation2 + $0x560] sm:$0xff] %vm5706, %v5366
      %5880 = vst.msk [vmem:[#allocation2 + $0x568] sm:$0xff] %vm5706, %v5367
      %5881 = vst.msk [vmem:[#allocation2 + $0x570] sm:$0xff] %vm5706, %v5368
      %5882 = vst.msk [vmem:[#allocation2 + $0x578] sm:$0xff] %vm5706, %v5369
      %5883 = vst.msk [vmem:[#allocation2 + $0x580] sm:$0xff] %vm5706, %v5370
      %5884 = vst.msk [vmem:[#allocation2 + $0x588] sm:$0xff] %vm5706, %v5371
      %5885 = vst.msk [vmem:[#allocation2 + $0x590] sm:$0xff] %vm5706, %v5372
      %5886 = vst.msk [vmem:[#allocation2 + $0x598] sm:$0xff] %vm5706, %v5373
      %5887 = vst.msk [vmem:[#allocation2 + $0x5a0] sm:$0xff] %vm5706, %v5374
      %5888 = vst.msk [vmem:[#allocation2 + $0x5a8] sm:$0xff] %vm5706, %v5375
      %5889 = vst.msk [vmem:[#allocation2 + $0x5b0] sm:$0xff] %vm5706, %v5376
      %5890 = vst.msk [vmem:[#allocation2 + $0x5b8] sm:$0xff] %vm5706, %v5377
      %5891 = vst.msk [vmem:[#allocation2 + $0x5c0] sm:$0xff] %vm5706, %v5378
      %5892 = vst.msk [vmem:[#allocation2 + $0x5c8] sm:$0xff] %vm5706, %v5379
      %5893 = vst.msk [vmem:[#allocation2 + $0x5d0] sm:$0xff] %vm5706, %v5380
      %5894 = vst.msk [vmem:[#allocation2 + $0x5d8] sm:$0xff] %vm5706, %v5381
      %5895 = vst.msk [vmem:[#allocation2 + $0x5e0] sm:$0xff] %vm5706, %v5382
      %5896 = vst.msk [vmem:[#allocation2 + $0x5e8] sm:$0xff] %vm5706, %v5383
      %5897 = vst.msk [vmem:[#allocation2 + $0x5f0] sm:$0xff] %vm5706, %v5384
      %5898 = vst.msk [vmem:[#allocation2 + $0x5f8] sm:$0xff] %vm5706, %v5385
      %5899 = vst.msk [vmem:[#allocation2 + $0x600] sm:$0xff] %vm5706, %v5386
      %5900 = vst.msk [vmem:[#allocation2 + $0x608] sm:$0xff] %vm5706, %v5387
      %5901 = vst.msk [vmem:[#allocation2 + $0x610] sm:$0xff] %vm5706, %v5388
      %5902 = vst.msk [vmem:[#allocation2 + $0x618] sm:$0xff] %vm5706, %v5389
      %5903 = vst.msk [vmem:[#allocation2 + $0x620] sm:$0xff] %vm5706, %v5390
      %5904 = vst.msk [vmem:[#allocation2 + $0x628] sm:$0xff] %vm5706, %v5391
      %5905 = vst.msk [vmem:[#allocation2 + $0x630] sm:$0xff] %vm5706, %v5392
      %5906 = vst.msk [vmem:[#allocation2 + $0x638] sm:$0xff] %vm5706, %v5393
      %5907 = vst.msk [vmem:[#allocation2 + $0x640] sm:$0xff] %vm5706, %v5394
      %5908 = vst.msk [vmem:[#allocation2 + $0x648] sm:$0xff] %vm5706, %v5395
      %5909 = vst.msk [vmem:[#allocation2 + $0x650] sm:$0xff] %vm5706, %v5396
      %5910 = vst.msk [vmem:[#allocation2 + $0x658] sm:$0xff] %vm5706, %v5397
      %5911 = vst.msk [vmem:[#allocation2 + $0x660] sm:$0xff] %vm5706, %v5398
      %5912 = vst.msk [vmem:[#allocation2 + $0x668] sm:$0xff] %vm5706, %v5399
      %5913 = vst.msk [vmem:[#allocation2 + $0x670] sm:$0xff] %vm5706, %v5400
      %5914 = vst.msk [vmem:[#allocation2 + $0x678] sm:$0xff] %vm5706, %v5401
      %5915 = vst.msk [vmem:[#allocation2 + $0x680] sm:$0xff] %vm5706, %v5402
      %5916 = vst.msk [vmem:[#allocation2 + $0x688] sm:$0xff] %vm5706, %v5403
      %5917 = vst.msk [vmem:[#allocation2 + $0x690] sm:$0xff] %vm5706, %v5404
      %5918 = vst.msk [vmem:[#allocation2 + $0x698] sm:$0xff] %vm5706, %v5405
      %5919 = vst.msk [vmem:[#allocation2 + $0x6a0] sm:$0xff] %vm5706, %v5406
      %5920 = vst.msk [vmem:[#allocation2 + $0x6a8] sm:$0xff] %vm5706, %v5407
      %5921 = vst.msk [vmem:[#allocation2 + $0x6b0] sm:$0xff] %vm5706, %v5408
      %5922 = vst.msk [vmem:[#allocation2 + $0x6b8] sm:$0xff] %vm5706, %v5409
      %5923 = vst.msk [vmem:[#allocation2 + $0x6c0] sm:$0xff] %vm5706, %v5410
      %5924 = vst.msk [vmem:[#allocation2 + $0x6c8] sm:$0xff] %vm5706, %v5411
      %5925 = vst.msk [vmem:[#allocation2 + $0x6d0] sm:$0xff] %vm5706, %v5412
      %5926 = vst.msk [vmem:[#allocation2 + $0x6d8] sm:$0xff] %vm5706, %v5413
      %5927 = vst.msk [vmem:[#allocation2 + $0x6e0] sm:$0xff] %vm5706, %v5414
      %5928 = vst.msk [vmem:[#allocation2 + $0x6e8] sm:$0xff] %vm5706, %v5415
      %5929 = vst.msk [vmem:[#allocation2 + $0x6f0] sm:$0xff] %vm5706, %v5416
      %5930 = vst.msk [vmem:[#allocation2 + $0x6f8] sm:$0xff] %vm5706, %v5417
      %5931 = vst.msk [vmem:[#allocation2 + $0x700] sm:$0xff] %vm5706, %v5418
      %5932 = vst.msk [vmem:[#allocation2 + $0x708] sm:$0xff] %vm5706, %v5419
      %5933 = vst.msk [vmem:[#allocation2 + $0x710] sm:$0xff] %vm5706, %v5420
      %5934 = vst.msk [vmem:[#allocation2 + $0x718] sm:$0xff] %vm5706, %v5421
      %5935 = vst.msk [vmem:[#allocation2 + $0x720] sm:$0xff] %vm5706, %v5422
      %5936 = vst.msk [vmem:[#allocation2 + $0x728] sm:$0xff] %vm5706, %v5423
      %5937 = vst.msk [vmem:[#allocation2 + $0x730] sm:$0xff] %vm5706, %v5424
      %5938 = vst.msk [vmem:[#allocation2 + $0x738] sm:$0xff] %vm5706, %v5425
      %5939 = vst.msk [vmem:[#allocation2 + $0x740] sm:$0xff] %vm5706, %v5426
      %5940 = vst.msk [vmem:[#allocation2 + $0x748] sm:$0xff] %vm5706, %v5427
      %5941 = vst.msk [vmem:[#allocation2 + $0x750] sm:$0xff] %vm5706, %v5428
      %5942 = vst.msk [vmem:[#allocation2 + $0x758] sm:$0xff] %vm5706, %v5429
      %5943 = vst.msk [vmem:[#allocation2 + $0x760] sm:$0xff] %vm5706, %v5430
      %5944 = vst.msk [vmem:[#allocation2 + $0x768] sm:$0xff] %vm5706, %v5431
      %5945 = vst.msk [vmem:[#allocation2 + $0x770] sm:$0xff] %vm5706, %v5432
      %5946 = vst.msk [vmem:[#allocation2 + $0x778] sm:$0xff] %vm5706, %v5433
      %5947 = vst.msk [vmem:[#allocation2 + $0x780] sm:$0xff] %vm5706, %v5434
      %5948 = vst.msk [vmem:[#allocation2 + $0x788] sm:$0xff] %vm5706, %v5435
      %5949 = vst.msk [vmem:[#allocation2 + $0x790] sm:$0xff] %vm5706, %v5436
      %5950 = vst.msk [vmem:[#allocation2 + $0x798] sm:$0xff] %vm5706, %v5437
      %5951 = vst.msk [vmem:[#allocation2 + $0x7a0] sm:$0xff] %vm5706, %v5438
      %5952 = vst.msk [vmem:[#allocation2 + $0x7a8] sm:$0xff] %vm5706, %v5439
      %5953 = vst.msk [vmem:[#allocation2 + $0x7b0] sm:$0xff] %vm5706, %v5440
      %5954 = vst.msk [vmem:[#allocation2 + $0x7b8] sm:$0xff] %vm5706, %v5441
      %5955 = vst.msk [vmem:[#allocation2 + $0x7c0] sm:$0xff] %vm5706, %v5442
      %5956 = vst.msk [vmem:[#allocation2 + $0x7c8] sm:$0xff] %vm5706, %v5443
      %5957 = vst.msk [vmem:[#allocation2 + $0x7d0] sm:$0xff] %vm5706, %v5444
      %5958 = vst.msk [vmem:[#allocation2 + $0x7d8] sm:$0xff] %vm5706, %v5445
      %5959 = vst.msk [vmem:[#allocation2 + $0x7e0] sm:$0xff] %vm5706, %v5446
      %5960 = vst.msk [vmem:[#allocation2 + $0x7e8] sm:$0xff] %vm5706, %v5447
      %5961 = vst.msk [vmem:[#allocation2 + $0x7f0] sm:$0xff] %vm5706, %v5448
      %5962 = vst.msk [vmem:[#allocation2 + $0x7f8] sm:$0xff] %vm5706, %v5449
      %5963 = vst.msk [vmem:[#allocation2 + $0x800] sm:$0xff] %vm5706, %v5450
      %5964 = vst.msk [vmem:[#allocation2 + $0x808] sm:$0xff] %vm5706, %v5451
      %5965 = vst.msk [vmem:[#allocation2 + $0x810] sm:$0xff] %vm5706, %v5452
      %5966 = vst.msk [vmem:[#allocation2 + $0x818] sm:$0xff] %vm5706, %v5453
      %5967 = vst.msk [vmem:[#allocation2 + $0x820] sm:$0xff] %vm5706, %v5454
      %5968 = vst.msk [vmem:[#allocation2 + $0x828] sm:$0xff] %vm5706, %v5455
      %5969 = vst.msk [vmem:[#allocation2 + $0x830] sm:$0xff] %vm5706, %v5456
      %5970 = vst.msk [vmem:[#allocation2 + $0x838] sm:$0xff] %vm5706, %v5457
      %5971 = vst.msk [vmem:[#allocation2 + $0x840] sm:$0xff] %vm5706, %v5458
      %5972 = vst.msk [vmem:[#allocation2 + $0x848] sm:$0xff] %vm5706, %v5459
      %5973 = vst.msk [vmem:[#allocation2 + $0x850] sm:$0xff] %vm5706, %v5460
      %5974 = vst.msk [vmem:[#allocation2 + $0x858] sm:$0xff] %vm5706, %v5461
      %5975 = vst.msk [vmem:[#allocation2 + $0x860] sm:$0xff] %vm5706, %v5462
      %5976 = vst.msk [vmem:[#allocation2 + $0x868] sm:$0xff] %vm5706, %v5463
      %5977 = vst.msk [vmem:[#allocation2 + $0x870] sm:$0xff] %vm5706, %v5464
      %5978 = vst.msk [vmem:[#allocation2 + $0x878] sm:$0xff] %vm5706, %v5465
      %5979 = vst.msk [vmem:[#allocation2 + $0x880] sm:$0xff] %vm5706, %v5466
      %5980 = vst.msk [vmem:[#allocation2 + $0x888] sm:$0xff] %vm5706, %v5467
      %5981 = vst.msk [vmem:[#allocation2 + $0x890] sm:$0xff] %vm5706, %v5468
      %5982 = vst.msk [vmem:[#allocation2 + $0x898] sm:$0xff] %vm5706, %v5469
      %5983 = vst.msk [vmem:[#allocation2 + $0x8a0] sm:$0xff] %vm5706, %v5470
      %5984 = vst.msk [vmem:[#allocation2 + $0x8a8] sm:$0xff] %vm5706, %v5471
      %5985 = vst.msk [vmem:[#allocation2 + $0x8b0] sm:$0xff] %vm5706, %v5472
      %5986 = vst.msk [vmem:[#allocation2 + $0x8b8] sm:$0xff] %vm5706, %v5473
      %5987 = vst.msk [vmem:[#allocation2 + $0x8c0] sm:$0xff] %vm5706, %v5474
      %5988 = vst.msk [vmem:[#allocation2 + $0x8c8] sm:$0xff] %vm5706, %v5475
      %5989 = vst.msk [vmem:[#allocation2 + $0x8d0] sm:$0xff] %vm5706, %v5476
      %5990 = vst.msk [vmem:[#allocation2 + $0x8d8] sm:$0xff] %vm5706, %v5477
      %5991 = vst.msk [vmem:[#allocation2 + $0x8e0] sm:$0xff] %vm5706, %v5478
      %5992 = vst.msk [vmem:[#allocation2 + $0x8e8] sm:$0xff] %vm5706, %v5479
      %5993 = vst.msk [vmem:[#allocation2 + $0x8f0] sm:$0xff] %vm5706, %v5480
      %5994 = vst.msk [vmem:[#allocation2 + $0x8f8] sm:$0xff] %vm5706, %v5481
      %5995 = vst.msk [vmem:[#allocation2 + $0x900] sm:$0xff] %vm5706, %v5482
      %5996 = vst.msk [vmem:[#allocation2 + $0x908] sm:$0xff] %vm5706, %v5483
      %5997 = vst.msk [vmem:[#allocation2 + $0x910] sm:$0xff] %vm5706, %v5484
      %5998 = vst.msk [vmem:[#allocation2 + $0x918] sm:$0xff] %vm5706, %v5485
      %5999 = vst.msk [vmem:[#allocation2 + $0x920] sm:$0xff] %vm5706, %v5486
      %6000 = vst.msk [vmem:[#allocation2 + $0x928] sm:$0xff] %vm5706, %v5487
      %6001 = vst.msk [vmem:[#allocation2 + $0x930] sm:$0xff] %vm5706, %v5488
      %6002 = vst.msk [vmem:[#allocation2 + $0x938] sm:$0xff] %vm5706, %v5489
      %6003 = vst.msk [vmem:[#allocation2 + $0x940] sm:$0xff] %vm5706, %v5490
      %6004 = vst.msk [vmem:[#allocation2 + $0x948] sm:$0xff] %vm5706, %v5491
      %6005 = vst.msk [vmem:[#allocation2 + $0x950] sm:$0xff] %vm5706, %v5492
      %6006 = vst.msk [vmem:[#allocation2 + $0x958] sm:$0xff] %vm5706, %v5493
      %6007 = vst.msk [vmem:[#allocation2 + $0x960] sm:$0xff] %vm5706, %v5494
      %6008 = vst.msk [vmem:[#allocation2 + $0x968] sm:$0xff] %vm5706, %v5495
      %6009 = vst.msk [vmem:[#allocation2 + $0x970] sm:$0xff] %vm5706, %v5496
      %6010 = vst.msk [vmem:[#allocation2 + $0x978] sm:$0xff] %vm5706, %v5497
      %6011 = vst.msk [vmem:[#allocation2 + $0x980] sm:$0xff] %vm5706, %v5498
      %6012 = vst.msk [vmem:[#allocation2 + $0x988] sm:$0xff] %vm5706, %v5499
      %6013 = vst.msk [vmem:[#allocation2 + $0x990] sm:$0xff] %vm5706, %v5500
      %6014 = vst.msk [vmem:[#allocation2 + $0x998] sm:$0xff] %vm5706, %v5501
      %6015 = vst.msk [vmem:[#allocation2 + $0x9a0] sm:$0xff] %vm5706, %v5502
      %6016 = vst.msk [vmem:[#allocation2 + $0x9a8] sm:$0xff] %vm5706, %v5503
      %6017 = vst.msk [vmem:[#allocation2 + $0x9b0] sm:$0xff] %vm5706, %v5504
      %6018 = vst.msk [vmem:[#allocation2 + $0x9b8] sm:$0xff] %vm5706, %v5505
      %6019 = vst.msk [vmem:[#allocation2 + $0x9c0] sm:$0xff] %vm5706, %v5506
      %6020 = vst.msk [vmem:[#allocation2 + $0x9c8] sm:$0xff] %vm5706, %v5507
      %6021 = vst.msk [vmem:[#allocation2 + $0x9d0] sm:$0xff] %vm5706, %v5508
      %6022 = vst.msk [vmem:[#allocation2 + $0x9d8] sm:$0xff] %vm5706, %v5509
      %6023 = vst.msk [vmem:[#allocation2 + $0x9e0] sm:$0xff] %vm5706, %v5510
      %6024 = vst.msk [vmem:[#allocation2 + $0x9e8] sm:$0xff] %vm5706, %v5511
      %6025 = vst.msk [vmem:[#allocation2 + $0x9f0] sm:$0xff] %vm5706, %v5512
      %6026 = vst.msk [vmem:[#allocation2 + $0x9f8] sm:$0xff] %vm5706, %v5513
      %6027 = vst.msk [vmem:[#allocation2 + $0xa00] sm:$0xff] %vm5706, %v5514
      %6028 = vst.msk [vmem:[#allocation2 + $0xa08] sm:$0xff] %vm5706, %v5515
      %6029 = vst.msk [vmem:[#allocation2 + $0xa10] sm:$0xff] %vm5706, %v5516
      %6030 = vst.msk [vmem:[#allocation2 + $0xa18] sm:$0xff] %vm5706, %v5517
      %6031 = vst.msk [vmem:[#allocation2 + $0xa20] sm:$0xff] %vm5706, %v5518
      %6032 = vst.msk [vmem:[#allocation2 + $0xa28] sm:$0xff] %vm5706, %v5519
      %6033 = vst.msk [vmem:[#allocation2 + $0xa30] sm:$0xff] %vm5706, %v5520
      %6034 = vst.msk [vmem:[#allocation2 + $0xa38] sm:$0xff] %vm5706, %v5521
      %6035 = vst.msk [vmem:[#allocation2 + $0xa40] sm:$0xff] %vm5706, %v5522
      %6036 = vst.msk [vmem:[#allocation2 + $0xa48] sm:$0xff] %vm5706, %v5523
      %6037 = vst.msk [vmem:[#allocation2 + $0xa50] sm:$0xff] %vm5706, %v5524
      %6038 = vst.msk [vmem:[#allocation2 + $0xa58] sm:$0xff] %vm5706, %v5525
      %6039 = vst.msk [vmem:[#allocation2 + $0xa60] sm:$0xff] %vm5706, %v5526
      %6040 = vst.msk [vmem:[#allocation2 + $0xa68] sm:$0xff] %vm5706, %v5527
      %6041 = vst.msk [vmem:[#allocation2 + $0xa70] sm:$0xff] %vm5706, %v5528
      %6042 = vst.msk [vmem:[#allocation2 + $0xa78] sm:$0xff] %vm5706, %v5529
      %6043 = vst.msk [vmem:[#allocation2 + $0xa80] sm:$0xff] %vm5706, %v5530
      %6044 = vst.msk [vmem:[#allocation2 + $0xa88] sm:$0xff] %vm5706, %v5531
      %6045 = vst.msk [vmem:[#allocation2 + $0xa90] sm:$0xff] %vm5706, %v5532
      %6046 = vst.msk [vmem:[#allocation2 + $0xa98] sm:$0xff] %vm5706, %v5533
      %6047 = vst.msk [vmem:[#allocation2 + $0xaa0] sm:$0xff] %vm5706, %v5534
      %6048 = vst.msk [vmem:[#allocation2 + $0xaa8] sm:$0xff] %vm5706, %v5535
      %6049 = vst.msk [vmem:[#allocation2 + $0xab0] sm:$0xff] %vm5706, %v5536
      %6050 = vst.msk [vmem:[#allocation2 + $0xab8] sm:$0xff] %vm5706, %v5537
      %6051 = vst.msk [vmem:[#allocation2 + $0xac0] sm:$0xff] %vm5706, %v5538
      %6052 = vst.msk [vmem:[#allocation2 + $0xac8] sm:$0xff] %vm5706, %v5539
      %6053 = vst.msk [vmem:[#allocation2 + $0xad0] sm:$0xff] %vm5706, %v5540
      %6054 = vst.msk [vmem:[#allocation2 + $0xad8] sm:$0xff] %vm5706, %v5541
      %6055 = vst.msk [vmem:[#allocation2 + $0xae0] sm:$0xff] %vm5706, %v5542
      %6056 = vst.msk [vmem:[#allocation2 + $0xae8] sm:$0xff] %vm5706, %v5543
      %6057 = vst.msk [vmem:[#allocation2 + $0xaf0] sm:$0xff] %vm5706, %v5544
      %6058 = vst.msk [vmem:[#allocation2 + $0xaf8] sm:$0xff] %vm5706, %v5545
      %6059 = vst.msk [vmem:[#allocation2 + $0xb00] sm:$0xff] %vm5706, %v5546
      %6060 = vst.msk [vmem:[#allocation2 + $0xb08] sm:$0xff] %vm5706, %v5547
      %6061 = vst.msk [vmem:[#allocation2 + $0xb10] sm:$0xff] %vm5706, %v5548
      %6062 = vst.msk [vmem:[#allocation2 + $0xb18] sm:$0xff] %vm5706, %v5549
      %6063 = vst.msk [vmem:[#allocation2 + $0xb20] sm:$0xff] %vm5706, %v5550
      %6064 = vst.msk [vmem:[#allocation2 + $0xb28] sm:$0xff] %vm5706, %v5551
      %6065 = vst.msk [vmem:[#allocation2 + $0xb30] sm:$0xff] %vm5706, %v5552
      %6066 = vst.msk [vmem:[#allocation2 + $0xb38] sm:$0xff] %vm5706, %v5553
      %6067 = vst.msk [vmem:[#allocation2 + $0xb40] sm:$0xff] %vm5706, %v5554
      %6068 = vst.msk [vmem:[#allocation2 + $0xb48] sm:$0xff] %vm5706, %v5555
      %6069 = vst.msk [vmem:[#allocation2 + $0xb50] sm:$0xff] %vm5706, %v5556
      %6070 = vst.msk [vmem:[#allocation2 + $0xb58] sm:$0xff] %vm5706, %v5557
      %6071 = vst.msk [vmem:[#allocation2 + $0xb60] sm:$0xff] %vm5706, %v5558
      %6072 = vst.msk [vmem:[#allocation2 + $0xb68] sm:$0xff] %vm5706, %v5559
      %6073 = vst.msk [vmem:[#allocation2 + $0xb70] sm:$0xff] %vm5706, %v5560
      %6074 = vst.msk [vmem:[#allocation2 + $0xb78] sm:$0xff] %vm5706, %v5561
      %6075 = vst.msk [vmem:[#allocation2 + $0xb80] sm:$0xff] %vm5706, %v5562
      %6076 = vst.msk [vmem:[#allocation2 + $0xb88] sm:$0xff] %vm5706, %v5563
      %6077 = vst.msk [vmem:[#allocation2 + $0xb90] sm:$0xff] %vm5706, %v5564
      %6078 = vst.msk [vmem:[#allocation2 + $0xb98] sm:$0xff] %vm5706, %v5565
      %6079 = vst.msk [vmem:[#allocation2 + $0xba0] sm:$0xff] %vm5706, %v5566
      %6080 = vst.msk [vmem:[#allocation2 + $0xba8] sm:$0xff] %vm5706, %v5567
      %6081 = vst.msk [vmem:[#allocation2 + $0xbb0] sm:$0xff] %vm5706, %v5568
      %6082 = vst.msk [vmem:[#allocation2 + $0xbb8] sm:$0xff] %vm5706, %v5569
      %6083 = vst.msk [vmem:[#allocation2 + $0xbc0] sm:$0xff] %vm5706, %v5570
      %6084 = vst.msk [vmem:[#allocation2 + $0xbc8] sm:$0xff] %vm5706, %v5571
      %6085 = vst.msk [vmem:[#allocation2 + $0xbd0] sm:$0xff] %vm5706, %v5572
      %6086 = vst.msk [vmem:[#allocation2 + $0xbd8] sm:$0xff] %vm5706, %v5573
      %6087 = vst.msk [vmem:[#allocation2 + $0xbe0] sm:$0xff] %vm5706, %v5574
      %6088 = vst.msk [vmem:[#allocation2 + $0xbe8] sm:$0xff] %vm5706, %v5575
      %6089 = vst.msk [vmem:[#allocation2 + $0xbf0] sm:$0xff] %vm5706, %v5576
      %6090 = vst.msk [vmem:[#allocation2 + $0xbf8] sm:$0xff] %vm5706, %v5577
      %6091 = vst.msk [vmem:[#allocation2 + $0xc00] sm:$0xff] %vm5706, %v5578
      %6092 = vst.msk [vmem:[#allocation2 + $0xc08] sm:$0xff] %vm5706, %v5579
      %6093 = vst.msk [vmem:[#allocation2 + $0xc10] sm:$0xff] %vm5706, %v5580
      %6094 = vst.msk [vmem:[#allocation2 + $0xc18] sm:$0xff] %vm5706, %v5581
      %6095 = vst.msk [vmem:[#allocation2 + $0xc20] sm:$0xff] %vm5706, %v5582
      %6096 = vst.msk [vmem:[#allocation2 + $0xc28] sm:$0xff] %vm5706, %v5583
      %6097 = vst.msk [vmem:[#allocation2 + $0xc30] sm:$0xff] %vm5706, %v5584
      %6098 = vst.msk [vmem:[#allocation2 + $0xc38] sm:$0xff] %vm5706, %v5585
      %6099 = vst.msk [vmem:[#allocation2 + $0xc40] sm:$0xff] %vm5706, %v5586
      %6100 = vst.msk [vmem:[#allocation2 + $0xc48] sm:$0xff] %vm5706, %v5587
      %6101 = vst.msk [vmem:[#allocation2 + $0xc50] sm:$0xff] %vm5706, %v5588
      %6102 = vst.msk [vmem:[#allocation2 + $0xc58] sm:$0xff] %vm5706, %v5589
      %6103 = vst.msk [vmem:[#allocation2 + $0xc60] sm:$0xff] %vm5706, %v5590
      %6104 = vst.msk [vmem:[#allocation2 + $0xc68] sm:$0xff] %vm5706, %v5591
      %6105 = vst.msk [vmem:[#allocation2 + $0xc70] sm:$0xff] %vm5706, %v5592
      %6106 = vst.msk [vmem:[#allocation2 + $0xc78] sm:$0xff] %vm5706, %v5593
      %6107 = vst.msk [vmem:[#allocation2 + $0xc80] sm:$0xff] %vm5706, %v5594
      %6108 = vst.msk [vmem:[#allocation2 + $0xc88] sm:$0xff] %vm5706, %v5595
      %6109 = vst.msk [vmem:[#allocation2 + $0xc90] sm:$0xff] %vm5706, %v5596
      %6110 = vst.msk [vmem:[#allocation2 + $0xc98] sm:$0xff] %vm5706, %v5597
      %6111 = vst.msk [vmem:[#allocation2 + $0xca0] sm:$0xff] %vm5706, %v5598
      %6112 = vst.msk [vmem:[#allocation2 + $0xca8] sm:$0xff] %vm5706, %v5599
      %6113 = vst.msk [vmem:[#allocation2 + $0xcb0] sm:$0xff] %vm5706, %v5600
      %6114 = vst.msk [vmem:[#allocation2 + $0xcb8] sm:$0xff] %vm5706, %v5601
      %6115 = vst.msk [vmem:[#allocation2 + $0xcc0] sm:$0xff] %vm5706, %v5602
      %6116 = vst.msk [vmem:[#allocation2 + $0xcc8] sm:$0xff] %vm5706, %v5603
      %6117 = vst.msk [vmem:[#allocation2 + $0xcd0] sm:$0xff] %vm5706, %v5604
      %6118 = vst.msk [vmem:[#allocation2 + $0xcd8] sm:$0xff] %vm5706, %v5605
      %6119 = vst.msk [vmem:[#allocation2 + $0xce0] sm:$0xff] %vm5706, %v5606
      %6120 = vst.msk [vmem:[#allocation2 + $0xce8] sm:$0xff] %vm5706, %v5607
      %6121 = vst.msk [vmem:[#allocation2 + $0xcf0] sm:$0xff] %vm5706, %v5608
      %6122 = vst.msk [vmem:[#allocation2 + $0xcf8] sm:$0xff] %vm5706, %v5609
      %6123 = vst.msk [vmem:[#allocation2 + $0xd00] sm:$0xff] %vm5706, %v5610
      %6124 = vst.msk [vmem:[#allocation2 + $0xd08] sm:$0xff] %vm5706, %v5611
      %6125 = vst.msk [vmem:[#allocation2 + $0xd10] sm:$0xff] %vm5706, %v5612
      %6126 = vst.msk [vmem:[#allocation2 + $0xd18] sm:$0xff] %vm5706, %v5613
      %6127 = vst.msk [vmem:[#allocation2 + $0xd20] sm:$0xff] %vm5706, %v5614
      %6128 = vst.msk [vmem:[#allocation2 + $0xd28] sm:$0xff] %vm5706, %v5615
      %6129 = vst.msk [vmem:[#allocation2 + $0xd30] sm:$0xff] %vm5706, %v5616
      %6130 = vst.msk [vmem:[#allocation2 + $0xd38] sm:$0xff] %vm5706, %v5617
      %6131 = vst.msk [vmem:[#allocation2 + $0xd40] sm:$0xff] %vm5706, %v5618
      %6132 = vst.msk [vmem:[#allocation2 + $0xd48] sm:$0xff] %vm5706, %v5619
      %6133 = vst.msk [vmem:[#allocation2 + $0xd50] sm:$0xff] %vm5706, %v5620
      %6134 = vst.msk [vmem:[#allocation2 + $0xd58] sm:$0xff] %vm5706, %v5621
      %6135 = vst.msk [vmem:[#allocation2 + $0xd60] sm:$0xff] %vm5706, %v5622
      %6136 = vst.msk [vmem:[#allocation2 + $0xd68] sm:$0xff] %vm5706, %v5623
      %6137 = vst.msk [vmem:[#allocation2 + $0xd70] sm:$0xff] %vm5706, %v5624
      %6138 = vst.msk [vmem:[#allocation2 + $0xd78] sm:$0xff] %vm5706, %v5625
      %6139 = vst.msk [vmem:[#allocation2 + $0xd80] sm:$0xff] %vm5706, %v5626
      %6140 = vst.msk [vmem:[#allocation2 + $0xd88] sm:$0xff] %vm5706, %v5627
      %6141 = vst.msk [vmem:[#allocation2 + $0xd90] sm:$0xff] %vm5706, %v5628
      %6142 = vst.msk [vmem:[#allocation2 + $0xd98] sm:$0xff] %vm5706, %v5629
      %6143 = vst.msk [vmem:[#allocation2 + $0xda0] sm:$0xff] %vm5706, %v5630
      %6144 = vst.msk [vmem:[#allocation2 + $0xda8] sm:$0xff] %vm5706, %v5631
      %6145 = vst.msk [vmem:[#allocation2 + $0xdb0] sm:$0xff] %vm5706, %v5632
      %6146 = vst.msk [vmem:[#allocation2 + $0xdb8] sm:$0xff] %vm5706, %v5633
      %6147 = vst.msk [vmem:[#allocation2 + $0xdc0] sm:$0xff] %vm5706, %v5634
      %6148 = vst.msk [vmem:[#allocation2 + $0xdc8] sm:$0xff] %vm5706, %v5635
      %6149 = vst.msk [vmem:[#allocation2 + $0xdd0] sm:$0xff] %vm5706, %v5636
      %6150 = vst.msk [vmem:[#allocation2 + $0xdd8] sm:$0xff] %vm5706, %v5637
      %6151 = vst.msk [vmem:[#allocation2 + $0xde0] sm:$0xff] %vm5706, %v5638
      %6152 = vst.msk [vmem:[#allocation2 + $0xde8] sm:$0xff] %vm5706, %v5639
      %6153 = vst.msk [vmem:[#allocation2 + $0xdf0] sm:$0xff] %vm5706, %v5640
      %6154 = vst.msk [vmem:[#allocation2 + $0xdf8] sm:$0xff] %vm5706, %v5641
      %6155 = vst.msk [vmem:[#allocation2 + $0xe00] sm:$0xff] %vm5706, %v5642
      %6156 = vst.msk [vmem:[#allocation2 + $0xe08] sm:$0xff] %vm5706, %v5643
      %6157 = vst.msk [vmem:[#allocation2 + $0xe10] sm:$0xff] %vm5706, %v5644
      %6158 = vst.msk [vmem:[#allocation2 + $0xe18] sm:$0xff] %vm5706, %v5645
      %6159 = vst.msk [vmem:[#allocation2 + $0xe20] sm:$0xff] %vm5706, %v5646
      %6160 = vst.msk [vmem:[#allocation2 + $0xe28] sm:$0xff] %vm5706, %v5647
      %6161 = vst.msk [vmem:[#allocation2 + $0xe30] sm:$0xff] %vm5706, %v5648
      %6162 = vst.msk [vmem:[#allocation2 + $0xe38] sm:$0xff] %vm5706, %v5649
      %6163 = vst.msk [vmem:[#allocation2 + $0xe40] sm:$0xff] %vm5706, %v5650
      %6164 = vst.msk [vmem:[#allocation2 + $0xe48] sm:$0xff] %vm5706, %v5651
      %6165 = vst.msk [vmem:[#allocation2 + $0xe50] sm:$0xff] %vm5706, %v5652
      %6166 = vst.msk [vmem:[#allocation2 + $0xe58] sm:$0xff] %vm5706, %v5653
      %6167 = vst.msk [vmem:[#allocation2 + $0xe60] sm:$0xff] %vm5706, %v5654
      %6168 = vst.msk [vmem:[#allocation2 + $0xe68] sm:$0xff] %vm5706, %v5655
      %6169 = vst.msk [vmem:[#allocation2 + $0xe70] sm:$0xff] %vm5706, %v5656
      %6170 = vst.msk [vmem:[#allocation2 + $0xe78] sm:$0xff] %vm5706, %v5657
      %6171 = vst.msk [vmem:[#allocation2 + $0xe80] sm:$0xff] %vm5706, %v5658
      %6172 = vst.msk [vmem:[#allocation2 + $0xe88] sm:$0xff] %vm5706, %v5659
      %6173 = vst.msk [vmem:[#allocation2 + $0xe90] sm:$0xff] %vm5706, %v5660
      %6174 = vst.msk [vmem:[#allocation2 + $0xe98] sm:$0xff] %vm5706, %v5661
      %6175 = vst.msk [vmem:[#allocation2 + $0xea0] sm:$0xff] %vm5706, %v5662
      %6176 = vst.msk [vmem:[#allocation2 + $0xea8] sm:$0xff] %vm5706, %v5663
      %6177 = vst.msk [vmem:[#allocation2 + $0xeb0] sm:$0xff] %vm5706, %v5664
      %6178 = vst.msk [vmem:[#allocation2 + $0xeb8] sm:$0xff] %vm5706, %v5665
      %6179 = vst.msk [vmem:[#allocation2 + $0xec0] sm:$0xff] %vm5706, %v5666
      %6180 = vst.msk [vmem:[#allocation2 + $0xec8] sm:$0xff] %vm5706, %v5667
      %6181 = vst.msk [vmem:[#allocation2 + $0xed0] sm:$0xff] %vm5706, %v5668
      %6182 = vst.msk [vmem:[#allocation2 + $0xed8] sm:$0xff] %vm5706, %v5669
      %6183 = vst.msk [vmem:[#allocation2 + $0xee0] sm:$0xff] %vm5706, %v5670
      %6184 = vst.msk [vmem:[#allocation2 + $0xee8] sm:$0xff] %vm5706, %v5671
      %6185 = vst.msk [vmem:[#allocation2 + $0xef0] sm:$0xff] %vm5706, %v5672
      %6186 = vst.msk [vmem:[#allocation2 + $0xef8] sm:$0xff] %vm5706, %v5673
      %6187 = vst.msk [vmem:[#allocation2 + $0xf00] sm:$0xff] %vm5706, %v5674
      %6188 = vst.msk [vmem:[#allocation2 + $0xf08] sm:$0xff] %vm5706, %v5675
      %6189 = vst.msk [vmem:[#allocation2 + $0xf10] sm:$0xff] %vm5706, %v5676
      %6190 = vst.msk [vmem:[#allocation2 + $0xf18] sm:$0xff] %vm5706, %v5677
      %6191 = vst.msk [vmem:[#allocation2 + $0xf20] sm:$0xff] %vm5706, %v5678
      %6192 = vst.msk [vmem:[#allocation2 + $0xf28] sm:$0xff] %vm5706, %v5679
      %6193 = vst.msk [vmem:[#allocation2 + $0xf30] sm:$0xff] %vm5706, %v5680
      %6194 = vst.msk [vmem:[#allocation2 + $0xf38] sm:$0xff] %vm5706, %v5681
      %6195 = vst.msk [vmem:[#allocation2 + $0xf40] sm:$0xff] %vm5706, %v5682
      %6196 = vst.msk [vmem:[#allocation2 + $0xf48] sm:$0xff] %vm5706, %v5683
      %6197 = vst.msk [vmem:[#allocation2 + $0xf50] sm:$0xff] %vm5706, %v5684
      %6198 = vst.msk [vmem:[#allocation2 + $0xf58] sm:$0xff] %vm5706, %v5685
      %6199 = vst.msk [vmem:[#allocation2 + $0xf60] sm:$0xff] %vm5706, %v5686
      %6200 = vst.msk [vmem:[#allocation2 + $0xf68] sm:$0xff] %vm5706, %v5687
      %6201 = vst.msk [vmem:[#allocation2 + $0xf70] sm:$0xff] %vm5706, %v5688
      %6202 = vst.msk [vmem:[#allocation2 + $0xf78] sm:$0xff] %vm5706, %v5689
      %6203 = vst.msk [vmem:[#allocation2 + $0xf80] sm:$0xff] %vm5706, %v5690
      %6204 = vst.msk [vmem:[#allocation2 + $0xf88] sm:$0xff] %vm5706, %v5691
      %6205 = vst.msk [vmem:[#allocation2 + $0xf90] sm:$0xff] %vm5706, %v5692
      %6206 = vst.msk [vmem:[#allocation2 + $0xf98] sm:$0xff] %vm5706, %v5693
      %6207 = vst.msk [vmem:[#allocation2 + $0xfa0] sm:$0xff] %vm5706, %v5694
      %6208 = vst.msk [vmem:[#allocation2 + $0xfa8] sm:$0xff] %vm5706, %v5695
      %6209 = vst.msk [vmem:[#allocation2 + $0xfb0] sm:$0xff] %vm5706, %v5696
      %6210 = vst.msk [vmem:[#allocation2 + $0xfb8] sm:$0xff] %vm5706, %v5697
      %6211 = vst.msk [vmem:[#allocation2 + $0xfc0] sm:$0xff] %vm5706, %v5698
      %6212 = vst.msk [vmem:[#allocation2 + $0xfc8] sm:$0xff] %vm5706, %v5699
      %6213 = vst.msk [vmem:[#allocation2 + $0xfd0] sm:$0xff] %vm5706, %v5700
      %6214 = vst.msk [vmem:[#allocation2 + $0xfd8] sm:$0xff] %vm5706, %v5701
      %6215 = vst.msk [vmem:[#allocation2 + $0xfe0] sm:$0xff] %vm5706, %v5702
      %6216 = vst.msk [vmem:[#allocation2 + $0xfe8] sm:$0xff] %vm5706, %v5703
      %6217 = vst.msk [vmem:[#allocation2 + $0xff0] sm:$0xff] %vm5706, %v5704
      %6218 = vst.msk [vmem:[#allocation2 + $0xff8] sm:$0xff] %vm5706, %v5705
      // Predicated region
      $region41: #{tpu_custom_call.1} parent=35 // pred_check
        %p6219 = pneg %p301
      $region42: #{tpu_custom_call.1} parent=35 // pred_check_branch
        %6221 = sbr.rel (%p6219) target = $region44
      $region43: #{tpu_custom_call.1} parent=35 // pred_region
        %v6222 = vld [vmem:[#allocation2] sm:$0xff]
        %v6223 = vld [vmem:[#allocation2 + $0x8] sm:$0xff]
        %v6224 = vld [vmem:[#allocation2 + $0x10] sm:$0xff]
        %v6225 = vld [vmem:[#allocation2 + $0x18] sm:$0xff]
        %v6226 = vld [vmem:[#allocation2 + $0x20] sm:$0xff]
        %v6227 = vld [vmem:[#allocation2 + $0x28] sm:$0xff]
        %v6228 = vld [vmem:[#allocation2 + $0x30] sm:$0xff]
        %v6229 = vld [vmem:[#allocation2 + $0x38] sm:$0xff]
        %v6230 = vld [vmem:[#allocation2 + $0x40] sm:$0xff]
        %v6231 = vld [vmem:[#allocation2 + $0x48] sm:$0xff]
        %v6232 = vld [vmem:[#allocation2 + $0x50] sm:$0xff]
        %v6233 = vld [vmem:[#allocation2 + $0x58] sm:$0xff]
        %v6234 = vld [vmem:[#allocation2 + $0x60] sm:$0xff]
        %v6235 = vld [vmem:[#allocation2 + $0x68] sm:$0xff]
        %v6236 = vld [vmem:[#allocation2 + $0x70] sm:$0xff]
        %v6237 = vld [vmem:[#allocation2 + $0x78] sm:$0xff]
        %v6238 = vld [vmem:[#allocation2 + $0x80] sm:$0xff]
        %v6239 = vld [vmem:[#allocation2 + $0x88] sm:$0xff]
        %v6240 = vld [vmem:[#allocation2 + $0x90] sm:$0xff]
        %v6241 = vld [vmem:[#allocation2 + $0x98] sm:$0xff]
        %v6242 = vld [vmem:[#allocation2 + $0xa0] sm:$0xff]
        %v6243 = vld [vmem:[#allocation2 + $0xa8] sm:$0xff]
        %v6244 = vld [vmem:[#allocation2 + $0xb0] sm:$0xff]
        %v6245 = vld [vmem:[#allocation2 + $0xb8] sm:$0xff]
        %v6246 = vld [vmem:[#allocation2 + $0xc0] sm:$0xff]
        %v6247 = vld [vmem:[#allocation2 + $0xc8] sm:$0xff]
        %v6248 = vld [vmem:[#allocation2 + $0xd0] sm:$0xff]
        %v6249 = vld [vmem:[#allocation2 + $0xd8] sm:$0xff]
        %v6250 = vld [vmem:[#allocation2 + $0xe0] sm:$0xff]
        %v6251 = vld [vmem:[#allocation2 + $0xe8] sm:$0xff]
        %v6252 = vld [vmem:[#allocation2 + $0xf0] sm:$0xff]
        %v6253 = vld [vmem:[#allocation2 + $0xf8] sm:$0xff]
        %v6254 = vld [vmem:[#allocation2 + $0x100] sm:$0xff]
        %v6255 = vld [vmem:[#allocation2 + $0x108] sm:$0xff]
        %v6256 = vld [vmem:[#allocation2 + $0x110] sm:$0xff]
        %v6257 = vld [vmem:[#allocation2 + $0x118] sm:$0xff]
        %v6258 = vld [vmem:[#allocation2 + $0x120] sm:$0xff]
        %v6259 = vld [vmem:[#allocation2 + $0x128] sm:$0xff]
        %v6260 = vld [vmem:[#allocation2 + $0x130] sm:$0xff]
        %v6261 = vld [vmem:[#allocation2 + $0x138] sm:$0xff]
        %v6262 = vld [vmem:[#allocation2 + $0x140] sm:$0xff]
        %v6263 = vld [vmem:[#allocation2 + $0x148] sm:$0xff]
        %v6264 = vld [vmem:[#allocation2 + $0x150] sm:$0xff]
        %v6265 = vld [vmem:[#allocation2 + $0x158] sm:$0xff]
        %v6266 = vld [vmem:[#allocation2 + $0x160] sm:$0xff]
        %v6267 = vld [vmem:[#allocation2 + $0x168] sm:$0xff]
        %v6268 = vld [vmem:[#allocation2 + $0x170] sm:$0xff]
        %v6269 = vld [vmem:[#allocation2 + $0x178] sm:$0xff]
        %v6270 = vld [vmem:[#allocation2 + $0x180] sm:$0xff]
        %v6271 = vld [vmem:[#allocation2 + $0x188] sm:$0xff]
        %v6272 = vld [vmem:[#allocation2 + $0x190] sm:$0xff]
        %v6273 = vld [vmem:[#allocation2 + $0x198] sm:$0xff]
        %v6274 = vld [vmem:[#allocation2 + $0x1a0] sm:$0xff]
        %v6275 = vld [vmem:[#allocation2 + $0x1a8] sm:$0xff]
        %v6276 = vld [vmem:[#allocation2 + $0x1b0] sm:$0xff]
        %v6277 = vld [vmem:[#allocation2 + $0x1b8] sm:$0xff]
        %v6278 = vld [vmem:[#allocation2 + $0x1c0] sm:$0xff]
        %v6279 = vld [vmem:[#allocation2 + $0x1c8] sm:$0xff]
        %v6280 = vld [vmem:[#allocation2 + $0x1d0] sm:$0xff]
        %v6281 = vld [vmem:[#allocation2 + $0x1d8] sm:$0xff]
        %v6282 = vld [vmem:[#allocation2 + $0x1e0] sm:$0xff]
        %v6283 = vld [vmem:[#allocation2 + $0x1e8] sm:$0xff]
        %v6284 = vld [vmem:[#allocation2 + $0x1f0] sm:$0xff]
        %v6285 = vld [vmem:[#allocation2 + $0x1f8] sm:$0xff]
        %v6286 = vld [vmem:[#allocation2 + $0x200] sm:$0xff]
        %v6287 = vld [vmem:[#allocation2 + $0x208] sm:$0xff]
        %v6288 = vld [vmem:[#allocation2 + $0x210] sm:$0xff]
        %v6289 = vld [vmem:[#allocation2 + $0x218] sm:$0xff]
        %v6290 = vld [vmem:[#allocation2 + $0x220] sm:$0xff]
        %v6291 = vld [vmem:[#allocation2 + $0x228] sm:$0xff]
        %v6292 = vld [vmem:[#allocation2 + $0x230] sm:$0xff]
        %v6293 = vld [vmem:[#allocation2 + $0x238] sm:$0xff]
        %v6294 = vld [vmem:[#allocation2 + $0x240] sm:$0xff]
        %v6295 = vld [vmem:[#allocation2 + $0x248] sm:$0xff]
        %v6296 = vld [vmem:[#allocation2 + $0x250] sm:$0xff]
        %v6297 = vld [vmem:[#allocation2 + $0x258] sm:$0xff]
        %v6298 = vld [vmem:[#allocation2 + $0x260] sm:$0xff]
        %v6299 = vld [vmem:[#allocation2 + $0x268] sm:$0xff]
        %v6300 = vld [vmem:[#allocation2 + $0x270] sm:$0xff]
        %v6301 = vld [vmem:[#allocation2 + $0x278] sm:$0xff]
        %v6302 = vld [vmem:[#allocation2 + $0x280] sm:$0xff]
        %v6303 = vld [vmem:[#allocation2 + $0x288] sm:$0xff]
        %v6304 = vld [vmem:[#allocation2 + $0x290] sm:$0xff]
        %v6305 = vld [vmem:[#allocation2 + $0x298] sm:$0xff]
        %v6306 = vld [vmem:[#allocation2 + $0x2a0] sm:$0xff]
        %v6307 = vld [vmem:[#allocation2 + $0x2a8] sm:$0xff]
        %v6308 = vld [vmem:[#allocation2 + $0x2b0] sm:$0xff]
        %v6309 = vld [vmem:[#allocation2 + $0x2b8] sm:$0xff]
        %v6310 = vld [vmem:[#allocation2 + $0x2c0] sm:$0xff]
        %v6311 = vld [vmem:[#allocation2 + $0x2c8] sm:$0xff]
        %v6312 = vld [vmem:[#allocation2 + $0x2d0] sm:$0xff]
        %v6313 = vld [vmem:[#allocation2 + $0x2d8] sm:$0xff]
        %v6314 = vld [vmem:[#allocation2 + $0x2e0] sm:$0xff]
        %v6315 = vld [vmem:[#allocation2 + $0x2e8] sm:$0xff]
        %v6316 = vld [vmem:[#allocation2 + $0x2f0] sm:$0xff]
        %v6317 = vld [vmem:[#allocation2 + $0x2f8] sm:$0xff]
        %v6318 = vld [vmem:[#allocation2 + $0x300] sm:$0xff]
        %v6319 = vld [vmem:[#allocation2 + $0x308] sm:$0xff]
        %v6320 = vld [vmem:[#allocation2 + $0x310] sm:$0xff]
        %v6321 = vld [vmem:[#allocation2 + $0x318] sm:$0xff]
        %v6322 = vld [vmem:[#allocation2 + $0x320] sm:$0xff]
        %v6323 = vld [vmem:[#allocation2 + $0x328] sm:$0xff]
        %v6324 = vld [vmem:[#allocation2 + $0x330] sm:$0xff]
        %v6325 = vld [vmem:[#allocation2 + $0x338] sm:$0xff]
        %v6326 = vld [vmem:[#allocation2 + $0x340] sm:$0xff]
        %v6327 = vld [vmem:[#allocation2 + $0x348] sm:$0xff]
        %v6328 = vld [vmem:[#allocation2 + $0x350] sm:$0xff]
        %v6329 = vld [vmem:[#allocation2 + $0x358] sm:$0xff]
        %v6330 = vld [vmem:[#allocation2 + $0x360] sm:$0xff]
        %v6331 = vld [vmem:[#allocation2 + $0x368] sm:$0xff]
        %v6332 = vld [vmem:[#allocation2 + $0x370] sm:$0xff]
        %v6333 = vld [vmem:[#allocation2 + $0x378] sm:$0xff]
        %v6334 = vld [vmem:[#allocation2 + $0x380] sm:$0xff]
        %v6335 = vld [vmem:[#allocation2 + $0x388] sm:$0xff]
        %v6336 = vld [vmem:[#allocation2 + $0x390] sm:$0xff]
        %v6337 = vld [vmem:[#allocation2 + $0x398] sm:$0xff]
        %v6338 = vld [vmem:[#allocation2 + $0x3a0] sm:$0xff]
        %v6339 = vld [vmem:[#allocation2 + $0x3a8] sm:$0xff]
        %v6340 = vld [vmem:[#allocation2 + $0x3b0] sm:$0xff]
        %v6341 = vld [vmem:[#allocation2 + $0x3b8] sm:$0xff]
        %v6342 = vld [vmem:[#allocation2 + $0x3c0] sm:$0xff]
        %v6343 = vld [vmem:[#allocation2 + $0x3c8] sm:$0xff]
        %v6344 = vld [vmem:[#allocation2 + $0x3d0] sm:$0xff]
        %v6345 = vld [vmem:[#allocation2 + $0x3d8] sm:$0xff]
        %v6346 = vld [vmem:[#allocation2 + $0x3e0] sm:$0xff]
        %v6347 = vld [vmem:[#allocation2 + $0x3e8] sm:$0xff]
        %v6348 = vld [vmem:[#allocation2 + $0x3f0] sm:$0xff]
        %v6349 = vld [vmem:[#allocation2 + $0x3f8] sm:$0xff]
        %v6350 = vld [vmem:[#allocation2 + $0x400] sm:$0xff]
        %v6351 = vld [vmem:[#allocation2 + $0x408] sm:$0xff]
        %v6352 = vld [vmem:[#allocation2 + $0x410] sm:$0xff]
        %v6353 = vld [vmem:[#allocation2 + $0x418] sm:$0xff]
        %v6354 = vld [vmem:[#allocation2 + $0x420] sm:$0xff]
        %v6355 = vld [vmem:[#allocation2 + $0x428] sm:$0xff]
        %v6356 = vld [vmem:[#allocation2 + $0x430] sm:$0xff]
        %v6357 = vld [vmem:[#allocation2 + $0x438] sm:$0xff]
        %v6358 = vld [vmem:[#allocation2 + $0x440] sm:$0xff]
        %v6359 = vld [vmem:[#allocation2 + $0x448] sm:$0xff]
        %v6360 = vld [vmem:[#allocation2 + $0x450] sm:$0xff]
        %v6361 = vld [vmem:[#allocation2 + $0x458] sm:$0xff]
        %v6362 = vld [vmem:[#allocation2 + $0x460] sm:$0xff]
        %v6363 = vld [vmem:[#allocation2 + $0x468] sm:$0xff]
        %v6364 = vld [vmem:[#allocation2 + $0x470] sm:$0xff]
        %v6365 = vld [vmem:[#allocation2 + $0x478] sm:$0xff]
        %v6366 = vld [vmem:[#allocation2 + $0x480] sm:$0xff]
        %v6367 = vld [vmem:[#allocation2 + $0x488] sm:$0xff]
        %v6368 = vld [vmem:[#allocation2 + $0x490] sm:$0xff]
        %v6369 = vld [vmem:[#allocation2 + $0x498] sm:$0xff]
        %v6370 = vld [vmem:[#allocation2 + $0x4a0] sm:$0xff]
        %v6371 = vld [vmem:[#allocation2 + $0x4a8] sm:$0xff]
        %v6372 = vld [vmem:[#allocation2 + $0x4b0] sm:$0xff]
        %v6373 = vld [vmem:[#allocation2 + $0x4b8] sm:$0xff]
        %v6374 = vld [vmem:[#allocation2 + $0x4c0] sm:$0xff]
        %v6375 = vld [vmem:[#allocation2 + $0x4c8] sm:$0xff]
        %v6376 = vld [vmem:[#allocation2 + $0x4d0] sm:$0xff]
        %v6377 = vld [vmem:[#allocation2 + $0x4d8] sm:$0xff]
        %v6378 = vld [vmem:[#allocation2 + $0x4e0] sm:$0xff]
        %v6379 = vld [vmem:[#allocation2 + $0x4e8] sm:$0xff]
        %v6380 = vld [vmem:[#allocation2 + $0x4f0] sm:$0xff]
        %v6381 = vld [vmem:[#allocation2 + $0x4f8] sm:$0xff]
        %v6382 = vld [vmem:[#allocation2 + $0x500] sm:$0xff]
        %v6383 = vld [vmem:[#allocation2 + $0x508] sm:$0xff]
        %v6384 = vld [vmem:[#allocation2 + $0x510] sm:$0xff]
        %v6385 = vld [vmem:[#allocation2 + $0x518] sm:$0xff]
        %v6386 = vld [vmem:[#allocation2 + $0x520] sm:$0xff]
        %v6387 = vld [vmem:[#allocation2 + $0x528] sm:$0xff]
        %v6388 = vld [vmem:[#allocation2 + $0x530] sm:$0xff]
        %v6389 = vld [vmem:[#allocation2 + $0x538] sm:$0xff]
        %v6390 = vld [vmem:[#allocation2 + $0x540] sm:$0xff]
        %v6391 = vld [vmem:[#allocation2 + $0x548] sm:$0xff]
        %v6392 = vld [vmem:[#allocation2 + $0x550] sm:$0xff]
        %v6393 = vld [vmem:[#allocation2 + $0x558] sm:$0xff]
        %v6394 = vld [vmem:[#allocation2 + $0x560] sm:$0xff]
        %v6395 = vld [vmem:[#allocation2 + $0x568] sm:$0xff]
        %v6396 = vld [vmem:[#allocation2 + $0x570] sm:$0xff]
        %v6397 = vld [vmem:[#allocation2 + $0x578] sm:$0xff]
        %v6398 = vld [vmem:[#allocation2 + $0x580] sm:$0xff]
        %v6399 = vld [vmem:[#allocation2 + $0x588] sm:$0xff]
        %v6400 = vld [vmem:[#allocation2 + $0x590] sm:$0xff]
        %v6401 = vld [vmem:[#allocation2 + $0x598] sm:$0xff]
        %v6402 = vld [vmem:[#allocation2 + $0x5a0] sm:$0xff]
        %v6403 = vld [vmem:[#allocation2 + $0x5a8] sm:$0xff]
        %v6404 = vld [vmem:[#allocation2 + $0x5b0] sm:$0xff]
        %v6405 = vld [vmem:[#allocation2 + $0x5b8] sm:$0xff]
        %v6406 = vld [vmem:[#allocation2 + $0x5c0] sm:$0xff]
        %v6407 = vld [vmem:[#allocation2 + $0x5c8] sm:$0xff]
        %v6408 = vld [vmem:[#allocation2 + $0x5d0] sm:$0xff]
        %v6409 = vld [vmem:[#allocation2 + $0x5d8] sm:$0xff]
        %v6410 = vld [vmem:[#allocation2 + $0x5e0] sm:$0xff]
        %v6411 = vld [vmem:[#allocation2 + $0x5e8] sm:$0xff]
        %v6412 = vld [vmem:[#allocation2 + $0x5f0] sm:$0xff]
        %v6413 = vld [vmem:[#allocation2 + $0x5f8] sm:$0xff]
        %v6414 = vld [vmem:[#allocation2 + $0x600] sm:$0xff]
        %v6415 = vld [vmem:[#allocation2 + $0x608] sm:$0xff]
        %v6416 = vld [vmem:[#allocation2 + $0x610] sm:$0xff]
        %v6417 = vld [vmem:[#allocation2 + $0x618] sm:$0xff]
        %v6418 = vld [vmem:[#allocation2 + $0x620] sm:$0xff]
        %v6419 = vld [vmem:[#allocation2 + $0x628] sm:$0xff]
        %v6420 = vld [vmem:[#allocation2 + $0x630] sm:$0xff]
        %v6421 = vld [vmem:[#allocation2 + $0x638] sm:$0xff]
        %v6422 = vld [vmem:[#allocation2 + $0x640] sm:$0xff]
        %v6423 = vld [vmem:[#allocation2 + $0x648] sm:$0xff]
        %v6424 = vld [vmem:[#allocation2 + $0x650] sm:$0xff]
        %v6425 = vld [vmem:[#allocation2 + $0x658] sm:$0xff]
        %v6426 = vld [vmem:[#allocation2 + $0x660] sm:$0xff]
        %v6427 = vld [vmem:[#allocation2 + $0x668] sm:$0xff]
        %v6428 = vld [vmem:[#allocation2 + $0x670] sm:$0xff]
        %v6429 = vld [vmem:[#allocation2 + $0x678] sm:$0xff]
        %v6430 = vld [vmem:[#allocation2 + $0x680] sm:$0xff]
        %v6431 = vld [vmem:[#allocation2 + $0x688] sm:$0xff]
        %v6432 = vld [vmem:[#allocation2 + $0x690] sm:$0xff]
        %v6433 = vld [vmem:[#allocation2 + $0x698] sm:$0xff]
        %v6434 = vld [vmem:[#allocation2 + $0x6a0] sm:$0xff]
        %v6435 = vld [vmem:[#allocation2 + $0x6a8] sm:$0xff]
        %v6436 = vld [vmem:[#allocation2 + $0x6b0] sm:$0xff]
        %v6437 = vld [vmem:[#allocation2 + $0x6b8] sm:$0xff]
        %v6438 = vld [vmem:[#allocation2 + $0x6c0] sm:$0xff]
        %v6439 = vld [vmem:[#allocation2 + $0x6c8] sm:$0xff]
        %v6440 = vld [vmem:[#allocation2 + $0x6d0] sm:$0xff]
        %v6441 = vld [vmem:[#allocation2 + $0x6d8] sm:$0xff]
        %v6442 = vld [vmem:[#allocation2 + $0x6e0] sm:$0xff]
        %v6443 = vld [vmem:[#allocation2 + $0x6e8] sm:$0xff]
        %v6444 = vld [vmem:[#allocation2 + $0x6f0] sm:$0xff]
        %v6445 = vld [vmem:[#allocation2 + $0x6f8] sm:$0xff]
        %v6446 = vld [vmem:[#allocation2 + $0x700] sm:$0xff]
        %v6447 = vld [vmem:[#allocation2 + $0x708] sm:$0xff]
        %v6448 = vld [vmem:[#allocation2 + $0x710] sm:$0xff]
        %v6449 = vld [vmem:[#allocation2 + $0x718] sm:$0xff]
        %v6450 = vld [vmem:[#allocation2 + $0x720] sm:$0xff]
        %v6451 = vld [vmem:[#allocation2 + $0x728] sm:$0xff]
        %v6452 = vld [vmem:[#allocation2 + $0x730] sm:$0xff]
        %v6453 = vld [vmem:[#allocation2 + $0x738] sm:$0xff]
        %v6454 = vld [vmem:[#allocation2 + $0x740] sm:$0xff]
        %v6455 = vld [vmem:[#allocation2 + $0x748] sm:$0xff]
        %v6456 = vld [vmem:[#allocation2 + $0x750] sm:$0xff]
        %v6457 = vld [vmem:[#allocation2 + $0x758] sm:$0xff]
        %v6458 = vld [vmem:[#allocation2 + $0x760] sm:$0xff]
        %v6459 = vld [vmem:[#allocation2 + $0x768] sm:$0xff]
        %v6460 = vld [vmem:[#allocation2 + $0x770] sm:$0xff]
        %v6461 = vld [vmem:[#allocation2 + $0x778] sm:$0xff]
        %v6462 = vld [vmem:[#allocation2 + $0x780] sm:$0xff]
        %v6463 = vld [vmem:[#allocation2 + $0x788] sm:$0xff]
        %v6464 = vld [vmem:[#allocation2 + $0x790] sm:$0xff]
        %v6465 = vld [vmem:[#allocation2 + $0x798] sm:$0xff]
        %v6466 = vld [vmem:[#allocation2 + $0x7a0] sm:$0xff]
        %v6467 = vld [vmem:[#allocation2 + $0x7a8] sm:$0xff]
        %v6468 = vld [vmem:[#allocation2 + $0x7b0] sm:$0xff]
        %v6469 = vld [vmem:[#allocation2 + $0x7b8] sm:$0xff]
        %v6470 = vld [vmem:[#allocation2 + $0x7c0] sm:$0xff]
        %v6471 = vld [vmem:[#allocation2 + $0x7c8] sm:$0xff]
        %v6472 = vld [vmem:[#allocation2 + $0x7d0] sm:$0xff]
        %v6473 = vld [vmem:[#allocation2 + $0x7d8] sm:$0xff]
        %v6474 = vld [vmem:[#allocation2 + $0x7e0] sm:$0xff]
        %v6475 = vld [vmem:[#allocation2 + $0x7e8] sm:$0xff]
        %v6476 = vld [vmem:[#allocation2 + $0x7f0] sm:$0xff]
        %v6477 = vld [vmem:[#allocation2 + $0x7f8] sm:$0xff]
        %v6478 = vld [vmem:[#allocation2 + $0x800] sm:$0xff]
        %v6479 = vld [vmem:[#allocation2 + $0x808] sm:$0xff]
        %v6480 = vld [vmem:[#allocation2 + $0x810] sm:$0xff]
        %v6481 = vld [vmem:[#allocation2 + $0x818] sm:$0xff]
        %v6482 = vld [vmem:[#allocation2 + $0x820] sm:$0xff]
        %v6483 = vld [vmem:[#allocation2 + $0x828] sm:$0xff]
        %v6484 = vld [vmem:[#allocation2 + $0x830] sm:$0xff]
        %v6485 = vld [vmem:[#allocation2 + $0x838] sm:$0xff]
        %v6486 = vld [vmem:[#allocation2 + $0x840] sm:$0xff]
        %v6487 = vld [vmem:[#allocation2 + $0x848] sm:$0xff]
        %v6488 = vld [vmem:[#allocation2 + $0x850] sm:$0xff]
        %v6489 = vld [vmem:[#allocation2 + $0x858] sm:$0xff]
        %v6490 = vld [vmem:[#allocation2 + $0x860] sm:$0xff]
        %v6491 = vld [vmem:[#allocation2 + $0x868] sm:$0xff]
        %v6492 = vld [vmem:[#allocation2 + $0x870] sm:$0xff]
        %v6493 = vld [vmem:[#allocation2 + $0x878] sm:$0xff]
        %v6494 = vld [vmem:[#allocation2 + $0x880] sm:$0xff]
        %v6495 = vld [vmem:[#allocation2 + $0x888] sm:$0xff]
        %v6496 = vld [vmem:[#allocation2 + $0x890] sm:$0xff]
        %v6497 = vld [vmem:[#allocation2 + $0x898] sm:$0xff]
        %v6498 = vld [vmem:[#allocation2 + $0x8a0] sm:$0xff]
        %v6499 = vld [vmem:[#allocation2 + $0x8a8] sm:$0xff]
        %v6500 = vld [vmem:[#allocation2 + $0x8b0] sm:$0xff]
        %v6501 = vld [vmem:[#allocation2 + $0x8b8] sm:$0xff]
        %v6502 = vld [vmem:[#allocation2 + $0x8c0] sm:$0xff]
        %v6503 = vld [vmem:[#allocation2 + $0x8c8] sm:$0xff]
        %v6504 = vld [vmem:[#allocation2 + $0x8d0] sm:$0xff]
        %v6505 = vld [vmem:[#allocation2 + $0x8d8] sm:$0xff]
        %v6506 = vld [vmem:[#allocation2 + $0x8e0] sm:$0xff]
        %v6507 = vld [vmem:[#allocation2 + $0x8e8] sm:$0xff]
        %v6508 = vld [vmem:[#allocation2 + $0x8f0] sm:$0xff]
        %v6509 = vld [vmem:[#allocation2 + $0x8f8] sm:$0xff]
        %v6510 = vld [vmem:[#allocation2 + $0x900] sm:$0xff]
        %v6511 = vld [vmem:[#allocation2 + $0x908] sm:$0xff]
        %v6512 = vld [vmem:[#allocation2 + $0x910] sm:$0xff]
        %v6513 = vld [vmem:[#allocation2 + $0x918] sm:$0xff]
        %v6514 = vld [vmem:[#allocation2 + $0x920] sm:$0xff]
        %v6515 = vld [vmem:[#allocation2 + $0x928] sm:$0xff]
        %v6516 = vld [vmem:[#allocation2 + $0x930] sm:$0xff]
        %v6517 = vld [vmem:[#allocation2 + $0x938] sm:$0xff]
        %v6518 = vld [vmem:[#allocation2 + $0x940] sm:$0xff]
        %v6519 = vld [vmem:[#allocation2 + $0x948] sm:$0xff]
        %v6520 = vld [vmem:[#allocation2 + $0x950] sm:$0xff]
        %v6521 = vld [vmem:[#allocation2 + $0x958] sm:$0xff]
        %v6522 = vld [vmem:[#allocation2 + $0x960] sm:$0xff]
        %v6523 = vld [vmem:[#allocation2 + $0x968] sm:$0xff]
        %v6524 = vld [vmem:[#allocation2 + $0x970] sm:$0xff]
        %v6525 = vld [vmem:[#allocation2 + $0x978] sm:$0xff]
        %v6526 = vld [vmem:[#allocation2 + $0x980] sm:$0xff]
        %v6527 = vld [vmem:[#allocation2 + $0x988] sm:$0xff]
        %v6528 = vld [vmem:[#allocation2 + $0x990] sm:$0xff]
        %v6529 = vld [vmem:[#allocation2 + $0x998] sm:$0xff]
        %v6530 = vld [vmem:[#allocation2 + $0x9a0] sm:$0xff]
        %v6531 = vld [vmem:[#allocation2 + $0x9a8] sm:$0xff]
        %v6532 = vld [vmem:[#allocation2 + $0x9b0] sm:$0xff]
        %v6533 = vld [vmem:[#allocation2 + $0x9b8] sm:$0xff]
        %v6534 = vld [vmem:[#allocation2 + $0x9c0] sm:$0xff]
        %v6535 = vld [vmem:[#allocation2 + $0x9c8] sm:$0xff]
        %v6536 = vld [vmem:[#allocation2 + $0x9d0] sm:$0xff]
        %v6537 = vld [vmem:[#allocation2 + $0x9d8] sm:$0xff]
        %v6538 = vld [vmem:[#allocation2 + $0x9e0] sm:$0xff]
        %v6539 = vld [vmem:[#allocation2 + $0x9e8] sm:$0xff]
        %v6540 = vld [vmem:[#allocation2 + $0x9f0] sm:$0xff]
        %v6541 = vld [vmem:[#allocation2 + $0x9f8] sm:$0xff]
        %v6542 = vld [vmem:[#allocation2 + $0xa00] sm:$0xff]
        %v6543 = vld [vmem:[#allocation2 + $0xa08] sm:$0xff]
        %v6544 = vld [vmem:[#allocation2 + $0xa10] sm:$0xff]
        %v6545 = vld [vmem:[#allocation2 + $0xa18] sm:$0xff]
        %v6546 = vld [vmem:[#allocation2 + $0xa20] sm:$0xff]
        %v6547 = vld [vmem:[#allocation2 + $0xa28] sm:$0xff]
        %v6548 = vld [vmem:[#allocation2 + $0xa30] sm:$0xff]
        %v6549 = vld [vmem:[#allocation2 + $0xa38] sm:$0xff]
        %v6550 = vld [vmem:[#allocation2 + $0xa40] sm:$0xff]
        %v6551 = vld [vmem:[#allocation2 + $0xa48] sm:$0xff]
        %v6552 = vld [vmem:[#allocation2 + $0xa50] sm:$0xff]
        %v6553 = vld [vmem:[#allocation2 + $0xa58] sm:$0xff]
        %v6554 = vld [vmem:[#allocation2 + $0xa60] sm:$0xff]
        %v6555 = vld [vmem:[#allocation2 + $0xa68] sm:$0xff]
        %v6556 = vld [vmem:[#allocation2 + $0xa70] sm:$0xff]
        %v6557 = vld [vmem:[#allocation2 + $0xa78] sm:$0xff]
        %v6558 = vld [vmem:[#allocation2 + $0xa80] sm:$0xff]
        %v6559 = vld [vmem:[#allocation2 + $0xa88] sm:$0xff]
        %v6560 = vld [vmem:[#allocation2 + $0xa90] sm:$0xff]
        %v6561 = vld [vmem:[#allocation2 + $0xa98] sm:$0xff]
        %v6562 = vld [vmem:[#allocation2 + $0xaa0] sm:$0xff]
        %v6563 = vld [vmem:[#allocation2 + $0xaa8] sm:$0xff]
        %v6564 = vld [vmem:[#allocation2 + $0xab0] sm:$0xff]
        %v6565 = vld [vmem:[#allocation2 + $0xab8] sm:$0xff]
        %v6566 = vld [vmem:[#allocation2 + $0xac0] sm:$0xff]
        %v6567 = vld [vmem:[#allocation2 + $0xac8] sm:$0xff]
        %v6568 = vld [vmem:[#allocation2 + $0xad0] sm:$0xff]
        %v6569 = vld [vmem:[#allocation2 + $0xad8] sm:$0xff]
        %v6570 = vld [vmem:[#allocation2 + $0xae0] sm:$0xff]
        %v6571 = vld [vmem:[#allocation2 + $0xae8] sm:$0xff]
        %v6572 = vld [vmem:[#allocation2 + $0xaf0] sm:$0xff]
        %v6573 = vld [vmem:[#allocation2 + $0xaf8] sm:$0xff]
        %v6574 = vld [vmem:[#allocation2 + $0xb00] sm:$0xff]
        %v6575 = vld [vmem:[#allocation2 + $0xb08] sm:$0xff]
        %v6576 = vld [vmem:[#allocation2 + $0xb10] sm:$0xff]
        %v6577 = vld [vmem:[#allocation2 + $0xb18] sm:$0xff]
        %v6578 = vld [vmem:[#allocation2 + $0xb20] sm:$0xff]
        %v6579 = vld [vmem:[#allocation2 + $0xb28] sm:$0xff]
        %v6580 = vld [vmem:[#allocation2 + $0xb30] sm:$0xff]
        %v6581 = vld [vmem:[#allocation2 + $0xb38] sm:$0xff]
        %v6582 = vld [vmem:[#allocation2 + $0xb40] sm:$0xff]
        %v6583 = vld [vmem:[#allocation2 + $0xb48] sm:$0xff]
        %v6584 = vld [vmem:[#allocation2 + $0xb50] sm:$0xff]
        %v6585 = vld [vmem:[#allocation2 + $0xb58] sm:$0xff]
        %v6586 = vld [vmem:[#allocation2 + $0xb60] sm:$0xff]
        %v6587 = vld [vmem:[#allocation2 + $0xb68] sm:$0xff]
        %v6588 = vld [vmem:[#allocation2 + $0xb70] sm:$0xff]
        %v6589 = vld [vmem:[#allocation2 + $0xb78] sm:$0xff]
        %v6590 = vld [vmem:[#allocation2 + $0xb80] sm:$0xff]
        %v6591 = vld [vmem:[#allocation2 + $0xb88] sm:$0xff]
        %v6592 = vld [vmem:[#allocation2 + $0xb90] sm:$0xff]
        %v6593 = vld [vmem:[#allocation2 + $0xb98] sm:$0xff]
        %v6594 = vld [vmem:[#allocation2 + $0xba0] sm:$0xff]
        %v6595 = vld [vmem:[#allocation2 + $0xba8] sm:$0xff]
        %v6596 = vld [vmem:[#allocation2 + $0xbb0] sm:$0xff]
        %v6597 = vld [vmem:[#allocation2 + $0xbb8] sm:$0xff]
        %v6598 = vld [vmem:[#allocation2 + $0xbc0] sm:$0xff]
        %v6599 = vld [vmem:[#allocation2 + $0xbc8] sm:$0xff]
        %v6600 = vld [vmem:[#allocation2 + $0xbd0] sm:$0xff]
        %v6601 = vld [vmem:[#allocation2 + $0xbd8] sm:$0xff]
        %v6602 = vld [vmem:[#allocation2 + $0xbe0] sm:$0xff]
        %v6603 = vld [vmem:[#allocation2 + $0xbe8] sm:$0xff]
        %v6604 = vld [vmem:[#allocation2 + $0xbf0] sm:$0xff]
        %v6605 = vld [vmem:[#allocation2 + $0xbf8] sm:$0xff]
        %v6606 = vld [vmem:[#allocation2 + $0xc00] sm:$0xff]
        %v6607 = vld [vmem:[#allocation2 + $0xc08] sm:$0xff]
        %v6608 = vld [vmem:[#allocation2 + $0xc10] sm:$0xff]
        %v6609 = vld [vmem:[#allocation2 + $0xc18] sm:$0xff]
        %v6610 = vld [vmem:[#allocation2 + $0xc20] sm:$0xff]
        %v6611 = vld [vmem:[#allocation2 + $0xc28] sm:$0xff]
        %v6612 = vld [vmem:[#allocation2 + $0xc30] sm:$0xff]
        %v6613 = vld [vmem:[#allocation2 + $0xc38] sm:$0xff]
        %v6614 = vld [vmem:[#allocation2 + $0xc40] sm:$0xff]
        %v6615 = vld [vmem:[#allocation2 + $0xc48] sm:$0xff]
        %v6616 = vld [vmem:[#allocation2 + $0xc50] sm:$0xff]
        %v6617 = vld [vmem:[#allocation2 + $0xc58] sm:$0xff]
        %v6618 = vld [vmem:[#allocation2 + $0xc60] sm:$0xff]
        %v6619 = vld [vmem:[#allocation2 + $0xc68] sm:$0xff]
        %v6620 = vld [vmem:[#allocation2 + $0xc70] sm:$0xff]
        %v6621 = vld [vmem:[#allocation2 + $0xc78] sm:$0xff]
        %v6622 = vld [vmem:[#allocation2 + $0xc80] sm:$0xff]
        %v6623 = vld [vmem:[#allocation2 + $0xc88] sm:$0xff]
        %v6624 = vld [vmem:[#allocation2 + $0xc90] sm:$0xff]
        %v6625 = vld [vmem:[#allocation2 + $0xc98] sm:$0xff]
        %v6626 = vld [vmem:[#allocation2 + $0xca0] sm:$0xff]
        %v6627 = vld [vmem:[#allocation2 + $0xca8] sm:$0xff]
        %v6628 = vld [vmem:[#allocation2 + $0xcb0] sm:$0xff]
        %v6629 = vld [vmem:[#allocation2 + $0xcb8] sm:$0xff]
        %v6630 = vld [vmem:[#allocation2 + $0xcc0] sm:$0xff]
        %v6631 = vld [vmem:[#allocation2 + $0xcc8] sm:$0xff]
        %v6632 = vld [vmem:[#allocation2 + $0xcd0] sm:$0xff]
        %v6633 = vld [vmem:[#allocation2 + $0xcd8] sm:$0xff]
        %v6634 = vld [vmem:[#allocation2 + $0xce0] sm:$0xff]
        %v6635 = vld [vmem:[#allocation2 + $0xce8] sm:$0xff]
        %v6636 = vld [vmem:[#allocation2 + $0xcf0] sm:$0xff]
        %v6637 = vld [vmem:[#allocation2 + $0xcf8] sm:$0xff]
        %v6638 = vld [vmem:[#allocation2 + $0xd00] sm:$0xff]
        %v6639 = vld [vmem:[#allocation2 + $0xd08] sm:$0xff]
        %v6640 = vld [vmem:[#allocation2 + $0xd10] sm:$0xff]
        %v6641 = vld [vmem:[#allocation2 + $0xd18] sm:$0xff]
        %v6642 = vld [vmem:[#allocation2 + $0xd20] sm:$0xff]
        %v6643 = vld [vmem:[#allocation2 + $0xd28] sm:$0xff]
        %v6644 = vld [vmem:[#allocation2 + $0xd30] sm:$0xff]
        %v6645 = vld [vmem:[#allocation2 + $0xd38] sm:$0xff]
        %v6646 = vld [vmem:[#allocation2 + $0xd40] sm:$0xff]
        %v6647 = vld [vmem:[#allocation2 + $0xd48] sm:$0xff]
        %v6648 = vld [vmem:[#allocation2 + $0xd50] sm:$0xff]
        %v6649 = vld [vmem:[#allocation2 + $0xd58] sm:$0xff]
        %v6650 = vld [vmem:[#allocation2 + $0xd60] sm:$0xff]
        %v6651 = vld [vmem:[#allocation2 + $0xd68] sm:$0xff]
        %v6652 = vld [vmem:[#allocation2 + $0xd70] sm:$0xff]
        %v6653 = vld [vmem:[#allocation2 + $0xd78] sm:$0xff]
        %v6654 = vld [vmem:[#allocation2 + $0xd80] sm:$0xff]
        %v6655 = vld [vmem:[#allocation2 + $0xd88] sm:$0xff]
        %v6656 = vld [vmem:[#allocation2 + $0xd90] sm:$0xff]
        %v6657 = vld [vmem:[#allocation2 + $0xd98] sm:$0xff]
        %v6658 = vld [vmem:[#allocation2 + $0xda0] sm:$0xff]
        %v6659 = vld [vmem:[#allocation2 + $0xda8] sm:$0xff]
        %v6660 = vld [vmem:[#allocation2 + $0xdb0] sm:$0xff]
        %v6661 = vld [vmem:[#allocation2 + $0xdb8] sm:$0xff]
        %v6662 = vld [vmem:[#allocation2 + $0xdc0] sm:$0xff]
        %v6663 = vld [vmem:[#allocation2 + $0xdc8] sm:$0xff]
        %v6664 = vld [vmem:[#allocation2 + $0xdd0] sm:$0xff]
        %v6665 = vld [vmem:[#allocation2 + $0xdd8] sm:$0xff]
        %v6666 = vld [vmem:[#allocation2 + $0xde0] sm:$0xff]
        %v6667 = vld [vmem:[#allocation2 + $0xde8] sm:$0xff]
        %v6668 = vld [vmem:[#allocation2 + $0xdf0] sm:$0xff]
        %v6669 = vld [vmem:[#allocation2 + $0xdf8] sm:$0xff]
        %v6670 = vld [vmem:[#allocation2 + $0xe00] sm:$0xff]
        %v6671 = vld [vmem:[#allocation2 + $0xe08] sm:$0xff]
        %v6672 = vld [vmem:[#allocation2 + $0xe10] sm:$0xff]
        %v6673 = vld [vmem:[#allocation2 + $0xe18] sm:$0xff]
        %v6674 = vld [vmem:[#allocation2 + $0xe20] sm:$0xff]
        %v6675 = vld [vmem:[#allocation2 + $0xe28] sm:$0xff]
        %v6676 = vld [vmem:[#allocation2 + $0xe30] sm:$0xff]
        %v6677 = vld [vmem:[#allocation2 + $0xe38] sm:$0xff]
        %v6678 = vld [vmem:[#allocation2 + $0xe40] sm:$0xff]
        %v6679 = vld [vmem:[#allocation2 + $0xe48] sm:$0xff]
        %v6680 = vld [vmem:[#allocation2 + $0xe50] sm:$0xff]
        %v6681 = vld [vmem:[#allocation2 + $0xe58] sm:$0xff]
        %v6682 = vld [vmem:[#allocation2 + $0xe60] sm:$0xff]
        %v6683 = vld [vmem:[#allocation2 + $0xe68] sm:$0xff]
        %v6684 = vld [vmem:[#allocation2 + $0xe70] sm:$0xff]
        %v6685 = vld [vmem:[#allocation2 + $0xe78] sm:$0xff]
        %v6686 = vld [vmem:[#allocation2 + $0xe80] sm:$0xff]
        %v6687 = vld [vmem:[#allocation2 + $0xe88] sm:$0xff]
        %v6688 = vld [vmem:[#allocation2 + $0xe90] sm:$0xff]
        %v6689 = vld [vmem:[#allocation2 + $0xe98] sm:$0xff]
        %v6690 = vld [vmem:[#allocation2 + $0xea0] sm:$0xff]
        %v6691 = vld [vmem:[#allocation2 + $0xea8] sm:$0xff]
        %v6692 = vld [vmem:[#allocation2 + $0xeb0] sm:$0xff]
        %v6693 = vld [vmem:[#allocation2 + $0xeb8] sm:$0xff]
        %v6694 = vld [vmem:[#allocation2 + $0xec0] sm:$0xff]
        %v6695 = vld [vmem:[#allocation2 + $0xec8] sm:$0xff]
        %v6696 = vld [vmem:[#allocation2 + $0xed0] sm:$0xff]
        %v6697 = vld [vmem:[#allocation2 + $0xed8] sm:$0xff]
        %v6698 = vld [vmem:[#allocation2 + $0xee0] sm:$0xff]
        %v6699 = vld [vmem:[#allocation2 + $0xee8] sm:$0xff]
        %v6700 = vld [vmem:[#allocation2 + $0xef0] sm:$0xff]
        %v6701 = vld [vmem:[#allocation2 + $0xef8] sm:$0xff]
        %v6702 = vld [vmem:[#allocation2 + $0xf00] sm:$0xff]
        %v6703 = vld [vmem:[#allocation2 + $0xf08] sm:$0xff]
        %v6704 = vld [vmem:[#allocation2 + $0xf10] sm:$0xff]
        %v6705 = vld [vmem:[#allocation2 + $0xf18] sm:$0xff]
        %v6706 = vld [vmem:[#allocation2 + $0xf20] sm:$0xff]
        %v6707 = vld [vmem:[#allocation2 + $0xf28] sm:$0xff]
        %v6708 = vld [vmem:[#allocation2 + $0xf30] sm:$0xff]
        %v6709 = vld [vmem:[#allocation2 + $0xf38] sm:$0xff]
        %v6710 = vld [vmem:[#allocation2 + $0xf40] sm:$0xff]
        %v6711 = vld [vmem:[#allocation2 + $0xf48] sm:$0xff]
        %v6712 = vld [vmem:[#allocation2 + $0xf50] sm:$0xff]
        %v6713 = vld [vmem:[#allocation2 + $0xf58] sm:$0xff]
        %v6714 = vld [vmem:[#allocation2 + $0xf60] sm:$0xff]
        %v6715 = vld [vmem:[#allocation2 + $0xf68] sm:$0xff]
        %v6716 = vld [vmem:[#allocation2 + $0xf70] sm:$0xff]
        %v6717 = vld [vmem:[#allocation2 + $0xf78] sm:$0xff]
        %v6718 = vld [vmem:[#allocation2 + $0xf80] sm:$0xff]
        %v6719 = vld [vmem:[#allocation2 + $0xf88] sm:$0xff]
        %v6720 = vld [vmem:[#allocation2 + $0xf90] sm:$0xff]
        %v6721 = vld [vmem:[#allocation2 + $0xf98] sm:$0xff]
        %v6722 = vld [vmem:[#allocation2 + $0xfa0] sm:$0xff]
        %v6723 = vld [vmem:[#allocation2 + $0xfa8] sm:$0xff]
        %v6724 = vld [vmem:[#allocation2 + $0xfb0] sm:$0xff]
        %v6725 = vld [vmem:[#allocation2 + $0xfb8] sm:$0xff]
        %v6726 = vld [vmem:[#allocation2 + $0xfc0] sm:$0xff]
        %v6727 = vld [vmem:[#allocation2 + $0xfc8] sm:$0xff]
        %v6728 = vld [vmem:[#allocation2 + $0xfd0] sm:$0xff]
        %v6729 = vld [vmem:[#allocation2 + $0xfd8] sm:$0xff]
        %v6730 = vld [vmem:[#allocation2 + $0xfe0] sm:$0xff]
        %v6731 = vld [vmem:[#allocation2 + $0xfe8] sm:$0xff]
        %v6732 = vld [vmem:[#allocation2 + $0xff0] sm:$0xff]
        %v6733 = vld [vmem:[#allocation2 + $0xff8] sm:$0xff]
        %v6734 = vld [vmem:[%s287] sm:$0x1]
        %v6736 = vperm.slane %v6734, 0
        %v6738 = vmul.f32 %v6222, %v6736
        %v6739 = vmul.f32 %v6223, %v6736
        %v6740 = vmul.f32 %v6224, %v6736
        %v6741 = vmul.f32 %v6225, %v6736
        %v6742 = vmul.f32 %v6226, %v6736
        %v6743 = vmul.f32 %v6227, %v6736
        %v6744 = vmul.f32 %v6228, %v6736
        %v6745 = vmul.f32 %v6229, %v6736
        %v6746 = vmul.f32 %v6230, %v6736
        %v6747 = vmul.f32 %v6231, %v6736
        %v6748 = vmul.f32 %v6232, %v6736
        %v6749 = vmul.f32 %v6233, %v6736
        %v6750 = vmul.f32 %v6234, %v6736
        %v6751 = vmul.f32 %v6235, %v6736
        %v6752 = vmul.f32 %v6236, %v6736
        %v6753 = vmul.f32 %v6237, %v6736
        %v6754 = vmul.f32 %v6238, %v6736
        %v6755 = vmul.f32 %v6239, %v6736
        %v6756 = vmul.f32 %v6240, %v6736
        %v6757 = vmul.f32 %v6241, %v6736
        %v6758 = vmul.f32 %v6242, %v6736
        %v6759 = vmul.f32 %v6243, %v6736
        %v6760 = vmul.f32 %v6244, %v6736
        %v6761 = vmul.f32 %v6245, %v6736
        %v6762 = vmul.f32 %v6246, %v6736
        %v6763 = vmul.f32 %v6247, %v6736
        %v6764 = vmul.f32 %v6248, %v6736
        %v6765 = vmul.f32 %v6249, %v6736
        %v6766 = vmul.f32 %v6250, %v6736
        %v6767 = vmul.f32 %v6251, %v6736
        %v6768 = vmul.f32 %v6252, %v6736
        %v6769 = vmul.f32 %v6253, %v6736
        %v6770 = vmul.f32 %v6254, %v6736
        %v6771 = vmul.f32 %v6255, %v6736
        %v6772 = vmul.f32 %v6256, %v6736
        %v6773 = vmul.f32 %v6257, %v6736
        %v6774 = vmul.f32 %v6258, %v6736
        %v6775 = vmul.f32 %v6259, %v6736
        %v6776 = vmul.f32 %v6260, %v6736
        %v6777 = vmul.f32 %v6261, %v6736
        %v6778 = vmul.f32 %v6262, %v6736
        %v6779 = vmul.f32 %v6263, %v6736
        %v6780 = vmul.f32 %v6264, %v6736
        %v6781 = vmul.f32 %v6265, %v6736
        %v6782 = vmul.f32 %v6266, %v6736
        %v6783 = vmul.f32 %v6267, %v6736
        %v6784 = vmul.f32 %v6268, %v6736
        %v6785 = vmul.f32 %v6269, %v6736
        %v6786 = vmul.f32 %v6270, %v6736
        %v6787 = vmul.f32 %v6271, %v6736
        %v6788 = vmul.f32 %v6272, %v6736
        %v6789 = vmul.f32 %v6273, %v6736
        %v6790 = vmul.f32 %v6274, %v6736
        %v6791 = vmul.f32 %v6275, %v6736
        %v6792 = vmul.f32 %v6276, %v6736
        %v6793 = vmul.f32 %v6277, %v6736
        %v6794 = vmul.f32 %v6278, %v6736
        %v6795 = vmul.f32 %v6279, %v6736
        %v6796 = vmul.f32 %v6280, %v6736
        %v6797 = vmul.f32 %v6281, %v6736
        %v6798 = vmul.f32 %v6282, %v6736
        %v6799 = vmul.f32 %v6283, %v6736
        %v6800 = vmul.f32 %v6284, %v6736
        %v6801 = vmul.f32 %v6285, %v6736
        %v6802 = vmul.f32 %v6286, %v6736
        %v6803 = vmul.f32 %v6287, %v6736
        %v6804 = vmul.f32 %v6288, %v6736
        %v6805 = vmul.f32 %v6289, %v6736
        %v6806 = vmul.f32 %v6290, %v6736
        %v6807 = vmul.f32 %v6291, %v6736
        %v6808 = vmul.f32 %v6292, %v6736
        %v6809 = vmul.f32 %v6293, %v6736
        %v6810 = vmul.f32 %v6294, %v6736
        %v6811 = vmul.f32 %v6295, %v6736
        %v6812 = vmul.f32 %v6296, %v6736
        %v6813 = vmul.f32 %v6297, %v6736
        %v6814 = vmul.f32 %v6298, %v6736
        %v6815 = vmul.f32 %v6299, %v6736
        %v6816 = vmul.f32 %v6300, %v6736
        %v6817 = vmul.f32 %v6301, %v6736
        %v6818 = vmul.f32 %v6302, %v6736
        %v6819 = vmul.f32 %v6303, %v6736
        %v6820 = vmul.f32 %v6304, %v6736
        %v6821 = vmul.f32 %v6305, %v6736
        %v6822 = vmul.f32 %v6306, %v6736
        %v6823 = vmul.f32 %v6307, %v6736
        %v6824 = vmul.f32 %v6308, %v6736
        %v6825 = vmul.f32 %v6309, %v6736
        %v6826 = vmul.f32 %v6310, %v6736
        %v6827 = vmul.f32 %v6311, %v6736
        %v6828 = vmul.f32 %v6312, %v6736
        %v6829 = vmul.f32 %v6313, %v6736
        %v6830 = vmul.f32 %v6314, %v6736
        %v6831 = vmul.f32 %v6315, %v6736
        %v6832 = vmul.f32 %v6316, %v6736
        %v6833 = vmul.f32 %v6317, %v6736
        %v6834 = vmul.f32 %v6318, %v6736
        %v6835 = vmul.f32 %v6319, %v6736
        %v6836 = vmul.f32 %v6320, %v6736
        %v6837 = vmul.f32 %v6321, %v6736
        %v6838 = vmul.f32 %v6322, %v6736
        %v6839 = vmul.f32 %v6323, %v6736
        %v6840 = vmul.f32 %v6324, %v6736
        %v6841 = vmul.f32 %v6325, %v6736
        %v6842 = vmul.f32 %v6326, %v6736
        %v6843 = vmul.f32 %v6327, %v6736
        %v6844 = vmul.f32 %v6328, %v6736
        %v6845 = vmul.f32 %v6329, %v6736
        %v6846 = vmul.f32 %v6330, %v6736
        %v6847 = vmul.f32 %v6331, %v6736
        %v6848 = vmul.f32 %v6332, %v6736
        %v6849 = vmul.f32 %v6333, %v6736
        %v6850 = vmul.f32 %v6334, %v6736
        %v6851 = vmul.f32 %v6335, %v6736
        %v6852 = vmul.f32 %v6336, %v6736
        %v6853 = vmul.f32 %v6337, %v6736
        %v6854 = vmul.f32 %v6338, %v6736
        %v6855 = vmul.f32 %v6339, %v6736
        %v6856 = vmul.f32 %v6340, %v6736
        %v6857 = vmul.f32 %v6341, %v6736
        %v6858 = vmul.f32 %v6342, %v6736
        %v6859 = vmul.f32 %v6343, %v6736
        %v6860 = vmul.f32 %v6344, %v6736
        %v6861 = vmul.f32 %v6345, %v6736
        %v6862 = vmul.f32 %v6346, %v6736
        %v6863 = vmul.f32 %v6347, %v6736
        %v6864 = vmul.f32 %v6348, %v6736
        %v6865 = vmul.f32 %v6349, %v6736
        %v6866 = vmul.f32 %v6350, %v6736
        %v6867 = vmul.f32 %v6351, %v6736
        %v6868 = vmul.f32 %v6352, %v6736
        %v6869 = vmul.f32 %v6353, %v6736
        %v6870 = vmul.f32 %v6354, %v6736
        %v6871 = vmul.f32 %v6355, %v6736
        %v6872 = vmul.f32 %v6356, %v6736
        %v6873 = vmul.f32 %v6357, %v6736
        %v6874 = vmul.f32 %v6358, %v6736
        %v6875 = vmul.f32 %v6359, %v6736
        %v6876 = vmul.f32 %v6360, %v6736
        %v6877 = vmul.f32 %v6361, %v6736
        %v6878 = vmul.f32 %v6362, %v6736
        %v6879 = vmul.f32 %v6363, %v6736
        %v6880 = vmul.f32 %v6364, %v6736
        %v6881 = vmul.f32 %v6365, %v6736
        %v6882 = vmul.f32 %v6366, %v6736
        %v6883 = vmul.f32 %v6367, %v6736
        %v6884 = vmul.f32 %v6368, %v6736
        %v6885 = vmul.f32 %v6369, %v6736
        %v6886 = vmul.f32 %v6370, %v6736
        %v6887 = vmul.f32 %v6371, %v6736
        %v6888 = vmul.f32 %v6372, %v6736
        %v6889 = vmul.f32 %v6373, %v6736
        %v6890 = vmul.f32 %v6374, %v6736
        %v6891 = vmul.f32 %v6375, %v6736
        %v6892 = vmul.f32 %v6376, %v6736
        %v6893 = vmul.f32 %v6377, %v6736
        %v6894 = vmul.f32 %v6378, %v6736
        %v6895 = vmul.f32 %v6379, %v6736
        %v6896 = vmul.f32 %v6380, %v6736
        %v6897 = vmul.f32 %v6381, %v6736
        %v6898 = vmul.f32 %v6382, %v6736
        %v6899 = vmul.f32 %v6383, %v6736
        %v6900 = vmul.f32 %v6384, %v6736
        %v6901 = vmul.f32 %v6385, %v6736
        %v6902 = vmul.f32 %v6386, %v6736
        %v6903 = vmul.f32 %v6387, %v6736
        %v6904 = vmul.f32 %v6388, %v6736
        %v6905 = vmul.f32 %v6389, %v6736
        %v6906 = vmul.f32 %v6390, %v6736
        %v6907 = vmul.f32 %v6391, %v6736
        %v6908 = vmul.f32 %v6392, %v6736
        %v6909 = vmul.f32 %v6393, %v6736
        %v6910 = vmul.f32 %v6394, %v6736
        %v6911 = vmul.f32 %v6395, %v6736
        %v6912 = vmul.f32 %v6396, %v6736
        %v6913 = vmul.f32 %v6397, %v6736
        %v6914 = vmul.f32 %v6398, %v6736
        %v6915 = vmul.f32 %v6399, %v6736
        %v6916 = vmul.f32 %v6400, %v6736
        %v6917 = vmul.f32 %v6401, %v6736
        %v6918 = vmul.f32 %v6402, %v6736
        %v6919 = vmul.f32 %v6403, %v6736
        %v6920 = vmul.f32 %v6404, %v6736
        %v6921 = vmul.f32 %v6405, %v6736
        %v6922 = vmul.f32 %v6406, %v6736
        %v6923 = vmul.f32 %v6407, %v6736
        %v6924 = vmul.f32 %v6408, %v6736
        %v6925 = vmul.f32 %v6409, %v6736
        %v6926 = vmul.f32 %v6410, %v6736
        %v6927 = vmul.f32 %v6411, %v6736
        %v6928 = vmul.f32 %v6412, %v6736
        %v6929 = vmul.f32 %v6413, %v6736
        %v6930 = vmul.f32 %v6414, %v6736
        %v6931 = vmul.f32 %v6415, %v6736
        %v6932 = vmul.f32 %v6416, %v6736
        %v6933 = vmul.f32 %v6417, %v6736
        %v6934 = vmul.f32 %v6418, %v6736
        %v6935 = vmul.f32 %v6419, %v6736
        %v6936 = vmul.f32 %v6420, %v6736
        %v6937 = vmul.f32 %v6421, %v6736
        %v6938 = vmul.f32 %v6422, %v6736
        %v6939 = vmul.f32 %v6423, %v6736
        %v6940 = vmul.f32 %v6424, %v6736
        %v6941 = vmul.f32 %v6425, %v6736
        %v6942 = vmul.f32 %v6426, %v6736
        %v6943 = vmul.f32 %v6427, %v6736
        %v6944 = vmul.f32 %v6428, %v6736
        %v6945 = vmul.f32 %v6429, %v6736
        %v6946 = vmul.f32 %v6430, %v6736
        %v6947 = vmul.f32 %v6431, %v6736
        %v6948 = vmul.f32 %v6432, %v6736
        %v6949 = vmul.f32 %v6433, %v6736
        %v6950 = vmul.f32 %v6434, %v6736
        %v6951 = vmul.f32 %v6435, %v6736
        %v6952 = vmul.f32 %v6436, %v6736
        %v6953 = vmul.f32 %v6437, %v6736
        %v6954 = vmul.f32 %v6438, %v6736
        %v6955 = vmul.f32 %v6439, %v6736
        %v6956 = vmul.f32 %v6440, %v6736
        %v6957 = vmul.f32 %v6441, %v6736
        %v6958 = vmul.f32 %v6442, %v6736
        %v6959 = vmul.f32 %v6443, %v6736
        %v6960 = vmul.f32 %v6444, %v6736
        %v6961 = vmul.f32 %v6445, %v6736
        %v6962 = vmul.f32 %v6446, %v6736
        %v6963 = vmul.f32 %v6447, %v6736
        %v6964 = vmul.f32 %v6448, %v6736
        %v6965 = vmul.f32 %v6449, %v6736
        %v6966 = vmul.f32 %v6450, %v6736
        %v6967 = vmul.f32 %v6451, %v6736
        %v6968 = vmul.f32 %v6452, %v6736
        %v6969 = vmul.f32 %v6453, %v6736
        %v6970 = vmul.f32 %v6454, %v6736
        %v6971 = vmul.f32 %v6455, %v6736
        %v6972 = vmul.f32 %v6456, %v6736
        %v6973 = vmul.f32 %v6457, %v6736
        %v6974 = vmul.f32 %v6458, %v6736
        %v6975 = vmul.f32 %v6459, %v6736
        %v6976 = vmul.f32 %v6460, %v6736
        %v6977 = vmul.f32 %v6461, %v6736
        %v6978 = vmul.f32 %v6462, %v6736
        %v6979 = vmul.f32 %v6463, %v6736
        %v6980 = vmul.f32 %v6464, %v6736
        %v6981 = vmul.f32 %v6465, %v6736
        %v6982 = vmul.f32 %v6466, %v6736
        %v6983 = vmul.f32 %v6467, %v6736
        %v6984 = vmul.f32 %v6468, %v6736
        %v6985 = vmul.f32 %v6469, %v6736
        %v6986 = vmul.f32 %v6470, %v6736
        %v6987 = vmul.f32 %v6471, %v6736
        %v6988 = vmul.f32 %v6472, %v6736
        %v6989 = vmul.f32 %v6473, %v6736
        %v6990 = vmul.f32 %v6474, %v6736
        %v6991 = vmul.f32 %v6475, %v6736
        %v6992 = vmul.f32 %v6476, %v6736
        %v6993 = vmul.f32 %v6477, %v6736
        %v6994 = vmul.f32 %v6478, %v6736
        %v6995 = vmul.f32 %v6479, %v6736
        %v6996 = vmul.f32 %v6480, %v6736
        %v6997 = vmul.f32 %v6481, %v6736
        %v6998 = vmul.f32 %v6482, %v6736
        %v6999 = vmul.f32 %v6483, %v6736
        %v7000 = vmul.f32 %v6484, %v6736
        %v7001 = vmul.f32 %v6485, %v6736
        %v7002 = vmul.f32 %v6486, %v6736
        %v7003 = vmul.f32 %v6487, %v6736
        %v7004 = vmul.f32 %v6488, %v6736
        %v7005 = vmul.f32 %v6489, %v6736
        %v7006 = vmul.f32 %v6490, %v6736
        %v7007 = vmul.f32 %v6491, %v6736
        %v7008 = vmul.f32 %v6492, %v6736
        %v7009 = vmul.f32 %v6493, %v6736
        %v7010 = vmul.f32 %v6494, %v6736
        %v7011 = vmul.f32 %v6495, %v6736
        %v7012 = vmul.f32 %v6496, %v6736
        %v7013 = vmul.f32 %v6497, %v6736
        %v7014 = vmul.f32 %v6498, %v6736
        %v7015 = vmul.f32 %v6499, %v6736
        %v7016 = vmul.f32 %v6500, %v6736
        %v7017 = vmul.f32 %v6501, %v6736
        %v7018 = vmul.f32 %v6502, %v6736
        %v7019 = vmul.f32 %v6503, %v6736
        %v7020 = vmul.f32 %v6504, %v6736
        %v7021 = vmul.f32 %v6505, %v6736
        %v7022 = vmul.f32 %v6506, %v6736
        %v7023 = vmul.f32 %v6507, %v6736
        %v7024 = vmul.f32 %v6508, %v6736
        %v7025 = vmul.f32 %v6509, %v6736
        %v7026 = vmul.f32 %v6510, %v6736
        %v7027 = vmul.f32 %v6511, %v6736
        %v7028 = vmul.f32 %v6512, %v6736
        %v7029 = vmul.f32 %v6513, %v6736
        %v7030 = vmul.f32 %v6514, %v6736
        %v7031 = vmul.f32 %v6515, %v6736
        %v7032 = vmul.f32 %v6516, %v6736
        %v7033 = vmul.f32 %v6517, %v6736
        %v7034 = vmul.f32 %v6518, %v6736
        %v7035 = vmul.f32 %v6519, %v6736
        %v7036 = vmul.f32 %v6520, %v6736
        %v7037 = vmul.f32 %v6521, %v6736
        %v7038 = vmul.f32 %v6522, %v6736
        %v7039 = vmul.f32 %v6523, %v6736
        %v7040 = vmul.f32 %v6524, %v6736
        %v7041 = vmul.f32 %v6525, %v6736
        %v7042 = vmul.f32 %v6526, %v6736
        %v7043 = vmul.f32 %v6527, %v6736
        %v7044 = vmul.f32 %v6528, %v6736
        %v7045 = vmul.f32 %v6529, %v6736
        %v7046 = vmul.f32 %v6530, %v6736
        %v7047 = vmul.f32 %v6531, %v6736
        %v7048 = vmul.f32 %v6532, %v6736
        %v7049 = vmul.f32 %v6533, %v6736
        %v7050 = vmul.f32 %v6534, %v6736
        %v7051 = vmul.f32 %v6535, %v6736
        %v7052 = vmul.f32 %v6536, %v6736
        %v7053 = vmul.f32 %v6537, %v6736
        %v7054 = vmul.f32 %v6538, %v6736
        %v7055 = vmul.f32 %v6539, %v6736
        %v7056 = vmul.f32 %v6540, %v6736
        %v7057 = vmul.f32 %v6541, %v6736
        %v7058 = vmul.f32 %v6542, %v6736
        %v7059 = vmul.f32 %v6543, %v6736
        %v7060 = vmul.f32 %v6544, %v6736
        %v7061 = vmul.f32 %v6545, %v6736
        %v7062 = vmul.f32 %v6546, %v6736
        %v7063 = vmul.f32 %v6547, %v6736
        %v7064 = vmul.f32 %v6548, %v6736
        %v7065 = vmul.f32 %v6549, %v6736
        %v7066 = vmul.f32 %v6550, %v6736
        %v7067 = vmul.f32 %v6551, %v6736
        %v7068 = vmul.f32 %v6552, %v6736
        %v7069 = vmul.f32 %v6553, %v6736
        %v7070 = vmul.f32 %v6554, %v6736
        %v7071 = vmul.f32 %v6555, %v6736
        %v7072 = vmul.f32 %v6556, %v6736
        %v7073 = vmul.f32 %v6557, %v6736
        %v7074 = vmul.f32 %v6558, %v6736
        %v7075 = vmul.f32 %v6559, %v6736
        %v7076 = vmul.f32 %v6560, %v6736
        %v7077 = vmul.f32 %v6561, %v6736
        %v7078 = vmul.f32 %v6562, %v6736
        %v7079 = vmul.f32 %v6563, %v6736
        %v7080 = vmul.f32 %v6564, %v6736
        %v7081 = vmul.f32 %v6565, %v6736
        %v7082 = vmul.f32 %v6566, %v6736
        %v7083 = vmul.f32 %v6567, %v6736
        %v7084 = vmul.f32 %v6568, %v6736
        %v7085 = vmul.f32 %v6569, %v6736
        %v7086 = vmul.f32 %v6570, %v6736
        %v7087 = vmul.f32 %v6571, %v6736
        %v7088 = vmul.f32 %v6572, %v6736
        %v7089 = vmul.f32 %v6573, %v6736
        %v7090 = vmul.f32 %v6574, %v6736
        %v7091 = vmul.f32 %v6575, %v6736
        %v7092 = vmul.f32 %v6576, %v6736
        %v7093 = vmul.f32 %v6577, %v6736
        %v7094 = vmul.f32 %v6578, %v6736
        %v7095 = vmul.f32 %v6579, %v6736
        %v7096 = vmul.f32 %v6580, %v6736
        %v7097 = vmul.f32 %v6581, %v6736
        %v7098 = vmul.f32 %v6582, %v6736
        %v7099 = vmul.f32 %v6583, %v6736
        %v7100 = vmul.f32 %v6584, %v6736
        %v7101 = vmul.f32 %v6585, %v6736
        %v7102 = vmul.f32 %v6586, %v6736
        %v7103 = vmul.f32 %v6587, %v6736
        %v7104 = vmul.f32 %v6588, %v6736
        %v7105 = vmul.f32 %v6589, %v6736
        %v7106 = vmul.f32 %v6590, %v6736
        %v7107 = vmul.f32 %v6591, %v6736
        %v7108 = vmul.f32 %v6592, %v6736
        %v7109 = vmul.f32 %v6593, %v6736
        %v7110 = vmul.f32 %v6594, %v6736
        %v7111 = vmul.f32 %v6595, %v6736
        %v7112 = vmul.f32 %v6596, %v6736
        %v7113 = vmul.f32 %v6597, %v6736
        %v7114 = vmul.f32 %v6598, %v6736
        %v7115 = vmul.f32 %v6599, %v6736
        %v7116 = vmul.f32 %v6600, %v6736
        %v7117 = vmul.f32 %v6601, %v6736
        %v7118 = vmul.f32 %v6602, %v6736
        %v7119 = vmul.f32 %v6603, %v6736
        %v7120 = vmul.f32 %v6604, %v6736
        %v7121 = vmul.f32 %v6605, %v6736
        %v7122 = vmul.f32 %v6606, %v6736
        %v7123 = vmul.f32 %v6607, %v6736
        %v7124 = vmul.f32 %v6608, %v6736
        %v7125 = vmul.f32 %v6609, %v6736
        %v7126 = vmul.f32 %v6610, %v6736
        %v7127 = vmul.f32 %v6611, %v6736
        %v7128 = vmul.f32 %v6612, %v6736
        %v7129 = vmul.f32 %v6613, %v6736
        %v7130 = vmul.f32 %v6614, %v6736
        %v7131 = vmul.f32 %v6615, %v6736
        %v7132 = vmul.f32 %v6616, %v6736
        %v7133 = vmul.f32 %v6617, %v6736
        %v7134 = vmul.f32 %v6618, %v6736
        %v7135 = vmul.f32 %v6619, %v6736
        %v7136 = vmul.f32 %v6620, %v6736
        %v7137 = vmul.f32 %v6621, %v6736
        %v7138 = vmul.f32 %v6622, %v6736
        %v7139 = vmul.f32 %v6623, %v6736
        %v7140 = vmul.f32 %v6624, %v6736
        %v7141 = vmul.f32 %v6625, %v6736
        %v7142 = vmul.f32 %v6626, %v6736
        %v7143 = vmul.f32 %v6627, %v6736
        %v7144 = vmul.f32 %v6628, %v6736
        %v7145 = vmul.f32 %v6629, %v6736
        %v7146 = vmul.f32 %v6630, %v6736
        %v7147 = vmul.f32 %v6631, %v6736
        %v7148 = vmul.f32 %v6632, %v6736
        %v7149 = vmul.f32 %v6633, %v6736
        %v7150 = vmul.f32 %v6634, %v6736
        %v7151 = vmul.f32 %v6635, %v6736
        %v7152 = vmul.f32 %v6636, %v6736
        %v7153 = vmul.f32 %v6637, %v6736
        %v7154 = vmul.f32 %v6638, %v6736
        %v7155 = vmul.f32 %v6639, %v6736
        %v7156 = vmul.f32 %v6640, %v6736
        %v7157 = vmul.f32 %v6641, %v6736
        %v7158 = vmul.f32 %v6642, %v6736
        %v7159 = vmul.f32 %v6643, %v6736
        %v7160 = vmul.f32 %v6644, %v6736
        %v7161 = vmul.f32 %v6645, %v6736
        %v7162 = vmul.f32 %v6646, %v6736
        %v7163 = vmul.f32 %v6647, %v6736
        %v7164 = vmul.f32 %v6648, %v6736
        %v7165 = vmul.f32 %v6649, %v6736
        %v7166 = vmul.f32 %v6650, %v6736
        %v7167 = vmul.f32 %v6651, %v6736
        %v7168 = vmul.f32 %v6652, %v6736
        %v7169 = vmul.f32 %v6653, %v6736
        %v7170 = vmul.f32 %v6654, %v6736
        %v7171 = vmul.f32 %v6655, %v6736
        %v7172 = vmul.f32 %v6656, %v6736
        %v7173 = vmul.f32 %v6657, %v6736
        %v7174 = vmul.f32 %v6658, %v6736
        %v7175 = vmul.f32 %v6659, %v6736
        %v7176 = vmul.f32 %v6660, %v6736
        %v7177 = vmul.f32 %v6661, %v6736
        %v7178 = vmul.f32 %v6662, %v6736
        %v7179 = vmul.f32 %v6663, %v6736
        %v7180 = vmul.f32 %v6664, %v6736
        %v7181 = vmul.f32 %v6665, %v6736
        %v7182 = vmul.f32 %v6666, %v6736
        %v7183 = vmul.f32 %v6667, %v6736
        %v7184 = vmul.f32 %v6668, %v6736
        %v7185 = vmul.f32 %v6669, %v6736
        %v7186 = vmul.f32 %v6670, %v6736
        %v7187 = vmul.f32 %v6671, %v6736
        %v7188 = vmul.f32 %v6672, %v6736
        %v7189 = vmul.f32 %v6673, %v6736
        %v7190 = vmul.f32 %v6674, %v6736
        %v7191 = vmul.f32 %v6675, %v6736
        %v7192 = vmul.f32 %v6676, %v6736
        %v7193 = vmul.f32 %v6677, %v6736
        %v7194 = vmul.f32 %v6678, %v6736
        %v7195 = vmul.f32 %v6679, %v6736
        %v7196 = vmul.f32 %v6680, %v6736
        %v7197 = vmul.f32 %v6681, %v6736
        %v7198 = vmul.f32 %v6682, %v6736
        %v7199 = vmul.f32 %v6683, %v6736
        %v7200 = vmul.f32 %v6684, %v6736
        %v7201 = vmul.f32 %v6685, %v6736
        %v7202 = vmul.f32 %v6686, %v6736
        %v7203 = vmul.f32 %v6687, %v6736
        %v7204 = vmul.f32 %v6688, %v6736
        %v7205 = vmul.f32 %v6689, %v6736
        %v7206 = vmul.f32 %v6690, %v6736
        %v7207 = vmul.f32 %v6691, %v6736
        %v7208 = vmul.f32 %v6692, %v6736
        %v7209 = vmul.f32 %v6693, %v6736
        %v7210 = vmul.f32 %v6694, %v6736
        %v7211 = vmul.f32 %v6695, %v6736
        %v7212 = vmul.f32 %v6696, %v6736
        %v7213 = vmul.f32 %v6697, %v6736
        %v7214 = vmul.f32 %v6698, %v6736
        %v7215 = vmul.f32 %v6699, %v6736
        %v7216 = vmul.f32 %v6700, %v6736
        %v7217 = vmul.f32 %v6701, %v6736
        %v7218 = vmul.f32 %v6702, %v6736
        %v7219 = vmul.f32 %v6703, %v6736
        %v7220 = vmul.f32 %v6704, %v6736
        %v7221 = vmul.f32 %v6705, %v6736
        %v7222 = vmul.f32 %v6706, %v6736
        %v7223 = vmul.f32 %v6707, %v6736
        %v7224 = vmul.f32 %v6708, %v6736
        %v7225 = vmul.f32 %v6709, %v6736
        %v7226 = vmul.f32 %v6710, %v6736
        %v7227 = vmul.f32 %v6711, %v6736
        %v7228 = vmul.f32 %v6712, %v6736
        %v7229 = vmul.f32 %v6713, %v6736
        %v7230 = vmul.f32 %v6714, %v6736
        %v7231 = vmul.f32 %v6715, %v6736
        %v7232 = vmul.f32 %v6716, %v6736
        %v7233 = vmul.f32 %v6717, %v6736
        %v7234 = vmul.f32 %v6718, %v6736
        %v7235 = vmul.f32 %v6719, %v6736
        %v7236 = vmul.f32 %v6720, %v6736
        %v7237 = vmul.f32 %v6721, %v6736
        %v7238 = vmul.f32 %v6722, %v6736
        %v7239 = vmul.f32 %v6723, %v6736
        %v7240 = vmul.f32 %v6724, %v6736
        %v7241 = vmul.f32 %v6725, %v6736
        %v7242 = vmul.f32 %v6726, %v6736
        %v7243 = vmul.f32 %v6727, %v6736
        %v7244 = vmul.f32 %v6728, %v6736
        %v7245 = vmul.f32 %v6729, %v6736
        %v7246 = vmul.f32 %v6730, %v6736
        %v7247 = vmul.f32 %v6731, %v6736
        %v7248 = vmul.f32 %v6732, %v6736
        %v7249 = vmul.f32 %v6733, %v6736
        %v7250 = vld [vmem:[%s290] sm:$0x1]
        %v7252 = vperm.slane %v7250, 0
        %v7254 = vadd.f32 %v6738, %v7252
        %v7255 = vadd.f32 %v6739, %v7252
        %v7256 = vadd.f32 %v6740, %v7252
        %v7257 = vadd.f32 %v6741, %v7252
        %v7258 = vadd.f32 %v6742, %v7252
        %v7259 = vadd.f32 %v6743, %v7252
        %v7260 = vadd.f32 %v6744, %v7252
        %v7261 = vadd.f32 %v6745, %v7252
        %v7262 = vadd.f32 %v6746, %v7252
        %v7263 = vadd.f32 %v6747, %v7252
        %v7264 = vadd.f32 %v6748, %v7252
        %v7265 = vadd.f32 %v6749, %v7252
        %v7266 = vadd.f32 %v6750, %v7252
        %v7267 = vadd.f32 %v6751, %v7252
        %v7268 = vadd.f32 %v6752, %v7252
        %v7269 = vadd.f32 %v6753, %v7252
        %v7270 = vadd.f32 %v6754, %v7252
        %v7271 = vadd.f32 %v6755, %v7252
        %v7272 = vadd.f32 %v6756, %v7252
        %v7273 = vadd.f32 %v6757, %v7252
        %v7274 = vadd.f32 %v6758, %v7252
        %v7275 = vadd.f32 %v6759, %v7252
        %v7276 = vadd.f32 %v6760, %v7252
        %v7277 = vadd.f32 %v6761, %v7252
        %v7278 = vadd.f32 %v6762, %v7252
        %v7279 = vadd.f32 %v6763, %v7252
        %v7280 = vadd.f32 %v6764, %v7252
        %v7281 = vadd.f32 %v6765, %v7252
        %v7282 = vadd.f32 %v6766, %v7252
        %v7283 = vadd.f32 %v6767, %v7252
        %v7284 = vadd.f32 %v6768, %v7252
        %v7285 = vadd.f32 %v6769, %v7252
        %v7286 = vadd.f32 %v6770, %v7252
        %v7287 = vadd.f32 %v6771, %v7252
        %v7288 = vadd.f32 %v6772, %v7252
        %v7289 = vadd.f32 %v6773, %v7252
        %v7290 = vadd.f32 %v6774, %v7252
        %v7291 = vadd.f32 %v6775, %v7252
        %v7292 = vadd.f32 %v6776, %v7252
        %v7293 = vadd.f32 %v6777, %v7252
        %v7294 = vadd.f32 %v6778, %v7252
        %v7295 = vadd.f32 %v6779, %v7252
        %v7296 = vadd.f32 %v6780, %v7252
        %v7297 = vadd.f32 %v6781, %v7252
        %v7298 = vadd.f32 %v6782, %v7252
        %v7299 = vadd.f32 %v6783, %v7252
        %v7300 = vadd.f32 %v6784, %v7252
        %v7301 = vadd.f32 %v6785, %v7252
        %v7302 = vadd.f32 %v6786, %v7252
        %v7303 = vadd.f32 %v6787, %v7252
        %v7304 = vadd.f32 %v6788, %v7252
        %v7305 = vadd.f32 %v6789, %v7252
        %v7306 = vadd.f32 %v6790, %v7252
        %v7307 = vadd.f32 %v6791, %v7252
        %v7308 = vadd.f32 %v6792, %v7252
        %v7309 = vadd.f32 %v6793, %v7252
        %v7310 = vadd.f32 %v6794, %v7252
        %v7311 = vadd.f32 %v6795, %v7252
        %v7312 = vadd.f32 %v6796, %v7252
        %v7313 = vadd.f32 %v6797, %v7252
        %v7314 = vadd.f32 %v6798, %v7252
        %v7315 = vadd.f32 %v6799, %v7252
        %v7316 = vadd.f32 %v6800, %v7252
        %v7317 = vadd.f32 %v6801, %v7252
        %v7318 = vadd.f32 %v6802, %v7252
        %v7319 = vadd.f32 %v6803, %v7252
        %v7320 = vadd.f32 %v6804, %v7252
        %v7321 = vadd.f32 %v6805, %v7252
        %v7322 = vadd.f32 %v6806, %v7252
        %v7323 = vadd.f32 %v6807, %v7252
        %v7324 = vadd.f32 %v6808, %v7252
        %v7325 = vadd.f32 %v6809, %v7252
        %v7326 = vadd.f32 %v6810, %v7252
        %v7327 = vadd.f32 %v6811, %v7252
        %v7328 = vadd.f32 %v6812, %v7252
        %v7329 = vadd.f32 %v6813, %v7252
        %v7330 = vadd.f32 %v6814, %v7252
        %v7331 = vadd.f32 %v6815, %v7252
        %v7332 = vadd.f32 %v6816, %v7252
        %v7333 = vadd.f32 %v6817, %v7252
        %v7334 = vadd.f32 %v6818, %v7252
        %v7335 = vadd.f32 %v6819, %v7252
        %v7336 = vadd.f32 %v6820, %v7252
        %v7337 = vadd.f32 %v6821, %v7252
        %v7338 = vadd.f32 %v6822, %v7252
        %v7339 = vadd.f32 %v6823, %v7252
        %v7340 = vadd.f32 %v6824, %v7252
        %v7341 = vadd.f32 %v6825, %v7252
        %v7342 = vadd.f32 %v6826, %v7252
        %v7343 = vadd.f32 %v6827, %v7252
        %v7344 = vadd.f32 %v6828, %v7252
        %v7345 = vadd.f32 %v6829, %v7252
        %v7346 = vadd.f32 %v6830, %v7252
        %v7347 = vadd.f32 %v6831, %v7252
        %v7348 = vadd.f32 %v6832, %v7252
        %v7349 = vadd.f32 %v6833, %v7252
        %v7350 = vadd.f32 %v6834, %v7252
        %v7351 = vadd.f32 %v6835, %v7252
        %v7352 = vadd.f32 %v6836, %v7252
        %v7353 = vadd.f32 %v6837, %v7252
        %v7354 = vadd.f32 %v6838, %v7252
        %v7355 = vadd.f32 %v6839, %v7252
        %v7356 = vadd.f32 %v6840, %v7252
        %v7357 = vadd.f32 %v6841, %v7252
        %v7358 = vadd.f32 %v6842, %v7252
        %v7359 = vadd.f32 %v6843, %v7252
        %v7360 = vadd.f32 %v6844, %v7252
        %v7361 = vadd.f32 %v6845, %v7252
        %v7362 = vadd.f32 %v6846, %v7252
        %v7363 = vadd.f32 %v6847, %v7252
        %v7364 = vadd.f32 %v6848, %v7252
        %v7365 = vadd.f32 %v6849, %v7252
        %v7366 = vadd.f32 %v6850, %v7252
        %v7367 = vadd.f32 %v6851, %v7252
        %v7368 = vadd.f32 %v6852, %v7252
        %v7369 = vadd.f32 %v6853, %v7252
        %v7370 = vadd.f32 %v6854, %v7252
        %v7371 = vadd.f32 %v6855, %v7252
        %v7372 = vadd.f32 %v6856, %v7252
        %v7373 = vadd.f32 %v6857, %v7252
        %v7374 = vadd.f32 %v6858, %v7252
        %v7375 = vadd.f32 %v6859, %v7252
        %v7376 = vadd.f32 %v6860, %v7252
        %v7377 = vadd.f32 %v6861, %v7252
        %v7378 = vadd.f32 %v6862, %v7252
        %v7379 = vadd.f32 %v6863, %v7252
        %v7380 = vadd.f32 %v6864, %v7252
        %v7381 = vadd.f32 %v6865, %v7252
        %v7382 = vadd.f32 %v6866, %v7252
        %v7383 = vadd.f32 %v6867, %v7252
        %v7384 = vadd.f32 %v6868, %v7252
        %v7385 = vadd.f32 %v6869, %v7252
        %v7386 = vadd.f32 %v6870, %v7252
        %v7387 = vadd.f32 %v6871, %v7252
        %v7388 = vadd.f32 %v6872, %v7252
        %v7389 = vadd.f32 %v6873, %v7252
        %v7390 = vadd.f32 %v6874, %v7252
        %v7391 = vadd.f32 %v6875, %v7252
        %v7392 = vadd.f32 %v6876, %v7252
        %v7393 = vadd.f32 %v6877, %v7252
        %v7394 = vadd.f32 %v6878, %v7252
        %v7395 = vadd.f32 %v6879, %v7252
        %v7396 = vadd.f32 %v6880, %v7252
        %v7397 = vadd.f32 %v6881, %v7252
        %v7398 = vadd.f32 %v6882, %v7252
        %v7399 = vadd.f32 %v6883, %v7252
        %v7400 = vadd.f32 %v6884, %v7252
        %v7401 = vadd.f32 %v6885, %v7252
        %v7402 = vadd.f32 %v6886, %v7252
        %v7403 = vadd.f32 %v6887, %v7252
        %v7404 = vadd.f32 %v6888, %v7252
        %v7405 = vadd.f32 %v6889, %v7252
        %v7406 = vadd.f32 %v6890, %v7252
        %v7407 = vadd.f32 %v6891, %v7252
        %v7408 = vadd.f32 %v6892, %v7252
        %v7409 = vadd.f32 %v6893, %v7252
        %v7410 = vadd.f32 %v6894, %v7252
        %v7411 = vadd.f32 %v6895, %v7252
        %v7412 = vadd.f32 %v6896, %v7252
        %v7413 = vadd.f32 %v6897, %v7252
        %v7414 = vadd.f32 %v6898, %v7252
        %v7415 = vadd.f32 %v6899, %v7252
        %v7416 = vadd.f32 %v6900, %v7252
        %v7417 = vadd.f32 %v6901, %v7252
        %v7418 = vadd.f32 %v6902, %v7252
        %v7419 = vadd.f32 %v6903, %v7252
        %v7420 = vadd.f32 %v6904, %v7252
        %v7421 = vadd.f32 %v6905, %v7252
        %v7422 = vadd.f32 %v6906, %v7252
        %v7423 = vadd.f32 %v6907, %v7252
        %v7424 = vadd.f32 %v6908, %v7252
        %v7425 = vadd.f32 %v6909, %v7252
        %v7426 = vadd.f32 %v6910, %v7252
        %v7427 = vadd.f32 %v6911, %v7252
        %v7428 = vadd.f32 %v6912, %v7252
        %v7429 = vadd.f32 %v6913, %v7252
        %v7430 = vadd.f32 %v6914, %v7252
        %v7431 = vadd.f32 %v6915, %v7252
        %v7432 = vadd.f32 %v6916, %v7252
        %v7433 = vadd.f32 %v6917, %v7252
        %v7434 = vadd.f32 %v6918, %v7252
        %v7435 = vadd.f32 %v6919, %v7252
        %v7436 = vadd.f32 %v6920, %v7252
        %v7437 = vadd.f32 %v6921, %v7252
        %v7438 = vadd.f32 %v6922, %v7252
        %v7439 = vadd.f32 %v6923, %v7252
        %v7440 = vadd.f32 %v6924, %v7252
        %v7441 = vadd.f32 %v6925, %v7252
        %v7442 = vadd.f32 %v6926, %v7252
        %v7443 = vadd.f32 %v6927, %v7252
        %v7444 = vadd.f32 %v6928, %v7252
        %v7445 = vadd.f32 %v6929, %v7252
        %v7446 = vadd.f32 %v6930, %v7252
        %v7447 = vadd.f32 %v6931, %v7252
        %v7448 = vadd.f32 %v6932, %v7252
        %v7449 = vadd.f32 %v6933, %v7252
        %v7450 = vadd.f32 %v6934, %v7252
        %v7451 = vadd.f32 %v6935, %v7252
        %v7452 = vadd.f32 %v6936, %v7252
        %v7453 = vadd.f32 %v6937, %v7252
        %v7454 = vadd.f32 %v6938, %v7252
        %v7455 = vadd.f32 %v6939, %v7252
        %v7456 = vadd.f32 %v6940, %v7252
        %v7457 = vadd.f32 %v6941, %v7252
        %v7458 = vadd.f32 %v6942, %v7252
        %v7459 = vadd.f32 %v6943, %v7252
        %v7460 = vadd.f32 %v6944, %v7252
        %v7461 = vadd.f32 %v6945, %v7252
        %v7462 = vadd.f32 %v6946, %v7252
        %v7463 = vadd.f32 %v6947, %v7252
        %v7464 = vadd.f32 %v6948, %v7252
        %v7465 = vadd.f32 %v6949, %v7252
        %v7466 = vadd.f32 %v6950, %v7252
        %v7467 = vadd.f32 %v6951, %v7252
        %v7468 = vadd.f32 %v6952, %v7252
        %v7469 = vadd.f32 %v6953, %v7252
        %v7470 = vadd.f32 %v6954, %v7252
        %v7471 = vadd.f32 %v6955, %v7252
        %v7472 = vadd.f32 %v6956, %v7252
        %v7473 = vadd.f32 %v6957, %v7252
        %v7474 = vadd.f32 %v6958, %v7252
        %v7475 = vadd.f32 %v6959, %v7252
        %v7476 = vadd.f32 %v6960, %v7252
        %v7477 = vadd.f32 %v6961, %v7252
        %v7478 = vadd.f32 %v6962, %v7252
        %v7479 = vadd.f32 %v6963, %v7252
        %v7480 = vadd.f32 %v6964, %v7252
        %v7481 = vadd.f32 %v6965, %v7252
        %v7482 = vadd.f32 %v6966, %v7252
        %v7483 = vadd.f32 %v6967, %v7252
        %v7484 = vadd.f32 %v6968, %v7252
        %v7485 = vadd.f32 %v6969, %v7252
        %v7486 = vadd.f32 %v6970, %v7252
        %v7487 = vadd.f32 %v6971, %v7252
        %v7488 = vadd.f32 %v6972, %v7252
        %v7489 = vadd.f32 %v6973, %v7252
        %v7490 = vadd.f32 %v6974, %v7252
        %v7491 = vadd.f32 %v6975, %v7252
        %v7492 = vadd.f32 %v6976, %v7252
        %v7493 = vadd.f32 %v6977, %v7252
        %v7494 = vadd.f32 %v6978, %v7252
        %v7495 = vadd.f32 %v6979, %v7252
        %v7496 = vadd.f32 %v6980, %v7252
        %v7497 = vadd.f32 %v6981, %v7252
        %v7498 = vadd.f32 %v6982, %v7252
        %v7499 = vadd.f32 %v6983, %v7252
        %v7500 = vadd.f32 %v6984, %v7252
        %v7501 = vadd.f32 %v6985, %v7252
        %v7502 = vadd.f32 %v6986, %v7252
        %v7503 = vadd.f32 %v6987, %v7252
        %v7504 = vadd.f32 %v6988, %v7252
        %v7505 = vadd.f32 %v6989, %v7252
        %v7506 = vadd.f32 %v6990, %v7252
        %v7507 = vadd.f32 %v6991, %v7252
        %v7508 = vadd.f32 %v6992, %v7252
        %v7509 = vadd.f32 %v6993, %v7252
        %v7510 = vadd.f32 %v6994, %v7252
        %v7511 = vadd.f32 %v6995, %v7252
        %v7512 = vadd.f32 %v6996, %v7252
        %v7513 = vadd.f32 %v6997, %v7252
        %v7514 = vadd.f32 %v6998, %v7252
        %v7515 = vadd.f32 %v6999, %v7252
        %v7516 = vadd.f32 %v7000, %v7252
        %v7517 = vadd.f32 %v7001, %v7252
        %v7518 = vadd.f32 %v7002, %v7252
        %v7519 = vadd.f32 %v7003, %v7252
        %v7520 = vadd.f32 %v7004, %v7252
        %v7521 = vadd.f32 %v7005, %v7252
        %v7522 = vadd.f32 %v7006, %v7252
        %v7523 = vadd.f32 %v7007, %v7252
        %v7524 = vadd.f32 %v7008, %v7252
        %v7525 = vadd.f32 %v7009, %v7252
        %v7526 = vadd.f32 %v7010, %v7252
        %v7527 = vadd.f32 %v7011, %v7252
        %v7528 = vadd.f32 %v7012, %v7252
        %v7529 = vadd.f32 %v7013, %v7252
        %v7530 = vadd.f32 %v7014, %v7252
        %v7531 = vadd.f32 %v7015, %v7252
        %v7532 = vadd.f32 %v7016, %v7252
        %v7533 = vadd.f32 %v7017, %v7252
        %v7534 = vadd.f32 %v7018, %v7252
        %v7535 = vadd.f32 %v7019, %v7252
        %v7536 = vadd.f32 %v7020, %v7252
        %v7537 = vadd.f32 %v7021, %v7252
        %v7538 = vadd.f32 %v7022, %v7252
        %v7539 = vadd.f32 %v7023, %v7252
        %v7540 = vadd.f32 %v7024, %v7252
        %v7541 = vadd.f32 %v7025, %v7252
        %v7542 = vadd.f32 %v7026, %v7252
        %v7543 = vadd.f32 %v7027, %v7252
        %v7544 = vadd.f32 %v7028, %v7252
        %v7545 = vadd.f32 %v7029, %v7252
        %v7546 = vadd.f32 %v7030, %v7252
        %v7547 = vadd.f32 %v7031, %v7252
        %v7548 = vadd.f32 %v7032, %v7252
        %v7549 = vadd.f32 %v7033, %v7252
        %v7550 = vadd.f32 %v7034, %v7252
        %v7551 = vadd.f32 %v7035, %v7252
        %v7552 = vadd.f32 %v7036, %v7252
        %v7553 = vadd.f32 %v7037, %v7252
        %v7554 = vadd.f32 %v7038, %v7252
        %v7555 = vadd.f32 %v7039, %v7252
        %v7556 = vadd.f32 %v7040, %v7252
        %v7557 = vadd.f32 %v7041, %v7252
        %v7558 = vadd.f32 %v7042, %v7252
        %v7559 = vadd.f32 %v7043, %v7252
        %v7560 = vadd.f32 %v7044, %v7252
        %v7561 = vadd.f32 %v7045, %v7252
        %v7562 = vadd.f32 %v7046, %v7252
        %v7563 = vadd.f32 %v7047, %v7252
        %v7564 = vadd.f32 %v7048, %v7252
        %v7565 = vadd.f32 %v7049, %v7252
        %v7566 = vadd.f32 %v7050, %v7252
        %v7567 = vadd.f32 %v7051, %v7252
        %v7568 = vadd.f32 %v7052, %v7252
        %v7569 = vadd.f32 %v7053, %v7252
        %v7570 = vadd.f32 %v7054, %v7252
        %v7571 = vadd.f32 %v7055, %v7252
        %v7572 = vadd.f32 %v7056, %v7252
        %v7573 = vadd.f32 %v7057, %v7252
        %v7574 = vadd.f32 %v7058, %v7252
        %v7575 = vadd.f32 %v7059, %v7252
        %v7576 = vadd.f32 %v7060, %v7252
        %v7577 = vadd.f32 %v7061, %v7252
        %v7578 = vadd.f32 %v7062, %v7252
        %v7579 = vadd.f32 %v7063, %v7252
        %v7580 = vadd.f32 %v7064, %v7252
        %v7581 = vadd.f32 %v7065, %v7252
        %v7582 = vadd.f32 %v7066, %v7252
        %v7583 = vadd.f32 %v7067, %v7252
        %v7584 = vadd.f32 %v7068, %v7252
        %v7585 = vadd.f32 %v7069, %v7252
        %v7586 = vadd.f32 %v7070, %v7252
        %v7587 = vadd.f32 %v7071, %v7252
        %v7588 = vadd.f32 %v7072, %v7252
        %v7589 = vadd.f32 %v7073, %v7252
        %v7590 = vadd.f32 %v7074, %v7252
        %v7591 = vadd.f32 %v7075, %v7252
        %v7592 = vadd.f32 %v7076, %v7252
        %v7593 = vadd.f32 %v7077, %v7252
        %v7594 = vadd.f32 %v7078, %v7252
        %v7595 = vadd.f32 %v7079, %v7252
        %v7596 = vadd.f32 %v7080, %v7252
        %v7597 = vadd.f32 %v7081, %v7252
        %v7598 = vadd.f32 %v7082, %v7252
        %v7599 = vadd.f32 %v7083, %v7252
        %v7600 = vadd.f32 %v7084, %v7252
        %v7601 = vadd.f32 %v7085, %v7252
        %v7602 = vadd.f32 %v7086, %v7252
        %v7603 = vadd.f32 %v7087, %v7252
        %v7604 = vadd.f32 %v7088, %v7252
        %v7605 = vadd.f32 %v7089, %v7252
        %v7606 = vadd.f32 %v7090, %v7252
        %v7607 = vadd.f32 %v7091, %v7252
        %v7608 = vadd.f32 %v7092, %v7252
        %v7609 = vadd.f32 %v7093, %v7252
        %v7610 = vadd.f32 %v7094, %v7252
        %v7611 = vadd.f32 %v7095, %v7252
        %v7612 = vadd.f32 %v7096, %v7252
        %v7613 = vadd.f32 %v7097, %v7252
        %v7614 = vadd.f32 %v7098, %v7252
        %v7615 = vadd.f32 %v7099, %v7252
        %v7616 = vadd.f32 %v7100, %v7252
        %v7617 = vadd.f32 %v7101, %v7252
        %v7618 = vadd.f32 %v7102, %v7252
        %v7619 = vadd.f32 %v7103, %v7252
        %v7620 = vadd.f32 %v7104, %v7252
        %v7621 = vadd.f32 %v7105, %v7252
        %v7622 = vadd.f32 %v7106, %v7252
        %v7623 = vadd.f32 %v7107, %v7252
        %v7624 = vadd.f32 %v7108, %v7252
        %v7625 = vadd.f32 %v7109, %v7252
        %v7626 = vadd.f32 %v7110, %v7252
        %v7627 = vadd.f32 %v7111, %v7252
        %v7628 = vadd.f32 %v7112, %v7252
        %v7629 = vadd.f32 %v7113, %v7252
        %v7630 = vadd.f32 %v7114, %v7252
        %v7631 = vadd.f32 %v7115, %v7252
        %v7632 = vadd.f32 %v7116, %v7252
        %v7633 = vadd.f32 %v7117, %v7252
        %v7634 = vadd.f32 %v7118, %v7252
        %v7635 = vadd.f32 %v7119, %v7252
        %v7636 = vadd.f32 %v7120, %v7252
        %v7637 = vadd.f32 %v7121, %v7252
        %v7638 = vadd.f32 %v7122, %v7252
        %v7639 = vadd.f32 %v7123, %v7252
        %v7640 = vadd.f32 %v7124, %v7252
        %v7641 = vadd.f32 %v7125, %v7252
        %v7642 = vadd.f32 %v7126, %v7252
        %v7643 = vadd.f32 %v7127, %v7252
        %v7644 = vadd.f32 %v7128, %v7252
        %v7645 = vadd.f32 %v7129, %v7252
        %v7646 = vadd.f32 %v7130, %v7252
        %v7647 = vadd.f32 %v7131, %v7252
        %v7648 = vadd.f32 %v7132, %v7252
        %v7649 = vadd.f32 %v7133, %v7252
        %v7650 = vadd.f32 %v7134, %v7252
        %v7651 = vadd.f32 %v7135, %v7252
        %v7652 = vadd.f32 %v7136, %v7252
        %v7653 = vadd.f32 %v7137, %v7252
        %v7654 = vadd.f32 %v7138, %v7252
        %v7655 = vadd.f32 %v7139, %v7252
        %v7656 = vadd.f32 %v7140, %v7252
        %v7657 = vadd.f32 %v7141, %v7252
        %v7658 = vadd.f32 %v7142, %v7252
        %v7659 = vadd.f32 %v7143, %v7252
        %v7660 = vadd.f32 %v7144, %v7252
        %v7661 = vadd.f32 %v7145, %v7252
        %v7662 = vadd.f32 %v7146, %v7252
        %v7663 = vadd.f32 %v7147, %v7252
        %v7664 = vadd.f32 %v7148, %v7252
        %v7665 = vadd.f32 %v7149, %v7252
        %v7666 = vadd.f32 %v7150, %v7252
        %v7667 = vadd.f32 %v7151, %v7252
        %v7668 = vadd.f32 %v7152, %v7252
        %v7669 = vadd.f32 %v7153, %v7252
        %v7670 = vadd.f32 %v7154, %v7252
        %v7671 = vadd.f32 %v7155, %v7252
        %v7672 = vadd.f32 %v7156, %v7252
        %v7673 = vadd.f32 %v7157, %v7252
        %v7674 = vadd.f32 %v7158, %v7252
        %v7675 = vadd.f32 %v7159, %v7252
        %v7676 = vadd.f32 %v7160, %v7252
        %v7677 = vadd.f32 %v7161, %v7252
        %v7678 = vadd.f32 %v7162, %v7252
        %v7679 = vadd.f32 %v7163, %v7252
        %v7680 = vadd.f32 %v7164, %v7252
        %v7681 = vadd.f32 %v7165, %v7252
        %v7682 = vadd.f32 %v7166, %v7252
        %v7683 = vadd.f32 %v7167, %v7252
        %v7684 = vadd.f32 %v7168, %v7252
        %v7685 = vadd.f32 %v7169, %v7252
        %v7686 = vadd.f32 %v7170, %v7252
        %v7687 = vadd.f32 %v7171, %v7252
        %v7688 = vadd.f32 %v7172, %v7252
        %v7689 = vadd.f32 %v7173, %v7252
        %v7690 = vadd.f32 %v7174, %v7252
        %v7691 = vadd.f32 %v7175, %v7252
        %v7692 = vadd.f32 %v7176, %v7252
        %v7693 = vadd.f32 %v7177, %v7252
        %v7694 = vadd.f32 %v7178, %v7252
        %v7695 = vadd.f32 %v7179, %v7252
        %v7696 = vadd.f32 %v7180, %v7252
        %v7697 = vadd.f32 %v7181, %v7252
        %v7698 = vadd.f32 %v7182, %v7252
        %v7699 = vadd.f32 %v7183, %v7252
        %v7700 = vadd.f32 %v7184, %v7252
        %v7701 = vadd.f32 %v7185, %v7252
        %v7702 = vadd.f32 %v7186, %v7252
        %v7703 = vadd.f32 %v7187, %v7252
        %v7704 = vadd.f32 %v7188, %v7252
        %v7705 = vadd.f32 %v7189, %v7252
        %v7706 = vadd.f32 %v7190, %v7252
        %v7707 = vadd.f32 %v7191, %v7252
        %v7708 = vadd.f32 %v7192, %v7252
        %v7709 = vadd.f32 %v7193, %v7252
        %v7710 = vadd.f32 %v7194, %v7252
        %v7711 = vadd.f32 %v7195, %v7252
        %v7712 = vadd.f32 %v7196, %v7252
        %v7713 = vadd.f32 %v7197, %v7252
        %v7714 = vadd.f32 %v7198, %v7252
        %v7715 = vadd.f32 %v7199, %v7252
        %v7716 = vadd.f32 %v7200, %v7252
        %v7717 = vadd.f32 %v7201, %v7252
        %v7718 = vadd.f32 %v7202, %v7252
        %v7719 = vadd.f32 %v7203, %v7252
        %v7720 = vadd.f32 %v7204, %v7252
        %v7721 = vadd.f32 %v7205, %v7252
        %v7722 = vadd.f32 %v7206, %v7252
        %v7723 = vadd.f32 %v7207, %v7252
        %v7724 = vadd.f32 %v7208, %v7252
        %v7725 = vadd.f32 %v7209, %v7252
        %v7726 = vadd.f32 %v7210, %v7252
        %v7727 = vadd.f32 %v7211, %v7252
        %v7728 = vadd.f32 %v7212, %v7252
        %v7729 = vadd.f32 %v7213, %v7252
        %v7730 = vadd.f32 %v7214, %v7252
        %v7731 = vadd.f32 %v7215, %v7252
        %v7732 = vadd.f32 %v7216, %v7252
        %v7733 = vadd.f32 %v7217, %v7252
        %v7734 = vadd.f32 %v7218, %v7252
        %v7735 = vadd.f32 %v7219, %v7252
        %v7736 = vadd.f32 %v7220, %v7252
        %v7737 = vadd.f32 %v7221, %v7252
        %v7738 = vadd.f32 %v7222, %v7252
        %v7739 = vadd.f32 %v7223, %v7252
        %v7740 = vadd.f32 %v7224, %v7252
        %v7741 = vadd.f32 %v7225, %v7252
        %v7742 = vadd.f32 %v7226, %v7252
        %v7743 = vadd.f32 %v7227, %v7252
        %v7744 = vadd.f32 %v7228, %v7252
        %v7745 = vadd.f32 %v7229, %v7252
        %v7746 = vadd.f32 %v7230, %v7252
        %v7747 = vadd.f32 %v7231, %v7252
        %v7748 = vadd.f32 %v7232, %v7252
        %v7749 = vadd.f32 %v7233, %v7252
        %v7750 = vadd.f32 %v7234, %v7252
        %v7751 = vadd.f32 %v7235, %v7252
        %v7752 = vadd.f32 %v7236, %v7252
        %v7753 = vadd.f32 %v7237, %v7252
        %v7754 = vadd.f32 %v7238, %v7252
        %v7755 = vadd.f32 %v7239, %v7252
        %v7756 = vadd.f32 %v7240, %v7252
        %v7757 = vadd.f32 %v7241, %v7252
        %v7758 = vadd.f32 %v7242, %v7252
        %v7759 = vadd.f32 %v7243, %v7252
        %v7760 = vadd.f32 %v7244, %v7252
        %v7761 = vadd.f32 %v7245, %v7252
        %v7762 = vadd.f32 %v7246, %v7252
        %v7763 = vadd.f32 %v7247, %v7252
        %v7764 = vadd.f32 %v7248, %v7252
        %v7765 = vadd.f32 %v7249, %v7252
        %v7766 = vmax.f32 %v7254, 0.0
        %v7767 = vmax.f32 %v7255, 0.0
        %v7768 = vmax.f32 %v7256, 0.0
        %v7769 = vmax.f32 %v7257, 0.0
        %v7770 = vmax.f32 %v7258, 0.0
        %v7771 = vmax.f32 %v7259, 0.0
        %v7772 = vmax.f32 %v7260, 0.0
        %v7773 = vmax.f32 %v7261, 0.0
        %v7774 = vmax.f32 %v7262, 0.0
        %v7775 = vmax.f32 %v7263, 0.0
        %v7776 = vmax.f32 %v7264, 0.0
        %v7777 = vmax.f32 %v7265, 0.0
        %v7778 = vmax.f32 %v7266, 0.0
        %v7779 = vmax.f32 %v7267, 0.0
        %v7780 = vmax.f32 %v7268, 0.0
        %v7781 = vmax.f32 %v7269, 0.0
        %v7782 = vmax.f32 %v7270, 0.0
        %v7783 = vmax.f32 %v7271, 0.0
        %v7784 = vmax.f32 %v7272, 0.0
        %v7785 = vmax.f32 %v7273, 0.0
        %v7786 = vmax.f32 %v7274, 0.0
        %v7787 = vmax.f32 %v7275, 0.0
        %v7788 = vmax.f32 %v7276, 0.0
        %v7789 = vmax.f32 %v7277, 0.0
        %v7790 = vmax.f32 %v7278, 0.0
        %v7791 = vmax.f32 %v7279, 0.0
        %v7792 = vmax.f32 %v7280, 0.0
        %v7793 = vmax.f32 %v7281, 0.0
        %v7794 = vmax.f32 %v7282, 0.0
        %v7795 = vmax.f32 %v7283, 0.0
        %v7796 = vmax.f32 %v7284, 0.0
        %v7797 = vmax.f32 %v7285, 0.0
        %v7798 = vmax.f32 %v7286, 0.0
        %v7799 = vmax.f32 %v7287, 0.0
        %v7800 = vmax.f32 %v7288, 0.0
        %v7801 = vmax.f32 %v7289, 0.0
        %v7802 = vmax.f32 %v7290, 0.0
        %v7803 = vmax.f32 %v7291, 0.0
        %v7804 = vmax.f32 %v7292, 0.0
        %v7805 = vmax.f32 %v7293, 0.0
        %v7806 = vmax.f32 %v7294, 0.0
        %v7807 = vmax.f32 %v7295, 0.0
        %v7808 = vmax.f32 %v7296, 0.0
        %v7809 = vmax.f32 %v7297, 0.0
        %v7810 = vmax.f32 %v7298, 0.0
        %v7811 = vmax.f32 %v7299, 0.0
        %v7812 = vmax.f32 %v7300, 0.0
        %v7813 = vmax.f32 %v7301, 0.0
        %v7814 = vmax.f32 %v7302, 0.0
        %v7815 = vmax.f32 %v7303, 0.0
        %v7816 = vmax.f32 %v7304, 0.0
        %v7817 = vmax.f32 %v7305, 0.0
        %v7818 = vmax.f32 %v7306, 0.0
        %v7819 = vmax.f32 %v7307, 0.0
        %v7820 = vmax.f32 %v7308, 0.0
        %v7821 = vmax.f32 %v7309, 0.0
        %v7822 = vmax.f32 %v7310, 0.0
        %v7823 = vmax.f32 %v7311, 0.0
        %v7824 = vmax.f32 %v7312, 0.0
        %v7825 = vmax.f32 %v7313, 0.0
        %v7826 = vmax.f32 %v7314, 0.0
        %v7827 = vmax.f32 %v7315, 0.0
        %v7828 = vmax.f32 %v7316, 0.0
        %v7829 = vmax.f32 %v7317, 0.0
        %v7830 = vmax.f32 %v7318, 0.0
        %v7831 = vmax.f32 %v7319, 0.0
        %v7832 = vmax.f32 %v7320, 0.0
        %v7833 = vmax.f32 %v7321, 0.0
        %v7834 = vmax.f32 %v7322, 0.0
        %v7835 = vmax.f32 %v7323, 0.0
        %v7836 = vmax.f32 %v7324, 0.0
        %v7837 = vmax.f32 %v7325, 0.0
        %v7838 = vmax.f32 %v7326, 0.0
        %v7839 = vmax.f32 %v7327, 0.0
        %v7840 = vmax.f32 %v7328, 0.0
        %v7841 = vmax.f32 %v7329, 0.0
        %v7842 = vmax.f32 %v7330, 0.0
        %v7843 = vmax.f32 %v7331, 0.0
        %v7844 = vmax.f32 %v7332, 0.0
        %v7845 = vmax.f32 %v7333, 0.0
        %v7846 = vmax.f32 %v7334, 0.0
        %v7847 = vmax.f32 %v7335, 0.0
        %v7848 = vmax.f32 %v7336, 0.0
        %v7849 = vmax.f32 %v7337, 0.0
        %v7850 = vmax.f32 %v7338, 0.0
        %v7851 = vmax.f32 %v7339, 0.0
        %v7852 = vmax.f32 %v7340, 0.0
        %v7853 = vmax.f32 %v7341, 0.0
        %v7854 = vmax.f32 %v7342, 0.0
        %v7855 = vmax.f32 %v7343, 0.0
        %v7856 = vmax.f32 %v7344, 0.0
        %v7857 = vmax.f32 %v7345, 0.0
        %v7858 = vmax.f32 %v7346, 0.0
        %v7859 = vmax.f32 %v7347, 0.0
        %v7860 = vmax.f32 %v7348, 0.0
        %v7861 = vmax.f32 %v7349, 0.0
        %v7862 = vmax.f32 %v7350, 0.0
        %v7863 = vmax.f32 %v7351, 0.0
        %v7864 = vmax.f32 %v7352, 0.0
        %v7865 = vmax.f32 %v7353, 0.0
        %v7866 = vmax.f32 %v7354, 0.0
        %v7867 = vmax.f32 %v7355, 0.0
        %v7868 = vmax.f32 %v7356, 0.0
        %v7869 = vmax.f32 %v7357, 0.0
        %v7870 = vmax.f32 %v7358, 0.0
        %v7871 = vmax.f32 %v7359, 0.0
        %v7872 = vmax.f32 %v7360, 0.0
        %v7873 = vmax.f32 %v7361, 0.0
        %v7874 = vmax.f32 %v7362, 0.0
        %v7875 = vmax.f32 %v7363, 0.0
        %v7876 = vmax.f32 %v7364, 0.0
        %v7877 = vmax.f32 %v7365, 0.0
        %v7878 = vmax.f32 %v7366, 0.0
        %v7879 = vmax.f32 %v7367, 0.0
        %v7880 = vmax.f32 %v7368, 0.0
        %v7881 = vmax.f32 %v7369, 0.0
        %v7882 = vmax.f32 %v7370, 0.0
        %v7883 = vmax.f32 %v7371, 0.0
        %v7884 = vmax.f32 %v7372, 0.0
        %v7885 = vmax.f32 %v7373, 0.0
        %v7886 = vmax.f32 %v7374, 0.0
        %v7887 = vmax.f32 %v7375, 0.0
        %v7888 = vmax.f32 %v7376, 0.0
        %v7889 = vmax.f32 %v7377, 0.0
        %v7890 = vmax.f32 %v7378, 0.0
        %v7891 = vmax.f32 %v7379, 0.0
        %v7892 = vmax.f32 %v7380, 0.0
        %v7893 = vmax.f32 %v7381, 0.0
        %v7894 = vmax.f32 %v7382, 0.0
        %v7895 = vmax.f32 %v7383, 0.0
        %v7896 = vmax.f32 %v7384, 0.0
        %v7897 = vmax.f32 %v7385, 0.0
        %v7898 = vmax.f32 %v7386, 0.0
        %v7899 = vmax.f32 %v7387, 0.0
        %v7900 = vmax.f32 %v7388, 0.0
        %v7901 = vmax.f32 %v7389, 0.0
        %v7902 = vmax.f32 %v7390, 0.0
        %v7903 = vmax.f32 %v7391, 0.0
        %v7904 = vmax.f32 %v7392, 0.0
        %v7905 = vmax.f32 %v7393, 0.0
        %v7906 = vmax.f32 %v7394, 0.0
        %v7907 = vmax.f32 %v7395, 0.0
        %v7908 = vmax.f32 %v7396, 0.0
        %v7909 = vmax.f32 %v7397, 0.0
        %v7910 = vmax.f32 %v7398, 0.0
        %v7911 = vmax.f32 %v7399, 0.0
        %v7912 = vmax.f32 %v7400, 0.0
        %v7913 = vmax.f32 %v7401, 0.0
        %v7914 = vmax.f32 %v7402, 0.0
        %v7915 = vmax.f32 %v7403, 0.0
        %v7916 = vmax.f32 %v7404, 0.0
        %v7917 = vmax.f32 %v7405, 0.0
        %v7918 = vmax.f32 %v7406, 0.0
        %v7919 = vmax.f32 %v7407, 0.0
        %v7920 = vmax.f32 %v7408, 0.0
        %v7921 = vmax.f32 %v7409, 0.0
        %v7922 = vmax.f32 %v7410, 0.0
        %v7923 = vmax.f32 %v7411, 0.0
        %v7924 = vmax.f32 %v7412, 0.0
        %v7925 = vmax.f32 %v7413, 0.0
        %v7926 = vmax.f32 %v7414, 0.0
        %v7927 = vmax.f32 %v7415, 0.0
        %v7928 = vmax.f32 %v7416, 0.0
        %v7929 = vmax.f32 %v7417, 0.0
        %v7930 = vmax.f32 %v7418, 0.0
        %v7931 = vmax.f32 %v7419, 0.0
        %v7932 = vmax.f32 %v7420, 0.0
        %v7933 = vmax.f32 %v7421, 0.0
        %v7934 = vmax.f32 %v7422, 0.0
        %v7935 = vmax.f32 %v7423, 0.0
        %v7936 = vmax.f32 %v7424, 0.0
        %v7937 = vmax.f32 %v7425, 0.0
        %v7938 = vmax.f32 %v7426, 0.0
        %v7939 = vmax.f32 %v7427, 0.0
        %v7940 = vmax.f32 %v7428, 0.0
        %v7941 = vmax.f32 %v7429, 0.0
        %v7942 = vmax.f32 %v7430, 0.0
        %v7943 = vmax.f32 %v7431, 0.0
        %v7944 = vmax.f32 %v7432, 0.0
        %v7945 = vmax.f32 %v7433, 0.0
        %v7946 = vmax.f32 %v7434, 0.0
        %v7947 = vmax.f32 %v7435, 0.0
        %v7948 = vmax.f32 %v7436, 0.0
        %v7949 = vmax.f32 %v7437, 0.0
        %v7950 = vmax.f32 %v7438, 0.0
        %v7951 = vmax.f32 %v7439, 0.0
        %v7952 = vmax.f32 %v7440, 0.0
        %v7953 = vmax.f32 %v7441, 0.0
        %v7954 = vmax.f32 %v7442, 0.0
        %v7955 = vmax.f32 %v7443, 0.0
        %v7956 = vmax.f32 %v7444, 0.0
        %v7957 = vmax.f32 %v7445, 0.0
        %v7958 = vmax.f32 %v7446, 0.0
        %v7959 = vmax.f32 %v7447, 0.0
        %v7960 = vmax.f32 %v7448, 0.0
        %v7961 = vmax.f32 %v7449, 0.0
        %v7962 = vmax.f32 %v7450, 0.0
        %v7963 = vmax.f32 %v7451, 0.0
        %v7964 = vmax.f32 %v7452, 0.0
        %v7965 = vmax.f32 %v7453, 0.0
        %v7966 = vmax.f32 %v7454, 0.0
        %v7967 = vmax.f32 %v7455, 0.0
        %v7968 = vmax.f32 %v7456, 0.0
        %v7969 = vmax.f32 %v7457, 0.0
        %v7970 = vmax.f32 %v7458, 0.0
        %v7971 = vmax.f32 %v7459, 0.0
        %v7972 = vmax.f32 %v7460, 0.0
        %v7973 = vmax.f32 %v7461, 0.0
        %v7974 = vmax.f32 %v7462, 0.0
        %v7975 = vmax.f32 %v7463, 0.0
        %v7976 = vmax.f32 %v7464, 0.0
        %v7977 = vmax.f32 %v7465, 0.0
        %v7978 = vmax.f32 %v7466, 0.0
        %v7979 = vmax.f32 %v7467, 0.0
        %v7980 = vmax.f32 %v7468, 0.0
        %v7981 = vmax.f32 %v7469, 0.0
        %v7982 = vmax.f32 %v7470, 0.0
        %v7983 = vmax.f32 %v7471, 0.0
        %v7984 = vmax.f32 %v7472, 0.0
        %v7985 = vmax.f32 %v7473, 0.0
        %v7986 = vmax.f32 %v7474, 0.0
        %v7987 = vmax.f32 %v7475, 0.0
        %v7988 = vmax.f32 %v7476, 0.0
        %v7989 = vmax.f32 %v7477, 0.0
        %v7990 = vmax.f32 %v7478, 0.0
        %v7991 = vmax.f32 %v7479, 0.0
        %v7992 = vmax.f32 %v7480, 0.0
        %v7993 = vmax.f32 %v7481, 0.0
        %v7994 = vmax.f32 %v7482, 0.0
        %v7995 = vmax.f32 %v7483, 0.0
        %v7996 = vmax.f32 %v7484, 0.0
        %v7997 = vmax.f32 %v7485, 0.0
        %v7998 = vmax.f32 %v7486, 0.0
        %v7999 = vmax.f32 %v7487, 0.0
        %v8000 = vmax.f32 %v7488, 0.0
        %v8001 = vmax.f32 %v7489, 0.0
        %v8002 = vmax.f32 %v7490, 0.0
        %v8003 = vmax.f32 %v7491, 0.0
        %v8004 = vmax.f32 %v7492, 0.0
        %v8005 = vmax.f32 %v7493, 0.0
        %v8006 = vmax.f32 %v7494, 0.0
        %v8007 = vmax.f32 %v7495, 0.0
        %v8008 = vmax.f32 %v7496, 0.0
        %v8009 = vmax.f32 %v7497, 0.0
        %v8010 = vmax.f32 %v7498, 0.0
        %v8011 = vmax.f32 %v7499, 0.0
        %v8012 = vmax.f32 %v7500, 0.0
        %v8013 = vmax.f32 %v7501, 0.0
        %v8014 = vmax.f32 %v7502, 0.0
        %v8015 = vmax.f32 %v7503, 0.0
        %v8016 = vmax.f32 %v7504, 0.0
        %v8017 = vmax.f32 %v7505, 0.0
        %v8018 = vmax.f32 %v7506, 0.0
        %v8019 = vmax.f32 %v7507, 0.0
        %v8020 = vmax.f32 %v7508, 0.0
        %v8021 = vmax.f32 %v7509, 0.0
        %v8022 = vmax.f32 %v7510, 0.0
        %v8023 = vmax.f32 %v7511, 0.0
        %v8024 = vmax.f32 %v7512, 0.0
        %v8025 = vmax.f32 %v7513, 0.0
        %v8026 = vmax.f32 %v7514, 0.0
        %v8027 = vmax.f32 %v7515, 0.0
        %v8028 = vmax.f32 %v7516, 0.0
        %v8029 = vmax.f32 %v7517, 0.0
        %v8030 = vmax.f32 %v7518, 0.0
        %v8031 = vmax.f32 %v7519, 0.0
        %v8032 = vmax.f32 %v7520, 0.0
        %v8033 = vmax.f32 %v7521, 0.0
        %v8034 = vmax.f32 %v7522, 0.0
        %v8035 = vmax.f32 %v7523, 0.0
        %v8036 = vmax.f32 %v7524, 0.0
        %v8037 = vmax.f32 %v7525, 0.0
        %v8038 = vmax.f32 %v7526, 0.0
        %v8039 = vmax.f32 %v7527, 0.0
        %v8040 = vmax.f32 %v7528, 0.0
        %v8041 = vmax.f32 %v7529, 0.0
        %v8042 = vmax.f32 %v7530, 0.0
        %v8043 = vmax.f32 %v7531, 0.0
        %v8044 = vmax.f32 %v7532, 0.0
        %v8045 = vmax.f32 %v7533, 0.0
        %v8046 = vmax.f32 %v7534, 0.0
        %v8047 = vmax.f32 %v7535, 0.0
        %v8048 = vmax.f32 %v7536, 0.0
        %v8049 = vmax.f32 %v7537, 0.0
        %v8050 = vmax.f32 %v7538, 0.0
        %v8051 = vmax.f32 %v7539, 0.0
        %v8052 = vmax.f32 %v7540, 0.0
        %v8053 = vmax.f32 %v7541, 0.0
        %v8054 = vmax.f32 %v7542, 0.0
        %v8055 = vmax.f32 %v7543, 0.0
        %v8056 = vmax.f32 %v7544, 0.0
        %v8057 = vmax.f32 %v7545, 0.0
        %v8058 = vmax.f32 %v7546, 0.0
        %v8059 = vmax.f32 %v7547, 0.0
        %v8060 = vmax.f32 %v7548, 0.0
        %v8061 = vmax.f32 %v7549, 0.0
        %v8062 = vmax.f32 %v7550, 0.0
        %v8063 = vmax.f32 %v7551, 0.0
        %v8064 = vmax.f32 %v7552, 0.0
        %v8065 = vmax.f32 %v7553, 0.0
        %v8066 = vmax.f32 %v7554, 0.0
        %v8067 = vmax.f32 %v7555, 0.0
        %v8068 = vmax.f32 %v7556, 0.0
        %v8069 = vmax.f32 %v7557, 0.0
        %v8070 = vmax.f32 %v7558, 0.0
        %v8071 = vmax.f32 %v7559, 0.0
        %v8072 = vmax.f32 %v7560, 0.0
        %v8073 = vmax.f32 %v7561, 0.0
        %v8074 = vmax.f32 %v7562, 0.0
        %v8075 = vmax.f32 %v7563, 0.0
        %v8076 = vmax.f32 %v7564, 0.0
        %v8077 = vmax.f32 %v7565, 0.0
        %v8078 = vmax.f32 %v7566, 0.0
        %v8079 = vmax.f32 %v7567, 0.0
        %v8080 = vmax.f32 %v7568, 0.0
        %v8081 = vmax.f32 %v7569, 0.0
        %v8082 = vmax.f32 %v7570, 0.0
        %v8083 = vmax.f32 %v7571, 0.0
        %v8084 = vmax.f32 %v7572, 0.0
        %v8085 = vmax.f32 %v7573, 0.0
        %v8086 = vmax.f32 %v7574, 0.0
        %v8087 = vmax.f32 %v7575, 0.0
        %v8088 = vmax.f32 %v7576, 0.0
        %v8089 = vmax.f32 %v7577, 0.0
        %v8090 = vmax.f32 %v7578, 0.0
        %v8091 = vmax.f32 %v7579, 0.0
        %v8092 = vmax.f32 %v7580, 0.0
        %v8093 = vmax.f32 %v7581, 0.0
        %v8094 = vmax.f32 %v7582, 0.0
        %v8095 = vmax.f32 %v7583, 0.0
        %v8096 = vmax.f32 %v7584, 0.0
        %v8097 = vmax.f32 %v7585, 0.0
        %v8098 = vmax.f32 %v7586, 0.0
        %v8099 = vmax.f32 %v7587, 0.0
        %v8100 = vmax.f32 %v7588, 0.0
        %v8101 = vmax.f32 %v7589, 0.0
        %v8102 = vmax.f32 %v7590, 0.0
        %v8103 = vmax.f32 %v7591, 0.0
        %v8104 = vmax.f32 %v7592, 0.0
        %v8105 = vmax.f32 %v7593, 0.0
        %v8106 = vmax.f32 %v7594, 0.0
        %v8107 = vmax.f32 %v7595, 0.0
        %v8108 = vmax.f32 %v7596, 0.0
        %v8109 = vmax.f32 %v7597, 0.0
        %v8110 = vmax.f32 %v7598, 0.0
        %v8111 = vmax.f32 %v7599, 0.0
        %v8112 = vmax.f32 %v7600, 0.0
        %v8113 = vmax.f32 %v7601, 0.0
        %v8114 = vmax.f32 %v7602, 0.0
        %v8115 = vmax.f32 %v7603, 0.0
        %v8116 = vmax.f32 %v7604, 0.0
        %v8117 = vmax.f32 %v7605, 0.0
        %v8118 = vmax.f32 %v7606, 0.0
        %v8119 = vmax.f32 %v7607, 0.0
        %v8120 = vmax.f32 %v7608, 0.0
        %v8121 = vmax.f32 %v7609, 0.0
        %v8122 = vmax.f32 %v7610, 0.0
        %v8123 = vmax.f32 %v7611, 0.0
        %v8124 = vmax.f32 %v7612, 0.0
        %v8125 = vmax.f32 %v7613, 0.0
        %v8126 = vmax.f32 %v7614, 0.0
        %v8127 = vmax.f32 %v7615, 0.0
        %v8128 = vmax.f32 %v7616, 0.0
        %v8129 = vmax.f32 %v7617, 0.0
        %v8130 = vmax.f32 %v7618, 0.0
        %v8131 = vmax.f32 %v7619, 0.0
        %v8132 = vmax.f32 %v7620, 0.0
        %v8133 = vmax.f32 %v7621, 0.0
        %v8134 = vmax.f32 %v7622, 0.0
        %v8135 = vmax.f32 %v7623, 0.0
        %v8136 = vmax.f32 %v7624, 0.0
        %v8137 = vmax.f32 %v7625, 0.0
        %v8138 = vmax.f32 %v7626, 0.0
        %v8139 = vmax.f32 %v7627, 0.0
        %v8140 = vmax.f32 %v7628, 0.0
        %v8141 = vmax.f32 %v7629, 0.0
        %v8142 = vmax.f32 %v7630, 0.0
        %v8143 = vmax.f32 %v7631, 0.0
        %v8144 = vmax.f32 %v7632, 0.0
        %v8145 = vmax.f32 %v7633, 0.0
        %v8146 = vmax.f32 %v7634, 0.0
        %v8147 = vmax.f32 %v7635, 0.0
        %v8148 = vmax.f32 %v7636, 0.0
        %v8149 = vmax.f32 %v7637, 0.0
        %v8150 = vmax.f32 %v7638, 0.0
        %v8151 = vmax.f32 %v7639, 0.0
        %v8152 = vmax.f32 %v7640, 0.0
        %v8153 = vmax.f32 %v7641, 0.0
        %v8154 = vmax.f32 %v7642, 0.0
        %v8155 = vmax.f32 %v7643, 0.0
        %v8156 = vmax.f32 %v7644, 0.0
        %v8157 = vmax.f32 %v7645, 0.0
        %v8158 = vmax.f32 %v7646, 0.0
        %v8159 = vmax.f32 %v7647, 0.0
        %v8160 = vmax.f32 %v7648, 0.0
        %v8161 = vmax.f32 %v7649, 0.0
        %v8162 = vmax.f32 %v7650, 0.0
        %v8163 = vmax.f32 %v7651, 0.0
        %v8164 = vmax.f32 %v7652, 0.0
        %v8165 = vmax.f32 %v7653, 0.0
        %v8166 = vmax.f32 %v7654, 0.0
        %v8167 = vmax.f32 %v7655, 0.0
        %v8168 = vmax.f32 %v7656, 0.0
        %v8169 = vmax.f32 %v7657, 0.0
        %v8170 = vmax.f32 %v7658, 0.0
        %v8171 = vmax.f32 %v7659, 0.0
        %v8172 = vmax.f32 %v7660, 0.0
        %v8173 = vmax.f32 %v7661, 0.0
        %v8174 = vmax.f32 %v7662, 0.0
        %v8175 = vmax.f32 %v7663, 0.0
        %v8176 = vmax.f32 %v7664, 0.0
        %v8177 = vmax.f32 %v7665, 0.0
        %v8178 = vmax.f32 %v7666, 0.0
        %v8179 = vmax.f32 %v7667, 0.0
        %v8180 = vmax.f32 %v7668, 0.0
        %v8181 = vmax.f32 %v7669, 0.0
        %v8182 = vmax.f32 %v7670, 0.0
        %v8183 = vmax.f32 %v7671, 0.0
        %v8184 = vmax.f32 %v7672, 0.0
        %v8185 = vmax.f32 %v7673, 0.0
        %v8186 = vmax.f32 %v7674, 0.0
        %v8187 = vmax.f32 %v7675, 0.0
        %v8188 = vmax.f32 %v7676, 0.0
        %v8189 = vmax.f32 %v7677, 0.0
        %v8190 = vmax.f32 %v7678, 0.0
        %v8191 = vmax.f32 %v7679, 0.0
        %v8192 = vmax.f32 %v7680, 0.0
        %v8193 = vmax.f32 %v7681, 0.0
        %v8194 = vmax.f32 %v7682, 0.0
        %v8195 = vmax.f32 %v7683, 0.0
        %v8196 = vmax.f32 %v7684, 0.0
        %v8197 = vmax.f32 %v7685, 0.0
        %v8198 = vmax.f32 %v7686, 0.0
        %v8199 = vmax.f32 %v7687, 0.0
        %v8200 = vmax.f32 %v7688, 0.0
        %v8201 = vmax.f32 %v7689, 0.0
        %v8202 = vmax.f32 %v7690, 0.0
        %v8203 = vmax.f32 %v7691, 0.0
        %v8204 = vmax.f32 %v7692, 0.0
        %v8205 = vmax.f32 %v7693, 0.0
        %v8206 = vmax.f32 %v7694, 0.0
        %v8207 = vmax.f32 %v7695, 0.0
        %v8208 = vmax.f32 %v7696, 0.0
        %v8209 = vmax.f32 %v7697, 0.0
        %v8210 = vmax.f32 %v7698, 0.0
        %v8211 = vmax.f32 %v7699, 0.0
        %v8212 = vmax.f32 %v7700, 0.0
        %v8213 = vmax.f32 %v7701, 0.0
        %v8214 = vmax.f32 %v7702, 0.0
        %v8215 = vmax.f32 %v7703, 0.0
        %v8216 = vmax.f32 %v7704, 0.0
        %v8217 = vmax.f32 %v7705, 0.0
        %v8218 = vmax.f32 %v7706, 0.0
        %v8219 = vmax.f32 %v7707, 0.0
        %v8220 = vmax.f32 %v7708, 0.0
        %v8221 = vmax.f32 %v7709, 0.0
        %v8222 = vmax.f32 %v7710, 0.0
        %v8223 = vmax.f32 %v7711, 0.0
        %v8224 = vmax.f32 %v7712, 0.0
        %v8225 = vmax.f32 %v7713, 0.0
        %v8226 = vmax.f32 %v7714, 0.0
        %v8227 = vmax.f32 %v7715, 0.0
        %v8228 = vmax.f32 %v7716, 0.0
        %v8229 = vmax.f32 %v7717, 0.0
        %v8230 = vmax.f32 %v7718, 0.0
        %v8231 = vmax.f32 %v7719, 0.0
        %v8232 = vmax.f32 %v7720, 0.0
        %v8233 = vmax.f32 %v7721, 0.0
        %v8234 = vmax.f32 %v7722, 0.0
        %v8235 = vmax.f32 %v7723, 0.0
        %v8236 = vmax.f32 %v7724, 0.0
        %v8237 = vmax.f32 %v7725, 0.0
        %v8238 = vmax.f32 %v7726, 0.0
        %v8239 = vmax.f32 %v7727, 0.0
        %v8240 = vmax.f32 %v7728, 0.0
        %v8241 = vmax.f32 %v7729, 0.0
        %v8242 = vmax.f32 %v7730, 0.0
        %v8243 = vmax.f32 %v7731, 0.0
        %v8244 = vmax.f32 %v7732, 0.0
        %v8245 = vmax.f32 %v7733, 0.0
        %v8246 = vmax.f32 %v7734, 0.0
        %v8247 = vmax.f32 %v7735, 0.0
        %v8248 = vmax.f32 %v7736, 0.0
        %v8249 = vmax.f32 %v7737, 0.0
        %v8250 = vmax.f32 %v7738, 0.0
        %v8251 = vmax.f32 %v7739, 0.0
        %v8252 = vmax.f32 %v7740, 0.0
        %v8253 = vmax.f32 %v7741, 0.0
        %v8254 = vmax.f32 %v7742, 0.0
        %v8255 = vmax.f32 %v7743, 0.0
        %v8256 = vmax.f32 %v7744, 0.0
        %v8257 = vmax.f32 %v7745, 0.0
        %v8258 = vmax.f32 %v7746, 0.0
        %v8259 = vmax.f32 %v7747, 0.0
        %v8260 = vmax.f32 %v7748, 0.0
        %v8261 = vmax.f32 %v7749, 0.0
        %v8262 = vmax.f32 %v7750, 0.0
        %v8263 = vmax.f32 %v7751, 0.0
        %v8264 = vmax.f32 %v7752, 0.0
        %v8265 = vmax.f32 %v7753, 0.0
        %v8266 = vmax.f32 %v7754, 0.0
        %v8267 = vmax.f32 %v7755, 0.0
        %v8268 = vmax.f32 %v7756, 0.0
        %v8269 = vmax.f32 %v7757, 0.0
        %v8270 = vmax.f32 %v7758, 0.0
        %v8271 = vmax.f32 %v7759, 0.0
        %v8272 = vmax.f32 %v7760, 0.0
        %v8273 = vmax.f32 %v7761, 0.0
        %v8274 = vmax.f32 %v7762, 0.0
        %v8275 = vmax.f32 %v7763, 0.0
        %v8276 = vmax.f32 %v7764, 0.0
        %v8277 = vmax.f32 %v7765, 0.0
        %v8278 = vpack.c.bf16 %v7766, %v7766
        %v8279 = vpack.c.bf16 %v7767, %v7767
        %v8280 = vpack.c.bf16 %v7768, %v7768
        %v8281 = vpack.c.bf16 %v7769, %v7769
        %v8282 = vpack.c.bf16 %v7770, %v7770
        %v8283 = vpack.c.bf16 %v7771, %v7771
        %v8284 = vpack.c.bf16 %v7772, %v7772
        %v8285 = vpack.c.bf16 %v7773, %v7773
        %v8286 = vpack.c.bf16 %v7774, %v7774
        %v8287 = vpack.c.bf16 %v7775, %v7775
        %v8288 = vpack.c.bf16 %v7776, %v7776
        %v8289 = vpack.c.bf16 %v7777, %v7777
        %v8290 = vpack.c.bf16 %v7778, %v7778
        %v8291 = vpack.c.bf16 %v7779, %v7779
        %v8292 = vpack.c.bf16 %v7780, %v7780
        %v8293 = vpack.c.bf16 %v7781, %v7781
        %v8294 = vpack.c.bf16 %v7782, %v7782
        %v8295 = vpack.c.bf16 %v7783, %v7783
        %v8296 = vpack.c.bf16 %v7784, %v7784
        %v8297 = vpack.c.bf16 %v7785, %v7785
        %v8298 = vpack.c.bf16 %v7786, %v7786
        %v8299 = vpack.c.bf16 %v7787, %v7787
        %v8300 = vpack.c.bf16 %v7788, %v7788
        %v8301 = vpack.c.bf16 %v7789, %v7789
        %v8302 = vpack.c.bf16 %v7790, %v7790
        %v8303 = vpack.c.bf16 %v7791, %v7791
        %v8304 = vpack.c.bf16 %v7792, %v7792
        %v8305 = vpack.c.bf16 %v7793, %v7793
        %v8306 = vpack.c.bf16 %v7794, %v7794
        %v8307 = vpack.c.bf16 %v7795, %v7795
        %v8308 = vpack.c.bf16 %v7796, %v7796
        %v8309 = vpack.c.bf16 %v7797, %v7797
        %v8310 = vpack.c.bf16 %v7798, %v7798
        %v8311 = vpack.c.bf16 %v7799, %v7799
        %v8312 = vpack.c.bf16 %v7800, %v7800
        %v8313 = vpack.c.bf16 %v7801, %v7801
        %v8314 = vpack.c.bf16 %v7802, %v7802
        %v8315 = vpack.c.bf16 %v7803, %v7803
        %v8316 = vpack.c.bf16 %v7804, %v7804
        %v8317 = vpack.c.bf16 %v7805, %v7805
        %v8318 = vpack.c.bf16 %v7806, %v7806
        %v8319 = vpack.c.bf16 %v7807, %v7807
        %v8320 = vpack.c.bf16 %v7808, %v7808
        %v8321 = vpack.c.bf16 %v7809, %v7809
        %v8322 = vpack.c.bf16 %v7810, %v7810
        %v8323 = vpack.c.bf16 %v7811, %v7811
        %v8324 = vpack.c.bf16 %v7812, %v7812
        %v8325 = vpack.c.bf16 %v7813, %v7813
        %v8326 = vpack.c.bf16 %v7814, %v7814
        %v8327 = vpack.c.bf16 %v7815, %v7815
        %v8328 = vpack.c.bf16 %v7816, %v7816
        %v8329 = vpack.c.bf16 %v7817, %v7817
        %v8330 = vpack.c.bf16 %v7818, %v7818
        %v8331 = vpack.c.bf16 %v7819, %v7819
        %v8332 = vpack.c.bf16 %v7820, %v7820
        %v8333 = vpack.c.bf16 %v7821, %v7821
        %v8334 = vpack.c.bf16 %v7822, %v7822
        %v8335 = vpack.c.bf16 %v7823, %v7823
        %v8336 = vpack.c.bf16 %v7824, %v7824
        %v8337 = vpack.c.bf16 %v7825, %v7825
        %v8338 = vpack.c.bf16 %v7826, %v7826
        %v8339 = vpack.c.bf16 %v7827, %v7827
        %v8340 = vpack.c.bf16 %v7828, %v7828
        %v8341 = vpack.c.bf16 %v7829, %v7829
        %v8342 = vpack.c.bf16 %v7830, %v7830
        %v8343 = vpack.c.bf16 %v7831, %v7831
        %v8344 = vpack.c.bf16 %v7832, %v7832
        %v8345 = vpack.c.bf16 %v7833, %v7833
        %v8346 = vpack.c.bf16 %v7834, %v7834
        %v8347 = vpack.c.bf16 %v7835, %v7835
        %v8348 = vpack.c.bf16 %v7836, %v7836
        %v8349 = vpack.c.bf16 %v7837, %v7837
        %v8350 = vpack.c.bf16 %v7838, %v7838
        %v8351 = vpack.c.bf16 %v7839, %v7839
        %v8352 = vpack.c.bf16 %v7840, %v7840
        %v8353 = vpack.c.bf16 %v7841, %v7841
        %v8354 = vpack.c.bf16 %v7842, %v7842
        %v8355 = vpack.c.bf16 %v7843, %v7843
        %v8356 = vpack.c.bf16 %v7844, %v7844
        %v8357 = vpack.c.bf16 %v7845, %v7845
        %v8358 = vpack.c.bf16 %v7846, %v7846
        %v8359 = vpack.c.bf16 %v7847, %v7847
        %v8360 = vpack.c.bf16 %v7848, %v7848
        %v8361 = vpack.c.bf16 %v7849, %v7849
        %v8362 = vpack.c.bf16 %v7850, %v7850
        %v8363 = vpack.c.bf16 %v7851, %v7851
        %v8364 = vpack.c.bf16 %v7852, %v7852
        %v8365 = vpack.c.bf16 %v7853, %v7853
        %v8366 = vpack.c.bf16 %v7854, %v7854
        %v8367 = vpack.c.bf16 %v7855, %v7855
        %v8368 = vpack.c.bf16 %v7856, %v7856
        %v8369 = vpack.c.bf16 %v7857, %v7857
        %v8370 = vpack.c.bf16 %v7858, %v7858
        %v8371 = vpack.c.bf16 %v7859, %v7859
        %v8372 = vpack.c.bf16 %v7860, %v7860
        %v8373 = vpack.c.bf16 %v7861, %v7861
        %v8374 = vpack.c.bf16 %v7862, %v7862
        %v8375 = vpack.c.bf16 %v7863, %v7863
        %v8376 = vpack.c.bf16 %v7864, %v7864
        %v8377 = vpack.c.bf16 %v7865, %v7865
        %v8378 = vpack.c.bf16 %v7866, %v7866
        %v8379 = vpack.c.bf16 %v7867, %v7867
        %v8380 = vpack.c.bf16 %v7868, %v7868
        %v8381 = vpack.c.bf16 %v7869, %v7869
        %v8382 = vpack.c.bf16 %v7870, %v7870
        %v8383 = vpack.c.bf16 %v7871, %v7871
        %v8384 = vpack.c.bf16 %v7872, %v7872
        %v8385 = vpack.c.bf16 %v7873, %v7873
        %v8386 = vpack.c.bf16 %v7874, %v7874
        %v8387 = vpack.c.bf16 %v7875, %v7875
        %v8388 = vpack.c.bf16 %v7876, %v7876
        %v8389 = vpack.c.bf16 %v7877, %v7877
        %v8390 = vpack.c.bf16 %v7878, %v7878
        %v8391 = vpack.c.bf16 %v7879, %v7879
        %v8392 = vpack.c.bf16 %v7880, %v7880
        %v8393 = vpack.c.bf16 %v7881, %v7881
        %v8394 = vpack.c.bf16 %v7882, %v7882
        %v8395 = vpack.c.bf16 %v7883, %v7883
        %v8396 = vpack.c.bf16 %v7884, %v7884
        %v8397 = vpack.c.bf16 %v7885, %v7885
        %v8398 = vpack.c.bf16 %v7886, %v7886
        %v8399 = vpack.c.bf16 %v7887, %v7887
        %v8400 = vpack.c.bf16 %v7888, %v7888
        %v8401 = vpack.c.bf16 %v7889, %v7889
        %v8402 = vpack.c.bf16 %v7890, %v7890
        %v8403 = vpack.c.bf16 %v7891, %v7891
        %v8404 = vpack.c.bf16 %v7892, %v7892
        %v8405 = vpack.c.bf16 %v7893, %v7893
        %v8406 = vpack.c.bf16 %v7894, %v7894
        %v8407 = vpack.c.bf16 %v7895, %v7895
        %v8408 = vpack.c.bf16 %v7896, %v7896
        %v8409 = vpack.c.bf16 %v7897, %v7897
        %v8410 = vpack.c.bf16 %v7898, %v7898
        %v8411 = vpack.c.bf16 %v7899, %v7899
        %v8412 = vpack.c.bf16 %v7900, %v7900
        %v8413 = vpack.c.bf16 %v7901, %v7901
        %v8414 = vpack.c.bf16 %v7902, %v7902
        %v8415 = vpack.c.bf16 %v7903, %v7903
        %v8416 = vpack.c.bf16 %v7904, %v7904
        %v8417 = vpack.c.bf16 %v7905, %v7905
        %v8418 = vpack.c.bf16 %v7906, %v7906
        %v8419 = vpack.c.bf16 %v7907, %v7907
        %v8420 = vpack.c.bf16 %v7908, %v7908
        %v8421 = vpack.c.bf16 %v7909, %v7909
        %v8422 = vpack.c.bf16 %v7910, %v7910
        %v8423 = vpack.c.bf16 %v7911, %v7911
        %v8424 = vpack.c.bf16 %v7912, %v7912
        %v8425 = vpack.c.bf16 %v7913, %v7913
        %v8426 = vpack.c.bf16 %v7914, %v7914
        %v8427 = vpack.c.bf16 %v7915, %v7915
        %v8428 = vpack.c.bf16 %v7916, %v7916
        %v8429 = vpack.c.bf16 %v7917, %v7917
        %v8430 = vpack.c.bf16 %v7918, %v7918
        %v8431 = vpack.c.bf16 %v7919, %v7919
        %v8432 = vpack.c.bf16 %v7920, %v7920
        %v8433 = vpack.c.bf16 %v7921, %v7921
        %v8434 = vpack.c.bf16 %v7922, %v7922
        %v8435 = vpack.c.bf16 %v7923, %v7923
        %v8436 = vpack.c.bf16 %v7924, %v7924
        %v8437 = vpack.c.bf16 %v7925, %v7925
        %v8438 = vpack.c.bf16 %v7926, %v7926
        %v8439 = vpack.c.bf16 %v7927, %v7927
        %v8440 = vpack.c.bf16 %v7928, %v7928
        %v8441 = vpack.c.bf16 %v7929, %v7929
        %v8442 = vpack.c.bf16 %v7930, %v7930
        %v8443 = vpack.c.bf16 %v7931, %v7931
        %v8444 = vpack.c.bf16 %v7932, %v7932
        %v8445 = vpack.c.bf16 %v7933, %v7933
        %v8446 = vpack.c.bf16 %v7934, %v7934
        %v8447 = vpack.c.bf16 %v7935, %v7935
        %v8448 = vpack.c.bf16 %v7936, %v7936
        %v8449 = vpack.c.bf16 %v7937, %v7937
        %v8450 = vpack.c.bf16 %v7938, %v7938
        %v8451 = vpack.c.bf16 %v7939, %v7939
        %v8452 = vpack.c.bf16 %v7940, %v7940
        %v8453 = vpack.c.bf16 %v7941, %v7941
        %v8454 = vpack.c.bf16 %v7942, %v7942
        %v8455 = vpack.c.bf16 %v7943, %v7943
        %v8456 = vpack.c.bf16 %v7944, %v7944
        %v8457 = vpack.c.bf16 %v7945, %v7945
        %v8458 = vpack.c.bf16 %v7946, %v7946
        %v8459 = vpack.c.bf16 %v7947, %v7947
        %v8460 = vpack.c.bf16 %v7948, %v7948
        %v8461 = vpack.c.bf16 %v7949, %v7949
        %v8462 = vpack.c.bf16 %v7950, %v7950
        %v8463 = vpack.c.bf16 %v7951, %v7951
        %v8464 = vpack.c.bf16 %v7952, %v7952
        %v8465 = vpack.c.bf16 %v7953, %v7953
        %v8466 = vpack.c.bf16 %v7954, %v7954
        %v8467 = vpack.c.bf16 %v7955, %v7955
        %v8468 = vpack.c.bf16 %v7956, %v7956
        %v8469 = vpack.c.bf16 %v7957, %v7957
        %v8470 = vpack.c.bf16 %v7958, %v7958
        %v8471 = vpack.c.bf16 %v7959, %v7959
        %v8472 = vpack.c.bf16 %v7960, %v7960
        %v8473 = vpack.c.bf16 %v7961, %v7961
        %v8474 = vpack.c.bf16 %v7962, %v7962
        %v8475 = vpack.c.bf16 %v7963, %v7963
        %v8476 = vpack.c.bf16 %v7964, %v7964
        %v8477 = vpack.c.bf16 %v7965, %v7965
        %v8478 = vpack.c.bf16 %v7966, %v7966
        %v8479 = vpack.c.bf16 %v7967, %v7967
        %v8480 = vpack.c.bf16 %v7968, %v7968
        %v8481 = vpack.c.bf16 %v7969, %v7969
        %v8482 = vpack.c.bf16 %v7970, %v7970
        %v8483 = vpack.c.bf16 %v7971, %v7971
        %v8484 = vpack.c.bf16 %v7972, %v7972
        %v8485 = vpack.c.bf16 %v7973, %v7973
        %v8486 = vpack.c.bf16 %v7974, %v7974
        %v8487 = vpack.c.bf16 %v7975, %v7975
        %v8488 = vpack.c.bf16 %v7976, %v7976
        %v8489 = vpack.c.bf16 %v7977, %v7977
        %v8490 = vpack.c.bf16 %v7978, %v7978
        %v8491 = vpack.c.bf16 %v7979, %v7979
        %v8492 = vpack.c.bf16 %v7980, %v7980
        %v8493 = vpack.c.bf16 %v7981, %v7981
        %v8494 = vpack.c.bf16 %v7982, %v7982
        %v8495 = vpack.c.bf16 %v7983, %v7983
        %v8496 = vpack.c.bf16 %v7984, %v7984
        %v8497 = vpack.c.bf16 %v7985, %v7985
        %v8498 = vpack.c.bf16 %v7986, %v7986
        %v8499 = vpack.c.bf16 %v7987, %v7987
        %v8500 = vpack.c.bf16 %v7988, %v7988
        %v8501 = vpack.c.bf16 %v7989, %v7989
        %v8502 = vpack.c.bf16 %v7990, %v7990
        %v8503 = vpack.c.bf16 %v7991, %v7991
        %v8504 = vpack.c.bf16 %v7992, %v7992
        %v8505 = vpack.c.bf16 %v7993, %v7993
        %v8506 = vpack.c.bf16 %v7994, %v7994
        %v8507 = vpack.c.bf16 %v7995, %v7995
        %v8508 = vpack.c.bf16 %v7996, %v7996
        %v8509 = vpack.c.bf16 %v7997, %v7997
        %v8510 = vpack.c.bf16 %v7998, %v7998
        %v8511 = vpack.c.bf16 %v7999, %v7999
        %v8512 = vpack.c.bf16 %v8000, %v8000
        %v8513 = vpack.c.bf16 %v8001, %v8001
        %v8514 = vpack.c.bf16 %v8002, %v8002
        %v8515 = vpack.c.bf16 %v8003, %v8003
        %v8516 = vpack.c.bf16 %v8004, %v8004
        %v8517 = vpack.c.bf16 %v8005, %v8005
        %v8518 = vpack.c.bf16 %v8006, %v8006
        %v8519 = vpack.c.bf16 %v8007, %v8007
        %v8520 = vpack.c.bf16 %v8008, %v8008
        %v8521 = vpack.c.bf16 %v8009, %v8009
        %v8522 = vpack.c.bf16 %v8010, %v8010
        %v8523 = vpack.c.bf16 %v8011, %v8011
        %v8524 = vpack.c.bf16 %v8012, %v8012
        %v8525 = vpack.c.bf16 %v8013, %v8013
        %v8526 = vpack.c.bf16 %v8014, %v8014
        %v8527 = vpack.c.bf16 %v8015, %v8015
        %v8528 = vpack.c.bf16 %v8016, %v8016
        %v8529 = vpack.c.bf16 %v8017, %v8017
        %v8530 = vpack.c.bf16 %v8018, %v8018
        %v8531 = vpack.c.bf16 %v8019, %v8019
        %v8532 = vpack.c.bf16 %v8020, %v8020
        %v8533 = vpack.c.bf16 %v8021, %v8021
        %v8534 = vpack.c.bf16 %v8022, %v8022
        %v8535 = vpack.c.bf16 %v8023, %v8023
        %v8536 = vpack.c.bf16 %v8024, %v8024
        %v8537 = vpack.c.bf16 %v8025, %v8025
        %v8538 = vpack.c.bf16 %v8026, %v8026
        %v8539 = vpack.c.bf16 %v8027, %v8027
        %v8540 = vpack.c.bf16 %v8028, %v8028
        %v8541 = vpack.c.bf16 %v8029, %v8029
        %v8542 = vpack.c.bf16 %v8030, %v8030
        %v8543 = vpack.c.bf16 %v8031, %v8031
        %v8544 = vpack.c.bf16 %v8032, %v8032
        %v8545 = vpack.c.bf16 %v8033, %v8033
        %v8546 = vpack.c.bf16 %v8034, %v8034
        %v8547 = vpack.c.bf16 %v8035, %v8035
        %v8548 = vpack.c.bf16 %v8036, %v8036
        %v8549 = vpack.c.bf16 %v8037, %v8037
        %v8550 = vpack.c.bf16 %v8038, %v8038
        %v8551 = vpack.c.bf16 %v8039, %v8039
        %v8552 = vpack.c.bf16 %v8040, %v8040
        %v8553 = vpack.c.bf16 %v8041, %v8041
        %v8554 = vpack.c.bf16 %v8042, %v8042
        %v8555 = vpack.c.bf16 %v8043, %v8043
        %v8556 = vpack.c.bf16 %v8044, %v8044
        %v8557 = vpack.c.bf16 %v8045, %v8045
        %v8558 = vpack.c.bf16 %v8046, %v8046
        %v8559 = vpack.c.bf16 %v8047, %v8047
        %v8560 = vpack.c.bf16 %v8048, %v8048
        %v8561 = vpack.c.bf16 %v8049, %v8049
        %v8562 = vpack.c.bf16 %v8050, %v8050
        %v8563 = vpack.c.bf16 %v8051, %v8051
        %v8564 = vpack.c.bf16 %v8052, %v8052
        %v8565 = vpack.c.bf16 %v8053, %v8053
        %v8566 = vpack.c.bf16 %v8054, %v8054
        %v8567 = vpack.c.bf16 %v8055, %v8055
        %v8568 = vpack.c.bf16 %v8056, %v8056
        %v8569 = vpack.c.bf16 %v8057, %v8057
        %v8570 = vpack.c.bf16 %v8058, %v8058
        %v8571 = vpack.c.bf16 %v8059, %v8059
        %v8572 = vpack.c.bf16 %v8060, %v8060
        %v8573 = vpack.c.bf16 %v8061, %v8061
        %v8574 = vpack.c.bf16 %v8062, %v8062
        %v8575 = vpack.c.bf16 %v8063, %v8063
        %v8576 = vpack.c.bf16 %v8064, %v8064
        %v8577 = vpack.c.bf16 %v8065, %v8065
        %v8578 = vpack.c.bf16 %v8066, %v8066
        %v8579 = vpack.c.bf16 %v8067, %v8067
        %v8580 = vpack.c.bf16 %v8068, %v8068
        %v8581 = vpack.c.bf16 %v8069, %v8069
        %v8582 = vpack.c.bf16 %v8070, %v8070
        %v8583 = vpack.c.bf16 %v8071, %v8071
        %v8584 = vpack.c.bf16 %v8072, %v8072
        %v8585 = vpack.c.bf16 %v8073, %v8073
        %v8586 = vpack.c.bf16 %v8074, %v8074
        %v8587 = vpack.c.bf16 %v8075, %v8075
        %v8588 = vpack.c.bf16 %v8076, %v8076
        %v8589 = vpack.c.bf16 %v8077, %v8077
        %v8590 = vpack.c.bf16 %v8078, %v8078
        %v8591 = vpack.c.bf16 %v8079, %v8079
        %v8592 = vpack.c.bf16 %v8080, %v8080
        %v8593 = vpack.c.bf16 %v8081, %v8081
        %v8594 = vpack.c.bf16 %v8082, %v8082
        %v8595 = vpack.c.bf16 %v8083, %v8083
        %v8596 = vpack.c.bf16 %v8084, %v8084
        %v8597 = vpack.c.bf16 %v8085, %v8085
        %v8598 = vpack.c.bf16 %v8086, %v8086
        %v8599 = vpack.c.bf16 %v8087, %v8087
        %v8600 = vpack.c.bf16 %v8088, %v8088
        %v8601 = vpack.c.bf16 %v8089, %v8089
        %v8602 = vpack.c.bf16 %v8090, %v8090
        %v8603 = vpack.c.bf16 %v8091, %v8091
        %v8604 = vpack.c.bf16 %v8092, %v8092
        %v8605 = vpack.c.bf16 %v8093, %v8093
        %v8606 = vpack.c.bf16 %v8094, %v8094
        %v8607 = vpack.c.bf16 %v8095, %v8095
        %v8608 = vpack.c.bf16 %v8096, %v8096
        %v8609 = vpack.c.bf16 %v8097, %v8097
        %v8610 = vpack.c.bf16 %v8098, %v8098
        %v8611 = vpack.c.bf16 %v8099, %v8099
        %v8612 = vpack.c.bf16 %v8100, %v8100
        %v8613 = vpack.c.bf16 %v8101, %v8101
        %v8614 = vpack.c.bf16 %v8102, %v8102
        %v8615 = vpack.c.bf16 %v8103, %v8103
        %v8616 = vpack.c.bf16 %v8104, %v8104
        %v8617 = vpack.c.bf16 %v8105, %v8105
        %v8618 = vpack.c.bf16 %v8106, %v8106
        %v8619 = vpack.c.bf16 %v8107, %v8107
        %v8620 = vpack.c.bf16 %v8108, %v8108
        %v8621 = vpack.c.bf16 %v8109, %v8109
        %v8622 = vpack.c.bf16 %v8110, %v8110
        %v8623 = vpack.c.bf16 %v8111, %v8111
        %v8624 = vpack.c.bf16 %v8112, %v8112
        %v8625 = vpack.c.bf16 %v8113, %v8113
        %v8626 = vpack.c.bf16 %v8114, %v8114
        %v8627 = vpack.c.bf16 %v8115, %v8115
        %v8628 = vpack.c.bf16 %v8116, %v8116
        %v8629 = vpack.c.bf16 %v8117, %v8117
        %v8630 = vpack.c.bf16 %v8118, %v8118
        %v8631 = vpack.c.bf16 %v8119, %v8119
        %v8632 = vpack.c.bf16 %v8120, %v8120
        %v8633 = vpack.c.bf16 %v8121, %v8121
        %v8634 = vpack.c.bf16 %v8122, %v8122
        %v8635 = vpack.c.bf16 %v8123, %v8123
        %v8636 = vpack.c.bf16 %v8124, %v8124
        %v8637 = vpack.c.bf16 %v8125, %v8125
        %v8638 = vpack.c.bf16 %v8126, %v8126
        %v8639 = vpack.c.bf16 %v8127, %v8127
        %v8640 = vpack.c.bf16 %v8128, %v8128
        %v8641 = vpack.c.bf16 %v8129, %v8129
        %v8642 = vpack.c.bf16 %v8130, %v8130
        %v8643 = vpack.c.bf16 %v8131, %v8131
        %v8644 = vpack.c.bf16 %v8132, %v8132
        %v8645 = vpack.c.bf16 %v8133, %v8133
        %v8646 = vpack.c.bf16 %v8134, %v8134
        %v8647 = vpack.c.bf16 %v8135, %v8135
        %v8648 = vpack.c.bf16 %v8136, %v8136
        %v8649 = vpack.c.bf16 %v8137, %v8137
        %v8650 = vpack.c.bf16 %v8138, %v8138
        %v8651 = vpack.c.bf16 %v8139, %v8139
        %v8652 = vpack.c.bf16 %v8140, %v8140
        %v8653 = vpack.c.bf16 %v8141, %v8141
        %v8654 = vpack.c.bf16 %v8142, %v8142
        %v8655 = vpack.c.bf16 %v8143, %v8143
        %v8656 = vpack.c.bf16 %v8144, %v8144
        %v8657 = vpack.c.bf16 %v8145, %v8145
        %v8658 = vpack.c.bf16 %v8146, %v8146
        %v8659 = vpack.c.bf16 %v8147, %v8147
        %v8660 = vpack.c.bf16 %v8148, %v8148
        %v8661 = vpack.c.bf16 %v8149, %v8149
        %v8662 = vpack.c.bf16 %v8150, %v8150
        %v8663 = vpack.c.bf16 %v8151, %v8151
        %v8664 = vpack.c.bf16 %v8152, %v8152
        %v8665 = vpack.c.bf16 %v8153, %v8153
        %v8666 = vpack.c.bf16 %v8154, %v8154
        %v8667 = vpack.c.bf16 %v8155, %v8155
        %v8668 = vpack.c.bf16 %v8156, %v8156
        %v8669 = vpack.c.bf16 %v8157, %v8157
        %v8670 = vpack.c.bf16 %v8158, %v8158
        %v8671 = vpack.c.bf16 %v8159, %v8159
        %v8672 = vpack.c.bf16 %v8160, %v8160
        %v8673 = vpack.c.bf16 %v8161, %v8161
        %v8674 = vpack.c.bf16 %v8162, %v8162
        %v8675 = vpack.c.bf16 %v8163, %v8163
        %v8676 = vpack.c.bf16 %v8164, %v8164
        %v8677 = vpack.c.bf16 %v8165, %v8165
        %v8678 = vpack.c.bf16 %v8166, %v8166
        %v8679 = vpack.c.bf16 %v8167, %v8167
        %v8680 = vpack.c.bf16 %v8168, %v8168
        %v8681 = vpack.c.bf16 %v8169, %v8169
        %v8682 = vpack.c.bf16 %v8170, %v8170
        %v8683 = vpack.c.bf16 %v8171, %v8171
        %v8684 = vpack.c.bf16 %v8172, %v8172
        %v8685 = vpack.c.bf16 %v8173, %v8173
        %v8686 = vpack.c.bf16 %v8174, %v8174
        %v8687 = vpack.c.bf16 %v8175, %v8175
        %v8688 = vpack.c.bf16 %v8176, %v8176
        %v8689 = vpack.c.bf16 %v8177, %v8177
        %v8690 = vpack.c.bf16 %v8178, %v8178
        %v8691 = vpack.c.bf16 %v8179, %v8179
        %v8692 = vpack.c.bf16 %v8180, %v8180
        %v8693 = vpack.c.bf16 %v8181, %v8181
        %v8694 = vpack.c.bf16 %v8182, %v8182
        %v8695 = vpack.c.bf16 %v8183, %v8183
        %v8696 = vpack.c.bf16 %v8184, %v8184
        %v8697 = vpack.c.bf16 %v8185, %v8185
        %v8698 = vpack.c.bf16 %v8186, %v8186
        %v8699 = vpack.c.bf16 %v8187, %v8187
        %v8700 = vpack.c.bf16 %v8188, %v8188
        %v8701 = vpack.c.bf16 %v8189, %v8189
        %v8702 = vpack.c.bf16 %v8190, %v8190
        %v8703 = vpack.c.bf16 %v8191, %v8191
        %v8704 = vpack.c.bf16 %v8192, %v8192
        %v8705 = vpack.c.bf16 %v8193, %v8193
        %v8706 = vpack.c.bf16 %v8194, %v8194
        %v8707 = vpack.c.bf16 %v8195, %v8195
        %v8708 = vpack.c.bf16 %v8196, %v8196
        %v8709 = vpack.c.bf16 %v8197, %v8197
        %v8710 = vpack.c.bf16 %v8198, %v8198
        %v8711 = vpack.c.bf16 %v8199, %v8199
        %v8712 = vpack.c.bf16 %v8200, %v8200
        %v8713 = vpack.c.bf16 %v8201, %v8201
        %v8714 = vpack.c.bf16 %v8202, %v8202
        %v8715 = vpack.c.bf16 %v8203, %v8203
        %v8716 = vpack.c.bf16 %v8204, %v8204
        %v8717 = vpack.c.bf16 %v8205, %v8205
        %v8718 = vpack.c.bf16 %v8206, %v8206
        %v8719 = vpack.c.bf16 %v8207, %v8207
        %v8720 = vpack.c.bf16 %v8208, %v8208
        %v8721 = vpack.c.bf16 %v8209, %v8209
        %v8722 = vpack.c.bf16 %v8210, %v8210
        %v8723 = vpack.c.bf16 %v8211, %v8211
        %v8724 = vpack.c.bf16 %v8212, %v8212
        %v8725 = vpack.c.bf16 %v8213, %v8213
        %v8726 = vpack.c.bf16 %v8214, %v8214
        %v8727 = vpack.c.bf16 %v8215, %v8215
        %v8728 = vpack.c.bf16 %v8216, %v8216
        %v8729 = vpack.c.bf16 %v8217, %v8217
        %v8730 = vpack.c.bf16 %v8218, %v8218
        %v8731 = vpack.c.bf16 %v8219, %v8219
        %v8732 = vpack.c.bf16 %v8220, %v8220
        %v8733 = vpack.c.bf16 %v8221, %v8221
        %v8734 = vpack.c.bf16 %v8222, %v8222
        %v8735 = vpack.c.bf16 %v8223, %v8223
        %v8736 = vpack.c.bf16 %v8224, %v8224
        %v8737 = vpack.c.bf16 %v8225, %v8225
        %v8738 = vpack.c.bf16 %v8226, %v8226
        %v8739 = vpack.c.bf16 %v8227, %v8227
        %v8740 = vpack.c.bf16 %v8228, %v8228
        %v8741 = vpack.c.bf16 %v8229, %v8229
        %v8742 = vpack.c.bf16 %v8230, %v8230
        %v8743 = vpack.c.bf16 %v8231, %v8231
        %v8744 = vpack.c.bf16 %v8232, %v8232
        %v8745 = vpack.c.bf16 %v8233, %v8233
        %v8746 = vpack.c.bf16 %v8234, %v8234
        %v8747 = vpack.c.bf16 %v8235, %v8235
        %v8748 = vpack.c.bf16 %v8236, %v8236
        %v8749 = vpack.c.bf16 %v8237, %v8237
        %v8750 = vpack.c.bf16 %v8238, %v8238
        %v8751 = vpack.c.bf16 %v8239, %v8239
        %v8752 = vpack.c.bf16 %v8240, %v8240
        %v8753 = vpack.c.bf16 %v8241, %v8241
        %v8754 = vpack.c.bf16 %v8242, %v8242
        %v8755 = vpack.c.bf16 %v8243, %v8243
        %v8756 = vpack.c.bf16 %v8244, %v8244
        %v8757 = vpack.c.bf16 %v8245, %v8245
        %v8758 = vpack.c.bf16 %v8246, %v8246
        %v8759 = vpack.c.bf16 %v8247, %v8247
        %v8760 = vpack.c.bf16 %v8248, %v8248
        %v8761 = vpack.c.bf16 %v8249, %v8249
        %v8762 = vpack.c.bf16 %v8250, %v8250
        %v8763 = vpack.c.bf16 %v8251, %v8251
        %v8764 = vpack.c.bf16 %v8252, %v8252
        %v8765 = vpack.c.bf16 %v8253, %v8253
        %v8766 = vpack.c.bf16 %v8254, %v8254
        %v8767 = vpack.c.bf16 %v8255, %v8255
        %v8768 = vpack.c.bf16 %v8256, %v8256
        %v8769 = vpack.c.bf16 %v8257, %v8257
        %v8770 = vpack.c.bf16 %v8258, %v8258
        %v8771 = vpack.c.bf16 %v8259, %v8259
        %v8772 = vpack.c.bf16 %v8260, %v8260
        %v8773 = vpack.c.bf16 %v8261, %v8261
        %v8774 = vpack.c.bf16 %v8262, %v8262
        %v8775 = vpack.c.bf16 %v8263, %v8263
        %v8776 = vpack.c.bf16 %v8264, %v8264
        %v8777 = vpack.c.bf16 %v8265, %v8265
        %v8778 = vpack.c.bf16 %v8266, %v8266
        %v8779 = vpack.c.bf16 %v8267, %v8267
        %v8780 = vpack.c.bf16 %v8268, %v8268
        %v8781 = vpack.c.bf16 %v8269, %v8269
        %v8782 = vpack.c.bf16 %v8270, %v8270
        %v8783 = vpack.c.bf16 %v8271, %v8271
        %v8784 = vpack.c.bf16 %v8272, %v8272
        %v8785 = vpack.c.bf16 %v8273, %v8273
        %v8786 = vpack.c.bf16 %v8274, %v8274
        %v8787 = vpack.c.bf16 %v8275, %v8275
        %v8788 = vpack.c.bf16 %v8276, %v8276
        %v8789 = vpack.c.bf16 %v8277, %v8277
        %vm8790 = vcmask 519168
        %8791 = vst.msk [vmem:[%s298] sm:$0xf] %vm8790, %v8278
        %8792 = vst.msk [vmem:[%s298 + $0x4] sm:$0xf] %vm8790, %v8279
        %8793 = vst.msk [vmem:[%s298 + $0x8] sm:$0xf] %vm8790, %v8280
        %8794 = vst.msk [vmem:[%s298 + $0xc] sm:$0xf] %vm8790, %v8281
        %8795 = vst.msk [vmem:[%s298 + $0x10] sm:$0xf] %vm8790, %v8282
        %8796 = vst.msk [vmem:[%s298 + $0x14] sm:$0xf] %vm8790, %v8283
        %8797 = vst.msk [vmem:[%s298 + $0x18] sm:$0xf] %vm8790, %v8284
        %8798 = vst.msk [vmem:[%s298 + $0x1c] sm:$0xf] %vm8790, %v8285
        %8799 = vst.msk [vmem:[%s298 + $0x20] sm:$0xf] %vm8790, %v8286
        %8800 = vst.msk [vmem:[%s298 + $0x24] sm:$0xf] %vm8790, %v8287
        %8801 = vst.msk [vmem:[%s298 + $0x28] sm:$0xf] %vm8790, %v8288
        %8802 = vst.msk [vmem:[%s298 + $0x2c] sm:$0xf] %vm8790, %v8289
        %8803 = vst.msk [vmem:[%s298 + $0x30] sm:$0xf] %vm8790, %v8290
        %8804 = vst.msk [vmem:[%s298 + $0x34] sm:$0xf] %vm8790, %v8291
        %8805 = vst.msk [vmem:[%s298 + $0x38] sm:$0xf] %vm8790, %v8292
        %8806 = vst.msk [vmem:[%s298 + $0x3c] sm:$0xf] %vm8790, %v8293
        %8807 = vst.msk [vmem:[%s298 + $0x40] sm:$0xf] %vm8790, %v8294
        %8808 = vst.msk [vmem:[%s298 + $0x44] sm:$0xf] %vm8790, %v8295
        %8809 = vst.msk [vmem:[%s298 + $0x48] sm:$0xf] %vm8790, %v8296
        %8810 = vst.msk [vmem:[%s298 + $0x4c] sm:$0xf] %vm8790, %v8297
        %8811 = vst.msk [vmem:[%s298 + $0x50] sm:$0xf] %vm8790, %v8298
        %8812 = vst.msk [vmem:[%s298 + $0x54] sm:$0xf] %vm8790, %v8299
        %8813 = vst.msk [vmem:[%s298 + $0x58] sm:$0xf] %vm8790, %v8300
        %8814 = vst.msk [vmem:[%s298 + $0x5c] sm:$0xf] %vm8790, %v8301
        %8815 = vst.msk [vmem:[%s298 + $0x60] sm:$0xf] %vm8790, %v8302
        %8816 = vst.msk [vmem:[%s298 + $0x64] sm:$0xf] %vm8790, %v8303
        %8817 = vst.msk [vmem:[%s298 + $0x68] sm:$0xf] %vm8790, %v8304
        %8818 = vst.msk [vmem:[%s298 + $0x6c] sm:$0xf] %vm8790, %v8305
        %8819 = vst.msk [vmem:[%s298 + $0x70] sm:$0xf] %vm8790, %v8306
        %8820 = vst.msk [vmem:[%s298 + $0x74] sm:$0xf] %vm8790, %v8307
        %8821 = vst.msk [vmem:[%s298 + $0x78] sm:$0xf] %vm8790, %v8308
        %8822 = vst.msk [vmem:[%s298 + $0x7c] sm:$0xf] %vm8790, %v8309
        %8823 = vst.msk [vmem:[%s298 + $0x80] sm:$0xf] %vm8790, %v8310
        %8824 = vst.msk [vmem:[%s298 + $0x84] sm:$0xf] %vm8790, %v8311
        %8825 = vst.msk [vmem:[%s298 + $0x88] sm:$0xf] %vm8790, %v8312
        %8826 = vst.msk [vmem:[%s298 + $0x8c] sm:$0xf] %vm8790, %v8313
        %8827 = vst.msk [vmem:[%s298 + $0x90] sm:$0xf] %vm8790, %v8314
        %8828 = vst.msk [vmem:[%s298 + $0x94] sm:$0xf] %vm8790, %v8315
        %8829 = vst.msk [vmem:[%s298 + $0x98] sm:$0xf] %vm8790, %v8316
        %8830 = vst.msk [vmem:[%s298 + $0x9c] sm:$0xf] %vm8790, %v8317
        %8831 = vst.msk [vmem:[%s298 + $0xa0] sm:$0xf] %vm8790, %v8318
        %8832 = vst.msk [vmem:[%s298 + $0xa4] sm:$0xf] %vm8790, %v8319
        %8833 = vst.msk [vmem:[%s298 + $0xa8] sm:$0xf] %vm8790, %v8320
        %8834 = vst.msk [vmem:[%s298 + $0xac] sm:$0xf] %vm8790, %v8321
        %8835 = vst.msk [vmem:[%s298 + $0xb0] sm:$0xf] %vm8790, %v8322
        %8836 = vst.msk [vmem:[%s298 + $0xb4] sm:$0xf] %vm8790, %v8323
        %8837 = vst.msk [vmem:[%s298 + $0xb8] sm:$0xf] %vm8790, %v8324
        %8838 = vst.msk [vmem:[%s298 + $0xbc] sm:$0xf] %vm8790, %v8325
        %8839 = vst.msk [vmem:[%s298 + $0xc0] sm:$0xf] %vm8790, %v8326
        %8840 = vst.msk [vmem:[%s298 + $0xc4] sm:$0xf] %vm8790, %v8327
        %8841 = vst.msk [vmem:[%s298 + $0xc8] sm:$0xf] %vm8790, %v8328
        %8842 = vst.msk [vmem:[%s298 + $0xcc] sm:$0xf] %vm8790, %v8329
        %8843 = vst.msk [vmem:[%s298 + $0xd0] sm:$0xf] %vm8790, %v8330
        %8844 = vst.msk [vmem:[%s298 + $0xd4] sm:$0xf] %vm8790, %v8331
        %8845 = vst.msk [vmem:[%s298 + $0xd8] sm:$0xf] %vm8790, %v8332
        %8846 = vst.msk [vmem:[%s298 + $0xdc] sm:$0xf] %vm8790, %v8333
        %8847 = vst.msk [vmem:[%s298 + $0xe0] sm:$0xf] %vm8790, %v8334
        %8848 = vst.msk [vmem:[%s298 + $0xe4] sm:$0xf] %vm8790, %v8335
        %8849 = vst.msk [vmem:[%s298 + $0xe8] sm:$0xf] %vm8790, %v8336
        %8850 = vst.msk [vmem:[%s298 + $0xec] sm:$0xf] %vm8790, %v8337
        %8851 = vst.msk [vmem:[%s298 + $0xf0] sm:$0xf] %vm8790, %v8338
        %8852 = vst.msk [vmem:[%s298 + $0xf4] sm:$0xf] %vm8790, %v8339
        %8853 = vst.msk [vmem:[%s298 + $0xf8] sm:$0xf] %vm8790, %v8340
        %8854 = vst.msk [vmem:[%s298 + $0xfc] sm:$0xf] %vm8790, %v8341
        %8855 = vst.msk [vmem:[%s298 + $0x100] sm:$0xf] %vm8790, %v8342
        %8856 = vst.msk [vmem:[%s298 + $0x104] sm:$0xf] %vm8790, %v8343
        %8857 = vst.msk [vmem:[%s298 + $0x108] sm:$0xf] %vm8790, %v8344
        %8858 = vst.msk [vmem:[%s298 + $0x10c] sm:$0xf] %vm8790, %v8345
        %8859 = vst.msk [vmem:[%s298 + $0x110] sm:$0xf] %vm8790, %v8346
        %8860 = vst.msk [vmem:[%s298 + $0x114] sm:$0xf] %vm8790, %v8347
        %8861 = vst.msk [vmem:[%s298 + $0x118] sm:$0xf] %vm8790, %v8348
        %8862 = vst.msk [vmem:[%s298 + $0x11c] sm:$0xf] %vm8790, %v8349
        %8863 = vst.msk [vmem:[%s298 + $0x120] sm:$0xf] %vm8790, %v8350
        %8864 = vst.msk [vmem:[%s298 + $0x124] sm:$0xf] %vm8790, %v8351
        %8865 = vst.msk [vmem:[%s298 + $0x128] sm:$0xf] %vm8790, %v8352
        %8866 = vst.msk [vmem:[%s298 + $0x12c] sm:$0xf] %vm8790, %v8353
        %8867 = vst.msk [vmem:[%s298 + $0x130] sm:$0xf] %vm8790, %v8354
        %8868 = vst.msk [vmem:[%s298 + $0x134] sm:$0xf] %vm8790, %v8355
        %8869 = vst.msk [vmem:[%s298 + $0x138] sm:$0xf] %vm8790, %v8356
        %8870 = vst.msk [vmem:[%s298 + $0x13c] sm:$0xf] %vm8790, %v8357
        %8871 = vst.msk [vmem:[%s298 + $0x140] sm:$0xf] %vm8790, %v8358
        %8872 = vst.msk [vmem:[%s298 + $0x144] sm:$0xf] %vm8790, %v8359
        %8873 = vst.msk [vmem:[%s298 + $0x148] sm:$0xf] %vm8790, %v8360
        %8874 = vst.msk [vmem:[%s298 + $0x14c] sm:$0xf] %vm8790, %v8361
        %8875 = vst.msk [vmem:[%s298 + $0x150] sm:$0xf] %vm8790, %v8362
        %8876 = vst.msk [vmem:[%s298 + $0x154] sm:$0xf] %vm8790, %v8363
        %8877 = vst.msk [vmem:[%s298 + $0x158] sm:$0xf] %vm8790, %v8364
        %8878 = vst.msk [vmem:[%s298 + $0x15c] sm:$0xf] %vm8790, %v8365
        %8879 = vst.msk [vmem:[%s298 + $0x160] sm:$0xf] %vm8790, %v8366
        %8880 = vst.msk [vmem:[%s298 + $0x164] sm:$0xf] %vm8790, %v8367
        %8881 = vst.msk [vmem:[%s298 + $0x168] sm:$0xf] %vm8790, %v8368
        %8882 = vst.msk [vmem:[%s298 + $0x16c] sm:$0xf] %vm8790, %v8369
        %8883 = vst.msk [vmem:[%s298 + $0x170] sm:$0xf] %vm8790, %v8370
        %8884 = vst.msk [vmem:[%s298 + $0x174] sm:$0xf] %vm8790, %v8371
        %8885 = vst.msk [vmem:[%s298 + $0x178] sm:$0xf] %vm8790, %v8372
        %8886 = vst.msk [vmem:[%s298 + $0x17c] sm:$0xf] %vm8790, %v8373
        %8887 = vst.msk [vmem:[%s298 + $0x180] sm:$0xf] %vm8790, %v8374
        %8888 = vst.msk [vmem:[%s298 + $0x184] sm:$0xf] %vm8790, %v8375
        %8889 = vst.msk [vmem:[%s298 + $0x188] sm:$0xf] %vm8790, %v8376
        %8890 = vst.msk [vmem:[%s298 + $0x18c] sm:$0xf] %vm8790, %v8377
        %8891 = vst.msk [vmem:[%s298 + $0x190] sm:$0xf] %vm8790, %v8378
        %8892 = vst.msk [vmem:[%s298 + $0x194] sm:$0xf] %vm8790, %v8379
        %8893 = vst.msk [vmem:[%s298 + $0x198] sm:$0xf] %vm8790, %v8380
        %8894 = vst.msk [vmem:[%s298 + $0x19c] sm:$0xf] %vm8790, %v8381
        %8895 = vst.msk [vmem:[%s298 + $0x1a0] sm:$0xf] %vm8790, %v8382
        %8896 = vst.msk [vmem:[%s298 + $0x1a4] sm:$0xf] %vm8790, %v8383
        %8897 = vst.msk [vmem:[%s298 + $0x1a8] sm:$0xf] %vm8790, %v8384
        %8898 = vst.msk [vmem:[%s298 + $0x1ac] sm:$0xf] %vm8790, %v8385
        %8899 = vst.msk [vmem:[%s298 + $0x1b0] sm:$0xf] %vm8790, %v8386
        %8900 = vst.msk [vmem:[%s298 + $0x1b4] sm:$0xf] %vm8790, %v8387
        %8901 = vst.msk [vmem:[%s298 + $0x1b8] sm:$0xf] %vm8790, %v8388
        %8902 = vst.msk [vmem:[%s298 + $0x1bc] sm:$0xf] %vm8790, %v8389
        %8903 = vst.msk [vmem:[%s298 + $0x1c0] sm:$0xf] %vm8790, %v8390
        %8904 = vst.msk [vmem:[%s298 + $0x1c4] sm:$0xf] %vm8790, %v8391
        %8905 = vst.msk [vmem:[%s298 + $0x1c8] sm:$0xf] %vm8790, %v8392
        %8906 = vst.msk [vmem:[%s298 + $0x1cc] sm:$0xf] %vm8790, %v8393
        %8907 = vst.msk [vmem:[%s298 + $0x1d0] sm:$0xf] %vm8790, %v8394
        %8908 = vst.msk [vmem:[%s298 + $0x1d4] sm:$0xf] %vm8790, %v8395
        %8909 = vst.msk [vmem:[%s298 + $0x1d8] sm:$0xf] %vm8790, %v8396
        %8910 = vst.msk [vmem:[%s298 + $0x1dc] sm:$0xf] %vm8790, %v8397
        %8911 = vst.msk [vmem:[%s298 + $0x1e0] sm:$0xf] %vm8790, %v8398
        %8912 = vst.msk [vmem:[%s298 + $0x1e4] sm:$0xf] %vm8790, %v8399
        %8913 = vst.msk [vmem:[%s298 + $0x1e8] sm:$0xf] %vm8790, %v8400
        %8914 = vst.msk [vmem:[%s298 + $0x1ec] sm:$0xf] %vm8790, %v8401
        %8915 = vst.msk [vmem:[%s298 + $0x1f0] sm:$0xf] %vm8790, %v8402
        %8916 = vst.msk [vmem:[%s298 + $0x1f4] sm:$0xf] %vm8790, %v8403
        %8917 = vst.msk [vmem:[%s298 + $0x1f8] sm:$0xf] %vm8790, %v8404
        %8918 = vst.msk [vmem:[%s298 + $0x1fc] sm:$0xf] %vm8790, %v8405
        %8919 = vst.msk [vmem:[%s298 + $0x200] sm:$0xf] %vm8790, %v8406
        %8920 = vst.msk [vmem:[%s298 + $0x204] sm:$0xf] %vm8790, %v8407
        %8921 = vst.msk [vmem:[%s298 + $0x208] sm:$0xf] %vm8790, %v8408
        %8922 = vst.msk [vmem:[%s298 + $0x20c] sm:$0xf] %vm8790, %v8409
        %8923 = vst.msk [vmem:[%s298 + $0x210] sm:$0xf] %vm8790, %v8410
        %8924 = vst.msk [vmem:[%s298 + $0x214] sm:$0xf] %vm8790, %v8411
        %8925 = vst.msk [vmem:[%s298 + $0x218] sm:$0xf] %vm8790, %v8412
        %8926 = vst.msk [vmem:[%s298 + $0x21c] sm:$0xf] %vm8790, %v8413
        %8927 = vst.msk [vmem:[%s298 + $0x220] sm:$0xf] %vm8790, %v8414
        %8928 = vst.msk [vmem:[%s298 + $0x224] sm:$0xf] %vm8790, %v8415
        %8929 = vst.msk [vmem:[%s298 + $0x228] sm:$0xf] %vm8790, %v8416
        %8930 = vst.msk [vmem:[%s298 + $0x22c] sm:$0xf] %vm8790, %v8417
        %8931 = vst.msk [vmem:[%s298 + $0x230] sm:$0xf] %vm8790, %v8418
        %8932 = vst.msk [vmem:[%s298 + $0x234] sm:$0xf] %vm8790, %v8419
        %8933 = vst.msk [vmem:[%s298 + $0x238] sm:$0xf] %vm8790, %v8420
        %8934 = vst.msk [vmem:[%s298 + $0x23c] sm:$0xf] %vm8790, %v8421
        %8935 = vst.msk [vmem:[%s298 + $0x240] sm:$0xf] %vm8790, %v8422
        %8936 = vst.msk [vmem:[%s298 + $0x244] sm:$0xf] %vm8790, %v8423
        %8937 = vst.msk [vmem:[%s298 + $0x248] sm:$0xf] %vm8790, %v8424
        %8938 = vst.msk [vmem:[%s298 + $0x24c] sm:$0xf] %vm8790, %v8425
        %8939 = vst.msk [vmem:[%s298 + $0x250] sm:$0xf] %vm8790, %v8426
        %8940 = vst.msk [vmem:[%s298 + $0x254] sm:$0xf] %vm8790, %v8427
        %8941 = vst.msk [vmem:[%s298 + $0x258] sm:$0xf] %vm8790, %v8428
        %8942 = vst.msk [vmem:[%s298 + $0x25c] sm:$0xf] %vm8790, %v8429
        %8943 = vst.msk [vmem:[%s298 + $0x260] sm:$0xf] %vm8790, %v8430
        %8944 = vst.msk [vmem:[%s298 + $0x264] sm:$0xf] %vm8790, %v8431
        %8945 = vst.msk [vmem:[%s298 + $0x268] sm:$0xf] %vm8790, %v8432
        %8946 = vst.msk [vmem:[%s298 + $0x26c] sm:$0xf] %vm8790, %v8433
        %8947 = vst.msk [vmem:[%s298 + $0x270] sm:$0xf] %vm8790, %v8434
        %8948 = vst.msk [vmem:[%s298 + $0x274] sm:$0xf] %vm8790, %v8435
        %8949 = vst.msk [vmem:[%s298 + $0x278] sm:$0xf] %vm8790, %v8436
        %8950 = vst.msk [vmem:[%s298 + $0x27c] sm:$0xf] %vm8790, %v8437
        %8951 = vst.msk [vmem:[%s298 + $0x280] sm:$0xf] %vm8790, %v8438
        %8952 = vst.msk [vmem:[%s298 + $0x284] sm:$0xf] %vm8790, %v8439
        %8953 = vst.msk [vmem:[%s298 + $0x288] sm:$0xf] %vm8790, %v8440
        %8954 = vst.msk [vmem:[%s298 + $0x28c] sm:$0xf] %vm8790, %v8441
        %8955 = vst.msk [vmem:[%s298 + $0x290] sm:$0xf] %vm8790, %v8442
        %8956 = vst.msk [vmem:[%s298 + $0x294] sm:$0xf] %vm8790, %v8443
        %8957 = vst.msk [vmem:[%s298 + $0x298] sm:$0xf] %vm8790, %v8444
        %8958 = vst.msk [vmem:[%s298 + $0x29c] sm:$0xf] %vm8790, %v8445
        %8959 = vst.msk [vmem:[%s298 + $0x2a0] sm:$0xf] %vm8790, %v8446
        %8960 = vst.msk [vmem:[%s298 + $0x2a4] sm:$0xf] %vm8790, %v8447
        %8961 = vst.msk [vmem:[%s298 + $0x2a8] sm:$0xf] %vm8790, %v8448
        %8962 = vst.msk [vmem:[%s298 + $0x2ac] sm:$0xf] %vm8790, %v8449
        %8963 = vst.msk [vmem:[%s298 + $0x2b0] sm:$0xf] %vm8790, %v8450
        %8964 = vst.msk [vmem:[%s298 + $0x2b4] sm:$0xf] %vm8790, %v8451
        %8965 = vst.msk [vmem:[%s298 + $0x2b8] sm:$0xf] %vm8790, %v8452
        %8966 = vst.msk [vmem:[%s298 + $0x2bc] sm:$0xf] %vm8790, %v8453
        %8967 = vst.msk [vmem:[%s298 + $0x2c0] sm:$0xf] %vm8790, %v8454
        %8968 = vst.msk [vmem:[%s298 + $0x2c4] sm:$0xf] %vm8790, %v8455
        %8969 = vst.msk [vmem:[%s298 + $0x2c8] sm:$0xf] %vm8790, %v8456
        %8970 = vst.msk [vmem:[%s298 + $0x2cc] sm:$0xf] %vm8790, %v8457
        %8971 = vst.msk [vmem:[%s298 + $0x2d0] sm:$0xf] %vm8790, %v8458
        %8972 = vst.msk [vmem:[%s298 + $0x2d4] sm:$0xf] %vm8790, %v8459
        %8973 = vst.msk [vmem:[%s298 + $0x2d8] sm:$0xf] %vm8790, %v8460
        %8974 = vst.msk [vmem:[%s298 + $0x2dc] sm:$0xf] %vm8790, %v8461
        %8975 = vst.msk [vmem:[%s298 + $0x2e0] sm:$0xf] %vm8790, %v8462
        %8976 = vst.msk [vmem:[%s298 + $0x2e4] sm:$0xf] %vm8790, %v8463
        %8977 = vst.msk [vmem:[%s298 + $0x2e8] sm:$0xf] %vm8790, %v8464
        %8978 = vst.msk [vmem:[%s298 + $0x2ec] sm:$0xf] %vm8790, %v8465
        %8979 = vst.msk [vmem:[%s298 + $0x2f0] sm:$0xf] %vm8790, %v8466
        %8980 = vst.msk [vmem:[%s298 + $0x2f4] sm:$0xf] %vm8790, %v8467
        %8981 = vst.msk [vmem:[%s298 + $0x2f8] sm:$0xf] %vm8790, %v8468
        %8982 = vst.msk [vmem:[%s298 + $0x2fc] sm:$0xf] %vm8790, %v8469
        %8983 = vst.msk [vmem:[%s298 + $0x300] sm:$0xf] %vm8790, %v8470
        %8984 = vst.msk [vmem:[%s298 + $0x304] sm:$0xf] %vm8790, %v8471
        %8985 = vst.msk [vmem:[%s298 + $0x308] sm:$0xf] %vm8790, %v8472
        %8986 = vst.msk [vmem:[%s298 + $0x30c] sm:$0xf] %vm8790, %v8473
        %8987 = vst.msk [vmem:[%s298 + $0x310] sm:$0xf] %vm8790, %v8474
        %8988 = vst.msk [vmem:[%s298 + $0x314] sm:$0xf] %vm8790, %v8475
        %8989 = vst.msk [vmem:[%s298 + $0x318] sm:$0xf] %vm8790, %v8476
        %8990 = vst.msk [vmem:[%s298 + $0x31c] sm:$0xf] %vm8790, %v8477
        %8991 = vst.msk [vmem:[%s298 + $0x320] sm:$0xf] %vm8790, %v8478
        %8992 = vst.msk [vmem:[%s298 + $0x324] sm:$0xf] %vm8790, %v8479
        %8993 = vst.msk [vmem:[%s298 + $0x328] sm:$0xf] %vm8790, %v8480
        %8994 = vst.msk [vmem:[%s298 + $0x32c] sm:$0xf] %vm8790, %v8481
        %8995 = vst.msk [vmem:[%s298 + $0x330] sm:$0xf] %vm8790, %v8482
        %8996 = vst.msk [vmem:[%s298 + $0x334] sm:$0xf] %vm8790, %v8483
        %8997 = vst.msk [vmem:[%s298 + $0x338] sm:$0xf] %vm8790, %v8484
        %8998 = vst.msk [vmem:[%s298 + $0x33c] sm:$0xf] %vm8790, %v8485
        %8999 = vst.msk [vmem:[%s298 + $0x340] sm:$0xf] %vm8790, %v8486
        %9000 = vst.msk [vmem:[%s298 + $0x344] sm:$0xf] %vm8790, %v8487
        %9001 = vst.msk [vmem:[%s298 + $0x348] sm:$0xf] %vm8790, %v8488
        %9002 = vst.msk [vmem:[%s298 + $0x34c] sm:$0xf] %vm8790, %v8489
        %9003 = vst.msk [vmem:[%s298 + $0x350] sm:$0xf] %vm8790, %v8490
        %9004 = vst.msk [vmem:[%s298 + $0x354] sm:$0xf] %vm8790, %v8491
        %9005 = vst.msk [vmem:[%s298 + $0x358] sm:$0xf] %vm8790, %v8492
        %9006 = vst.msk [vmem:[%s298 + $0x35c] sm:$0xf] %vm8790, %v8493
        %9007 = vst.msk [vmem:[%s298 + $0x360] sm:$0xf] %vm8790, %v8494
        %9008 = vst.msk [vmem:[%s298 + $0x364] sm:$0xf] %vm8790, %v8495
        %9009 = vst.msk [vmem:[%s298 + $0x368] sm:$0xf] %vm8790, %v8496
        %9010 = vst.msk [vmem:[%s298 + $0x36c] sm:$0xf] %vm8790, %v8497
        %9011 = vst.msk [vmem:[%s298 + $0x370] sm:$0xf] %vm8790, %v8498
        %9012 = vst.msk [vmem:[%s298 + $0x374] sm:$0xf] %vm8790, %v8499
        %9013 = vst.msk [vmem:[%s298 + $0x378] sm:$0xf] %vm8790, %v8500
        %9014 = vst.msk [vmem:[%s298 + $0x37c] sm:$0xf] %vm8790, %v8501
        %9015 = vst.msk [vmem:[%s298 + $0x380] sm:$0xf] %vm8790, %v8502
        %9016 = vst.msk [vmem:[%s298 + $0x384] sm:$0xf] %vm8790, %v8503
        %9017 = vst.msk [vmem:[%s298 + $0x388] sm:$0xf] %vm8790, %v8504
        %9018 = vst.msk [vmem:[%s298 + $0x38c] sm:$0xf] %vm8790, %v8505
        %9019 = vst.msk [vmem:[%s298 + $0x390] sm:$0xf] %vm8790, %v8506
        %9020 = vst.msk [vmem:[%s298 + $0x394] sm:$0xf] %vm8790, %v8507
        %9021 = vst.msk [vmem:[%s298 + $0x398] sm:$0xf] %vm8790, %v8508
        %9022 = vst.msk [vmem:[%s298 + $0x39c] sm:$0xf] %vm8790, %v8509
        %9023 = vst.msk [vmem:[%s298 + $0x3a0] sm:$0xf] %vm8790, %v8510
        %9024 = vst.msk [vmem:[%s298 + $0x3a4] sm:$0xf] %vm8790, %v8511
        %9025 = vst.msk [vmem:[%s298 + $0x3a8] sm:$0xf] %vm8790, %v8512
        %9026 = vst.msk [vmem:[%s298 + $0x3ac] sm:$0xf] %vm8790, %v8513
        %9027 = vst.msk [vmem:[%s298 + $0x3b0] sm:$0xf] %vm8790, %v8514
        %9028 = vst.msk [vmem:[%s298 + $0x3b4] sm:$0xf] %vm8790, %v8515
        %9029 = vst.msk [vmem:[%s298 + $0x3b8] sm:$0xf] %vm8790, %v8516
        %9030 = vst.msk [vmem:[%s298 + $0x3bc] sm:$0xf] %vm8790, %v8517
        %9031 = vst.msk [vmem:[%s298 + $0x3c0] sm:$0xf] %vm8790, %v8518
        %9032 = vst.msk [vmem:[%s298 + $0x3c4] sm:$0xf] %vm8790, %v8519
        %9033 = vst.msk [vmem:[%s298 + $0x3c8] sm:$0xf] %vm8790, %v8520
        %9034 = vst.msk [vmem:[%s298 + $0x3cc] sm:$0xf] %vm8790, %v8521
        %9035 = vst.msk [vmem:[%s298 + $0x3d0] sm:$0xf] %vm8790, %v8522
        %9036 = vst.msk [vmem:[%s298 + $0x3d4] sm:$0xf] %vm8790, %v8523
        %9037 = vst.msk [vmem:[%s298 + $0x3d8] sm:$0xf] %vm8790, %v8524
        %9038 = vst.msk [vmem:[%s298 + $0x3dc] sm:$0xf] %vm8790, %v8525
        %9039 = vst.msk [vmem:[%s298 + $0x3e0] sm:$0xf] %vm8790, %v8526
        %9040 = vst.msk [vmem:[%s298 + $0x3e4] sm:$0xf] %vm8790, %v8527
        %9041 = vst.msk [vmem:[%s298 + $0x3e8] sm:$0xf] %vm8790, %v8528
        %9042 = vst.msk [vmem:[%s298 + $0x3ec] sm:$0xf] %vm8790, %v8529
        %9043 = vst.msk [vmem:[%s298 + $0x3f0] sm:$0xf] %vm8790, %v8530
        %9044 = vst.msk [vmem:[%s298 + $0x3f4] sm:$0xf] %vm8790, %v8531
        %9045 = vst.msk [vmem:[%s298 + $0x3f8] sm:$0xf] %vm8790, %v8532
        %9046 = vst.msk [vmem:[%s298 + $0x3fc] sm:$0xf] %vm8790, %v8533
        %9047 = vst.msk [vmem:[%s298 + $0x400] sm:$0xf] %vm8790, %v8534
        %9048 = vst.msk [vmem:[%s298 + $0x404] sm:$0xf] %vm8790, %v8535
        %9049 = vst.msk [vmem:[%s298 + $0x408] sm:$0xf] %vm8790, %v8536
        %9050 = vst.msk [vmem:[%s298 + $0x40c] sm:$0xf] %vm8790, %v8537
        %9051 = vst.msk [vmem:[%s298 + $0x410] sm:$0xf] %vm8790, %v8538
        %9052 = vst.msk [vmem:[%s298 + $0x414] sm:$0xf] %vm8790, %v8539
        %9053 = vst.msk [vmem:[%s298 + $0x418] sm:$0xf] %vm8790, %v8540
        %9054 = vst.msk [vmem:[%s298 + $0x41c] sm:$0xf] %vm8790, %v8541
        %9055 = vst.msk [vmem:[%s298 + $0x420] sm:$0xf] %vm8790, %v8542
        %9056 = vst.msk [vmem:[%s298 + $0x424] sm:$0xf] %vm8790, %v8543
        %9057 = vst.msk [vmem:[%s298 + $0x428] sm:$0xf] %vm8790, %v8544
        %9058 = vst.msk [vmem:[%s298 + $0x42c] sm:$0xf] %vm8790, %v8545
        %9059 = vst.msk [vmem:[%s298 + $0x430] sm:$0xf] %vm8790, %v8546
        %9060 = vst.msk [vmem:[%s298 + $0x434] sm:$0xf] %vm8790, %v8547
        %9061 = vst.msk [vmem:[%s298 + $0x438] sm:$0xf] %vm8790, %v8548
        %9062 = vst.msk [vmem:[%s298 + $0x43c] sm:$0xf] %vm8790, %v8549
        %9063 = vst.msk [vmem:[%s298 + $0x440] sm:$0xf] %vm8790, %v8550
        %9064 = vst.msk [vmem:[%s298 + $0x444] sm:$0xf] %vm8790, %v8551
        %9065 = vst.msk [vmem:[%s298 + $0x448] sm:$0xf] %vm8790, %v8552
        %9066 = vst.msk [vmem:[%s298 + $0x44c] sm:$0xf] %vm8790, %v8553
        %9067 = vst.msk [vmem:[%s298 + $0x450] sm:$0xf] %vm8790, %v8554
        %9068 = vst.msk [vmem:[%s298 + $0x454] sm:$0xf] %vm8790, %v8555
        %9069 = vst.msk [vmem:[%s298 + $0x458] sm:$0xf] %vm8790, %v8556
        %9070 = vst.msk [vmem:[%s298 + $0x45c] sm:$0xf] %vm8790, %v8557
        %9071 = vst.msk [vmem:[%s298 + $0x460] sm:$0xf] %vm8790, %v8558
        %9072 = vst.msk [vmem:[%s298 + $0x464] sm:$0xf] %vm8790, %v8559
        %9073 = vst.msk [vmem:[%s298 + $0x468] sm:$0xf] %vm8790, %v8560
        %9074 = vst.msk [vmem:[%s298 + $0x46c] sm:$0xf] %vm8790, %v8561
        %9075 = vst.msk [vmem:[%s298 + $0x470] sm:$0xf] %vm8790, %v8562
        %9076 = vst.msk [vmem:[%s298 + $0x474] sm:$0xf] %vm8790, %v8563
        %9077 = vst.msk [vmem:[%s298 + $0x478] sm:$0xf] %vm8790, %v8564
        %9078 = vst.msk [vmem:[%s298 + $0x47c] sm:$0xf] %vm8790, %v8565
        %9079 = vst.msk [vmem:[%s298 + $0x480] sm:$0xf] %vm8790, %v8566
        %9080 = vst.msk [vmem:[%s298 + $0x484] sm:$0xf] %vm8790, %v8567
        %9081 = vst.msk [vmem:[%s298 + $0x488] sm:$0xf] %vm8790, %v8568
        %9082 = vst.msk [vmem:[%s298 + $0x48c] sm:$0xf] %vm8790, %v8569
        %9083 = vst.msk [vmem:[%s298 + $0x490] sm:$0xf] %vm8790, %v8570
        %9084 = vst.msk [vmem:[%s298 + $0x494] sm:$0xf] %vm8790, %v8571
        %9085 = vst.msk [vmem:[%s298 + $0x498] sm:$0xf] %vm8790, %v8572
        %9086 = vst.msk [vmem:[%s298 + $0x49c] sm:$0xf] %vm8790, %v8573
        %9087 = vst.msk [vmem:[%s298 + $0x4a0] sm:$0xf] %vm8790, %v8574
        %9088 = vst.msk [vmem:[%s298 + $0x4a4] sm:$0xf] %vm8790, %v8575
        %9089 = vst.msk [vmem:[%s298 + $0x4a8] sm:$0xf] %vm8790, %v8576
        %9090 = vst.msk [vmem:[%s298 + $0x4ac] sm:$0xf] %vm8790, %v8577
        %9091 = vst.msk [vmem:[%s298 + $0x4b0] sm:$0xf] %vm8790, %v8578
        %9092 = vst.msk [vmem:[%s298 + $0x4b4] sm:$0xf] %vm8790, %v8579
        %9093 = vst.msk [vmem:[%s298 + $0x4b8] sm:$0xf] %vm8790, %v8580
        %9094 = vst.msk [vmem:[%s298 + $0x4bc] sm:$0xf] %vm8790, %v8581
        %9095 = vst.msk [vmem:[%s298 + $0x4c0] sm:$0xf] %vm8790, %v8582
        %9096 = vst.msk [vmem:[%s298 + $0x4c4] sm:$0xf] %vm8790, %v8583
        %9097 = vst.msk [vmem:[%s298 + $0x4c8] sm:$0xf] %vm8790, %v8584
        %9098 = vst.msk [vmem:[%s298 + $0x4cc] sm:$0xf] %vm8790, %v8585
        %9099 = vst.msk [vmem:[%s298 + $0x4d0] sm:$0xf] %vm8790, %v8586
        %9100 = vst.msk [vmem:[%s298 + $0x4d4] sm:$0xf] %vm8790, %v8587
        %9101 = vst.msk [vmem:[%s298 + $0x4d8] sm:$0xf] %vm8790, %v8588
        %9102 = vst.msk [vmem:[%s298 + $0x4dc] sm:$0xf] %vm8790, %v8589
        %9103 = vst.msk [vmem:[%s298 + $0x4e0] sm:$0xf] %vm8790, %v8590
        %9104 = vst.msk [vmem:[%s298 + $0x4e4] sm:$0xf] %vm8790, %v8591
        %9105 = vst.msk [vmem:[%s298 + $0x4e8] sm:$0xf] %vm8790, %v8592
        %9106 = vst.msk [vmem:[%s298 + $0x4ec] sm:$0xf] %vm8790, %v8593
        %9107 = vst.msk [vmem:[%s298 + $0x4f0] sm:$0xf] %vm8790, %v8594
        %9108 = vst.msk [vmem:[%s298 + $0x4f4] sm:$0xf] %vm8790, %v8595
        %9109 = vst.msk [vmem:[%s298 + $0x4f8] sm:$0xf] %vm8790, %v8596
        %9110 = vst.msk [vmem:[%s298 + $0x4fc] sm:$0xf] %vm8790, %v8597
        %9111 = vst.msk [vmem:[%s298 + $0x500] sm:$0xf] %vm8790, %v8598
        %9112 = vst.msk [vmem:[%s298 + $0x504] sm:$0xf] %vm8790, %v8599
        %9113 = vst.msk [vmem:[%s298 + $0x508] sm:$0xf] %vm8790, %v8600
        %9114 = vst.msk [vmem:[%s298 + $0x50c] sm:$0xf] %vm8790, %v8601
        %9115 = vst.msk [vmem:[%s298 + $0x510] sm:$0xf] %vm8790, %v8602
        %9116 = vst.msk [vmem:[%s298 + $0x514] sm:$0xf] %vm8790, %v8603
        %9117 = vst.msk [vmem:[%s298 + $0x518] sm:$0xf] %vm8790, %v8604
        %9118 = vst.msk [vmem:[%s298 + $0x51c] sm:$0xf] %vm8790, %v8605
        %9119 = vst.msk [vmem:[%s298 + $0x520] sm:$0xf] %vm8790, %v8606
        %9120 = vst.msk [vmem:[%s298 + $0x524] sm:$0xf] %vm8790, %v8607
        %9121 = vst.msk [vmem:[%s298 + $0x528] sm:$0xf] %vm8790, %v8608
        %9122 = vst.msk [vmem:[%s298 + $0x52c] sm:$0xf] %vm8790, %v8609
        %9123 = vst.msk [vmem:[%s298 + $0x530] sm:$0xf] %vm8790, %v8610
        %9124 = vst.msk [vmem:[%s298 + $0x534] sm:$0xf] %vm8790, %v8611
        %9125 = vst.msk [vmem:[%s298 + $0x538] sm:$0xf] %vm8790, %v8612
        %9126 = vst.msk [vmem:[%s298 + $0x53c] sm:$0xf] %vm8790, %v8613
        %9127 = vst.msk [vmem:[%s298 + $0x540] sm:$0xf] %vm8790, %v8614
        %9128 = vst.msk [vmem:[%s298 + $0x544] sm:$0xf] %vm8790, %v8615
        %9129 = vst.msk [vmem:[%s298 + $0x548] sm:$0xf] %vm8790, %v8616
        %9130 = vst.msk [vmem:[%s298 + $0x54c] sm:$0xf] %vm8790, %v8617
        %9131 = vst.msk [vmem:[%s298 + $0x550] sm:$0xf] %vm8790, %v8618
        %9132 = vst.msk [vmem:[%s298 + $0x554] sm:$0xf] %vm8790, %v8619
        %9133 = vst.msk [vmem:[%s298 + $0x558] sm:$0xf] %vm8790, %v8620
        %9134 = vst.msk [vmem:[%s298 + $0x55c] sm:$0xf] %vm8790, %v8621
        %9135 = vst.msk [vmem:[%s298 + $0x560] sm:$0xf] %vm8790, %v8622
        %9136 = vst.msk [vmem:[%s298 + $0x564] sm:$0xf] %vm8790, %v8623
        %9137 = vst.msk [vmem:[%s298 + $0x568] sm:$0xf] %vm8790, %v8624
        %9138 = vst.msk [vmem:[%s298 + $0x56c] sm:$0xf] %vm8790, %v8625
        %9139 = vst.msk [vmem:[%s298 + $0x570] sm:$0xf] %vm8790, %v8626
        %9140 = vst.msk [vmem:[%s298 + $0x574] sm:$0xf] %vm8790, %v8627
        %9141 = vst.msk [vmem:[%s298 + $0x578] sm:$0xf] %vm8790, %v8628
        %9142 = vst.msk [vmem:[%s298 + $0x57c] sm:$0xf] %vm8790, %v8629
        %9143 = vst.msk [vmem:[%s298 + $0x580] sm:$0xf] %vm8790, %v8630
        %9144 = vst.msk [vmem:[%s298 + $0x584] sm:$0xf] %vm8790, %v8631
        %9145 = vst.msk [vmem:[%s298 + $0x588] sm:$0xf] %vm8790, %v8632
        %9146 = vst.msk [vmem:[%s298 + $0x58c] sm:$0xf] %vm8790, %v8633
        %9147 = vst.msk [vmem:[%s298 + $0x590] sm:$0xf] %vm8790, %v8634
        %9148 = vst.msk [vmem:[%s298 + $0x594] sm:$0xf] %vm8790, %v8635
        %9149 = vst.msk [vmem:[%s298 + $0x598] sm:$0xf] %vm8790, %v8636
        %9150 = vst.msk [vmem:[%s298 + $0x59c] sm:$0xf] %vm8790, %v8637
        %9151 = vst.msk [vmem:[%s298 + $0x5a0] sm:$0xf] %vm8790, %v8638
        %9152 = vst.msk [vmem:[%s298 + $0x5a4] sm:$0xf] %vm8790, %v8639
        %9153 = vst.msk [vmem:[%s298 + $0x5a8] sm:$0xf] %vm8790, %v8640
        %9154 = vst.msk [vmem:[%s298 + $0x5ac] sm:$0xf] %vm8790, %v8641
        %9155 = vst.msk [vmem:[%s298 + $0x5b0] sm:$0xf] %vm8790, %v8642
        %9156 = vst.msk [vmem:[%s298 + $0x5b4] sm:$0xf] %vm8790, %v8643
        %9157 = vst.msk [vmem:[%s298 + $0x5b8] sm:$0xf] %vm8790, %v8644
        %9158 = vst.msk [vmem:[%s298 + $0x5bc] sm:$0xf] %vm8790, %v8645
        %9159 = vst.msk [vmem:[%s298 + $0x5c0] sm:$0xf] %vm8790, %v8646
        %9160 = vst.msk [vmem:[%s298 + $0x5c4] sm:$0xf] %vm8790, %v8647
        %9161 = vst.msk [vmem:[%s298 + $0x5c8] sm:$0xf] %vm8790, %v8648
        %9162 = vst.msk [vmem:[%s298 + $0x5cc] sm:$0xf] %vm8790, %v8649
        %9163 = vst.msk [vmem:[%s298 + $0x5d0] sm:$0xf] %vm8790, %v8650
        %9164 = vst.msk [vmem:[%s298 + $0x5d4] sm:$0xf] %vm8790, %v8651
        %9165 = vst.msk [vmem:[%s298 + $0x5d8] sm:$0xf] %vm8790, %v8652
        %9166 = vst.msk [vmem:[%s298 + $0x5dc] sm:$0xf] %vm8790, %v8653
        %9167 = vst.msk [vmem:[%s298 + $0x5e0] sm:$0xf] %vm8790, %v8654
        %9168 = vst.msk [vmem:[%s298 + $0x5e4] sm:$0xf] %vm8790, %v8655
        %9169 = vst.msk [vmem:[%s298 + $0x5e8] sm:$0xf] %vm8790, %v8656
        %9170 = vst.msk [vmem:[%s298 + $0x5ec] sm:$0xf] %vm8790, %v8657
        %9171 = vst.msk [vmem:[%s298 + $0x5f0] sm:$0xf] %vm8790, %v8658
        %9172 = vst.msk [vmem:[%s298 + $0x5f4] sm:$0xf] %vm8790, %v8659
        %9173 = vst.msk [vmem:[%s298 + $0x5f8] sm:$0xf] %vm8790, %v8660
        %9174 = vst.msk [vmem:[%s298 + $0x5fc] sm:$0xf] %vm8790, %v8661
        %9175 = vst.msk [vmem:[%s298 + $0x600] sm:$0xf] %vm8790, %v8662
        %9176 = vst.msk [vmem:[%s298 + $0x604] sm:$0xf] %vm8790, %v8663
        %9177 = vst.msk [vmem:[%s298 + $0x608] sm:$0xf] %vm8790, %v8664
        %9178 = vst.msk [vmem:[%s298 + $0x60c] sm:$0xf] %vm8790, %v8665
        %9179 = vst.msk [vmem:[%s298 + $0x610] sm:$0xf] %vm8790, %v8666
        %9180 = vst.msk [vmem:[%s298 + $0x614] sm:$0xf] %vm8790, %v8667
        %9181 = vst.msk [vmem:[%s298 + $0x618] sm:$0xf] %vm8790, %v8668
        %9182 = vst.msk [vmem:[%s298 + $0x61c] sm:$0xf] %vm8790, %v8669
        %9183 = vst.msk [vmem:[%s298 + $0x620] sm:$0xf] %vm8790, %v8670
        %9184 = vst.msk [vmem:[%s298 + $0x624] sm:$0xf] %vm8790, %v8671
        %9185 = vst.msk [vmem:[%s298 + $0x628] sm:$0xf] %vm8790, %v8672
        %9186 = vst.msk [vmem:[%s298 + $0x62c] sm:$0xf] %vm8790, %v8673
        %9187 = vst.msk [vmem:[%s298 + $0x630] sm:$0xf] %vm8790, %v8674
        %9188 = vst.msk [vmem:[%s298 + $0x634] sm:$0xf] %vm8790, %v8675
        %9189 = vst.msk [vmem:[%s298 + $0x638] sm:$0xf] %vm8790, %v8676
        %9190 = vst.msk [vmem:[%s298 + $0x63c] sm:$0xf] %vm8790, %v8677
        %9191 = vst.msk [vmem:[%s298 + $0x640] sm:$0xf] %vm8790, %v8678
        %9192 = vst.msk [vmem:[%s298 + $0x644] sm:$0xf] %vm8790, %v8679
        %9193 = vst.msk [vmem:[%s298 + $0x648] sm:$0xf] %vm8790, %v8680
        %9194 = vst.msk [vmem:[%s298 + $0x64c] sm:$0xf] %vm8790, %v8681
        %9195 = vst.msk [vmem:[%s298 + $0x650] sm:$0xf] %vm8790, %v8682
        %9196 = vst.msk [vmem:[%s298 + $0x654] sm:$0xf] %vm8790, %v8683
        %9197 = vst.msk [vmem:[%s298 + $0x658] sm:$0xf] %vm8790, %v8684
        %9198 = vst.msk [vmem:[%s298 + $0x65c] sm:$0xf] %vm8790, %v8685
        %9199 = vst.msk [vmem:[%s298 + $0x660] sm:$0xf] %vm8790, %v8686
        %9200 = vst.msk [vmem:[%s298 + $0x664] sm:$0xf] %vm8790, %v8687
        %9201 = vst.msk [vmem:[%s298 + $0x668] sm:$0xf] %vm8790, %v8688
        %9202 = vst.msk [vmem:[%s298 + $0x66c] sm:$0xf] %vm8790, %v8689
        %9203 = vst.msk [vmem:[%s298 + $0x670] sm:$0xf] %vm8790, %v8690
        %9204 = vst.msk [vmem:[%s298 + $0x674] sm:$0xf] %vm8790, %v8691
        %9205 = vst.msk [vmem:[%s298 + $0x678] sm:$0xf] %vm8790, %v8692
        %9206 = vst.msk [vmem:[%s298 + $0x67c] sm:$0xf] %vm8790, %v8693
        %9207 = vst.msk [vmem:[%s298 + $0x680] sm:$0xf] %vm8790, %v8694
        %9208 = vst.msk [vmem:[%s298 + $0x684] sm:$0xf] %vm8790, %v8695
        %9209 = vst.msk [vmem:[%s298 + $0x688] sm:$0xf] %vm8790, %v8696
        %9210 = vst.msk [vmem:[%s298 + $0x68c] sm:$0xf] %vm8790, %v8697
        %9211 = vst.msk [vmem:[%s298 + $0x690] sm:$0xf] %vm8790, %v8698
        %9212 = vst.msk [vmem:[%s298 + $0x694] sm:$0xf] %vm8790, %v8699
        %9213 = vst.msk [vmem:[%s298 + $0x698] sm:$0xf] %vm8790, %v8700
        %9214 = vst.msk [vmem:[%s298 + $0x69c] sm:$0xf] %vm8790, %v8701
        %9215 = vst.msk [vmem:[%s298 + $0x6a0] sm:$0xf] %vm8790, %v8702
        %9216 = vst.msk [vmem:[%s298 + $0x6a4] sm:$0xf] %vm8790, %v8703
        %9217 = vst.msk [vmem:[%s298 + $0x6a8] sm:$0xf] %vm8790, %v8704
        %9218 = vst.msk [vmem:[%s298 + $0x6ac] sm:$0xf] %vm8790, %v8705
        %9219 = vst.msk [vmem:[%s298 + $0x6b0] sm:$0xf] %vm8790, %v8706
        %9220 = vst.msk [vmem:[%s298 + $0x6b4] sm:$0xf] %vm8790, %v8707
        %9221 = vst.msk [vmem:[%s298 + $0x6b8] sm:$0xf] %vm8790, %v8708
        %9222 = vst.msk [vmem:[%s298 + $0x6bc] sm:$0xf] %vm8790, %v8709
        %9223 = vst.msk [vmem:[%s298 + $0x6c0] sm:$0xf] %vm8790, %v8710
        %9224 = vst.msk [vmem:[%s298 + $0x6c4] sm:$0xf] %vm8790, %v8711
        %9225 = vst.msk [vmem:[%s298 + $0x6c8] sm:$0xf] %vm8790, %v8712
        %9226 = vst.msk [vmem:[%s298 + $0x6cc] sm:$0xf] %vm8790, %v8713
        %9227 = vst.msk [vmem:[%s298 + $0x6d0] sm:$0xf] %vm8790, %v8714
        %9228 = vst.msk [vmem:[%s298 + $0x6d4] sm:$0xf] %vm8790, %v8715
        %9229 = vst.msk [vmem:[%s298 + $0x6d8] sm:$0xf] %vm8790, %v8716
        %9230 = vst.msk [vmem:[%s298 + $0x6dc] sm:$0xf] %vm8790, %v8717
        %9231 = vst.msk [vmem:[%s298 + $0x6e0] sm:$0xf] %vm8790, %v8718
        %9232 = vst.msk [vmem:[%s298 + $0x6e4] sm:$0xf] %vm8790, %v8719
        %9233 = vst.msk [vmem:[%s298 + $0x6e8] sm:$0xf] %vm8790, %v8720
        %9234 = vst.msk [vmem:[%s298 + $0x6ec] sm:$0xf] %vm8790, %v8721
        %9235 = vst.msk [vmem:[%s298 + $0x6f0] sm:$0xf] %vm8790, %v8722
        %9236 = vst.msk [vmem:[%s298 + $0x6f4] sm:$0xf] %vm8790, %v8723
        %9237 = vst.msk [vmem:[%s298 + $0x6f8] sm:$0xf] %vm8790, %v8724
        %9238 = vst.msk [vmem:[%s298 + $0x6fc] sm:$0xf] %vm8790, %v8725
        %9239 = vst.msk [vmem:[%s298 + $0x700] sm:$0xf] %vm8790, %v8726
        %9240 = vst.msk [vmem:[%s298 + $0x704] sm:$0xf] %vm8790, %v8727
        %9241 = vst.msk [vmem:[%s298 + $0x708] sm:$0xf] %vm8790, %v8728
        %9242 = vst.msk [vmem:[%s298 + $0x70c] sm:$0xf] %vm8790, %v8729
        %9243 = vst.msk [vmem:[%s298 + $0x710] sm:$0xf] %vm8790, %v8730
        %9244 = vst.msk [vmem:[%s298 + $0x714] sm:$0xf] %vm8790, %v8731
        %9245 = vst.msk [vmem:[%s298 + $0x718] sm:$0xf] %vm8790, %v8732
        %9246 = vst.msk [vmem:[%s298 + $0x71c] sm:$0xf] %vm8790, %v8733
        %9247 = vst.msk [vmem:[%s298 + $0x720] sm:$0xf] %vm8790, %v8734
        %9248 = vst.msk [vmem:[%s298 + $0x724] sm:$0xf] %vm8790, %v8735
        %9249 = vst.msk [vmem:[%s298 + $0x728] sm:$0xf] %vm8790, %v8736
        %9250 = vst.msk [vmem:[%s298 + $0x72c] sm:$0xf] %vm8790, %v8737
        %9251 = vst.msk [vmem:[%s298 + $0x730] sm:$0xf] %vm8790, %v8738
        %9252 = vst.msk [vmem:[%s298 + $0x734] sm:$0xf] %vm8790, %v8739
        %9253 = vst.msk [vmem:[%s298 + $0x738] sm:$0xf] %vm8790, %v8740
        %9254 = vst.msk [vmem:[%s298 + $0x73c] sm:$0xf] %vm8790, %v8741
        %9255 = vst.msk [vmem:[%s298 + $0x740] sm:$0xf] %vm8790, %v8742
        %9256 = vst.msk [vmem:[%s298 + $0x744] sm:$0xf] %vm8790, %v8743
        %9257 = vst.msk [vmem:[%s298 + $0x748] sm:$0xf] %vm8790, %v8744
        %9258 = vst.msk [vmem:[%s298 + $0x74c] sm:$0xf] %vm8790, %v8745
        %9259 = vst.msk [vmem:[%s298 + $0x750] sm:$0xf] %vm8790, %v8746
        %9260 = vst.msk [vmem:[%s298 + $0x754] sm:$0xf] %vm8790, %v8747
        %9261 = vst.msk [vmem:[%s298 + $0x758] sm:$0xf] %vm8790, %v8748
        %9262 = vst.msk [vmem:[%s298 + $0x75c] sm:$0xf] %vm8790, %v8749
        %9263 = vst.msk [vmem:[%s298 + $0x760] sm:$0xf] %vm8790, %v8750
        %9264 = vst.msk [vmem:[%s298 + $0x764] sm:$0xf] %vm8790, %v8751
        %9265 = vst.msk [vmem:[%s298 + $0x768] sm:$0xf] %vm8790, %v8752
        %9266 = vst.msk [vmem:[%s298 + $0x76c] sm:$0xf] %vm8790, %v8753
        %9267 = vst.msk [vmem:[%s298 + $0x770] sm:$0xf] %vm8790, %v8754
        %9268 = vst.msk [vmem:[%s298 + $0x774] sm:$0xf] %vm8790, %v8755
        %9269 = vst.msk [vmem:[%s298 + $0x778] sm:$0xf] %vm8790, %v8756
        %9270 = vst.msk [vmem:[%s298 + $0x77c] sm:$0xf] %vm8790, %v8757
        %9271 = vst.msk [vmem:[%s298 + $0x780] sm:$0xf] %vm8790, %v8758
        %9272 = vst.msk [vmem:[%s298 + $0x784] sm:$0xf] %vm8790, %v8759
        %9273 = vst.msk [vmem:[%s298 + $0x788] sm:$0xf] %vm8790, %v8760
        %9274 = vst.msk [vmem:[%s298 + $0x78c] sm:$0xf] %vm8790, %v8761
        %9275 = vst.msk [vmem:[%s298 + $0x790] sm:$0xf] %vm8790, %v8762
        %9276 = vst.msk [vmem:[%s298 + $0x794] sm:$0xf] %vm8790, %v8763
        %9277 = vst.msk [vmem:[%s298 + $0x798] sm:$0xf] %vm8790, %v8764
        %9278 = vst.msk [vmem:[%s298 + $0x79c] sm:$0xf] %vm8790, %v8765
        %9279 = vst.msk [vmem:[%s298 + $0x7a0] sm:$0xf] %vm8790, %v8766
        %9280 = vst.msk [vmem:[%s298 + $0x7a4] sm:$0xf] %vm8790, %v8767
        %9281 = vst.msk [vmem:[%s298 + $0x7a8] sm:$0xf] %vm8790, %v8768
        %9282 = vst.msk [vmem:[%s298 + $0x7ac] sm:$0xf] %vm8790, %v8769
        %9283 = vst.msk [vmem:[%s298 + $0x7b0] sm:$0xf] %vm8790, %v8770
        %9284 = vst.msk [vmem:[%s298 + $0x7b4] sm:$0xf] %vm8790, %v8771
        %9285 = vst.msk [vmem:[%s298 + $0x7b8] sm:$0xf] %vm8790, %v8772
        %9286 = vst.msk [vmem:[%s298 + $0x7bc] sm:$0xf] %vm8790, %v8773
        %9287 = vst.msk [vmem:[%s298 + $0x7c0] sm:$0xf] %vm8790, %v8774
        %9288 = vst.msk [vmem:[%s298 + $0x7c4] sm:$0xf] %vm8790, %v8775
        %9289 = vst.msk [vmem:[%s298 + $0x7c8] sm:$0xf] %vm8790, %v8776
        %9290 = vst.msk [vmem:[%s298 + $0x7cc] sm:$0xf] %vm8790, %v8777
        %9291 = vst.msk [vmem:[%s298 + $0x7d0] sm:$0xf] %vm8790, %v8778
        %9292 = vst.msk [vmem:[%s298 + $0x7d4] sm:$0xf] %vm8790, %v8779
        %9293 = vst.msk [vmem:[%s298 + $0x7d8] sm:$0xf] %vm8790, %v8780
        %9294 = vst.msk [vmem:[%s298 + $0x7dc] sm:$0xf] %vm8790, %v8781
        %9295 = vst.msk [vmem:[%s298 + $0x7e0] sm:$0xf] %vm8790, %v8782
        %9296 = vst.msk [vmem:[%s298 + $0x7e4] sm:$0xf] %vm8790, %v8783
        %9297 = vst.msk [vmem:[%s298 + $0x7e8] sm:$0xf] %vm8790, %v8784
        %9298 = vst.msk [vmem:[%s298 + $0x7ec] sm:$0xf] %vm8790, %v8785
        %9299 = vst.msk [vmem:[%s298 + $0x7f0] sm:$0xf] %vm8790, %v8786
        %9300 = vst.msk [vmem:[%s298 + $0x7f4] sm:$0xf] %vm8790, %v8787
        %9301 = vst.msk [vmem:[%s298 + $0x7f8] sm:$0xf] %vm8790, %v8788
        %9302 = vst.msk [vmem:[%s298 + $0x7fc] sm:$0xf] %vm8790, %v8789
      $region44: #{tpu_custom_call.1} parent=35 // pred_fallthru
        _
      %s9303 = smul.u32 512, %s20
      %p9304 = scmp.lt.s32.totalorder %s9303, 1535
      %s9305 = scalar_select %p9304, %s9303, 1535
      %p9306 = scmp.lt.s32.totalorder %s21, 0
      %s9307 = scalar_select %p9306, %s21, 0
      %s9308 = sadd.s32 %s9307, %s9305
      %s9309 = smul.addr %s9308, 4
      %s9310 = scalar_lea.vmem %s4, %s9309
      // Predicated region
      $region45: #{tpu_custom_call.1} parent=35 // pred_check
        %p9311 = pneg %p162
      $region46: #{tpu_custom_call.1} parent=35 // pred_check_branch
        %9313 = sbr.rel (%p9311) target = $region48
      $region47: #{tpu_custom_call.1} parent=35 // pred_region
        %s9314 = smul.u32 512, %s20
      $region48: #{tpu_custom_call.1} parent=35 // pred_fallthru
        _
    $region36: #{tpu_custom_call.1} parent=5 // pred_fallthru
      _
    %p9315 = scmp.le.s32.totalorder 2, %s10
    // Predicated region
    $region49: #{tpu_custom_call.1} parent=5 // pred_check
      %p9316 = pneg %p9315
    $region50: #{tpu_custom_call.1} parent=5 // pred_check_branch
      %9318 = sbr.rel (%p9316) target = $region52
    $region51: #{tpu_custom_call.1} parent=5 // pred_region
      %s9319 = ssub.s32 %s10, 2
      // Predicated region
      $region53: #{tpu_custom_call.1} parent=51 // pred_check
        %p9320 = pneg %p168
      $region54: #{tpu_custom_call.1} parent=51 // pred_check_branch
        %9322 = sbr.rel (%p9320) target = $region56
      $region55: #{tpu_custom_call.1} parent=51 // pred_region
        %s9323 = smul.u32 512, %s23
        %p9324 = scmp.lt.s32.totalorder %s9323, 1535
        %s9325 = scalar_select %p9324, %s9323, 1535
        %p9326 = scmp.lt.s32.totalorder %s24, 0
        %s9327 = scalar_select %p9326, %s24, 0
        %s9328 = sadd.s32 %s9327, %s9325
        %s9329 = smul.addr %s9328, 4
        %s9330 = scalar_lea.vmem %s4, %s9329
      $region56: #{tpu_custom_call.1} parent=51 // pred_fallthru
        _
    $region52: #{tpu_custom_call.1} parent=5 // pred_fallthru
      _
  $region6: #{tpu_custom_call.1} parent=0 // loop_footer
    %s14 = sadd.s32 1, %s10
  $region7: #{tpu_custom_call.1} parent=0 // loop_footer_branch
    %9 = sbr.rel target = $region3
  $region8: #{tpu_custom_call.1} parent=0 // loop_exit
    _

</llo_original>
